<compile_context>
chip_gen: v7x
topology: tpu7x:2x2x1
jax: 0.10.0
libtpu: 0.0.40
codegen_flags: <defaults>
</compile_context>

<pallas_src>
import functools
import math

import jax
import jax.numpy as jnp
from jax import lax
from jax.experimental import pallas as pl
from jax.experimental.pallas import tpu as pltpu


def _sigmoid(x):
    return 1.0 / (1.0 + jnp.exp(-x))


# --------------------------------------------------------------------------- #
# Single fused kernel: BiLSTM (packed-sequence semantics) + QKV + MHA + out_proj
# --------------------------------------------------------------------------- #
def _fused_bilstm_mha_kernel(
        x2d_ref, w_ih_ref, b8_ref, w_hh_f_ref, w_hh_b_ref, len_ref,
        wqkv_ref, bqkv_ref, wo_t_ref, bo_ref,
        lstm_out_ref, ctx_ref, attw_ref,
        xseq_ref, *, T, B, H, A, NH):
    f32 = jnp.float32
    HD = A // NH

    # ---- 1) input projection: both LSTM directions, all timesteps, one MXU matmul ----
    #   gates[:, :4H] = x @ W_ih_fwd^T + (b_ih_f + b_hh_f)
    #   gates[:, 4H:] = x @ W_ih_bwd^T + (b_ih_b + b_hh_b)
    gates = lax.dot_general(
        x2d_ref[...], w_ih_ref[...],
        dimension_numbers=(((1,), (1,)), ((), ())),
        preferred_element_type=f32) + b8_ref[...]                  # [T*B, 8H]

    lens = len_ref[...]                                            # [B, 1] int32
    w_hh_f = w_hh_f_ref[...]                                       # [4H, H]
    w_hh_b = w_hh_b_ref[...]                                       # [4H, H]

    def lstm_cell(z, c_prev):
        i = _sigmoid(z[:, 0 * H:1 * H])
        f = _sigmoid(z[:, 1 * H:2 * H])
        g = jnp.tanh(z[:, 2 * H:3 * H])
        o = _sigmoid(z[:, 3 * H:4 * H])
        c_new = f * c_prev + i * g
        return o * jnp.tanh(c_new), c_new

    h_f = jnp.zeros((B, H), f32)
    c_f = jnp.zeros((B, H), f32)
    h_b = jnp.zeros((B, H), f32)
    c_b = jnp.zeros((B, H), f32)

    # ---- 2) merged fwd/bwd recurrence (independent after the shared projection) ----
    for t in range(T):                                             # static unroll, T small
        tb = T - 1 - t
        g_f = gates[t * B:(t + 1) * B, 0:4 * H]                    # [B, 4H]
        g_b = gates[tb * B:(tb + 1) * B, 4 * H:8 * H]              # [B, 4H]

        # two small, independent cell matmuls issued back-to-back (MXU overlaps them)
        z_f = g_f + lax.dot_general(h_f, w_hh_f,
                                    dimension_numbers=(((1,), (1,)), ((), ())),
                                    preferred_element_type=f32)
        z_b = g_b + lax.dot_general(h_b, w_hh_b,
                                    dimension_numbers=(((1,), (1,)), ((), ())),
                                    preferred_element_type=f32)

        h_f, c_f = lstm_cell(z_f, c_f)
        h_b_new, c_b_new = lstm_cell(z_b, c_b)

        mask_f = (t < lens).astype(f32)                            # [B, 1]
        mask_b = (tb < lens).astype(f32)                           # [B, 1]
        out_f = h_f * mask_f                                       # fwd outputs zeroed past len
        # reverse direction: state held at zero until t = len-1, outputs zeroed past len
        h_b = h_b_new * mask_b
        c_b = c_b_new * mask_b

        # external (seq-first) LSTM output, [T, B, 2H]
        lstm_out_ref[t, :, 0:H] = out_f
        lstm_out_ref[tb, :, H:2 * H] = h_b
        # batch-major copy in VMEM scratch for the fused attention below, [B, T, 2H]
        for b in range(B):
            xseq_ref[b, t:t + 1, 0:H] = out_f[b:b + 1, :]
            xseq_ref[b, tb:tb + 1, H:2 * H] = h_b[b:b + 1, :]

    # ---- 3) fused (dense_qkv ∘ in_proj) + per-head attention + out_proj ----
    scale = 1.0 / math.sqrt(HD)
    bo = bo_ref[...]                                               # [1, A]

    for b in range(B):                                             # static, tiny batch
        x_b = xseq_ref[b]                                          # [T, 2H]
        out_acc = jnp.zeros((T, A), f32)
        w_sum = jnp.zeros((T, T), f32)
        for hi in range(NH):                                       # static unrolled heads
            rq = hi * HD
            rk = A + hi * HD
            rv = 2 * A + hi * HD
            # per-head weights are sublane (row) slices of the composed weight ref
            q_h = lax.dot_general(x_b, wqkv_ref[rq:rq + HD, :],
                                  dimension_numbers=(((1,), (1,)), ((), ())),
                                  preferred_element_type=f32) + bqkv_ref[hi:hi + 1, :]
            k_h = lax.dot_general(x_b, wqkv_ref[rk:rk + HD, :],
                                  dimension_numbers=(((1,), (1,)), ((), ())),
                                  preferred_element_type=f32) + bqkv_ref[NH + hi:NH + hi + 1, :]
            v_h = lax.dot_general(x_b, wqkv_ref[rv:rv + HD, :],
                                  dimension_numbers=(((1,), (1,)), ((), ())),
                                  preferred_element_type=f32) + bqkv_ref[2 * NH + hi:2 * NH + hi + 1, :]

            s = lax.dot_general(q_h * scale, k_h,
                                dimension_numbers=(((1,), (1,)), ((), ())),
                                preferred_element_type=f32)        # [T, T]
            s = s - jnp.max(s, axis=-1, keepdims=True)
            e = jnp.exp(s)
            p = e / jnp.sum(e, axis=-1, keepdims=True)             # exact softmax (weights sum to 1)
            w_sum = w_sum + p

            ctx_h = jnp.dot(p, v_h, preferred_element_type=f32)    # [T, HD]
            # out_proj folded into the head loop: accumulate into full-width [T, A]
            out_acc = out_acc + jnp.dot(ctx_h, wo_t_ref[hi * HD:(hi + 1) * HD, :],
                                        preferred_element_type=f32)

        ctx_ref[b] = (out_acc + bo).astype(ctx_ref.dtype)
        attw_ref[b] = (w_sum * (1.0 / NH)).astype(attw_ref.dtype)


# --------------------------------------------------------------------------- #
# One-time weight fusion (outside the jitted forward)
# --------------------------------------------------------------------------- #
def prepare_params(params, *, attn_heads):
    NH = attn_heads
    w_ih8 = jnp.concatenate([params["w_ih_f"], params["w_ih_b"]], axis=0)        # [8H, D]
    b8 = jnp.concatenate([params["b_ih_f"] + params["b_hh_f"],
                          params["b_ih_b"] + params["b_hh_b"]], axis=0)[None, :]  # [1, 8H]

    # compose dense_q/k/v with mha.in_proj (both affine; dropout p=0 -> identity)
    wq_in, wk_in, wv_in = jnp.split(params["in_proj_w"], 3, axis=0)              # each [A, A]
    bq_in, bk_in, bv_in = jnp.split(params["in_proj_b"], 3, axis=0)
    wqkv = jnp.concatenate([wq_in @ params["wq_d"],
                            wk_in @ params["wk_d"],
                            wv_in @ params["wv_d"]], axis=0)                     # [3A, 2H]
    bqkv = jnp.concatenate([wq_in @ params["bq_d"] + bq_in,
                            wk_in @ params["bk_d"] + bk_in,
                            wv_in @ params["bv_d"] + bv_in], axis=0)             # [3A]
    A = params["out_proj_w"].shape[0]
    HD = A // NH
    return {
        "w_ih8": w_ih8,
        "b8": b8,
        "w_hh_f": params["w_hh_f"],
        "w_hh_b": params["w_hh_b"],
        "wqkv": wqkv,                              # rows head-major inside each q/k/v block
        "bqkv_hd": bqkv.reshape(3 * NH, HD),       # row r = (q|k|v, head) bias block
        "wo_t": params["out_proj_w"].T,            # [A_in, A_out]
        "bo": params["out_proj_b"][None, :],       # [1, A]
    }


# --------------------------------------------------------------------------- #
# Jitted forward: one pallas_call + two free reshapes
# --------------------------------------------------------------------------- #
def bilstm_attention_forward(txt_e, txt_l, fused, *, hidden_dim, attn_density, attn_heads):
    T, B, D = txt_e.shape
    H, A, NH = hidden_dim, attn_density, attn_heads
    HD = A // NH

    x2d = txt_e.reshape(T * B, D)                        # free reshape (seq-major rows)
    lens2d = txt_l.astype(jnp.int32).reshape(B, 1)

    kernel = functools.partial(_fused_bilstm_mha_kernel, T=T, B=B, H=H, A=A, NH=NH)

    lstm_out, ctx, attw = pl.pallas_call(
        kernel,
        out_shape=(jax.ShapeDtypeStruct((T, B, 2 * H), jnp.float32),
                   jax.ShapeDtypeStruct((B, T, A), jnp.float32),
                   jax.ShapeDtypeStruct((B, T, T), jnp.float32)),
        grid_spec=pltpu.PrefetchScalarGridSpec(
            num_scalar_prefetch=0,
            grid=(1,),
            in_specs=[
                pl.BlockSpec((T * B, D), lambda i: (0, 0)),
                pl.BlockSpec((8 * H, D), lambda i: (0, 0)),
                pl.BlockSpec((1, 8 * H), lambda i: (0, 0)),
                pl.BlockSpec((4 * H, H), lambda i: (0, 0)),
                pl.BlockSpec((4 * H, H), lambda i: (0, 0)),
                pl.BlockSpec((B, 1), lambda i: (0, 0)),
                pl.BlockSpec((3 * A, 2 * H), lambda i: (0, 0)),
                pl.BlockSpec((3 * NH, HD), lambda i: (0, 0)),
                pl.BlockSpec((A, A), lambda i: (0, 0)),
                pl.BlockSpec((1, A), lambda i: (0, 0)),
            ],
            out_specs=(pl.BlockSpec((T, B, 2 * H), lambda i: (0, 0, 0)),
                       pl.BlockSpec((B, T, A), lambda i: (0, 0, 0)),
                       pl.BlockSpec((B, T, T), lambda i: (0, 0, 0))),
            scratch_shapes=[pltpu.VMEM((B, T, 2 * H), jnp.float32)],
        ),
        compiler_params=pltpu.CompilerParams(dimension_semantics=("arbitrary",)),
    )(x2d, fused["w_ih8"], fused["b8"], fused["w_hh_f"], fused["w_hh_b"], lens2d,
      fused["wqkv"], fused["bqkv_hd"], fused["wo_t"], fused["bo"])

    # attn_out.transpose(0,1).reshape(B, -1): kernel already wrote [B, T, A]; free reshape.
    attention_output = ctx.reshape(B, T * A)

    return {"text_lstm_output": lstm_out,
            "attention_output": attention_output,
            "attention_weights": attw}


# --------------------------------------------------------------------------- #
# Pure-JAX reference mirroring the PyTorch module (un-fused, exact softmax)
# --------------------------------------------------------------------------- #
def _reference(txt_e, txt_l, params, *, hidden_dim, attn_density, attn_heads):
    T, B, D = txt_e.shape
    H, A, NH = hidden_dim, attn_density, attn_heads
    HD = A // NH
    lens = txt_l.astype(jnp.int32)

    def cell(x_t, h, c, w_ih, w_hh, b_ih, b_hh):
        z = x_t @ w_ih.T + b_ih + h @ w_hh.T + b_hh
        i = jax.nn.sigmoid(z[:, 0:H])
        f = jax.nn.sigmoid(z[:, H:2 * H])
        g = jnp.tanh(z[:, 2 * H:3 * H])
        o = jax.nn.sigmoid(z[:, 3 * H:4 * H])
        c = f * c + i * g
        h = o * jnp.tanh(c)
        return h, c

    h = c = jnp.zeros((B, H), jnp.float32)
    outs_f = []
    for t in range(T):
        h, c = cell(txt_e[t], h, c, params["w_ih_f"], params["w_hh_f"],
                    params["b_ih_f"], params["b_hh_f"])
        mask = (t < lens).astype(jnp.float32)[:, None]
        outs_f.append(h * mask)
    h = c = jnp.zeros((B, H), jnp.float32)
    outs_b = [None] * T
    for t in range(T - 1, -1, -1):
        h, c = cell(txt_e[t], h, c, params["w_ih_b"], params["w_hh_b"],
                    params["b_ih_b"], params["b_hh_b"])
        mask = (t < lens).astype(jnp.float32)[:, None]
        h = h * mask
        c = c * mask
        outs_b[t] = h
    lstm_out = jnp.concatenate([jnp.stack(outs_f), jnp.stack(outs_b)], axis=-1)

    q_d = lstm_out @ params["wq_d"].T + params["bq_d"]
    k_d = lstm_out @ params["wk_d"].T + params["bk_d"]
    v_d = lstm_out @ params["wv_d"].T + params["bv_d"]
    wq, wk, wv = jnp.split(params["in_proj_w"], 3, axis=0)
    bq, bk, bv = jnp.split(params["in_proj_b"], 3, axis=0)
    q = q_d @ wq.T + bq
    k = k_d @ wk.T + bk
    v = v_d @ wv.T + bv

    def heads(z):  # [T,B,A] -> [B,NH,T,HD]
        return z.reshape(T, B, NH, HD).transpose(1, 2, 0, 3)

    qh = heads(q) / math.sqrt(HD)
    kh = heads(k)
    vh = heads(v)
    s = qh @ kh.transpose(0, 1, 3, 2)
    p = jax.nn.softmax(s, axis=-1)
    ctx = p @ vh
    ctx_tba = ctx.transpose(2, 0, 1, 3).reshape(T, B, A)
    out = ctx_tba @ params["out_proj_w"].T + params["out_proj_b"]
    attention_output = out.transpose(1, 0, 2).reshape(B, T * A)
    attention_weights = p.mean(axis=1)
    return lstm_out, attention_output, attention_weights


if __name__ == "__main__":
    # Small shapes consistent with the module: seq T=8, batch B=2, input D=32,
    # lstm_hidden_dim H=16 (-> 2H=32), attention_density A=16, heads=4.
    T, B, D = 8, 2, 32
    H, A, NH = 16, 16, 4

    key = jax.random.PRNGKey(0)
    keys = jax.random.split(key, 20)

    def uinit(k, shape, fan_in):
        bound = 1.0 / math.sqrt(fan_in)
        return jax.random.uniform(k, shape, minval=-bound, maxval=bound,
                                  dtype=jnp.float32)

    params = {
        "w_ih_f": uinit(keys[0], (4 * H, D), H),
        "w_hh_f": uinit(keys[1], (4 * H, H), H),
        "b_ih_f": uinit(keys[2], (4 * H,), H),
        "b_hh_f": uinit(keys[3], (4 * H,), H),
        "w_ih_b": uinit(keys[4], (4 * H, D), H),
        "w_hh_b": uinit(keys[5], (4 * H, H), H),
        "b_ih_b": uinit(keys[6], (4 * H,), H),
        "b_hh_b": uinit(keys[7], (4 * H,), H),
        "wq_d": uinit(keys[8], (A, 2 * H), 2 * H),
        "bq_d": uinit(keys[9], (A,), 2 * H),
        "wk_d": uinit(keys[10], (A, 2 * H), 2 * H),
        "bk_d": uinit(keys[11], (A,), 2 * H),
        "wv_d": uinit(keys[12], (A, 2 * H), 2 * H),
        "bv_d": uinit(keys[13], (A,), 2 * H),
        "in_proj_w": uinit(keys[14], (3 * A, A), A),
        "in_proj_b": uinit(keys[15], (3 * A,), A),
        "out_proj_w": uinit(keys[16], (A, A), A),
        "out_proj_b": uinit(keys[17], (A,), A),
    }

    txt_l = jnp.array([T, 5], dtype=jnp.int32)           # variable lengths
    x = jax.random.normal(keys[18], (T, B, D), dtype=jnp.float32)
    pad_mask = (jnp.arange(T)[:, None] < txt_l[None, :]).astype(jnp.float32)[:, :, None]
    txt_e = x * pad_mask                                 # zero-padded like a padded batch

    # One-time weight fusion, OUTSIDE the jitted hot path (perf feedback item 6).
    fused = jax.tree_util.tree_map(jax.block_until_ready,
                                   prepare_params(params, attn_heads=NH))

    forward = jax.jit(functools.partial(bilstm_attention_forward,
                                        hidden_dim=H, attn_density=A, attn_heads=NH))
    out = forward(txt_e, txt_l, fused)
    jax.block_until_ready(out)

    ref_lstm, ref_attn, ref_w = _reference(txt_e, txt_l, params,
                                           hidden_dim=H, attn_density=A, attn_heads=NH)

    assert jnp.allclose(out["text_lstm_output"], ref_lstm, atol=1e-4, rtol=1e-4)
    # exact softmax now; remaining deviation is only f32 rounding of the composed weights
    assert jnp.allclose(out["attention_output"], ref_attn, atol=1e-3, rtol=1e-3)
    assert jnp.allclose(out["attention_weights"], ref_w, atol=1e-3, rtol=1e-3)

    print("KERNEL_OK")
</pallas_src>

<mosaic_0001>
module attributes {stable_mosaic.version = 11 : i64} {
  func.func @_fused_bilstm_mha_kernel(%arg0: i32, %arg1: memref<16x32xf32, #tpu.memory_space<vmem>>, %arg2: memref<128x32xf32, #tpu.memory_space<vmem>>, %arg3: memref<1x128xf32, #tpu.memory_space<vmem>>, %arg4: memref<64x16xf32, #tpu.memory_space<vmem>>, %arg5: memref<64x16xf32, #tpu.memory_space<vmem>>, %arg6: memref<2x1xi32, #tpu.memory_space<vmem>>, %arg7: memref<48x32xf32, #tpu.memory_space<vmem>>, %arg8: memref<12x4xf32, #tpu.memory_space<vmem>>, %arg9: memref<16x16xf32, #tpu.memory_space<vmem>>, %arg10: memref<1x16xf32, #tpu.memory_space<vmem>>, %arg11: memref<8x2x32xf32, #tpu.memory_space<vmem>>, %arg12: memref<2x8x16xf32, #tpu.memory_space<vmem>>, %arg13: memref<2x8x8xf32, #tpu.memory_space<vmem>>, %arg14: memref<2x8x32xf32, #tpu.memory_space<vmem>>) attributes {dimension_semantics = [#tpu.dimension_semantics<arbitrary>], iteration_bounds = array<i64: 1>, scalar_prefetch = 0 : i64, scratch_operands = 1 : i64, tpu.core_type = #tpu.core_type<tc>, window_params = [{pipeline_mode = #tpu.pipeline_mode<synchronous>, transform_indices = @transform_0, window_bounds = array<i64: 16, 32>}, {pipeline_mode = #tpu.pipeline_mode<synchronous>, transform_indices = @transform_1, window_bounds = array<i64: 128, 32>}, {pipeline_mode = #tpu.pipeline_mode<synchronous>, transform_indices = @transform_2, window_bounds = array<i64: 1, 128>}, {pipeline_mode = #tpu.pipeline_mode<synchronous>, transform_indices = @transform_3, window_bounds = array<i64: 64, 16>}, {pipeline_mode = #tpu.pipeline_mode<synchronous>, transform_indices = @transform_4, window_bounds = array<i64: 64, 16>}, {pipeline_mode = #tpu.pipeline_mode<synchronous>, transform_indices = @transform_5, window_bounds = array<i64: 2, 1>}, {pipeline_mode = #tpu.pipeline_mode<synchronous>, transform_indices = @transform_6, window_bounds = array<i64: 48, 32>}, {pipeline_mode = #tpu.pipeline_mode<synchronous>, transform_indices = @transform_7, window_bounds = array<i64: 12, 4>}, {pipeline_mode = #tpu.pipeline_mode<synchronous>, transform_indices = @transform_8, window_bounds = array<i64: 16, 16>}, {pipeline_mode = #tpu.pipeline_mode<synchronous>, transform_indices = @transform_9, window_bounds = array<i64: 1, 16>}, {pipeline_mode = #tpu.pipeline_mode<synchronous>, transform_indices = @transform_10, window_bounds = array<i64: 8, 2, 32>}, {pipeline_mode = #tpu.pipeline_mode<synchronous>, transform_indices = @transform_11, window_bounds = array<i64: 2, 8, 16>}, {pipeline_mode = #tpu.pipeline_mode<synchronous>, transform_indices = @transform_12, window_bounds = array<i64: 2, 8, 8>}]} {
    %c0 = arith.constant 0 : index
    %c0_0 = arith.constant 0 : index
    %0 = vector.load %arg1[%c0, %c0_0] : memref<16x32xf32, #tpu.memory_space<vmem>>, vector<16x32xf32>
    %c0_1 = arith.constant 0 : index
    %c0_2 = arith.constant 0 : index
    %1 = vector.load %arg2[%c0_1, %c0_2] : memref<128x32xf32, #tpu.memory_space<vmem>>, vector<128x32xf32>
    %cst = arith.constant dense<0.000000e+00> : vector<16x128xf32>
    %2 = tpu.matmul %0, %1, %cst {dimension_numbers = #tpu.dot_dimension_numbers<[1], [1], [0], [0], [0, 0, 1, 0], [], []>} : vector<16x32xf32>, vector<128x32xf32>, vector<16x128xf32> -> vector<16x128xf32>
    %c0_3 = arith.constant 0 : index
    %c0_4 = arith.constant 0 : index
    %3 = vector.load %arg3[%c0_3, %c0_4] : memref<1x128xf32, #tpu.memory_space<vmem>>, vector<1x128xf32>
    %4 = vector.broadcast %3 : vector<1x128xf32> to vector<16x128xf32>
    %5 = arith.addf %2, %4 : vector<16x128xf32>
    %c0_5 = arith.constant 0 : index
    %c0_6 = arith.constant 0 : index
    %6 = vector.load %arg6[%c0_5, %c0_6] : memref<2x1xi32, #tpu.memory_space<vmem>>, vector<2x1xi32>
    %c0_7 = arith.constant 0 : index
    %c0_8 = arith.constant 0 : index
    %7 = vector.load %arg4[%c0_7, %c0_8] : memref<64x16xf32, #tpu.memory_space<vmem>>, vector<64x16xf32>
    %c0_9 = arith.constant 0 : index
    %c0_10 = arith.constant 0 : index
    %8 = vector.load %arg5[%c0_9, %c0_10] : memref<64x16xf32, #tpu.memory_space<vmem>>, vector<64x16xf32>
    %cst_11 = arith.constant 0.000000e+00 : f32
    %9 = vector.broadcast %cst_11 : f32 to vector<2x16xf32>
    %cst_12 = arith.constant 0.000000e+00 : f32
    %10 = vector.broadcast %cst_12 : f32 to vector<2x16xf32>
    %cst_13 = arith.constant 0.000000e+00 : f32
    %11 = vector.broadcast %cst_13 : f32 to vector<2x16xf32>
    %cst_14 = arith.constant 0.000000e+00 : f32
    %12 = vector.broadcast %cst_14 : f32 to vector<2x16xf32>
    %13 = vector.extract_strided_slice %5 {offsets = [0, 0], sizes = [2, 64], strides = [1, 1]} : vector<16x128xf32> to vector<2x64xf32>
    %14 = vector.extract_strided_slice %5 {offsets = [14, 64], sizes = [2, 64], strides = [1, 1]} : vector<16x128xf32> to vector<2x64xf32>
    %cst_15 = arith.constant dense<0.000000e+00> : vector<2x64xf32>
    %15 = tpu.matmul %9, %7, %cst_15 {dimension_numbers = #tpu.dot_dimension_numbers<[1], [1], [0], [0], [0, 0, 1, 0], [], []>} : vector<2x16xf32>, vector<64x16xf32>, vector<2x64xf32> -> vector<2x64xf32>
    %16 = arith.addf %13, %15 : vector<2x64xf32>
    %cst_16 = arith.constant dense<0.000000e+00> : vector<2x64xf32>
    %17 = tpu.matmul %11, %8, %cst_16 {dimension_numbers = #tpu.dot_dimension_numbers<[1], [1], [0], [0], [0, 0, 1, 0], [], []>} : vector<2x16xf32>, vector<64x16xf32>, vector<2x64xf32> -> vector<2x64xf32>
    %18 = arith.addf %14, %17 : vector<2x64xf32>
    %19 = vector.extract_strided_slice %16 {offsets = [0, 0], sizes = [2, 16], strides = [1, 1]} : vector<2x64xf32> to vector<2x16xf32>
    %cst_17 = arith.constant 0.000000e+00 : f32
    %20 = vector.broadcast %cst_17 : f32 to vector<2x16xf32>
    %21 = arith.subf %20, %19 : vector<2x16xf32>
    %22 = math.exp %21 : vector<2x16xf32>
    %cst_18 = arith.constant 1.000000e+00 : f32
    %23 = vector.broadcast %cst_18 : f32 to vector<2x16xf32>
    %24 = arith.addf %23, %22 : vector<2x16xf32>
    %cst_19 = arith.constant 1.000000e+00 : f32
    %25 = vector.broadcast %cst_19 : f32 to vector<2x16xf32>
    %26 = arith.divf %25, %24 : vector<2x16xf32>
    %27 = vector.extract_strided_slice %16 {offsets = [0, 16], sizes = [2, 16], strides = [1, 1]} : vector<2x64xf32> to vector<2x16xf32>
    %cst_20 = arith.constant 0.000000e+00 : f32
    %28 = vector.broadcast %cst_20 : f32 to vector<2x16xf32>
    %29 = arith.subf %28, %27 : vector<2x16xf32>
    %30 = math.exp %29 : vector<2x16xf32>
    %cst_21 = arith.constant 1.000000e+00 : f32
    %31 = vector.broadcast %cst_21 : f32 to vector<2x16xf32>
    %32 = arith.addf %31, %30 : vector<2x16xf32>
    %cst_22 = arith.constant 1.000000e+00 : f32
    %33 = vector.broadcast %cst_22 : f32 to vector<2x16xf32>
    %34 = arith.divf %33, %32 : vector<2x16xf32>
    %35 = vector.extract_strided_slice %16 {offsets = [0, 32], sizes = [2, 16], strides = [1, 1]} : vector<2x64xf32> to vector<2x16xf32>
    %36 = math.tanh %35 : vector<2x16xf32>
    %37 = vector.extract_strided_slice %16 {offsets = [0, 48], sizes = [2, 16], strides = [1, 1]} : vector<2x64xf32> to vector<2x16xf32>
    %cst_23 = arith.constant 0.000000e+00 : f32
    %38 = vector.broadcast %cst_23 : f32 to vector<2x16xf32>
    %39 = arith.subf %38, %37 : vector<2x16xf32>
    %40 = math.exp %39 : vector<2x16xf32>
    %cst_24 = arith.constant 1.000000e+00 : f32
    %41 = vector.broadcast %cst_24 : f32 to vector<2x16xf32>
    %42 = arith.addf %41, %40 : vector<2x16xf32>
    %cst_25 = arith.constant 1.000000e+00 : f32
    %43 = vector.broadcast %cst_25 : f32 to vector<2x16xf32>
    %44 = arith.divf %43, %42 : vector<2x16xf32>
    %45 = arith.mulf %34, %10 : vector<2x16xf32>
    %46 = arith.mulf %26, %36 : vector<2x16xf32>
    %47 = arith.addf %45, %46 : vector<2x16xf32>
    %48 = math.tanh %47 : vector<2x16xf32>
    %49 = arith.mulf %44, %48 : vector<2x16xf32>
    %50 = vector.extract_strided_slice %18 {offsets = [0, 0], sizes = [2, 16], strides = [1, 1]} : vector<2x64xf32> to vector<2x16xf32>
    %cst_26 = arith.constant 0.000000e+00 : f32
    %51 = vector.broadcast %cst_26 : f32 to vector<2x16xf32>
    %52 = arith.subf %51, %50 : vector<2x16xf32>
    %53 = math.exp %52 : vector<2x16xf32>
    %cst_27 = arith.constant 1.000000e+00 : f32
    %54 = vector.broadcast %cst_27 : f32 to vector<2x16xf32>
    %55 = arith.addf %54, %53 : vector<2x16xf32>
    %cst_28 = arith.constant 1.000000e+00 : f32
    %56 = vector.broadcast %cst_28 : f32 to vector<2x16xf32>
    %57 = arith.divf %56, %55 : vector<2x16xf32>
    %58 = vector.extract_strided_slice %18 {offsets = [0, 16], sizes = [2, 16], strides = [1, 1]} : vector<2x64xf32> to vector<2x16xf32>
    %cst_29 = arith.constant 0.000000e+00 : f32
    %59 = vector.broadcast %cst_29 : f32 to vector<2x16xf32>
    %60 = arith.subf %59, %58 : vector<2x16xf32>
    %61 = math.exp %60 : vector<2x16xf32>
    %cst_30 = arith.constant 1.000000e+00 : f32
    %62 = vector.broadcast %cst_30 : f32 to vector<2x16xf32>
    %63 = arith.addf %62, %61 : vector<2x16xf32>
    %cst_31 = arith.constant 1.000000e+00 : f32
    %64 = vector.broadcast %cst_31 : f32 to vector<2x16xf32>
    %65 = arith.divf %64, %63 : vector<2x16xf32>
    %66 = vector.extract_strided_slice %18 {offsets = [0, 32], sizes = [2, 16], strides = [1, 1]} : vector<2x64xf32> to vector<2x16xf32>
    %67 = math.tanh %66 : vector<2x16xf32>
    %68 = vector.extract_strided_slice %18 {offsets = [0, 48], sizes = [2, 16], strides = [1, 1]} : vector<2x64xf32> to vector<2x16xf32>
    %cst_32 = arith.constant 0.000000e+00 : f32
    %69 = vector.broadcast %cst_32 : f32 to vector<2x16xf32>
    %70 = arith.subf %69, %68 : vector<2x16xf32>
    %71 = math.exp %70 : vector<2x16xf32>
    %cst_33 = arith.constant 1.000000e+00 : f32
    %72 = vector.broadcast %cst_33 : f32 to vector<2x16xf32>
    %73 = arith.addf %72, %71 : vector<2x16xf32>
    %cst_34 = arith.constant 1.000000e+00 : f32
    %74 = vector.broadcast %cst_34 : f32 to vector<2x16xf32>
    %75 = arith.divf %74, %73 : vector<2x16xf32>
    %76 = arith.mulf %65, %12 : vector<2x16xf32>
    %77 = arith.mulf %57, %67 : vector<2x16xf32>
    %78 = arith.addf %76, %77 : vector<2x16xf32>
    %79 = math.tanh %78 : vector<2x16xf32>
    %80 = arith.mulf %75, %79 : vector<2x16xf32>
    %c0_i32 = arith.constant 0 : i32
    %81 = vector.broadcast %c0_i32 : i32 to vector<2x1xi32>
    %82 = arith.cmpi sgt, %6, %81 : vector<2x1xi32>
    %83 = arith.extui %82 : vector<2x1xi1> to vector<2x1xi32>
    %84 = arith.sitofp %83 : vector<2x1xi32> to vector<2x1xf32>
    %c7_i32 = arith.constant 7 : i32
    %85 = vector.broadcast %c7_i32 : i32 to vector<2x1xi32>
    %86 = arith.cmpi sgt, %6, %85 : vector<2x1xi32>
    %87 = arith.extui %86 : vector<2x1xi1> to vector<2x1xi32>
    %88 = arith.sitofp %87 : vector<2x1xi32> to vector<2x1xf32>
    %89 = vector.broadcast %84 : vector<2x1xf32> to vector<2x16xf32>
    %90 = arith.mulf %49, %89 : vector<2x16xf32>
    %91 = vector.broadcast %88 : vector<2x1xf32> to vector<2x16xf32>
    %92 = arith.mulf %80, %91 : vector<2x16xf32>
    %93 = vector.broadcast %88 : vector<2x1xf32> to vector<2x16xf32>
    %94 = arith.mulf %78, %93 : vector<2x16xf32>
    %c0_35 = arith.constant 0 : index
    %c0_36 = arith.constant 0 : index
    %c0_37 = arith.constant 0 : index
    %95 = vector.load %arg11[%c0_35, %c0_36, %c0_37] : memref<8x2x32xf32, #tpu.memory_space<vmem>>, vector<1x2x16xf32>
    %96 = vector.shape_cast %95 : vector<1x2x16xf32> to vector<2x16xf32>
    %97 = vector.shape_cast %90 : vector<2x16xf32> to vector<1x2x16xf32>
    tpu.vector_store %arg11[%c0_35, %c0_36, %c0_37], %97 {strides = array<i32>} : memref<8x2x32xf32, #tpu.memory_space<vmem>>, vector<1x2x16xf32>,
    %c7 = arith.constant 7 : index
    %c0_38 = arith.constant 0 : index
    %c16 = arith.constant 16 : index
    %98 = vector.load %arg11[%c7, %c0_38, %c16] : memref<8x2x32xf32, #tpu.memory_space<vmem>>, vector<1x2x16xf32>
    %99 = vector.shape_cast %98 : vector<1x2x16xf32> to vector<2x16xf32>
    %100 = vector.shape_cast %92 : vector<2x16xf32> to vector<1x2x16xf32>
    tpu.vector_store %arg11[%c7, %c0_38, %c16], %100 {strides = array<i32>} : memref<8x2x32xf32, #tpu.memory_space<vmem>>, vector<1x2x16xf32>,
    %101 = vector.extract_strided_slice %90 {offsets = [0, 0], sizes = [1, 16], strides = [1, 1]} : vector<2x16xf32> to vector<1x16xf32>
    %c0_39 = arith.constant 0 : index
    %c0_40 = arith.constant 0 : index
    %c0_41 = arith.constant 0 : index
    %102 = vector.load %arg14[%c0_39, %c0_40, %c0_41] : memref<2x8x32xf32, #tpu.memory_space<vmem>>, vector<1x1x16xf32>
    %103 = vector.shape_cast %102 : vector<1x1x16xf32> to vector<1x16xf32>
    %104 = vector.shape_cast %101 : vector<1x16xf32> to vector<1x1x16xf32>
    tpu.vector_store %arg14[%c0_39, %c0_40, %c0_41], %104 {strides = array<i32>} : memref<2x8x32xf32, #tpu.memory_space<vmem>>, vector<1x1x16xf32>,
    %105 = vector.extract_strided_slice %92 {offsets = [0, 0], sizes = [1, 16], strides = [1, 1]} : vector<2x16xf32> to vector<1x16xf32>
    %c0_42 = arith.constant 0 : index
    %c7_43 = arith.constant 7 : index
    %c16_44 = arith.constant 16 : index
    %106 = vector.load %arg14[%c0_42, %c7_43, %c16_44] : memref<2x8x32xf32, #tpu.memory_space<vmem>>, vector<1x1x16xf32>
    %107 = vector.shape_cast %106 : vector<1x1x16xf32> to vector<1x16xf32>
    %108 = vector.shape_cast %105 : vector<1x16xf32> to vector<1x1x16xf32>
    tpu.vector_store %arg14[%c0_42, %c7_43, %c16_44], %108 {strides = array<i32>} : memref<2x8x32xf32, #tpu.memory_space<vmem>>, vector<1x1x16xf32>,
    %109 = vector.extract_strided_slice %90 {offsets = [1, 0], sizes = [1, 16], strides = [1, 1]} : vector<2x16xf32> to vector<1x16xf32>
    %c1 = arith.constant 1 : index
    %c0_45 = arith.constant 0 : index
    %c0_46 = arith.constant 0 : index
    %110 = vector.load %arg14[%c1, %c0_45, %c0_46] : memref<2x8x32xf32, #tpu.memory_space<vmem>>, vector<1x1x16xf32>
    %111 = vector.shape_cast %110 : vector<1x1x16xf32> to vector<1x16xf32>
    %112 = vector.shape_cast %109 : vector<1x16xf32> to vector<1x1x16xf32>
    tpu.vector_store %arg14[%c1, %c0_45, %c0_46], %112 {strides = array<i32>} : memref<2x8x32xf32, #tpu.memory_space<vmem>>, vector<1x1x16xf32>,
    %113 = vector.extract_strided_slice %92 {offsets = [1, 0], sizes = [1, 16], strides = [1, 1]} : vector<2x16xf32> to vector<1x16xf32>
    %c1_47 = arith.constant 1 : index
    %c7_48 = arith.constant 7 : index
    %c16_49 = arith.constant 16 : index
    %114 = vector.load %arg14[%c1_47, %c7_48, %c16_49] : memref<2x8x32xf32, #tpu.memory_space<vmem>>, vector<1x1x16xf32>
    %115 = vector.shape_cast %114 : vector<1x1x16xf32> to vector<1x16xf32>
    %116 = vector.shape_cast %113 : vector<1x16xf32> to vector<1x1x16xf32>
    tpu.vector_store %arg14[%c1_47, %c7_48, %c16_49], %116 {strides = array<i32>} : memref<2x8x32xf32, #tpu.memory_space<vmem>>, vector<1x1x16xf32>,
    %117 = vector.extract_strided_slice %5 {offsets = [2, 0], sizes = [2, 64], strides = [1, 1]} : vector<16x128xf32> to vector<2x64xf32>
    %118 = vector.extract_strided_slice %5 {offsets = [12, 64], sizes = [2, 64], strides = [1, 1]} : vector<16x128xf32> to vector<2x64xf32>
    %cst_50 = arith.constant dense<0.000000e+00> : vector<2x64xf32>
    %119 = tpu.matmul %49, %7, %cst_50 {dimension_numbers = #tpu.dot_dimension_numbers<[1], [1], [0], [0], [0, 0, 1, 0], [], []>} : vector<2x16xf32>, vector<64x16xf32>, vector<2x64xf32> -> vector<2x64xf32>
    %120 = arith.addf %117, %119 : vector<2x64xf32>
    %cst_51 = arith.constant dense<0.000000e+00> : vector<2x64xf32>
    %121 = tpu.matmul %92, %8, %cst_51 {dimension_numbers = #tpu.dot_dimension_numbers<[1], [1], [0], [0], [0, 0, 1, 0], [], []>} : vector<2x16xf32>, vector<64x16xf32>, vector<2x64xf32> -> vector<2x64xf32>
    %122 = arith.addf %118, %121 : vector<2x64xf32>
    %123 = vector.extract_strided_slice %120 {offsets = [0, 0], sizes = [2, 16], strides = [1, 1]} : vector<2x64xf32> to vector<2x16xf32>
    %cst_52 = arith.constant 0.000000e+00 : f32
    %124 = vector.broadcast %cst_52 : f32 to vector<2x16xf32>
    %125 = arith.subf %124, %123 : vector<2x16xf32>
    %126 = math.exp %125 : vector<2x16xf32>
    %cst_53 = arith.constant 1.000000e+00 : f32
    %127 = vector.broadcast %cst_53 : f32 to vector<2x16xf32>
    %128 = arith.addf %127, %126 : vector<2x16xf32>
    %cst_54 = arith.constant 1.000000e+00 : f32
    %129 = vector.broadcast %cst_54 : f32 to vector<2x16xf32>
    %130 = arith.divf %129, %128 : vector<2x16xf32>
    %131 = vector.extract_strided_slice %120 {offsets = [0, 16], sizes = [2, 16], strides = [1, 1]} : vector<2x64xf32> to vector<2x16xf32>
    %cst_55 = arith.constant 0.000000e+00 : f32
    %132 = vector.broadcast %cst_55 : f32 to vector<2x16xf32>
    %133 = arith.subf %132, %131 : vector<2x16xf32>
    %134 = math.exp %133 : vector<2x16xf32>
    %cst_56 = arith.constant 1.000000e+00 : f32
    %135 = vector.broadcast %cst_56 : f32 to vector<2x16xf32>
    %136 = arith.addf %135, %134 : vector<2x16xf32>
    %cst_57 = arith.constant 1.000000e+00 : f32
    %137 = vector.broadcast %cst_57 : f32 to vector<2x16xf32>
    %138 = arith.divf %137, %136 : vector<2x16xf32>
    %139 = vector.extract_strided_slice %120 {offsets = [0, 32], sizes = [2, 16], strides = [1, 1]} : vector<2x64xf32> to vector<2x16xf32>
    %140 = math.tanh %139 : vector<2x16xf32>
    %141 = vector.extract_strided_slice %120 {offsets = [0, 48], sizes = [2, 16], strides = [1, 1]} : vector<2x64xf32> to vector<2x16xf32>
    %cst_58 = arith.constant 0.000000e+00 : f32
    %142 = vector.broadcast %cst_58 : f32 to vector<2x16xf32>
    %143 = arith.subf %142, %141 : vector<2x16xf32>
    %144 = math.exp %143 : vector<2x16xf32>
    %cst_59 = arith.constant 1.000000e+00 : f32
    %145 = vector.broadcast %cst_59 : f32 to vector<2x16xf32>
    %146 = arith.addf %145, %144 : vector<2x16xf32>
    %cst_60 = arith.constant 1.000000e+00 : f32
    %147 = vector.broadcast %cst_60 : f32 to vector<2x16xf32>
    %148 = arith.divf %147, %146 : vector<2x16xf32>
    %149 = arith.mulf %138, %47 : vector<2x16xf32>
    %150 = arith.mulf %130, %140 : vector<2x16xf32>
    %151 = arith.addf %149, %150 : vector<2x16xf32>
    %152 = math.tanh %151 : vector<2x16xf32>
    %153 = arith.mulf %148, %152 : vector<2x16xf32>
    %154 = vector.extract_strided_slice %122 {offsets = [0, 0], sizes = [2, 16], strides = [1, 1]} : vector<2x64xf32> to vector<2x16xf32>
    %cst_61 = arith.constant 0.000000e+00 : f32
    %155 = vector.broadcast %cst_61 : f32 to vector<2x16xf32>
    %156 = arith.subf %155, %154 : vector<2x16xf32>
    %157 = math.exp %156 : vector<2x16xf32>
    %cst_62 = arith.constant 1.000000e+00 : f32
    %158 = vector.broadcast %cst_62 : f32 to vector<2x16xf32>
    %159 = arith.addf %158, %157 : vector<2x16xf32>
    %cst_63 = arith.constant 1.000000e+00 : f32
    %160 = vector.broadcast %cst_63 : f32 to vector<2x16xf32>
    %161 = arith.divf %160, %159 : vector<2x16xf32>
    %162 = vector.extract_strided_slice %122 {offsets = [0, 16], sizes = [2, 16], strides = [1, 1]} : vector<2x64xf32> to vector<2x16xf32>
    %cst_64 = arith.constant 0.000000e+00 : f32
    %163 = vector.broadcast %cst_64 : f32 to vector<2x16xf32>
    %164 = arith.subf %163, %162 : vector<2x16xf32>
    %165 = math.exp %164 : vector<2x16xf32>
    %cst_65 = arith.constant 1.000000e+00 : f32
    %166 = vector.broadcast %cst_65 : f32 to vector<2x16xf32>
    %167 = arith.addf %166, %165 : vector<2x16xf32>
    %cst_66 = arith.constant 1.000000e+00 : f32
    %168 = vector.broadcast %cst_66 : f32 to vector<2x16xf32>
    %169 = arith.divf %168, %167 : vector<2x16xf32>
    %170 = vector.extract_strided_slice %122 {offsets = [0, 32], sizes = [2, 16], strides = [1, 1]} : vector<2x64xf32> to vector<2x16xf32>
    %171 = math.tanh %170 : vector<2x16xf32>
    %172 = vector.extract_strided_slice %122 {offsets = [0, 48], sizes = [2, 16], strides = [1, 1]} : vector<2x64xf32> to vector<2x16xf32>
    %cst_67 = arith.constant 0.000000e+00 : f32
    %173 = vector.broadcast %cst_67 : f32 to vector<2x16xf32>
    %174 = arith.subf %173, %172 : vector<2x16xf32>
    %175 = math.exp %174 : vector<2x16xf32>
    %cst_68 = arith.constant 1.000000e+00 : f32
    %176 = vector.broadcast %cst_68 : f32 to vector<2x16xf32>
    %177 = arith.addf %176, %175 : vector<2x16xf32>
    %cst_69 = arith.constant 1.000000e+00 : f32
    %178 = vector.broadcast %cst_69 : f32 to vector<2x16xf32>
    %179 = arith.divf %178, %177 : vector<2x16xf32>
    %180 = arith.mulf %169, %94 : vector<2x16xf32>
    %181 = arith.mulf %161, %171 : vector<2x16xf32>
    %182 = arith.addf %180, %181 : vector<2x16xf32>
    %183 = math.tanh %182 : vector<2x16xf32>
    %184 = arith.mulf %179, %183 : vector<2x16xf32>
    %c1_i32 = arith.constant 1 : i32
    %185 = vector.broadcast %c1_i32 : i32 to vector<2x1xi32>
    %186 = arith.cmpi sgt, %6, %185 : vector<2x1xi32>
    %187 = arith.extui %186 : vector<2x1xi1> to vector<2x1xi32>
    %188 = arith.sitofp %187 : vector<2x1xi32> to vector<2x1xf32>
    %c6_i32 = arith.constant 6 : i32
    %189 = vector.broadcast %c6_i32 : i32 to vector<2x1xi32>
    %190 = arith.cmpi sgt, %6, %189 : vector<2x1xi32>
    %191 = arith.extui %190 : vector<2x1xi1> to vector<2x1xi32>
    %192 = arith.sitofp %191 : vector<2x1xi32> to vector<2x1xf32>
    %193 = vector.broadcast %188 : vector<2x1xf32> to vector<2x16xf32>
    %194 = arith.mulf %153, %193 : vector<2x16xf32>
    %195 = vector.broadcast %192 : vector<2x1xf32> to vector<2x16xf32>
    %196 = arith.mulf %184, %195 : vector<2x16xf32>
    %197 = vector.broadcast %192 : vector<2x1xf32> to vector<2x16xf32>
    %198 = arith.mulf %182, %197 : vector<2x16xf32>
    %c1_70 = arith.constant 1 : index
    %c0_71 = arith.constant 0 : index
    %c0_72 = arith.constant 0 : index
    %199 = vector.load %arg11[%c1_70, %c0_71, %c0_72] : memref<8x2x32xf32, #tpu.memory_space<vmem>>, vector<1x2x16xf32>
    %200 = vector.shape_cast %199 : vector<1x2x16xf32> to vector<2x16xf32>
    %201 = vector.shape_cast %194 : vector<2x16xf32> to vector<1x2x16xf32>
    tpu.vector_store %arg11[%c1_70, %c0_71, %c0_72], %201 {strides = array<i32>} : memref<8x2x32xf32, #tpu.memory_space<vmem>>, vector<1x2x16xf32>,
    %c6 = arith.constant 6 : index
    %c0_73 = arith.constant 0 : index
    %c16_74 = arith.constant 16 : index
    %202 = vector.load %arg11[%c6, %c0_73, %c16_74] : memref<8x2x32xf32, #tpu.memory_space<vmem>>, vector<1x2x16xf32>
    %203 = vector.shape_cast %202 : vector<1x2x16xf32> to vector<2x16xf32>
    %204 = vector.shape_cast %196 : vector<2x16xf32> to vector<1x2x16xf32>
    tpu.vector_store %arg11[%c6, %c0_73, %c16_74], %204 {strides = array<i32>} : memref<8x2x32xf32, #tpu.memory_space<vmem>>, vector<1x2x16xf32>,
    %205 = vector.extract_strided_slice %194 {offsets = [0, 0], sizes = [1, 16], strides = [1, 1]} : vector<2x16xf32> to vector<1x16xf32>
    %c0_75 = arith.constant 0 : index
    %c1_76 = arith.constant 1 : index
    %c0_77 = arith.constant 0 : index
    %206 = vector.load %arg14[%c0_75, %c1_76, %c0_77] : memref<2x8x32xf32, #tpu.memory_space<vmem>>, vector<1x1x16xf32>
    %207 = vector.shape_cast %206 : vector<1x1x16xf32> to vector<1x16xf32>
    %208 = vector.shape_cast %205 : vector<1x16xf32> to vector<1x1x16xf32>
    tpu.vector_store %arg14[%c0_75, %c1_76, %c0_77], %208 {strides = array<i32>} : memref<2x8x32xf32, #tpu.memory_space<vmem>>, vector<1x1x16xf32>,
    %209 = vector.extract_strided_slice %196 {offsets = [0, 0], sizes = [1, 16], strides = [1, 1]} : vector<2x16xf32> to vector<1x16xf32>
    %c0_78 = arith.constant 0 : index
    %c6_79 = arith.constant 6 : index
    %c16_80 = arith.constant 16 : index
    %210 = vector.load %arg14[%c0_78, %c6_79, %c16_80] : memref<2x8x32xf32, #tpu.memory_space<vmem>>, vector<1x1x16xf32>
    %211 = vector.shape_cast %210 : vector<1x1x16xf32> to vector<1x16xf32>
    %212 = vector.shape_cast %209 : vector<1x16xf32> to vector<1x1x16xf32>
    tpu.vector_store %arg14[%c0_78, %c6_79, %c16_80], %212 {strides = array<i32>} : memref<2x8x32xf32, #tpu.memory_space<vmem>>, vector<1x1x16xf32>,
    %213 = vector.extract_strided_slice %194 {offsets = [1, 0], sizes = [1, 16], strides = [1, 1]} : vector<2x16xf32> to vector<1x16xf32>
    %c1_81 = arith.constant 1 : index
    %c1_82 = arith.constant 1 : index
    %c0_83 = arith.constant 0 : index
    %214 = vector.load %arg14[%c1_81, %c1_82, %c0_83] : memref<2x8x32xf32, #tpu.memory_space<vmem>>, vector<1x1x16xf32>
    %215 = vector.shape_cast %214 : vector<1x1x16xf32> to vector<1x16xf32>
    %216 = vector.shape_cast %213 : vector<1x16xf32> to vector<1x1x16xf32>
    tpu.vector_store %arg14[%c1_81, %c1_82, %c0_83], %216 {strides = array<i32>} : memref<2x8x32xf32, #tpu.memory_space<vmem>>, vector<1x1x16xf32>,
    %217 = vector.extract_strided_slice %196 {offsets = [1, 0], sizes = [1, 16], strides = [1, 1]} : vector<2x16xf32> to vector<1x16xf32>
    %c1_84 = arith.constant 1 : index
    %c6_85 = arith.constant 6 : index
    %c16_86 = arith.constant 16 : index
    %218 = vector.load %arg14[%c1_84, %c6_85, %c16_86] : memref<2x8x32xf32, #tpu.memory_space<vmem>>, vector<1x1x16xf32>
    %219 = vector.shape_cast %218 : vector<1x1x16xf32> to vector<1x16xf32>
    %220 = vector.shape_cast %217 : vector<1x16xf32> to vector<1x1x16xf32>
    tpu.vector_store %arg14[%c1_84, %c6_85, %c16_86], %220 {strides = array<i32>} : memref<2x8x32xf32, #tpu.memory_space<vmem>>, vector<1x1x16xf32>,
    %221 = vector.extract_strided_slice %5 {offsets = [4, 0], sizes = [2, 64], strides = [1, 1]} : vector<16x128xf32> to vector<2x64xf32>
    %222 = vector.extract_strided_slice %5 {offsets = [10, 64], sizes = [2, 64], strides = [1, 1]} : vector<16x128xf32> to vector<2x64xf32>
    %cst_87 = arith.constant dense<0.000000e+00> : vector<2x64xf32>
    %223 = tpu.matmul %153, %7, %cst_87 {dimension_numbers = #tpu.dot_dimension_numbers<[1], [1], [0], [0], [0, 0, 1, 0], [], []>} : vector<2x16xf32>, vector<64x16xf32>, vector<2x64xf32> -> vector<2x64xf32>
    %224 = arith.addf %221, %223 : vector<2x64xf32>
    %cst_88 = arith.constant dense<0.000000e+00> : vector<2x64xf32>
    %225 = tpu.matmul %196, %8, %cst_88 {dimension_numbers = #tpu.dot_dimension_numbers<[1], [1], [0], [0], [0, 0, 1, 0], [], []>} : vector<2x16xf32>, vector<64x16xf32>, vector<2x64xf32> -> vector<2x64xf32>
    %226 = arith.addf %222, %225 : vector<2x64xf32>
    %227 = vector.extract_strided_slice %224 {offsets = [0, 0], sizes = [2, 16], strides = [1, 1]} : vector<2x64xf32> to vector<2x16xf32>
    %cst_89 = arith.constant 0.000000e+00 : f32
    %228 = vector.broadcast %cst_89 : f32 to vector<2x16xf32>
    %229 = arith.subf %228, %227 : vector<2x16xf32>
    %230 = math.exp %229 : vector<2x16xf32>
    %cst_90 = arith.constant 1.000000e+00 : f32
    %231 = vector.broadcast %cst_90 : f32 to vector<2x16xf32>
    %232 = arith.addf %231, %230 : vector<2x16xf32>
    %cst_91 = arith.constant 1.000000e+00 : f32
    %233 = vector.broadcast %cst_91 : f32 to vector<2x16xf32>
    %234 = arith.divf %233, %232 : vector<2x16xf32>
    %235 = vector.extract_strided_slice %224 {offsets = [0, 16], sizes = [2, 16], strides = [1, 1]} : vector<2x64xf32> to vector<2x16xf32>
    %cst_92 = arith.constant 0.000000e+00 : f32
    %236 = vector.broadcast %cst_92 : f32 to vector<2x16xf32>
    %237 = arith.subf %236, %235 : vector<2x16xf32>
    %238 = math.exp %237 : vector<2x16xf32>
    %cst_93 = arith.constant 1.000000e+00 : f32
    %239 = vector.broadcast %cst_93 : f32 to vector<2x16xf32>
    %240 = arith.addf %239, %238 : vector<2x16xf32>
    %cst_94 = arith.constant 1.000000e+00 : f32
    %241 = vector.broadcast %cst_94 : f32 to vector<2x16xf32>
    %242 = arith.divf %241, %240 : vector<2x16xf32>
    %243 = vector.extract_strided_slice %224 {offsets = [0, 32], sizes = [2, 16], strides = [1, 1]} : vector<2x64xf32> to vector<2x16xf32>
    %244 = math.tanh %243 : vector<2x16xf32>
    %245 = vector.extract_strided_slice %224 {offsets = [0, 48], sizes = [2, 16], strides = [1, 1]} : vector<2x64xf32> to vector<2x16xf32>
    %cst_95 = arith.constant 0.000000e+00 : f32
    %246 = vector.broadcast %cst_95 : f32 to vector<2x16xf32>
    %247 = arith.subf %246, %245 : vector<2x16xf32>
    %248 = math.exp %247 : vector<2x16xf32>
    %cst_96 = arith.constant 1.000000e+00 : f32
    %249 = vector.broadcast %cst_96 : f32 to vector<2x16xf32>
    %250 = arith.addf %249, %248 : vector<2x16xf32>
    %cst_97 = arith.constant 1.000000e+00 : f32
    %251 = vector.broadcast %cst_97 : f32 to vector<2x16xf32>
    %252 = arith.divf %251, %250 : vector<2x16xf32>
    %253 = arith.mulf %242, %151 : vector<2x16xf32>
    %254 = arith.mulf %234, %244 : vector<2x16xf32>
    %255 = arith.addf %253, %254 : vector<2x16xf32>
    %256 = math.tanh %255 : vector<2x16xf32>
    %257 = arith.mulf %252, %256 : vector<2x16xf32>
    %258 = vector.extract_strided_slice %226 {offsets = [0, 0], sizes = [2, 16], strides = [1, 1]} : vector<2x64xf32> to vector<2x16xf32>
    %cst_98 = arith.constant 0.000000e+00 : f32
    %259 = vector.broadcast %cst_98 : f32 to vector<2x16xf32>
    %260 = arith.subf %259, %258 : vector<2x16xf32>
    %261 = math.exp %260 : vector<2x16xf32>
    %cst_99 = arith.constant 1.000000e+00 : f32
    %262 = vector.broadcast %cst_99 : f32 to vector<2x16xf32>
    %263 = arith.addf %262, %261 : vector<2x16xf32>
    %cst_100 = arith.constant 1.000000e+00 : f32
    %264 = vector.broadcast %cst_100 : f32 to vector<2x16xf32>
    %265 = arith.divf %264, %263 : vector<2x16xf32>
    %266 = vector.extract_strided_slice %226 {offsets = [0, 16], sizes = [2, 16], strides = [1, 1]} : vector<2x64xf32> to vector<2x16xf32>
    %cst_101 = arith.constant 0.000000e+00 : f32
    %267 = vector.broadcast %cst_101 : f32 to vector<2x16xf32>
    %268 = arith.subf %267, %266 : vector<2x16xf32>
    %269 = math.exp %268 : vector<2x16xf32>
    %cst_102 = arith.constant 1.000000e+00 : f32
    %270 = vector.broadcast %cst_102 : f32 to vector<2x16xf32>
    %271 = arith.addf %270, %269 : vector<2x16xf32>
    %cst_103 = arith.constant 1.000000e+00 : f32
    %272 = vector.broadcast %cst_103 : f32 to vector<2x16xf32>
    %273 = arith.divf %272, %271 : vector<2x16xf32>
    %274 = vector.extract_strided_slice %226 {offsets = [0, 32], sizes = [2, 16], strides = [1, 1]} : vector<2x64xf32> to vector<2x16xf32>
    %275 = math.tanh %274 : vector<2x16xf32>
    %276 = vector.extract_strided_slice %226 {offsets = [0, 48], sizes = [2, 16], strides = [1, 1]} : vector<2x64xf32> to vector<2x16xf32>
    %cst_104 = arith.constant 0.000000e+00 : f32
    %277 = vector.broadcast %cst_104 : f32 to vector<2x16xf32>
    %278 = arith.subf %277, %276 : vector<2x16xf32>
    %279 = math.exp %278 : vector<2x16xf32>
    %cst_105 = arith.constant 1.000000e+00 : f32
    %280 = vector.broadcast %cst_105 : f32 to vector<2x16xf32>
    %281 = arith.addf %280, %279 : vector<2x16xf32>
    %cst_106 = arith.constant 1.000000e+00 : f32
    %282 = vector.broadcast %cst_106 : f32 to vector<2x16xf32>
    %283 = arith.divf %282, %281 : vector<2x16xf32>
    %284 = arith.mulf %273, %198 : vector<2x16xf32>
    %285 = arith.mulf %265, %275 : vector<2x16xf32>
    %286 = arith.addf %284, %285 : vector<2x16xf32>
    %287 = math.tanh %286 : vector<2x16xf32>
    %288 = arith.mulf %283, %287 : vector<2x16xf32>
    %c2_i32 = arith.constant 2 : i32
    %289 = vector.broadcast %c2_i32 : i32 to vector<2x1xi32>
    %290 = arith.cmpi sgt, %6, %289 : vector<2x1xi32>
    %291 = arith.extui %290 : vector<2x1xi1> to vector<2x1xi32>
    %292 = arith.sitofp %291 : vector<2x1xi32> to vector<2x1xf32>
    %c5_i32 = arith.constant 5 : i32
    %293 = vector.broadcast %c5_i32 : i32 to vector<2x1xi32>
    %294 = arith.cmpi sgt, %6, %293 : vector<2x1xi32>
    %295 = arith.extui %294 : vector<2x1xi1> to vector<2x1xi32>
    %296 = arith.sitofp %295 : vector<2x1xi32> to vector<2x1xf32>
    %297 = vector.broadcast %292 : vector<2x1xf32> to vector<2x16xf32>
    %298 = arith.mulf %257, %297 : vector<2x16xf32>
    %299 = vector.broadcast %296 : vector<2x1xf32> to vector<2x16xf32>
    %300 = arith.mulf %288, %299 : vector<2x16xf32>
    %301 = vector.broadcast %296 : vector<2x1xf32> to vector<2x16xf32>
    %302 = arith.mulf %286, %301 : vector<2x16xf32>
    %c2 = arith.constant 2 : index
    %c0_107 = arith.constant 0 : index
    %c0_108 = arith.constant 0 : index
    %303 = vector.load %arg11[%c2, %c0_107, %c0_108] : memref<8x2x32xf32, #tpu.memory_space<vmem>>, vector<1x2x16xf32>
    %304 = vector.shape_cast %303 : vector<1x2x16xf32> to vector<2x16xf32>
    %305 = vector.shape_cast %298 : vector<2x16xf32> to vector<1x2x16xf32>
    tpu.vector_store %arg11[%c2, %c0_107, %c0_108], %305 {strides = array<i32>} : memref<8x2x32xf32, #tpu.memory_space<vmem>>, vector<1x2x16xf32>,
    %c5 = arith.constant 5 : index
    %c0_109 = arith.constant 0 : index
    %c16_110 = arith.constant 16 : index
    %306 = vector.load %arg11[%c5, %c0_109, %c16_110] : memref<8x2x32xf32, #tpu.memory_space<vmem>>, vector<1x2x16xf32>
    %307 = vector.shape_cast %306 : vector<1x2x16xf32> to vector<2x16xf32>
    %308 = vector.shape_cast %300 : vector<2x16xf32> to vector<1x2x16xf32>
    tpu.vector_store %arg11[%c5, %c0_109, %c16_110], %308 {strides = array<i32>} : memref<8x2x32xf32, #tpu.memory_space<vmem>>, vector<1x2x16xf32>,
    %309 = vector.extract_strided_slice %298 {offsets = [0, 0], sizes = [1, 16], strides = [1, 1]} : vector<2x16xf32> to vector<1x16xf32>
    %c0_111 = arith.constant 0 : index
    %c2_112 = arith.constant 2 : index
    %c0_113 = arith.constant 0 : index
    %310 = vector.load %arg14[%c0_111, %c2_112, %c0_113] : memref<2x8x32xf32, #tpu.memory_space<vmem>>, vector<1x1x16xf32>
    %311 = vector.shape_cast %310 : vector<1x1x16xf32> to vector<1x16xf32>
    %312 = vector.shape_cast %309 : vector<1x16xf32> to vector<1x1x16xf32>
    tpu.vector_store %arg14[%c0_111, %c2_112, %c0_113], %312 {strides = array<i32>} : memref<2x8x32xf32, #tpu.memory_space<vmem>>, vector<1x1x16xf32>,
    %313 = vector.extract_strided_slice %300 {offsets = [0, 0], sizes = [1, 16], strides = [1, 1]} : vector<2x16xf32> to vector<1x16xf32>
    %c0_114 = arith.constant 0 : index
    %c5_115 = arith.constant 5 : index
    %c16_116 = arith.constant 16 : index
    %314 = vector.load %arg14[%c0_114, %c5_115, %c16_116] : memref<2x8x32xf32, #tpu.memory_space<vmem>>, vector<1x1x16xf32>
    %315 = vector.shape_cast %314 : vector<1x1x16xf32> to vector<1x16xf32>
    %316 = vector.shape_cast %313 : vector<1x16xf32> to vector<1x1x16xf32>
    tpu.vector_store %arg14[%c0_114, %c5_115, %c16_116], %316 {strides = array<i32>} : memref<2x8x32xf32, #tpu.memory_space<vmem>>, vector<1x1x16xf32>,
    %317 = vector.extract_strided_slice %298 {offsets = [1, 0], sizes = [1, 16], strides = [1, 1]} : vector<2x16xf32> to vector<1x16xf32>
    %c1_117 = arith.constant 1 : index
    %c2_118 = arith.constant 2 : index
    %c0_119 = arith.constant 0 : index
    %318 = vector.load %arg14[%c1_117, %c2_118, %c0_119] : memref<2x8x32xf32, #tpu.memory_space<vmem>>, vector<1x1x16xf32>
    %319 = vector.shape_cast %318 : vector<1x1x16xf32> to vector<1x16xf32>
    %320 = vector.shape_cast %317 : vector<1x16xf32> to vector<1x1x16xf32>
    tpu.vector_store %arg14[%c1_117, %c2_118, %c0_119], %320 {strides = array<i32>} : memref<2x8x32xf32, #tpu.memory_space<vmem>>, vector<1x1x16xf32>,
    %321 = vector.extract_strided_slice %300 {offsets = [1, 0], sizes = [1, 16], strides = [1, 1]} : vector<2x16xf32> to vector<1x16xf32>
    %c1_120 = arith.constant 1 : index
    %c5_121 = arith.constant 5 : index
    %c16_122 = arith.constant 16 : index
    %322 = vector.load %arg14[%c1_120, %c5_121, %c16_122] : memref<2x8x32xf32, #tpu.memory_space<vmem>>, vector<1x1x16xf32>
    %323 = vector.shape_cast %322 : vector<1x1x16xf32> to vector<1x16xf32>
    %324 = vector.shape_cast %321 : vector<1x16xf32> to vector<1x1x16xf32>
    tpu.vector_store %arg14[%c1_120, %c5_121, %c16_122], %324 {strides = array<i32>} : memref<2x8x32xf32, #tpu.memory_space<vmem>>, vector<1x1x16xf32>,
    %325 = vector.extract_strided_slice %5 {offsets = [6, 0], sizes = [2, 64], strides = [1, 1]} : vector<16x128xf32> to vector<2x64xf32>
    %326 = vector.extract_strided_slice %5 {offsets = [8, 64], sizes = [2, 64], strides = [1, 1]} : vector<16x128xf32> to vector<2x64xf32>
    %cst_123 = arith.constant dense<0.000000e+00> : vector<2x64xf32>
    %327 = tpu.matmul %257, %7, %cst_123 {dimension_numbers = #tpu.dot_dimension_numbers<[1], [1], [0], [0], [0, 0, 1, 0], [], []>} : vector<2x16xf32>, vector<64x16xf32>, vector<2x64xf32> -> vector<2x64xf32>
    %328 = arith.addf %325, %327 : vector<2x64xf32>
    %cst_124 = arith.constant dense<0.000000e+00> : vector<2x64xf32>
    %329 = tpu.matmul %300, %8, %cst_124 {dimension_numbers = #tpu.dot_dimension_numbers<[1], [1], [0], [0], [0, 0, 1, 0], [], []>} : vector<2x16xf32>, vector<64x16xf32>, vector<2x64xf32> -> vector<2x64xf32>
    %330 = arith.addf %326, %329 : vector<2x64xf32>
    %331 = vector.extract_strided_slice %328 {offsets = [0, 0], sizes = [2, 16], strides = [1, 1]} : vector<2x64xf32> to vector<2x16xf32>
    %cst_125 = arith.constant 0.000000e+00 : f32
    %332 = vector.broadcast %cst_125 : f32 to vector<2x16xf32>
    %333 = arith.subf %332, %331 : vector<2x16xf32>
    %334 = math.exp %333 : vector<2x16xf32>
    %cst_126 = arith.constant 1.000000e+00 : f32
    %335 = vector.broadcast %cst_126 : f32 to vector<2x16xf32>
    %336 = arith.addf %335, %334 : vector<2x16xf32>
    %cst_127 = arith.constant 1.000000e+00 : f32
    %337 = vector.broadcast %cst_127 : f32 to vector<2x16xf32>
    %338 = arith.divf %337, %336 : vector<2x16xf32>
    %339 = vector.extract_strided_slice %328 {offsets = [0, 16], sizes = [2, 16], strides = [1, 1]} : vector<2x64xf32> to vector<2x16xf32>
    %cst_128 = arith.constant 0.000000e+00 : f32
    %340 = vector.broadcast %cst_128 : f32 to vector<2x16xf32>
    %341 = arith.subf %340, %339 : vector<2x16xf32>
    %342 = math.exp %341 : vector<2x16xf32>
    %cst_129 = arith.constant 1.000000e+00 : f32
    %343 = vector.broadcast %cst_129 : f32 to vector<2x16xf32>
    %344 = arith.addf %343, %342 : vector<2x16xf32>
    %cst_130 = arith.constant 1.000000e+00 : f32
    %345 = vector.broadcast %cst_130 : f32 to vector<2x16xf32>
    %346 = arith.divf %345, %344 : vector<2x16xf32>
    %347 = vector.extract_strided_slice %328 {offsets = [0, 32], sizes = [2, 16], strides = [1, 1]} : vector<2x64xf32> to vector<2x16xf32>
    %348 = math.tanh %347 : vector<2x16xf32>
    %349 = vector.extract_strided_slice %328 {offsets = [0, 48], sizes = [2, 16], strides = [1, 1]} : vector<2x64xf32> to vector<2x16xf32>
    %cst_131 = arith.constant 0.000000e+00 : f32
    %350 = vector.broadcast %cst_131 : f32 to vector<2x16xf32>
    %351 = arith.subf %350, %349 : vector<2x16xf32>
    %352 = math.exp %351 : vector<2x16xf32>
    %cst_132 = arith.constant 1.000000e+00 : f32
    %353 = vector.broadcast %cst_132 : f32 to vector<2x16xf32>
    %354 = arith.addf %353, %352 : vector<2x16xf32>
    %cst_133 = arith.constant 1.000000e+00 : f32
    %355 = vector.broadcast %cst_133 : f32 to vector<2x16xf32>
    %356 = arith.divf %355, %354 : vector<2x16xf32>
    %357 = arith.mulf %346, %255 : vector<2x16xf32>
    %358 = arith.mulf %338, %348 : vector<2x16xf32>
    %359 = arith.addf %357, %358 : vector<2x16xf32>
    %360 = math.tanh %359 : vector<2x16xf32>
    %361 = arith.mulf %356, %360 : vector<2x16xf32>
    %362 = vector.extract_strided_slice %330 {offsets = [0, 0], sizes = [2, 16], strides = [1, 1]} : vector<2x64xf32> to vector<2x16xf32>
    %cst_134 = arith.constant 0.000000e+00 : f32
    %363 = vector.broadcast %cst_134 : f32 to vector<2x16xf32>
    %364 = arith.subf %363, %362 : vector<2x16xf32>
    %365 = math.exp %364 : vector<2x16xf32>
    %cst_135 = arith.constant 1.000000e+00 : f32
    %366 = vector.broadcast %cst_135 : f32 to vector<2x16xf32>
    %367 = arith.addf %366, %365 : vector<2x16xf32>
    %cst_136 = arith.constant 1.000000e+00 : f32
    %368 = vector.broadcast %cst_136 : f32 to vector<2x16xf32>
    %369 = arith.divf %368, %367 : vector<2x16xf32>
    %370 = vector.extract_strided_slice %330 {offsets = [0, 16], sizes = [2, 16], strides = [1, 1]} : vector<2x64xf32> to vector<2x16xf32>
    %cst_137 = arith.constant 0.000000e+00 : f32
    %371 = vector.broadcast %cst_137 : f32 to vector<2x16xf32>
    %372 = arith.subf %371, %370 : vector<2x16xf32>
    %373 = math.exp %372 : vector<2x16xf32>
    %cst_138 = arith.constant 1.000000e+00 : f32
    %374 = vector.broadcast %cst_138 : f32 to vector<2x16xf32>
    %375 = arith.addf %374, %373 : vector<2x16xf32>
    %cst_139 = arith.constant 1.000000e+00 : f32
    %376 = vector.broadcast %cst_139 : f32 to vector<2x16xf32>
    %377 = arith.divf %376, %375 : vector<2x16xf32>
    %378 = vector.extract_strided_slice %330 {offsets = [0, 32], sizes = [2, 16], strides = [1, 1]} : vector<2x64xf32> to vector<2x16xf32>
    %379 = math.tanh %378 : vector<2x16xf32>
    %380 = vector.extract_strided_slice %330 {offsets = [0, 48], sizes = [2, 16], strides = [1, 1]} : vector<2x64xf32> to vector<2x16xf32>
    %cst_140 = arith.constant 0.000000e+00 : f32
    %381 = vector.broadcast %cst_140 : f32 to vector<2x16xf32>
    %382 = arith.subf %381, %380 : vector<2x16xf32>
    %383 = math.exp %382 : vector<2x16xf32>
    %cst_141 = arith.constant 1.000000e+00 : f32
    %384 = vector.broadcast %cst_141 : f32 to vector<2x16xf32>
    %385 = arith.addf %384, %383 : vector<2x16xf32>
    %cst_142 = arith.constant 1.000000e+00 : f32
    %386 = vector.broadcast %cst_142 : f32 to vector<2x16xf32>
    %387 = arith.divf %386, %385 : vector<2x16xf32>
    %388 = arith.mulf %377, %302 : vector<2x16xf32>
    %389 = arith.mulf %369, %379 : vector<2x16xf32>
    %390 = arith.addf %388, %389 : vector<2x16xf32>
    %391 = math.tanh %390 : vector<2x16xf32>
    %392 = arith.mulf %387, %391 : vector<2x16xf32>
    %c3_i32 = arith.constant 3 : i32
    %393 = vector.broadcast %c3_i32 : i32 to vector<2x1xi32>
    %394 = arith.cmpi sgt, %6, %393 : vector<2x1xi32>
    %395 = arith.extui %394 : vector<2x1xi1> to vector<2x1xi32>
    %396 = arith.sitofp %395 : vector<2x1xi32> to vector<2x1xf32>
    %c4_i32 = arith.constant 4 : i32
    %397 = vector.broadcast %c4_i32 : i32 to vector<2x1xi32>
    %398 = arith.cmpi sgt, %6, %397 : vector<2x1xi32>
    %399 = arith.extui %398 : vector<2x1xi1> to vector<2x1xi32>
    %400 = arith.sitofp %399 : vector<2x1xi32> to vector<2x1xf32>
    %401 = vector.broadcast %396 : vector<2x1xf32> to vector<2x16xf32>
    %402 = arith.mulf %361, %401 : vector<2x16xf32>
    %403 = vector.broadcast %400 : vector<2x1xf32> to vector<2x16xf32>
    %404 = arith.mulf %392, %403 : vector<2x16xf32>
    %405 = vector.broadcast %400 : vector<2x1xf32> to vector<2x16xf32>
    %406 = arith.mulf %390, %405 : vector<2x16xf32>
    %c3 = arith.constant 3 : index
    %c0_143 = arith.constant 0 : index
    %c0_144 = arith.constant 0 : index
    %407 = vector.load %arg11[%c3, %c0_143, %c0_144] : memref<8x2x32xf32, #tpu.memory_space<vmem>>, vector<1x2x16xf32>
    %408 = vector.shape_cast %407 : vector<1x2x16xf32> to vector<2x16xf32>
    %409 = vector.shape_cast %402 : vector<2x16xf32> to vector<1x2x16xf32>
    tpu.vector_store %arg11[%c3, %c0_143, %c0_144], %409 {strides = array<i32>} : memref<8x2x32xf32, #tpu.memory_space<vmem>>, vector<1x2x16xf32>,
    %c4 = arith.constant 4 : index
    %c0_145 = arith.constant 0 : index
    %c16_146 = arith.constant 16 : index
    %410 = vector.load %arg11[%c4, %c0_145, %c16_146] : memref<8x2x32xf32, #tpu.memory_space<vmem>>, vector<1x2x16xf32>
    %411 = vector.shape_cast %410 : vector<1x2x16xf32> to vector<2x16xf32>
    %412 = vector.shape_cast %404 : vector<2x16xf32> to vector<1x2x16xf32>
    tpu.vector_store %arg11[%c4, %c0_145, %c16_146], %412 {strides = array<i32>} : memref<8x2x32xf32, #tpu.memory_space<vmem>>, vector<1x2x16xf32>,
    %413 = vector.extract_strided_slice %402 {offsets = [0, 0], sizes = [1, 16], strides = [1, 1]} : vector<2x16xf32> to vector<1x16xf32>
    %c0_147 = arith.constant 0 : index
    %c3_148 = arith.constant 3 : index
    %c0_149 = arith.constant 0 : index
    %414 = vector.load %arg14[%c0_147, %c3_148, %c0_149] : memref<2x8x32xf32, #tpu.memory_space<vmem>>, vector<1x1x16xf32>
    %415 = vector.shape_cast %414 : vector<1x1x16xf32> to vector<1x16xf32>
    %416 = vector.shape_cast %413 : vector<1x16xf32> to vector<1x1x16xf32>
    tpu.vector_store %arg14[%c0_147, %c3_148, %c0_149], %416 {strides = array<i32>} : memref<2x8x32xf32, #tpu.memory_space<vmem>>, vector<1x1x16xf32>,
    %417 = vector.extract_strided_slice %404 {offsets = [0, 0], sizes = [1, 16], strides = [1, 1]} : vector<2x16xf32> to vector<1x16xf32>
    %c0_150 = arith.constant 0 : index
    %c4_151 = arith.constant 4 : index
    %c16_152 = arith.constant 16 : index
    %418 = vector.load %arg14[%c0_150, %c4_151, %c16_152] : memref<2x8x32xf32, #tpu.memory_space<vmem>>, vector<1x1x16xf32>
    %419 = vector.shape_cast %418 : vector<1x1x16xf32> to vector<1x16xf32>
    %420 = vector.shape_cast %417 : vector<1x16xf32> to vector<1x1x16xf32>
    tpu.vector_store %arg14[%c0_150, %c4_151, %c16_152], %420 {strides = array<i32>} : memref<2x8x32xf32, #tpu.memory_space<vmem>>, vector<1x1x16xf32>,
    %421 = vector.extract_strided_slice %402 {offsets = [1, 0], sizes = [1, 16], strides = [1, 1]} : vector<2x16xf32> to vector<1x16xf32>
    %c1_153 = arith.constant 1 : index
    %c3_154 = arith.constant 3 : index
    %c0_155 = arith.constant 0 : index
    %422 = vector.load %arg14[%c1_153, %c3_154, %c0_155] : memref<2x8x32xf32, #tpu.memory_space<vmem>>, vector<1x1x16xf32>
    %423 = vector.shape_cast %422 : vector<1x1x16xf32> to vector<1x16xf32>
    %424 = vector.shape_cast %421 : vector<1x16xf32> to vector<1x1x16xf32>
    tpu.vector_store %arg14[%c1_153, %c3_154, %c0_155], %424 {strides = array<i32>} : memref<2x8x32xf32, #tpu.memory_space<vmem>>, vector<1x1x16xf32>,
    %425 = vector.extract_strided_slice %404 {offsets = [1, 0], sizes = [1, 16], strides = [1, 1]} : vector<2x16xf32> to vector<1x16xf32>
    %c1_156 = arith.constant 1 : index
    %c4_157 = arith.constant 4 : index
    %c16_158 = arith.constant 16 : index
    %426 = vector.load %arg14[%c1_156, %c4_157, %c16_158] : memref<2x8x32xf32, #tpu.memory_space<vmem>>, vector<1x1x16xf32>
    %427 = vector.shape_cast %426 : vector<1x1x16xf32> to vector<1x16xf32>
    %428 = vector.shape_cast %425 : vector<1x16xf32> to vector<1x1x16xf32>
    tpu.vector_store %arg14[%c1_156, %c4_157, %c16_158], %428 {strides = array<i32>} : memref<2x8x32xf32, #tpu.memory_space<vmem>>, vector<1x1x16xf32>,
    %429 = vector.extract_strided_slice %5 {offsets = [8, 0], sizes = [2, 64], strides = [1, 1]} : vector<16x128xf32> to vector<2x64xf32>
    %430 = vector.extract_strided_slice %5 {offsets = [6, 64], sizes = [2, 64], strides = [1, 1]} : vector<16x128xf32> to vector<2x64xf32>
    %cst_159 = arith.constant dense<0.000000e+00> : vector<2x64xf32>
    %431 = tpu.matmul %361, %7, %cst_159 {dimension_numbers = #tpu.dot_dimension_numbers<[1], [1], [0], [0], [0, 0, 1, 0], [], []>} : vector<2x16xf32>, vector<64x16xf32>, vector<2x64xf32> -> vector<2x64xf32>
    %432 = arith.addf %429, %431 : vector<2x64xf32>
    %cst_160 = arith.constant dense<0.000000e+00> : vector<2x64xf32>
    %433 = tpu.matmul %404, %8, %cst_160 {dimension_numbers = #tpu.dot_dimension_numbers<[1], [1], [0], [0], [0, 0, 1, 0], [], []>} : vector<2x16xf32>, vector<64x16xf32>, vector<2x64xf32> -> vector<2x64xf32>
    %434 = arith.addf %430, %433 : vector<2x64xf32>
    %435 = vector.extract_strided_slice %432 {offsets = [0, 0], sizes = [2, 16], strides = [1, 1]} : vector<2x64xf32> to vector<2x16xf32>
    %cst_161 = arith.constant 0.000000e+00 : f32
    %436 = vector.broadcast %cst_161 : f32 to vector<2x16xf32>
    %437 = arith.subf %436, %435 : vector<2x16xf32>
    %438 = math.exp %437 : vector<2x16xf32>
    %cst_162 = arith.constant 1.000000e+00 : f32
    %439 = vector.broadcast %cst_162 : f32 to vector<2x16xf32>
    %440 = arith.addf %439, %438 : vector<2x16xf32>
    %cst_163 = arith.constant 1.000000e+00 : f32
    %441 = vector.broadcast %cst_163 : f32 to vector<2x16xf32>
    %442 = arith.divf %441, %440 : vector<2x16xf32>
    %443 = vector.extract_strided_slice %432 {offsets = [0, 16], sizes = [2, 16], strides = [1, 1]} : vector<2x64xf32> to vector<2x16xf32>
    %cst_164 = arith.constant 0.000000e+00 : f32
    %444 = vector.broadcast %cst_164 : f32 to vector<2x16xf32>
    %445 = arith.subf %444, %443 : vector<2x16xf32>
    %446 = math.exp %445 : vector<2x16xf32>
    %cst_165 = arith.constant 1.000000e+00 : f32
    %447 = vector.broadcast %cst_165 : f32 to vector<2x16xf32>
    %448 = arith.addf %447, %446 : vector<2x16xf32>
    %cst_166 = arith.constant 1.000000e+00 : f32
    %449 = vector.broadcast %cst_166 : f32 to vector<2x16xf32>
    %450 = arith.divf %449, %448 : vector<2x16xf32>
    %451 = vector.extract_strided_slice %432 {offsets = [0, 32], sizes = [2, 16], strides = [1, 1]} : vector<2x64xf32> to vector<2x16xf32>
    %452 = math.tanh %451 : vector<2x16xf32>
    %453 = vector.extract_strided_slice %432 {offsets = [0, 48], sizes = [2, 16], strides = [1, 1]} : vector<2x64xf32> to vector<2x16xf32>
    %cst_167 = arith.constant 0.000000e+00 : f32
    %454 = vector.broadcast %cst_167 : f32 to vector<2x16xf32>
    %455 = arith.subf %454, %453 : vector<2x16xf32>
    %456 = math.exp %455 : vector<2x16xf32>
    %cst_168 = arith.constant 1.000000e+00 : f32
    %457 = vector.broadcast %cst_168 : f32 to vector<2x16xf32>
    %458 = arith.addf %457, %456 : vector<2x16xf32>
    %cst_169 = arith.constant 1.000000e+00 : f32
    %459 = vector.broadcast %cst_169 : f32 to vector<2x16xf32>
    %460 = arith.divf %459, %458 : vector<2x16xf32>
    %461 = arith.mulf %450, %359 : vector<2x16xf32>
    %462 = arith.mulf %442, %452 : vector<2x16xf32>
    %463 = arith.addf %461, %462 : vector<2x16xf32>
    %464 = math.tanh %463 : vector<2x16xf32>
    %465 = arith.mulf %460, %464 : vector<2x16xf32>
    %466 = vector.extract_strided_slice %434 {offsets = [0, 0], sizes = [2, 16], strides = [1, 1]} : vector<2x64xf32> to vector<2x16xf32>
    %cst_170 = arith.constant 0.000000e+00 : f32
    %467 = vector.broadcast %cst_170 : f32 to vector<2x16xf32>
    %468 = arith.subf %467, %466 : vector<2x16xf32>
    %469 = math.exp %468 : vector<2x16xf32>
    %cst_171 = arith.constant 1.000000e+00 : f32
    %470 = vector.broadcast %cst_171 : f32 to vector<2x16xf32>
    %471 = arith.addf %470, %469 : vector<2x16xf32>
    %cst_172 = arith.constant 1.000000e+00 : f32
    %472 = vector.broadcast %cst_172 : f32 to vector<2x16xf32>
    %473 = arith.divf %472, %471 : vector<2x16xf32>
    %474 = vector.extract_strided_slice %434 {offsets = [0, 16], sizes = [2, 16], strides = [1, 1]} : vector<2x64xf32> to vector<2x16xf32>
    %cst_173 = arith.constant 0.000000e+00 : f32
    %475 = vector.broadcast %cst_173 : f32 to vector<2x16xf32>
    %476 = arith.subf %475, %474 : vector<2x16xf32>
    %477 = math.exp %476 : vector<2x16xf32>
    %cst_174 = arith.constant 1.000000e+00 : f32
    %478 = vector.broadcast %cst_174 : f32 to vector<2x16xf32>
    %479 = arith.addf %478, %477 : vector<2x16xf32>
    %cst_175 = arith.constant 1.000000e+00 : f32
    %480 = vector.broadcast %cst_175 : f32 to vector<2x16xf32>
    %481 = arith.divf %480, %479 : vector<2x16xf32>
    %482 = vector.extract_strided_slice %434 {offsets = [0, 32], sizes = [2, 16], strides = [1, 1]} : vector<2x64xf32> to vector<2x16xf32>
    %483 = math.tanh %482 : vector<2x16xf32>
    %484 = vector.extract_strided_slice %434 {offsets = [0, 48], sizes = [2, 16], strides = [1, 1]} : vector<2x64xf32> to vector<2x16xf32>
    %cst_176 = arith.constant 0.000000e+00 : f32
    %485 = vector.broadcast %cst_176 : f32 to vector<2x16xf32>
    %486 = arith.subf %485, %484 : vector<2x16xf32>
    %487 = math.exp %486 : vector<2x16xf32>
    %cst_177 = arith.constant 1.000000e+00 : f32
    %488 = vector.broadcast %cst_177 : f32 to vector<2x16xf32>
    %489 = arith.addf %488, %487 : vector<2x16xf32>
    %cst_178 = arith.constant 1.000000e+00 : f32
    %490 = vector.broadcast %cst_178 : f32 to vector<2x16xf32>
    %491 = arith.divf %490, %489 : vector<2x16xf32>
    %492 = arith.mulf %481, %406 : vector<2x16xf32>
    %493 = arith.mulf %473, %483 : vector<2x16xf32>
    %494 = arith.addf %492, %493 : vector<2x16xf32>
    %495 = math.tanh %494 : vector<2x16xf32>
    %496 = arith.mulf %491, %495 : vector<2x16xf32>
    %c4_i32_179 = arith.constant 4 : i32
    %497 = vector.broadcast %c4_i32_179 : i32 to vector<2x1xi32>
    %498 = arith.cmpi sgt, %6, %497 : vector<2x1xi32>
    %499 = arith.extui %498 : vector<2x1xi1> to vector<2x1xi32>
    %500 = arith.sitofp %499 : vector<2x1xi32> to vector<2x1xf32>
    %c3_i32_180 = arith.constant 3 : i32
    %501 = vector.broadcast %c3_i32_180 : i32 to vector<2x1xi32>
    %502 = arith.cmpi sgt, %6, %501 : vector<2x1xi32>
    %503 = arith.extui %502 : vector<2x1xi1> to vector<2x1xi32>
    %504 = arith.sitofp %503 : vector<2x1xi32> to vector<2x1xf32>
    %505 = vector.broadcast %500 : vector<2x1xf32> to vector<2x16xf32>
    %506 = arith.mulf %465, %505 : vector<2x16xf32>
    %507 = vector.broadcast %504 : vector<2x1xf32> to vector<2x16xf32>
    %508 = arith.mulf %496, %507 : vector<2x16xf32>
    %509 = vector.broadcast %504 : vector<2x1xf32> to vector<2x16xf32>
    %510 = arith.mulf %494, %509 : vector<2x16xf32>
    %c4_181 = arith.constant 4 : index
    %c0_182 = arith.constant 0 : index
    %c0_183 = arith.constant 0 : index
    %511 = vector.load %arg11[%c4_181, %c0_182, %c0_183] : memref<8x2x32xf32, #tpu.memory_space<vmem>>, vector<1x2x16xf32>
    %512 = vector.shape_cast %511 : vector<1x2x16xf32> to vector<2x16xf32>
    %513 = vector.shape_cast %506 : vector<2x16xf32> to vector<1x2x16xf32>
    tpu.vector_store %arg11[%c4_181, %c0_182, %c0_183], %513 {strides = array<i32>} : memref<8x2x32xf32, #tpu.memory_space<vmem>>, vector<1x2x16xf32>,
    %c3_184 = arith.constant 3 : index
    %c0_185 = arith.constant 0 : index
    %c16_186 = arith.constant 16 : index
    %514 = vector.load %arg11[%c3_184, %c0_185, %c16_186] : memref<8x2x32xf32, #tpu.memory_space<vmem>>, vector<1x2x16xf32>
    %515 = vector.shape_cast %514 : vector<1x2x16xf32> to vector<2x16xf32>
    %516 = vector.shape_cast %508 : vector<2x16xf32> to vector<1x2x16xf32>
    tpu.vector_store %arg11[%c3_184, %c0_185, %c16_186], %516 {strides = array<i32>} : memref<8x2x32xf32, #tpu.memory_space<vmem>>, vector<1x2x16xf32>,
    %517 = vector.extract_strided_slice %506 {offsets = [0, 0], sizes = [1, 16], strides = [1, 1]} : vector<2x16xf32> to vector<1x16xf32>
    %c0_187 = arith.constant 0 : index
    %c4_188 = arith.constant 4 : index
    %c0_189 = arith.constant 0 : index
    %518 = vector.load %arg14[%c0_187, %c4_188, %c0_189] : memref<2x8x32xf32, #tpu.memory_space<vmem>>, vector<1x1x16xf32>
    %519 = vector.shape_cast %518 : vector<1x1x16xf32> to vector<1x16xf32>
    %520 = vector.shape_cast %517 : vector<1x16xf32> to vector<1x1x16xf32>
    tpu.vector_store %arg14[%c0_187, %c4_188, %c0_189], %520 {strides = array<i32>} : memref<2x8x32xf32, #tpu.memory_space<vmem>>, vector<1x1x16xf32>,
    %521 = vector.extract_strided_slice %508 {offsets = [0, 0], sizes = [1, 16], strides = [1, 1]} : vector<2x16xf32> to vector<1x16xf32>
    %c0_190 = arith.constant 0 : index
    %c3_191 = arith.constant 3 : index
    %c16_192 = arith.constant 16 : index
    %522 = vector.load %arg14[%c0_190, %c3_191, %c16_192] : memref<2x8x32xf32, #tpu.memory_space<vmem>>, vector<1x1x16xf32>
    %523 = vector.shape_cast %522 : vector<1x1x16xf32> to vector<1x16xf32>
    %524 = vector.shape_cast %521 : vector<1x16xf32> to vector<1x1x16xf32>
    tpu.vector_store %arg14[%c0_190, %c3_191, %c16_192], %524 {strides = array<i32>} : memref<2x8x32xf32, #tpu.memory_space<vmem>>, vector<1x1x16xf32>,
    %525 = vector.extract_strided_slice %506 {offsets = [1, 0], sizes = [1, 16], strides = [1, 1]} : vector<2x16xf32> to vector<1x16xf32>
    %c1_193 = arith.constant 1 : index
    %c4_194 = arith.constant 4 : index
    %c0_195 = arith.constant 0 : index
    %526 = vector.load %arg14[%c1_193, %c4_194, %c0_195] : memref<2x8x32xf32, #tpu.memory_space<vmem>>, vector<1x1x16xf32>
    %527 = vector.shape_cast %526 : vector<1x1x16xf32> to vector<1x16xf32>
    %528 = vector.shape_cast %525 : vector<1x16xf32> to vector<1x1x16xf32>
    tpu.vector_store %arg14[%c1_193, %c4_194, %c0_195], %528 {strides = array<i32>} : memref<2x8x32xf32, #tpu.memory_space<vmem>>, vector<1x1x16xf32>,
    %529 = vector.extract_strided_slice %508 {offsets = [1, 0], sizes = [1, 16], strides = [1, 1]} : vector<2x16xf32> to vector<1x16xf32>
    %c1_196 = arith.constant 1 : index
    %c3_197 = arith.constant 3 : index
    %c16_198 = arith.constant 16 : index
    %530 = vector.load %arg14[%c1_196, %c3_197, %c16_198] : memref<2x8x32xf32, #tpu.memory_space<vmem>>, vector<1x1x16xf32>
    %531 = vector.shape_cast %530 : vector<1x1x16xf32> to vector<1x16xf32>
    %532 = vector.shape_cast %529 : vector<1x16xf32> to vector<1x1x16xf32>
    tpu.vector_store %arg14[%c1_196, %c3_197, %c16_198], %532 {strides = array<i32>} : memref<2x8x32xf32, #tpu.memory_space<vmem>>, vector<1x1x16xf32>,
    %533 = vector.extract_strided_slice %5 {offsets = [10, 0], sizes = [2, 64], strides = [1, 1]} : vector<16x128xf32> to vector<2x64xf32>
    %534 = vector.extract_strided_slice %5 {offsets = [4, 64], sizes = [2, 64], strides = [1, 1]} : vector<16x128xf32> to vector<2x64xf32>
    %cst_199 = arith.constant dense<0.000000e+00> : vector<2x64xf32>
    %535 = tpu.matmul %465, %7, %cst_199 {dimension_numbers = #tpu.dot_dimension_numbers<[1], [1], [0], [0], [0, 0, 1, 0], [], []>} : vector<2x16xf32>, vector<64x16xf32>, vector<2x64xf32> -> vector<2x64xf32>
    %536 = arith.addf %533, %535 : vector<2x64xf32>
    %cst_200 = arith.constant dense<0.000000e+00> : vector<2x64xf32>
    %537 = tpu.matmul %508, %8, %cst_200 {dimension_numbers = #tpu.dot_dimension_numbers<[1], [1], [0], [0], [0, 0, 1, 0], [], []>} : vector<2x16xf32>, vector<64x16xf32>, vector<2x64xf32> -> vector<2x64xf32>
    %538 = arith.addf %534, %537 : vector<2x64xf32>
    %539 = vector.extract_strided_slice %536 {offsets = [0, 0], sizes = [2, 16], strides = [1, 1]} : vector<2x64xf32> to vector<2x16xf32>
    %cst_201 = arith.constant 0.000000e+00 : f32
    %540 = vector.broadcast %cst_201 : f32 to vector<2x16xf32>
    %541 = arith.subf %540, %539 : vector<2x16xf32>
    %542 = math.exp %541 : vector<2x16xf32>
    %cst_202 = arith.constant 1.000000e+00 : f32
    %543 = vector.broadcast %cst_202 : f32 to vector<2x16xf32>
    %544 = arith.addf %543, %542 : vector<2x16xf32>
    %cst_203 = arith.constant 1.000000e+00 : f32
    %545 = vector.broadcast %cst_203 : f32 to vector<2x16xf32>
    %546 = arith.divf %545, %544 : vector<2x16xf32>
    %547 = vector.extract_strided_slice %536 {offsets = [0, 16], sizes = [2, 16], strides = [1, 1]} : vector<2x64xf32> to vector<2x16xf32>
    %cst_204 = arith.constant 0.000000e+00 : f32
    %548 = vector.broadcast %cst_204 : f32 to vector<2x16xf32>
    %549 = arith.subf %548, %547 : vector<2x16xf32>
    %550 = math.exp %549 : vector<2x16xf32>
    %cst_205 = arith.constant 1.000000e+00 : f32
    %551 = vector.broadcast %cst_205 : f32 to vector<2x16xf32>
    %552 = arith.addf %551, %550 : vector<2x16xf32>
    %cst_206 = arith.constant 1.000000e+00 : f32
    %553 = vector.broadcast %cst_206 : f32 to vector<2x16xf32>
    %554 = arith.divf %553, %552 : vector<2x16xf32>
    %555 = vector.extract_strided_slice %536 {offsets = [0, 32], sizes = [2, 16], strides = [1, 1]} : vector<2x64xf32> to vector<2x16xf32>
    %556 = math.tanh %555 : vector<2x16xf32>
    %557 = vector.extract_strided_slice %536 {offsets = [0, 48], sizes = [2, 16], strides = [1, 1]} : vector<2x64xf32> to vector<2x16xf32>
    %cst_207 = arith.constant 0.000000e+00 : f32
    %558 = vector.broadcast %cst_207 : f32 to vector<2x16xf32>
    %559 = arith.subf %558, %557 : vector<2x16xf32>
    %560 = math.exp %559 : vector<2x16xf32>
    %cst_208 = arith.constant 1.000000e+00 : f32
    %561 = vector.broadcast %cst_208 : f32 to vector<2x16xf32>
    %562 = arith.addf %561, %560 : vector<2x16xf32>
    %cst_209 = arith.constant 1.000000e+00 : f32
    %563 = vector.broadcast %cst_209 : f32 to vector<2x16xf32>
    %564 = arith.divf %563, %562 : vector<2x16xf32>
    %565 = arith.mulf %554, %463 : vector<2x16xf32>
    %566 = arith.mulf %546, %556 : vector<2x16xf32>
    %567 = arith.addf %565, %566 : vector<2x16xf32>
    %568 = math.tanh %567 : vector<2x16xf32>
    %569 = arith.mulf %564, %568 : vector<2x16xf32>
    %570 = vector.extract_strided_slice %538 {offsets = [0, 0], sizes = [2, 16], strides = [1, 1]} : vector<2x64xf32> to vector<2x16xf32>
    %cst_210 = arith.constant 0.000000e+00 : f32
    %571 = vector.broadcast %cst_210 : f32 to vector<2x16xf32>
    %572 = arith.subf %571, %570 : vector<2x16xf32>
    %573 = math.exp %572 : vector<2x16xf32>
    %cst_211 = arith.constant 1.000000e+00 : f32
    %574 = vector.broadcast %cst_211 : f32 to vector<2x16xf32>
    %575 = arith.addf %574, %573 : vector<2x16xf32>
    %cst_212 = arith.constant 1.000000e+00 : f32
    %576 = vector.broadcast %cst_212 : f32 to vector<2x16xf32>
    %577 = arith.divf %576, %575 : vector<2x16xf32>
    %578 = vector.extract_strided_slice %538 {offsets = [0, 16], sizes = [2, 16], strides = [1, 1]} : vector<2x64xf32> to vector<2x16xf32>
    %cst_213 = arith.constant 0.000000e+00 : f32
    %579 = vector.broadcast %cst_213 : f32 to vector<2x16xf32>
    %580 = arith.subf %579, %578 : vector<2x16xf32>
    %581 = math.exp %580 : vector<2x16xf32>
    %cst_214 = arith.constant 1.000000e+00 : f32
    %582 = vector.broadcast %cst_214 : f32 to vector<2x16xf32>
    %583 = arith.addf %582, %581 : vector<2x16xf32>
    %cst_215 = arith.constant 1.000000e+00 : f32
    %584 = vector.broadcast %cst_215 : f32 to vector<2x16xf32>
    %585 = arith.divf %584, %583 : vector<2x16xf32>
    %586 = vector.extract_strided_slice %538 {offsets = [0, 32], sizes = [2, 16], strides = [1, 1]} : vector<2x64xf32> to vector<2x16xf32>
    %587 = math.tanh %586 : vector<2x16xf32>
    %588 = vector.extract_strided_slice %538 {offsets = [0, 48], sizes = [2, 16], strides = [1, 1]} : vector<2x64xf32> to vector<2x16xf32>
    %cst_216 = arith.constant 0.000000e+00 : f32
    %589 = vector.broadcast %cst_216 : f32 to vector<2x16xf32>
    %590 = arith.subf %589, %588 : vector<2x16xf32>
    %591 = math.exp %590 : vector<2x16xf32>
    %cst_217 = arith.constant 1.000000e+00 : f32
    %592 = vector.broadcast %cst_217 : f32 to vector<2x16xf32>
    %593 = arith.addf %592, %591 : vector<2x16xf32>
    %cst_218 = arith.constant 1.000000e+00 : f32
    %594 = vector.broadcast %cst_218 : f32 to vector<2x16xf32>
    %595 = arith.divf %594, %593 : vector<2x16xf32>
    %596 = arith.mulf %585, %510 : vector<2x16xf32>
    %597 = arith.mulf %577, %587 : vector<2x16xf32>
    %598 = arith.addf %596, %597 : vector<2x16xf32>
    %599 = math.tanh %598 : vector<2x16xf32>
    %600 = arith.mulf %595, %599 : vector<2x16xf32>
    %c5_i32_219 = arith.constant 5 : i32
    %601 = vector.broadcast %c5_i32_219 : i32 to vector<2x1xi32>
    %602 = arith.cmpi sgt, %6, %601 : vector<2x1xi32>
    %603 = arith.extui %602 : vector<2x1xi1> to vector<2x1xi32>
    %604 = arith.sitofp %603 : vector<2x1xi32> to vector<2x1xf32>
    %c2_i32_220 = arith.constant 2 : i32
    %605 = vector.broadcast %c2_i32_220 : i32 to vector<2x1xi32>
    %606 = arith.cmpi sgt, %6, %605 : vector<2x1xi32>
    %607 = arith.extui %606 : vector<2x1xi1> to vector<2x1xi32>
    %608 = arith.sitofp %607 : vector<2x1xi32> to vector<2x1xf32>
    %609 = vector.broadcast %604 : vector<2x1xf32> to vector<2x16xf32>
    %610 = arith.mulf %569, %609 : vector<2x16xf32>
    %611 = vector.broadcast %608 : vector<2x1xf32> to vector<2x16xf32>
    %612 = arith.mulf %600, %611 : vector<2x16xf32>
    %613 = vector.broadcast %608 : vector<2x1xf32> to vector<2x16xf32>
    %614 = arith.mulf %598, %613 : vector<2x16xf32>
    %c5_221 = arith.constant 5 : index
    %c0_222 = arith.constant 0 : index
    %c0_223 = arith.constant 0 : index
    %615 = vector.load %arg11[%c5_221, %c0_222, %c0_223] : memref<8x2x32xf32, #tpu.memory_space<vmem>>, vector<1x2x16xf32>
    %616 = vector.shape_cast %615 : vector<1x2x16xf32> to vector<2x16xf32>
    %617 = vector.shape_cast %610 : vector<2x16xf32> to vector<1x2x16xf32>
    tpu.vector_store %arg11[%c5_221, %c0_222, %c0_223], %617 {strides = array<i32>} : memref<8x2x32xf32, #tpu.memory_space<vmem>>, vector<1x2x16xf32>,
    %c2_224 = arith.constant 2 : index
    %c0_225 = arith.constant 0 : index
    %c16_226 = arith.constant 16 : index
    %618 = vector.load %arg11[%c2_224, %c0_225, %c16_226] : memref<8x2x32xf32, #tpu.memory_space<vmem>>, vector<1x2x16xf32>
    %619 = vector.shape_cast %618 : vector<1x2x16xf32> to vector<2x16xf32>
    %620 = vector.shape_cast %612 : vector<2x16xf32> to vector<1x2x16xf32>
    tpu.vector_store %arg11[%c2_224, %c0_225, %c16_226], %620 {strides = array<i32>} : memref<8x2x32xf32, #tpu.memory_space<vmem>>, vector<1x2x16xf32>,
    %621 = vector.extract_strided_slice %610 {offsets = [0, 0], sizes = [1, 16], strides = [1, 1]} : vector<2x16xf32> to vector<1x16xf32>
    %c0_227 = arith.constant 0 : index
    %c5_228 = arith.constant 5 : index
    %c0_229 = arith.constant 0 : index
    %622 = vector.load %arg14[%c0_227, %c5_228, %c0_229] : memref<2x8x32xf32, #tpu.memory_space<vmem>>, vector<1x1x16xf32>
    %623 = vector.shape_cast %622 : vector<1x1x16xf32> to vector<1x16xf32>
    %624 = vector.shape_cast %621 : vector<1x16xf32> to vector<1x1x16xf32>
    tpu.vector_store %arg14[%c0_227, %c5_228, %c0_229], %624 {strides = array<i32>} : memref<2x8x32xf32, #tpu.memory_space<vmem>>, vector<1x1x16xf32>,
    %625 = vector.extract_strided_slice %612 {offsets = [0, 0], sizes = [1, 16], strides = [1, 1]} : vector<2x16xf32> to vector<1x16xf32>
    %c0_230 = arith.constant 0 : index
    %c2_231 = arith.constant 2 : index
    %c16_232 = arith.constant 16 : index
    %626 = vector.load %arg14[%c0_230, %c2_231, %c16_232] : memref<2x8x32xf32, #tpu.memory_space<vmem>>, vector<1x1x16xf32>
    %627 = vector.shape_cast %626 : vector<1x1x16xf32> to vector<1x16xf32>
    %628 = vector.shape_cast %625 : vector<1x16xf32> to vector<1x1x16xf32>
    tpu.vector_store %arg14[%c0_230, %c2_231, %c16_232], %628 {strides = array<i32>} : memref<2x8x32xf32, #tpu.memory_space<vmem>>, vector<1x1x16xf32>,
    %629 = vector.extract_strided_slice %610 {offsets = [1, 0], sizes = [1, 16], strides = [1, 1]} : vector<2x16xf32> to vector<1x16xf32>
    %c1_233 = arith.constant 1 : index
    %c5_234 = arith.constant 5 : index
    %c0_235 = arith.constant 0 : index
    %630 = vector.load %arg14[%c1_233, %c5_234, %c0_235] : memref<2x8x32xf32, #tpu.memory_space<vmem>>, vector<1x1x16xf32>
    %631 = vector.shape_cast %630 : vector<1x1x16xf32> to vector<1x16xf32>
    %632 = vector.shape_cast %629 : vector<1x16xf32> to vector<1x1x16xf32>
    tpu.vector_store %arg14[%c1_233, %c5_234, %c0_235], %632 {strides = array<i32>} : memref<2x8x32xf32, #tpu.memory_space<vmem>>, vector<1x1x16xf32>,
    %633 = vector.extract_strided_slice %612 {offsets = [1, 0], sizes = [1, 16], strides = [1, 1]} : vector<2x16xf32> to vector<1x16xf32>
    %c1_236 = arith.constant 1 : index
    %c2_237 = arith.constant 2 : index
    %c16_238 = arith.constant 16 : index
    %634 = vector.load %arg14[%c1_236, %c2_237, %c16_238] : memref<2x8x32xf32, #tpu.memory_space<vmem>>, vector<1x1x16xf32>
    %635 = vector.shape_cast %634 : vector<1x1x16xf32> to vector<1x16xf32>
    %636 = vector.shape_cast %633 : vector<1x16xf32> to vector<1x1x16xf32>
    tpu.vector_store %arg14[%c1_236, %c2_237, %c16_238], %636 {strides = array<i32>} : memref<2x8x32xf32, #tpu.memory_space<vmem>>, vector<1x1x16xf32>,
    %637 = vector.extract_strided_slice %5 {offsets = [12, 0], sizes = [2, 64], strides = [1, 1]} : vector<16x128xf32> to vector<2x64xf32>
    %638 = vector.extract_strided_slice %5 {offsets = [2, 64], sizes = [2, 64], strides = [1, 1]} : vector<16x128xf32> to vector<2x64xf32>
    %cst_239 = arith.constant dense<0.000000e+00> : vector<2x64xf32>
    %639 = tpu.matmul %569, %7, %cst_239 {dimension_numbers = #tpu.dot_dimension_numbers<[1], [1], [0], [0], [0, 0, 1, 0], [], []>} : vector<2x16xf32>, vector<64x16xf32>, vector<2x64xf32> -> vector<2x64xf32>
    %640 = arith.addf %637, %639 : vector<2x64xf32>
    %cst_240 = arith.constant dense<0.000000e+00> : vector<2x64xf32>
    %641 = tpu.matmul %612, %8, %cst_240 {dimension_numbers = #tpu.dot_dimension_numbers<[1], [1], [0], [0], [0, 0, 1, 0], [], []>} : vector<2x16xf32>, vector<64x16xf32>, vector<2x64xf32> -> vector<2x64xf32>
    %642 = arith.addf %638, %641 : vector<2x64xf32>
    %643 = vector.extract_strided_slice %640 {offsets = [0, 0], sizes = [2, 16], strides = [1, 1]} : vector<2x64xf32> to vector<2x16xf32>
    %cst_241 = arith.constant 0.000000e+00 : f32
    %644 = vector.broadcast %cst_241 : f32 to vector<2x16xf32>
    %645 = arith.subf %644, %643 : vector<2x16xf32>
    %646 = math.exp %645 : vector<2x16xf32>
    %cst_242 = arith.constant 1.000000e+00 : f32
    %647 = vector.broadcast %cst_242 : f32 to vector<2x16xf32>
    %648 = arith.addf %647, %646 : vector<2x16xf32>
    %cst_243 = arith.constant 1.000000e+00 : f32
    %649 = vector.broadcast %cst_243 : f32 to vector<2x16xf32>
    %650 = arith.divf %649, %648 : vector<2x16xf32>
    %651 = vector.extract_strided_slice %640 {offsets = [0, 16], sizes = [2, 16], strides = [1, 1]} : vector<2x64xf32> to vector<2x16xf32>
    %cst_244 = arith.constant 0.000000e+00 : f32
    %652 = vector.broadcast %cst_244 : f32 to vector<2x16xf32>
    %653 = arith.subf %652, %651 : vector<2x16xf32>
    %654 = math.exp %653 : vector<2x16xf32>
    %cst_245 = arith.constant 1.000000e+00 : f32
    %655 = vector.broadcast %cst_245 : f32 to vector<2x16xf32>
    %656 = arith.addf %655, %654 : vector<2x16xf32>
    %cst_246 = arith.constant 1.000000e+00 : f32
    %657 = vector.broadcast %cst_246 : f32 to vector<2x16xf32>
    %658 = arith.divf %657, %656 : vector<2x16xf32>
    %659 = vector.extract_strided_slice %640 {offsets = [0, 32], sizes = [2, 16], strides = [1, 1]} : vector<2x64xf32> to vector<2x16xf32>
    %660 = math.tanh %659 : vector<2x16xf32>
    %661 = vector.extract_strided_slice %640 {offsets = [0, 48], sizes = [2, 16], strides = [1, 1]} : vector<2x64xf32> to vector<2x16xf32>
    %cst_247 = arith.constant 0.000000e+00 : f32
    %662 = vector.broadcast %cst_247 : f32 to vector<2x16xf32>
    %663 = arith.subf %662, %661 : vector<2x16xf32>
    %664 = math.exp %663 : vector<2x16xf32>
    %cst_248 = arith.constant 1.000000e+00 : f32
    %665 = vector.broadcast %cst_248 : f32 to vector<2x16xf32>
    %666 = arith.addf %665, %664 : vector<2x16xf32>
    %cst_249 = arith.constant 1.000000e+00 : f32
    %667 = vector.broadcast %cst_249 : f32 to vector<2x16xf32>
    %668 = arith.divf %667, %666 : vector<2x16xf32>
    %669 = arith.mulf %658, %567 : vector<2x16xf32>
    %670 = arith.mulf %650, %660 : vector<2x16xf32>
    %671 = arith.addf %669, %670 : vector<2x16xf32>
    %672 = math.tanh %671 : vector<2x16xf32>
    %673 = arith.mulf %668, %672 : vector<2x16xf32>
    %674 = vector.extract_strided_slice %642 {offsets = [0, 0], sizes = [2, 16], strides = [1, 1]} : vector<2x64xf32> to vector<2x16xf32>
    %cst_250 = arith.constant 0.000000e+00 : f32
    %675 = vector.broadcast %cst_250 : f32 to vector<2x16xf32>
    %676 = arith.subf %675, %674 : vector<2x16xf32>
    %677 = math.exp %676 : vector<2x16xf32>
    %cst_251 = arith.constant 1.000000e+00 : f32
    %678 = vector.broadcast %cst_251 : f32 to vector<2x16xf32>
    %679 = arith.addf %678, %677 : vector<2x16xf32>
    %cst_252 = arith.constant 1.000000e+00 : f32
    %680 = vector.broadcast %cst_252 : f32 to vector<2x16xf32>
    %681 = arith.divf %680, %679 : vector<2x16xf32>
    %682 = vector.extract_strided_slice %642 {offsets = [0, 16], sizes = [2, 16], strides = [1, 1]} : vector<2x64xf32> to vector<2x16xf32>
    %cst_253 = arith.constant 0.000000e+00 : f32
    %683 = vector.broadcast %cst_253 : f32 to vector<2x16xf32>
    %684 = arith.subf %683, %682 : vector<2x16xf32>
    %685 = math.exp %684 : vector<2x16xf32>
    %cst_254 = arith.constant 1.000000e+00 : f32
    %686 = vector.broadcast %cst_254 : f32 to vector<2x16xf32>
    %687 = arith.addf %686, %685 : vector<2x16xf32>
    %cst_255 = arith.constant 1.000000e+00 : f32
    %688 = vector.broadcast %cst_255 : f32 to vector<2x16xf32>
    %689 = arith.divf %688, %687 : vector<2x16xf32>
    %690 = vector.extract_strided_slice %642 {offsets = [0, 32], sizes = [2, 16], strides = [1, 1]} : vector<2x64xf32> to vector<2x16xf32>
    %691 = math.tanh %690 : vector<2x16xf32>
    %692 = vector.extract_strided_slice %642 {offsets = [0, 48], sizes = [2, 16], strides = [1, 1]} : vector<2x64xf32> to vector<2x16xf32>
    %cst_256 = arith.constant 0.000000e+00 : f32
    %693 = vector.broadcast %cst_256 : f32 to vector<2x16xf32>
    %694 = arith.subf %693, %692 : vector<2x16xf32>
    %695 = math.exp %694 : vector<2x16xf32>
    %cst_257 = arith.constant 1.000000e+00 : f32
    %696 = vector.broadcast %cst_257 : f32 to vector<2x16xf32>
    %697 = arith.addf %696, %695 : vector<2x16xf32>
    %cst_258 = arith.constant 1.000000e+00 : f32
    %698 = vector.broadcast %cst_258 : f32 to vector<2x16xf32>
    %699 = arith.divf %698, %697 : vector<2x16xf32>
    %700 = arith.mulf %689, %614 : vector<2x16xf32>
    %701 = arith.mulf %681, %691 : vector<2x16xf32>
    %702 = arith.addf %700, %701 : vector<2x16xf32>
    %703 = math.tanh %702 : vector<2x16xf32>
    %704 = arith.mulf %699, %703 : vector<2x16xf32>
    %c6_i32_259 = arith.constant 6 : i32
    %705 = vector.broadcast %c6_i32_259 : i32 to vector<2x1xi32>
    %706 = arith.cmpi sgt, %6, %705 : vector<2x1xi32>
    %707 = arith.extui %706 : vector<2x1xi1> to vector<2x1xi32>
    %708 = arith.sitofp %707 : vector<2x1xi32> to vector<2x1xf32>
    %c1_i32_260 = arith.constant 1 : i32
    %709 = vector.broadcast %c1_i32_260 : i32 to vector<2x1xi32>
    %710 = arith.cmpi sgt, %6, %709 : vector<2x1xi32>
    %711 = arith.extui %710 : vector<2x1xi1> to vector<2x1xi32>
    %712 = arith.sitofp %711 : vector<2x1xi32> to vector<2x1xf32>
    %713 = vector.broadcast %708 : vector<2x1xf32> to vector<2x16xf32>
    %714 = arith.mulf %673, %713 : vector<2x16xf32>
    %715 = vector.broadcast %712 : vector<2x1xf32> to vector<2x16xf32>
    %716 = arith.mulf %704, %715 : vector<2x16xf32>
    %717 = vector.broadcast %712 : vector<2x1xf32> to vector<2x16xf32>
    %718 = arith.mulf %702, %717 : vector<2x16xf32>
    %c6_261 = arith.constant 6 : index
    %c0_262 = arith.constant 0 : index
    %c0_263 = arith.constant 0 : index
    %719 = vector.load %arg11[%c6_261, %c0_262, %c0_263] : memref<8x2x32xf32, #tpu.memory_space<vmem>>, vector<1x2x16xf32>
    %720 = vector.shape_cast %719 : vector<1x2x16xf32> to vector<2x16xf32>
    %721 = vector.shape_cast %714 : vector<2x16xf32> to vector<1x2x16xf32>
    tpu.vector_store %arg11[%c6_261, %c0_262, %c0_263], %721 {strides = array<i32>} : memref<8x2x32xf32, #tpu.memory_space<vmem>>, vector<1x2x16xf32>,
    %c1_264 = arith.constant 1 : index
    %c0_265 = arith.constant 0 : index
    %c16_266 = arith.constant 16 : index
    %722 = vector.load %arg11[%c1_264, %c0_265, %c16_266] : memref<8x2x32xf32, #tpu.memory_space<vmem>>, vector<1x2x16xf32>
    %723 = vector.shape_cast %722 : vector<1x2x16xf32> to vector<2x16xf32>
    %724 = vector.shape_cast %716 : vector<2x16xf32> to vector<1x2x16xf32>
    tpu.vector_store %arg11[%c1_264, %c0_265, %c16_266], %724 {strides = array<i32>} : memref<8x2x32xf32, #tpu.memory_space<vmem>>, vector<1x2x16xf32>,
    %725 = vector.extract_strided_slice %714 {offsets = [0, 0], sizes = [1, 16], strides = [1, 1]} : vector<2x16xf32> to vector<1x16xf32>
    %c0_267 = arith.constant 0 : index
    %c6_268 = arith.constant 6 : index
    %c0_269 = arith.constant 0 : index
    %726 = vector.load %arg14[%c0_267, %c6_268, %c0_269] : memref<2x8x32xf32, #tpu.memory_space<vmem>>, vector<1x1x16xf32>
    %727 = vector.shape_cast %726 : vector<1x1x16xf32> to vector<1x16xf32>
    %728 = vector.shape_cast %725 : vector<1x16xf32> to vector<1x1x16xf32>
    tpu.vector_store %arg14[%c0_267, %c6_268, %c0_269], %728 {strides = array<i32>} : memref<2x8x32xf32, #tpu.memory_space<vmem>>, vector<1x1x16xf32>,
    %729 = vector.extract_strided_slice %716 {offsets = [0, 0], sizes = [1, 16], strides = [1, 1]} : vector<2x16xf32> to vector<1x16xf32>
    %c0_270 = arith.constant 0 : index
    %c1_271 = arith.constant 1 : index
    %c16_272 = arith.constant 16 : index
    %730 = vector.load %arg14[%c0_270, %c1_271, %c16_272] : memref<2x8x32xf32, #tpu.memory_space<vmem>>, vector<1x1x16xf32>
    %731 = vector.shape_cast %730 : vector<1x1x16xf32> to vector<1x16xf32>
    %732 = vector.shape_cast %729 : vector<1x16xf32> to vector<1x1x16xf32>
    tpu.vector_store %arg14[%c0_270, %c1_271, %c16_272], %732 {strides = array<i32>} : memref<2x8x32xf32, #tpu.memory_space<vmem>>, vector<1x1x16xf32>,
    %733 = vector.extract_strided_slice %714 {offsets = [1, 0], sizes = [1, 16], strides = [1, 1]} : vector<2x16xf32> to vector<1x16xf32>
    %c1_273 = arith.constant 1 : index
    %c6_274 = arith.constant 6 : index
    %c0_275 = arith.constant 0 : index
    %734 = vector.load %arg14[%c1_273, %c6_274, %c0_275] : memref<2x8x32xf32, #tpu.memory_space<vmem>>, vector<1x1x16xf32>
    %735 = vector.shape_cast %734 : vector<1x1x16xf32> to vector<1x16xf32>
    %736 = vector.shape_cast %733 : vector<1x16xf32> to vector<1x1x16xf32>
    tpu.vector_store %arg14[%c1_273, %c6_274, %c0_275], %736 {strides = array<i32>} : memref<2x8x32xf32, #tpu.memory_space<vmem>>, vector<1x1x16xf32>,
    %737 = vector.extract_strided_slice %716 {offsets = [1, 0], sizes = [1, 16], strides = [1, 1]} : vector<2x16xf32> to vector<1x16xf32>
    %c1_276 = arith.constant 1 : index
    %c1_277 = arith.constant 1 : index
    %c16_278 = arith.constant 16 : index
    %738 = vector.load %arg14[%c1_276, %c1_277, %c16_278] : memref<2x8x32xf32, #tpu.memory_space<vmem>>, vector<1x1x16xf32>
    %739 = vector.shape_cast %738 : vector<1x1x16xf32> to vector<1x16xf32>
    %740 = vector.shape_cast %737 : vector<1x16xf32> to vector<1x1x16xf32>
    tpu.vector_store %arg14[%c1_276, %c1_277, %c16_278], %740 {strides = array<i32>} : memref<2x8x32xf32, #tpu.memory_space<vmem>>, vector<1x1x16xf32>,
    %741 = vector.extract_strided_slice %5 {offsets = [14, 0], sizes = [2, 64], strides = [1, 1]} : vector<16x128xf32> to vector<2x64xf32>
    %742 = vector.extract_strided_slice %5 {offsets = [0, 64], sizes = [2, 64], strides = [1, 1]} : vector<16x128xf32> to vector<2x64xf32>
    %cst_279 = arith.constant dense<0.000000e+00> : vector<2x64xf32>
    %743 = tpu.matmul %673, %7, %cst_279 {dimension_numbers = #tpu.dot_dimension_numbers<[1], [1], [0], [0], [0, 0, 1, 0], [], []>} : vector<2x16xf32>, vector<64x16xf32>, vector<2x64xf32> -> vector<2x64xf32>
    %744 = arith.addf %741, %743 : vector<2x64xf32>
    %cst_280 = arith.constant dense<0.000000e+00> : vector<2x64xf32>
    %745 = tpu.matmul %716, %8, %cst_280 {dimension_numbers = #tpu.dot_dimension_numbers<[1], [1], [0], [0], [0, 0, 1, 0], [], []>} : vector<2x16xf32>, vector<64x16xf32>, vector<2x64xf32> -> vector<2x64xf32>
    %746 = arith.addf %742, %745 : vector<2x64xf32>
    %747 = vector.extract_strided_slice %744 {offsets = [0, 0], sizes = [2, 16], strides = [1, 1]} : vector<2x64xf32> to vector<2x16xf32>
    %cst_281 = arith.constant 0.000000e+00 : f32
    %748 = vector.broadcast %cst_281 : f32 to vector<2x16xf32>
    %749 = arith.subf %748, %747 : vector<2x16xf32>
    %750 = math.exp %749 : vector<2x16xf32>
    %cst_282 = arith.constant 1.000000e+00 : f32
    %751 = vector.broadcast %cst_282 : f32 to vector<2x16xf32>
    %752 = arith.addf %751, %750 : vector<2x16xf32>
    %cst_283 = arith.constant 1.000000e+00 : f32
    %753 = vector.broadcast %cst_283 : f32 to vector<2x16xf32>
    %754 = arith.divf %753, %752 : vector<2x16xf32>
    %755 = vector.extract_strided_slice %744 {offsets = [0, 16], sizes = [2, 16], strides = [1, 1]} : vector<2x64xf32> to vector<2x16xf32>
    %cst_284 = arith.constant 0.000000e+00 : f32
    %756 = vector.broadcast %cst_284 : f32 to vector<2x16xf32>
    %757 = arith.subf %756, %755 : vector<2x16xf32>
    %758 = math.exp %757 : vector<2x16xf32>
    %cst_285 = arith.constant 1.000000e+00 : f32
    %759 = vector.broadcast %cst_285 : f32 to vector<2x16xf32>
    %760 = arith.addf %759, %758 : vector<2x16xf32>
    %cst_286 = arith.constant 1.000000e+00 : f32
    %761 = vector.broadcast %cst_286 : f32 to vector<2x16xf32>
    %762 = arith.divf %761, %760 : vector<2x16xf32>
    %763 = vector.extract_strided_slice %744 {offsets = [0, 32], sizes = [2, 16], strides = [1, 1]} : vector<2x64xf32> to vector<2x16xf32>
    %764 = math.tanh %763 : vector<2x16xf32>
    %765 = vector.extract_strided_slice %744 {offsets = [0, 48], sizes = [2, 16], strides = [1, 1]} : vector<2x64xf32> to vector<2x16xf32>
    %cst_287 = arith.constant 0.000000e+00 : f32
    %766 = vector.broadcast %cst_287 : f32 to vector<2x16xf32>
    %767 = arith.subf %766, %765 : vector<2x16xf32>
    %768 = math.exp %767 : vector<2x16xf32>
    %cst_288 = arith.constant 1.000000e+00 : f32
    %769 = vector.broadcast %cst_288 : f32 to vector<2x16xf32>
    %770 = arith.addf %769, %768 : vector<2x16xf32>
    %cst_289 = arith.constant 1.000000e+00 : f32
    %771 = vector.broadcast %cst_289 : f32 to vector<2x16xf32>
    %772 = arith.divf %771, %770 : vector<2x16xf32>
    %773 = arith.mulf %762, %671 : vector<2x16xf32>
    %774 = arith.mulf %754, %764 : vector<2x16xf32>
    %775 = arith.addf %773, %774 : vector<2x16xf32>
    %776 = math.tanh %775 : vector<2x16xf32>
    %777 = arith.mulf %772, %776 : vector<2x16xf32>
    %778 = vector.extract_strided_slice %746 {offsets = [0, 0], sizes = [2, 16], strides = [1, 1]} : vector<2x64xf32> to vector<2x16xf32>
    %cst_290 = arith.constant 0.000000e+00 : f32
    %779 = vector.broadcast %cst_290 : f32 to vector<2x16xf32>
    %780 = arith.subf %779, %778 : vector<2x16xf32>
    %781 = math.exp %780 : vector<2x16xf32>
    %cst_291 = arith.constant 1.000000e+00 : f32
    %782 = vector.broadcast %cst_291 : f32 to vector<2x16xf32>
    %783 = arith.addf %782, %781 : vector<2x16xf32>
    %cst_292 = arith.constant 1.000000e+00 : f32
    %784 = vector.broadcast %cst_292 : f32 to vector<2x16xf32>
    %785 = arith.divf %784, %783 : vector<2x16xf32>
    %786 = vector.extract_strided_slice %746 {offsets = [0, 16], sizes = [2, 16], strides = [1, 1]} : vector<2x64xf32> to vector<2x16xf32>
    %cst_293 = arith.constant 0.000000e+00 : f32
    %787 = vector.broadcast %cst_293 : f32 to vector<2x16xf32>
    %788 = arith.subf %787, %786 : vector<2x16xf32>
    %789 = math.exp %788 : vector<2x16xf32>
    %cst_294 = arith.constant 1.000000e+00 : f32
    %790 = vector.broadcast %cst_294 : f32 to vector<2x16xf32>
    %791 = arith.addf %790, %789 : vector<2x16xf32>
    %cst_295 = arith.constant 1.000000e+00 : f32
    %792 = vector.broadcast %cst_295 : f32 to vector<2x16xf32>
    %793 = arith.divf %792, %791 : vector<2x16xf32>
    %794 = vector.extract_strided_slice %746 {offsets = [0, 32], sizes = [2, 16], strides = [1, 1]} : vector<2x64xf32> to vector<2x16xf32>
    %795 = math.tanh %794 : vector<2x16xf32>
    %796 = vector.extract_strided_slice %746 {offsets = [0, 48], sizes = [2, 16], strides = [1, 1]} : vector<2x64xf32> to vector<2x16xf32>
    %cst_296 = arith.constant 0.000000e+00 : f32
    %797 = vector.broadcast %cst_296 : f32 to vector<2x16xf32>
    %798 = arith.subf %797, %796 : vector<2x16xf32>
    %799 = math.exp %798 : vector<2x16xf32>
    %cst_297 = arith.constant 1.000000e+00 : f32
    %800 = vector.broadcast %cst_297 : f32 to vector<2x16xf32>
    %801 = arith.addf %800, %799 : vector<2x16xf32>
    %cst_298 = arith.constant 1.000000e+00 : f32
    %802 = vector.broadcast %cst_298 : f32 to vector<2x16xf32>
    %803 = arith.divf %802, %801 : vector<2x16xf32>
    %804 = arith.mulf %793, %718 : vector<2x16xf32>
    %805 = arith.mulf %785, %795 : vector<2x16xf32>
    %806 = arith.addf %804, %805 : vector<2x16xf32>
    %807 = math.tanh %806 : vector<2x16xf32>
    %808 = arith.mulf %803, %807 : vector<2x16xf32>
    %c7_i32_299 = arith.constant 7 : i32
    %809 = vector.broadcast %c7_i32_299 : i32 to vector<2x1xi32>
    %810 = arith.cmpi sgt, %6, %809 : vector<2x1xi32>
    %811 = arith.extui %810 : vector<2x1xi1> to vector<2x1xi32>
    %812 = arith.sitofp %811 : vector<2x1xi32> to vector<2x1xf32>
    %c0_i32_300 = arith.constant 0 : i32
    %813 = vector.broadcast %c0_i32_300 : i32 to vector<2x1xi32>
    %814 = arith.cmpi sgt, %6, %813 : vector<2x1xi32>
    %815 = arith.extui %814 : vector<2x1xi1> to vector<2x1xi32>
    %816 = arith.sitofp %815 : vector<2x1xi32> to vector<2x1xf32>
    %817 = vector.broadcast %812 : vector<2x1xf32> to vector<2x16xf32>
    %818 = arith.mulf %777, %817 : vector<2x16xf32>
    %819 = vector.broadcast %816 : vector<2x1xf32> to vector<2x16xf32>
    %820 = arith.mulf %808, %819 : vector<2x16xf32>
    %c7_301 = arith.constant 7 : index
    %c0_302 = arith.constant 0 : index
    %c0_303 = arith.constant 0 : index
    %821 = vector.load %arg11[%c7_301, %c0_302, %c0_303] : memref<8x2x32xf32, #tpu.memory_space<vmem>>, vector<1x2x16xf32>
    %822 = vector.shape_cast %821 : vector<1x2x16xf32> to vector<2x16xf32>
    %823 = vector.shape_cast %818 : vector<2x16xf32> to vector<1x2x16xf32>
    tpu.vector_store %arg11[%c7_301, %c0_302, %c0_303], %823 {strides = array<i32>} : memref<8x2x32xf32, #tpu.memory_space<vmem>>, vector<1x2x16xf32>,
    %c0_304 = arith.constant 0 : index
    %c0_305 = arith.constant 0 : index
    %c16_306 = arith.constant 16 : index
    %824 = vector.load %arg11[%c0_304, %c0_305, %c16_306] : memref<8x2x32xf32, #tpu.memory_space<vmem>>, vector<1x2x16xf32>
    %825 = vector.shape_cast %824 : vector<1x2x16xf32> to vector<2x16xf32>
    %826 = vector.shape_cast %820 : vector<2x16xf32> to vector<1x2x16xf32>
    tpu.vector_store %arg11[%c0_304, %c0_305, %c16_306], %826 {strides = array<i32>} : memref<8x2x32xf32, #tpu.memory_space<vmem>>, vector<1x2x16xf32>,
    %827 = vector.extract_strided_slice %818 {offsets = [0, 0], sizes = [1, 16], strides = [1, 1]} : vector<2x16xf32> to vector<1x16xf32>
    %c0_307 = arith.constant 0 : index
    %c7_308 = arith.constant 7 : index
    %c0_309 = arith.constant 0 : index
    %828 = vector.load %arg14[%c0_307, %c7_308, %c0_309] : memref<2x8x32xf32, #tpu.memory_space<vmem>>, vector<1x1x16xf32>
    %829 = vector.shape_cast %828 : vector<1x1x16xf32> to vector<1x16xf32>
    %830 = vector.shape_cast %827 : vector<1x16xf32> to vector<1x1x16xf32>
    tpu.vector_store %arg14[%c0_307, %c7_308, %c0_309], %830 {strides = array<i32>} : memref<2x8x32xf32, #tpu.memory_space<vmem>>, vector<1x1x16xf32>,
    %831 = vector.extract_strided_slice %820 {offsets = [0, 0], sizes = [1, 16], strides = [1, 1]} : vector<2x16xf32> to vector<1x16xf32>
    %c0_310 = arith.constant 0 : index
    %c0_311 = arith.constant 0 : index
    %c16_312 = arith.constant 16 : index
    %832 = vector.load %arg14[%c0_310, %c0_311, %c16_312] : memref<2x8x32xf32, #tpu.memory_space<vmem>>, vector<1x1x16xf32>
    %833 = vector.shape_cast %832 : vector<1x1x16xf32> to vector<1x16xf32>
    %834 = vector.shape_cast %831 : vector<1x16xf32> to vector<1x1x16xf32>
    tpu.vector_store %arg14[%c0_310, %c0_311, %c16_312], %834 {strides = array<i32>} : memref<2x8x32xf32, #tpu.memory_space<vmem>>, vector<1x1x16xf32>,
    %835 = vector.extract_strided_slice %818 {offsets = [1, 0], sizes = [1, 16], strides = [1, 1]} : vector<2x16xf32> to vector<1x16xf32>
    %c1_313 = arith.constant 1 : index
    %c7_314 = arith.constant 7 : index
    %c0_315 = arith.constant 0 : index
    %836 = vector.load %arg14[%c1_313, %c7_314, %c0_315] : memref<2x8x32xf32, #tpu.memory_space<vmem>>, vector<1x1x16xf32>
    %837 = vector.shape_cast %836 : vector<1x1x16xf32> to vector<1x16xf32>
    %838 = vector.shape_cast %835 : vector<1x16xf32> to vector<1x1x16xf32>
    tpu.vector_store %arg14[%c1_313, %c7_314, %c0_315], %838 {strides = array<i32>} : memref<2x8x32xf32, #tpu.memory_space<vmem>>, vector<1x1x16xf32>,
    %839 = vector.extract_strided_slice %820 {offsets = [1, 0], sizes = [1, 16], strides = [1, 1]} : vector<2x16xf32> to vector<1x16xf32>
    %c1_316 = arith.constant 1 : index
    %c0_317 = arith.constant 0 : index
    %c16_318 = arith.constant 16 : index
    %840 = vector.load %arg14[%c1_316, %c0_317, %c16_318] : memref<2x8x32xf32, #tpu.memory_space<vmem>>, vector<1x1x16xf32>
    %841 = vector.shape_cast %840 : vector<1x1x16xf32> to vector<1x16xf32>
    %842 = vector.shape_cast %839 : vector<1x16xf32> to vector<1x1x16xf32>
    tpu.vector_store %arg14[%c1_316, %c0_317, %c16_318], %842 {strides = array<i32>} : memref<2x8x32xf32, #tpu.memory_space<vmem>>, vector<1x1x16xf32>,
    %c0_319 = arith.constant 0 : index
    %c0_320 = arith.constant 0 : index
    %843 = vector.load %arg10[%c0_319, %c0_320] : memref<1x16xf32, #tpu.memory_space<vmem>>, vector<1x16xf32>
    %c0_321 = arith.constant 0 : index
    %c0_322 = arith.constant 0 : index
    %c0_323 = arith.constant 0 : index
    %844 = vector.load %arg14[%c0_321, %c0_322, %c0_323] : memref<2x8x32xf32, #tpu.memory_space<vmem>>, vector<1x8x32xf32>
    %845 = vector.shape_cast %844 : vector<1x8x32xf32> to vector<8x32xf32>
    %cst_324 = arith.constant 0.000000e+00 : f32
    %846 = vector.broadcast %cst_324 : f32 to vector<8x16xf32>
    %cst_325 = arith.constant 0.000000e+00 : f32
    %847 = vector.broadcast %cst_325 : f32 to vector<8x8xf32>
    %c0_326 = arith.constant 0 : index
    %c0_327 = arith.constant 0 : index
    %848 = vector.load %arg7[%c0_326, %c0_327] : memref<48x32xf32, #tpu.memory_space<vmem>>, vector<4x32xf32>
    %cst_328 = arith.constant dense<0.000000e+00> : vector<8x4xf32>
    %849 = tpu.matmul %845, %848, %cst_328 {dimension_numbers = #tpu.dot_dimension_numbers<[1], [1], [0], [0], [0, 0, 1, 0], [], []>} : vector<8x32xf32>, vector<4x32xf32>, vector<8x4xf32> -> vector<8x4xf32>
    %c0_329 = arith.constant 0 : index
    %c0_330 = arith.constant 0 : index
    %850 = vector.load %arg8[%c0_329, %c0_330] : memref<12x4xf32, #tpu.memory_space<vmem>>, vector<1x4xf32>
    %851 = vector.broadcast %850 : vector<1x4xf32> to vector<8x4xf32>
    %852 = arith.addf %849, %851 : vector<8x4xf32>
    %c16_331 = arith.constant 16 : index
    %c0_332 = arith.constant 0 : index
    %853 = vector.load %arg7[%c16_331, %c0_332] : memref<48x32xf32, #tpu.memory_space<vmem>>, vector<4x32xf32>
    %cst_333 = arith.constant dense<0.000000e+00> : vector<8x4xf32>
    %854 = tpu.matmul %845, %853, %cst_333 {dimension_numbers = #tpu.dot_dimension_numbers<[1], [1], [0], [0], [0, 0, 1, 0], [], []>} : vector<8x32xf32>, vector<4x32xf32>, vector<8x4xf32> -> vector<8x4xf32>
    %c4_334 = arith.constant 4 : index
    %c0_335 = arith.constant 0 : index
    %855 = vector.load %arg8[%c4_334, %c0_335] : memref<12x4xf32, #tpu.memory_space<vmem>>, vector<1x4xf32>
    %856 = vector.broadcast %855 : vector<1x4xf32> to vector<8x4xf32>
    %857 = arith.addf %854, %856 : vector<8x4xf32>
    %c32 = arith.constant 32 : index
    %c0_336 = arith.constant 0 : index
    %858 = vector.load %arg7[%c32, %c0_336] : memref<48x32xf32, #tpu.memory_space<vmem>>, vector<4x32xf32>
    %cst_337 = arith.constant dense<0.000000e+00> : vector<8x4xf32>
    %859 = tpu.matmul %845, %858, %cst_337 {dimension_numbers = #tpu.dot_dimension_numbers<[1], [1], [0], [0], [0, 0, 1, 0], [], []>} : vector<8x32xf32>, vector<4x32xf32>, vector<8x4xf32> -> vector<8x4xf32>
    %c8 = arith.constant 8 : index
    %c0_338 = arith.constant 0 : index
    %860 = vector.load %arg8[%c8, %c0_338] : memref<12x4xf32, #tpu.memory_space<vmem>>, vector<1x4xf32>
    %861 = vector.broadcast %860 : vector<1x4xf32> to vector<8x4xf32>
    %862 = arith.addf %859, %861 : vector<8x4xf32>
    %cst_339 = arith.constant 5.000000e-01 : f32
    %863 = vector.broadcast %cst_339 : f32 to vector<8x4xf32>
    %864 = arith.mulf %852, %863 : vector<8x4xf32>
    %cst_340 = arith.constant dense<0.000000e+00> : vector<8x8xf32>
    %865 = tpu.matmul %864, %857, %cst_340 {dimension_numbers = #tpu.dot_dimension_numbers<[1], [1], [0], [0], [0, 0, 1, 0], [], []>} : vector<8x4xf32>, vector<8x4xf32>, vector<8x8xf32> -> vector<8x8xf32>
    %cst_341 = arith.constant dense<0xFF800000> : vector<8xf32>
    %866 = vector.multi_reduction <maximumf>, %865, %cst_341 [1] : vector<8x8xf32> to vector<8xf32>
    %867 = vector.shape_cast %866 : vector<8xf32> to vector<8x1xf32>
    %868 = vector.broadcast %867 : vector<8x1xf32> to vector<8x8xf32>
    %869 = arith.subf %865, %868 : vector<8x8xf32>
    %870 = math.exp %869 : vector<8x8xf32>
    %cst_342 = arith.constant dense<0.000000e+00> : vector<8xf32>
    %871 = vector.multi_reduction <add>, %870, %cst_342 [1] : vector<8x8xf32> to vector<8xf32>
    %872 = vector.shape_cast %871 : vector<8xf32> to vector<8x1xf32>
    %873 = vector.broadcast %872 : vector<8x1xf32> to vector<8x8xf32>
    %874 = arith.divf %870, %873 : vector<8x8xf32>
    %875 = arith.addf %847, %874 : vector<8x8xf32>
    %cst_343 = arith.constant dense<0.000000e+00> : vector<8x4xf32>
    %876 = tpu.matmul %874, %862, %cst_343 {dimension_numbers = #tpu.dot_dimension_numbers<[1], [0], [0], [1], [0, 0, 1, 1], [], []>} : vector<8x8xf32>, vector<8x4xf32>, vector<8x4xf32> -> vector<8x4xf32>
    %c0_344 = arith.constant 0 : index
    %c0_345 = arith.constant 0 : index
    %877 = vector.load %arg9[%c0_344, %c0_345] : memref<16x16xf32, #tpu.memory_space<vmem>>, vector<4x16xf32>
    %cst_346 = arith.constant dense<0.000000e+00> : vector<8x16xf32>
    %878 = tpu.matmul %876, %877, %cst_346 {dimension_numbers = #tpu.dot_dimension_numbers<[1], [0], [0], [1], [0, 0, 1, 1], [], []>} : vector<8x4xf32>, vector<4x16xf32>, vector<8x16xf32> -> vector<8x16xf32>
    %879 = arith.addf %846, %878 : vector<8x16xf32>
    %c4_347 = arith.constant 4 : index
    %c0_348 = arith.constant 0 : index
    %880 = vector.load %arg7[%c4_347, %c0_348] : memref<48x32xf32, #tpu.memory_space<vmem>>, vector<4x32xf32>
    %cst_349 = arith.constant dense<0.000000e+00> : vector<8x4xf32>
    %881 = tpu.matmul %845, %880, %cst_349 {dimension_numbers = #tpu.dot_dimension_numbers<[1], [1], [0], [0], [0, 0, 1, 0], [], []>} : vector<8x32xf32>, vector<4x32xf32>, vector<8x4xf32> -> vector<8x4xf32>
    %c1_350 = arith.constant 1 : index
    %c0_351 = arith.constant 0 : index
    %882 = vector.load %arg8[%c1_350, %c0_351] : memref<12x4xf32, #tpu.memory_space<vmem>>, vector<1x4xf32>
    %883 = vector.broadcast %882 : vector<1x4xf32> to vector<8x4xf32>
    %884 = arith.addf %881, %883 : vector<8x4xf32>
    %c20 = arith.constant 20 : index
    %c0_352 = arith.constant 0 : index
    %885 = vector.load %arg7[%c20, %c0_352] : memref<48x32xf32, #tpu.memory_space<vmem>>, vector<4x32xf32>
    %cst_353 = arith.constant dense<0.000000e+00> : vector<8x4xf32>
    %886 = tpu.matmul %845, %885, %cst_353 {dimension_numbers = #tpu.dot_dimension_numbers<[1], [1], [0], [0], [0, 0, 1, 0], [], []>} : vector<8x32xf32>, vector<4x32xf32>, vector<8x4xf32> -> vector<8x4xf32>
    %c5_354 = arith.constant 5 : index
    %c0_355 = arith.constant 0 : index
    %887 = vector.load %arg8[%c5_354, %c0_355] : memref<12x4xf32, #tpu.memory_space<vmem>>, vector<1x4xf32>
    %888 = vector.broadcast %887 : vector<1x4xf32> to vector<8x4xf32>
    %889 = arith.addf %886, %888 : vector<8x4xf32>
    %c36 = arith.constant 36 : index
    %c0_356 = arith.constant 0 : index
    %890 = vector.load %arg7[%c36, %c0_356] : memref<48x32xf32, #tpu.memory_space<vmem>>, vector<4x32xf32>
    %cst_357 = arith.constant dense<0.000000e+00> : vector<8x4xf32>
    %891 = tpu.matmul %845, %890, %cst_357 {dimension_numbers = #tpu.dot_dimension_numbers<[1], [1], [0], [0], [0, 0, 1, 0], [], []>} : vector<8x32xf32>, vector<4x32xf32>, vector<8x4xf32> -> vector<8x4xf32>
    %c9 = arith.constant 9 : index
    %c0_358 = arith.constant 0 : index
    %892 = vector.load %arg8[%c9, %c0_358] : memref<12x4xf32, #tpu.memory_space<vmem>>, vector<1x4xf32>
    %893 = vector.broadcast %892 : vector<1x4xf32> to vector<8x4xf32>
    %894 = arith.addf %891, %893 : vector<8x4xf32>
    %cst_359 = arith.constant 5.000000e-01 : f32
    %895 = vector.broadcast %cst_359 : f32 to vector<8x4xf32>
    %896 = arith.mulf %884, %895 : vector<8x4xf32>
    %cst_360 = arith.constant dense<0.000000e+00> : vector<8x8xf32>
    %897 = tpu.matmul %896, %889, %cst_360 {dimension_numbers = #tpu.dot_dimension_numbers<[1], [1], [0], [0], [0, 0, 1, 0], [], []>} : vector<8x4xf32>, vector<8x4xf32>, vector<8x8xf32> -> vector<8x8xf32>
    %cst_361 = arith.constant dense<0xFF800000> : vector<8xf32>
    %898 = vector.multi_reduction <maximumf>, %897, %cst_361 [1] : vector<8x8xf32> to vector<8xf32>
    %899 = vector.shape_cast %898 : vector<8xf32> to vector<8x1xf32>
    %900 = vector.broadcast %899 : vector<8x1xf32> to vector<8x8xf32>
    %901 = arith.subf %897, %900 : vector<8x8xf32>
    %902 = math.exp %901 : vector<8x8xf32>
    %cst_362 = arith.constant dense<0.000000e+00> : vector<8xf32>
    %903 = vector.multi_reduction <add>, %902, %cst_362 [1] : vector<8x8xf32> to vector<8xf32>
    %904 = vector.shape_cast %903 : vector<8xf32> to vector<8x1xf32>
    %905 = vector.broadcast %904 : vector<8x1xf32> to vector<8x8xf32>
    %906 = arith.divf %902, %905 : vector<8x8xf32>
    %907 = arith.addf %875, %906 : vector<8x8xf32>
    %cst_363 = arith.constant dense<0.000000e+00> : vector<8x4xf32>
    %908 = tpu.matmul %906, %894, %cst_363 {dimension_numbers = #tpu.dot_dimension_numbers<[1], [0], [0], [1], [0, 0, 1, 1], [], []>} : vector<8x8xf32>, vector<8x4xf32>, vector<8x4xf32> -> vector<8x4xf32>
    %c4_364 = arith.constant 4 : index
    %c0_365 = arith.constant 0 : index
    %909 = vector.load %arg9[%c4_364, %c0_365] : memref<16x16xf32, #tpu.memory_space<vmem>>, vector<4x16xf32>
    %cst_366 = arith.constant dense<0.000000e+00> : vector<8x16xf32>
    %910 = tpu.matmul %908, %909, %cst_366 {dimension_numbers = #tpu.dot_dimension_numbers<[1], [0], [0], [1], [0, 0, 1, 1], [], []>} : vector<8x4xf32>, vector<4x16xf32>, vector<8x16xf32> -> vector<8x16xf32>
    %911 = arith.addf %879, %910 : vector<8x16xf32>
    %c8_367 = arith.constant 8 : index
    %c0_368 = arith.constant 0 : index
    %912 = vector.load %arg7[%c8_367, %c0_368] : memref<48x32xf32, #tpu.memory_space<vmem>>, vector<4x32xf32>
    %cst_369 = arith.constant dense<0.000000e+00> : vector<8x4xf32>
    %913 = tpu.matmul %845, %912, %cst_369 {dimension_numbers = #tpu.dot_dimension_numbers<[1], [1], [0], [0], [0, 0, 1, 0], [], []>} : vector<8x32xf32>, vector<4x32xf32>, vector<8x4xf32> -> vector<8x4xf32>
    %c2_370 = arith.constant 2 : index
    %c0_371 = arith.constant 0 : index
    %914 = vector.load %arg8[%c2_370, %c0_371] : memref<12x4xf32, #tpu.memory_space<vmem>>, vector<1x4xf32>
    %915 = vector.broadcast %914 : vector<1x4xf32> to vector<8x4xf32>
    %916 = arith.addf %913, %915 : vector<8x4xf32>
    %c24 = arith.constant 24 : index
    %c0_372 = arith.constant 0 : index
    %917 = vector.load %arg7[%c24, %c0_372] : memref<48x32xf32, #tpu.memory_space<vmem>>, vector<4x32xf32>
    %cst_373 = arith.constant dense<0.000000e+00> : vector<8x4xf32>
    %918 = tpu.matmul %845, %917, %cst_373 {dimension_numbers = #tpu.dot_dimension_numbers<[1], [1], [0], [0], [0, 0, 1, 0], [], []>} : vector<8x32xf32>, vector<4x32xf32>, vector<8x4xf32> -> vector<8x4xf32>
    %c6_374 = arith.constant 6 : index
    %c0_375 = arith.constant 0 : index
    %919 = vector.load %arg8[%c6_374, %c0_375] : memref<12x4xf32, #tpu.memory_space<vmem>>, vector<1x4xf32>
    %920 = vector.broadcast %919 : vector<1x4xf32> to vector<8x4xf32>
    %921 = arith.addf %918, %920 : vector<8x4xf32>
    %c40 = arith.constant 40 : index
    %c0_376 = arith.constant 0 : index
    %922 = vector.load %arg7[%c40, %c0_376] : memref<48x32xf32, #tpu.memory_space<vmem>>, vector<4x32xf32>
    %cst_377 = arith.constant dense<0.000000e+00> : vector<8x4xf32>
    %923 = tpu.matmul %845, %922, %cst_377 {dimension_numbers = #tpu.dot_dimension_numbers<[1], [1], [0], [0], [0, 0, 1, 0], [], []>} : vector<8x32xf32>, vector<4x32xf32>, vector<8x4xf32> -> vector<8x4xf32>
    %c10 = arith.constant 10 : index
    %c0_378 = arith.constant 0 : index
    %924 = vector.load %arg8[%c10, %c0_378] : memref<12x4xf32, #tpu.memory_space<vmem>>, vector<1x4xf32>
    %925 = vector.broadcast %924 : vector<1x4xf32> to vector<8x4xf32>
    %926 = arith.addf %923, %925 : vector<8x4xf32>
    %cst_379 = arith.constant 5.000000e-01 : f32
    %927 = vector.broadcast %cst_379 : f32 to vector<8x4xf32>
    %928 = arith.mulf %916, %927 : vector<8x4xf32>
    %cst_380 = arith.constant dense<0.000000e+00> : vector<8x8xf32>
    %929 = tpu.matmul %928, %921, %cst_380 {dimension_numbers = #tpu.dot_dimension_numbers<[1], [1], [0], [0], [0, 0, 1, 0], [], []>} : vector<8x4xf32>, vector<8x4xf32>, vector<8x8xf32> -> vector<8x8xf32>
    %cst_381 = arith.constant dense<0xFF800000> : vector<8xf32>
    %930 = vector.multi_reduction <maximumf>, %929, %cst_381 [1] : vector<8x8xf32> to vector<8xf32>
    %931 = vector.shape_cast %930 : vector<8xf32> to vector<8x1xf32>
    %932 = vector.broadcast %931 : vector<8x1xf32> to vector<8x8xf32>
    %933 = arith.subf %929, %932 : vector<8x8xf32>
    %934 = math.exp %933 : vector<8x8xf32>
    %cst_382 = arith.constant dense<0.000000e+00> : vector<8xf32>
    %935 = vector.multi_reduction <add>, %934, %cst_382 [1] : vector<8x8xf32> to vector<8xf32>
    %936 = vector.shape_cast %935 : vector<8xf32> to vector<8x1xf32>
    %937 = vector.broadcast %936 : vector<8x1xf32> to vector<8x8xf32>
    %938 = arith.divf %934, %937 : vector<8x8xf32>
    %939 = arith.addf %907, %938 : vector<8x8xf32>
    %cst_383 = arith.constant dense<0.000000e+00> : vector<8x4xf32>
    %940 = tpu.matmul %938, %926, %cst_383 {dimension_numbers = #tpu.dot_dimension_numbers<[1], [0], [0], [1], [0, 0, 1, 1], [], []>} : vector<8x8xf32>, vector<8x4xf32>, vector<8x4xf32> -> vector<8x4xf32>
    %c8_384 = arith.constant 8 : index
    %c0_385 = arith.constant 0 : index
    %941 = vector.load %arg9[%c8_384, %c0_385] : memref<16x16xf32, #tpu.memory_space<vmem>>, vector<4x16xf32>
    %cst_386 = arith.constant dense<0.000000e+00> : vector<8x16xf32>
    %942 = tpu.matmul %940, %941, %cst_386 {dimension_numbers = #tpu.dot_dimension_numbers<[1], [0], [0], [1], [0, 0, 1, 1], [], []>} : vector<8x4xf32>, vector<4x16xf32>, vector<8x16xf32> -> vector<8x16xf32>
    %943 = arith.addf %911, %942 : vector<8x16xf32>
    %c12 = arith.constant 12 : index
    %c0_387 = arith.constant 0 : index
    %944 = vector.load %arg7[%c12, %c0_387] : memref<48x32xf32, #tpu.memory_space<vmem>>, vector<4x32xf32>
    %cst_388 = arith.constant dense<0.000000e+00> : vector<8x4xf32>
    %945 = tpu.matmul %845, %944, %cst_388 {dimension_numbers = #tpu.dot_dimension_numbers<[1], [1], [0], [0], [0, 0, 1, 0], [], []>} : vector<8x32xf32>, vector<4x32xf32>, vector<8x4xf32> -> vector<8x4xf32>
    %c3_389 = arith.constant 3 : index
    %c0_390 = arith.constant 0 : index
    %946 = vector.load %arg8[%c3_389, %c0_390] : memref<12x4xf32, #tpu.memory_space<vmem>>, vector<1x4xf32>
    %947 = vector.broadcast %946 : vector<1x4xf32> to vector<8x4xf32>
    %948 = arith.addf %945, %947 : vector<8x4xf32>
    %c28 = arith.constant 28 : index
    %c0_391 = arith.constant 0 : index
    %949 = vector.load %arg7[%c28, %c0_391] : memref<48x32xf32, #tpu.memory_space<vmem>>, vector<4x32xf32>
    %cst_392 = arith.constant dense<0.000000e+00> : vector<8x4xf32>
    %950 = tpu.matmul %845, %949, %cst_392 {dimension_numbers = #tpu.dot_dimension_numbers<[1], [1], [0], [0], [0, 0, 1, 0], [], []>} : vector<8x32xf32>, vector<4x32xf32>, vector<8x4xf32> -> vector<8x4xf32>
    %c7_393 = arith.constant 7 : index
    %c0_394 = arith.constant 0 : index
    %951 = vector.load %arg8[%c7_393, %c0_394] : memref<12x4xf32, #tpu.memory_space<vmem>>, vector<1x4xf32>
    %952 = vector.broadcast %951 : vector<1x4xf32> to vector<8x4xf32>
    %953 = arith.addf %950, %952 : vector<8x4xf32>
    %c44 = arith.constant 44 : index
    %c0_395 = arith.constant 0 : index
    %954 = vector.load %arg7[%c44, %c0_395] : memref<48x32xf32, #tpu.memory_space<vmem>>, vector<4x32xf32>
    %cst_396 = arith.constant dense<0.000000e+00> : vector<8x4xf32>
    %955 = tpu.matmul %845, %954, %cst_396 {dimension_numbers = #tpu.dot_dimension_numbers<[1], [1], [0], [0], [0, 0, 1, 0], [], []>} : vector<8x32xf32>, vector<4x32xf32>, vector<8x4xf32> -> vector<8x4xf32>
    %c11 = arith.constant 11 : index
    %c0_397 = arith.constant 0 : index
    %956 = vector.load %arg8[%c11, %c0_397] : memref<12x4xf32, #tpu.memory_space<vmem>>, vector<1x4xf32>
    %957 = vector.broadcast %956 : vector<1x4xf32> to vector<8x4xf32>
    %958 = arith.addf %955, %957 : vector<8x4xf32>
    %cst_398 = arith.constant 5.000000e-01 : f32
    %959 = vector.broadcast %cst_398 : f32 to vector<8x4xf32>
    %960 = arith.mulf %948, %959 : vector<8x4xf32>
    %cst_399 = arith.constant dense<0.000000e+00> : vector<8x8xf32>
    %961 = tpu.matmul %960, %953, %cst_399 {dimension_numbers = #tpu.dot_dimension_numbers<[1], [1], [0], [0], [0, 0, 1, 0], [], []>} : vector<8x4xf32>, vector<8x4xf32>, vector<8x8xf32> -> vector<8x8xf32>
    %cst_400 = arith.constant dense<0xFF800000> : vector<8xf32>
    %962 = vector.multi_reduction <maximumf>, %961, %cst_400 [1] : vector<8x8xf32> to vector<8xf32>
    %963 = vector.shape_cast %962 : vector<8xf32> to vector<8x1xf32>
    %964 = vector.broadcast %963 : vector<8x1xf32> to vector<8x8xf32>
    %965 = arith.subf %961, %964 : vector<8x8xf32>
    %966 = math.exp %965 : vector<8x8xf32>
    %cst_401 = arith.constant dense<0.000000e+00> : vector<8xf32>
    %967 = vector.multi_reduction <add>, %966, %cst_401 [1] : vector<8x8xf32> to vector<8xf32>
    %968 = vector.shape_cast %967 : vector<8xf32> to vector<8x1xf32>
    %969 = vector.broadcast %968 : vector<8x1xf32> to vector<8x8xf32>
    %970 = arith.divf %966, %969 : vector<8x8xf32>
    %971 = arith.addf %939, %970 : vector<8x8xf32>
    %cst_402 = arith.constant dense<0.000000e+00> : vector<8x4xf32>
    %972 = tpu.matmul %970, %958, %cst_402 {dimension_numbers = #tpu.dot_dimension_numbers<[1], [0], [0], [1], [0, 0, 1, 1], [], []>} : vector<8x8xf32>, vector<8x4xf32>, vector<8x4xf32> -> vector<8x4xf32>
    %c12_403 = arith.constant 12 : index
    %c0_404 = arith.constant 0 : index
    %973 = vector.load %arg9[%c12_403, %c0_404] : memref<16x16xf32, #tpu.memory_space<vmem>>, vector<4x16xf32>
    %cst_405 = arith.constant dense<0.000000e+00> : vector<8x16xf32>
    %974 = tpu.matmul %972, %973, %cst_405 {dimension_numbers = #tpu.dot_dimension_numbers<[1], [0], [0], [1], [0, 0, 1, 1], [], []>} : vector<8x4xf32>, vector<4x16xf32>, vector<8x16xf32> -> vector<8x16xf32>
    %975 = arith.addf %943, %974 : vector<8x16xf32>
    %976 = vector.broadcast %843 : vector<1x16xf32> to vector<8x16xf32>
    %977 = arith.addf %975, %976 : vector<8x16xf32>
    %c0_406 = arith.constant 0 : index
    %c0_407 = arith.constant 0 : index
    %c0_408 = arith.constant 0 : index
    %978 = vector.load %arg12[%c0_406, %c0_407, %c0_408] : memref<2x8x16xf32, #tpu.memory_space<vmem>>, vector<1x8x16xf32>
    %979 = vector.shape_cast %978 : vector<1x8x16xf32> to vector<8x16xf32>
    %980 = vector.shape_cast %977 : vector<8x16xf32> to vector<1x8x16xf32>
    tpu.vector_store %arg12[%c0_406, %c0_407, %c0_408], %980 {strides = array<i32>} : memref<2x8x16xf32, #tpu.memory_space<vmem>>, vector<1x8x16xf32>,
    %cst_409 = arith.constant 2.500000e-01 : f32
    %981 = vector.broadcast %cst_409 : f32 to vector<8x8xf32>
    %982 = arith.mulf %971, %981 : vector<8x8xf32>
    %c0_410 = arith.constant 0 : index
    %c0_411 = arith.constant 0 : index
    %c0_412 = arith.constant 0 : index
    %983 = vector.load %arg13[%c0_410, %c0_411, %c0_412] : memref<2x8x8xf32, #tpu.memory_space<vmem>>, vector<1x8x8xf32>
    %984 = vector.shape_cast %983 : vector<1x8x8xf32> to vector<8x8xf32>
    %985 = vector.shape_cast %982 : vector<8x8xf32> to vector<1x8x8xf32>
    tpu.vector_store %arg13[%c0_410, %c0_411, %c0_412], %985 {strides = array<i32>} : memref<2x8x8xf32, #tpu.memory_space<vmem>>, vector<1x8x8xf32>,
    %c1_413 = arith.constant 1 : index
    %c0_414 = arith.constant 0 : index
    %c0_415 = arith.constant 0 : index
    %986 = vector.load %arg14[%c1_413, %c0_414, %c0_415] : memref<2x8x32xf32, #tpu.memory_space<vmem>>, vector<1x8x32xf32>
    %987 = vector.shape_cast %986 : vector<1x8x32xf32> to vector<8x32xf32>
    %cst_416 = arith.constant 0.000000e+00 : f32
    %988 = vector.broadcast %cst_416 : f32 to vector<8x16xf32>
    %cst_417 = arith.constant 0.000000e+00 : f32
    %989 = vector.broadcast %cst_417 : f32 to vector<8x8xf32>
    %c0_418 = arith.constant 0 : index
    %c0_419 = arith.constant 0 : index
    %990 = vector.load %arg7[%c0_418, %c0_419] : memref<48x32xf32, #tpu.memory_space<vmem>>, vector<4x32xf32>
    %cst_420 = arith.constant dense<0.000000e+00> : vector<8x4xf32>
    %991 = tpu.matmul %987, %990, %cst_420 {dimension_numbers = #tpu.dot_dimension_numbers<[1], [1], [0], [0], [0, 0, 1, 0], [], []>} : vector<8x32xf32>, vector<4x32xf32>, vector<8x4xf32> -> vector<8x4xf32>
    %c0_421 = arith.constant 0 : index
    %c0_422 = arith.constant 0 : index
    %992 = vector.load %arg8[%c0_421, %c0_422] : memref<12x4xf32, #tpu.memory_space<vmem>>, vector<1x4xf32>
    %993 = vector.broadcast %992 : vector<1x4xf32> to vector<8x4xf32>
    %994 = arith.addf %991, %993 : vector<8x4xf32>
    %c16_423 = arith.constant 16 : index
    %c0_424 = arith.constant 0 : index
    %995 = vector.load %arg7[%c16_423, %c0_424] : memref<48x32xf32, #tpu.memory_space<vmem>>, vector<4x32xf32>
    %cst_425 = arith.constant dense<0.000000e+00> : vector<8x4xf32>
    %996 = tpu.matmul %987, %995, %cst_425 {dimension_numbers = #tpu.dot_dimension_numbers<[1], [1], [0], [0], [0, 0, 1, 0], [], []>} : vector<8x32xf32>, vector<4x32xf32>, vector<8x4xf32> -> vector<8x4xf32>
    %c4_426 = arith.constant 4 : index
    %c0_427 = arith.constant 0 : index
    %997 = vector.load %arg8[%c4_426, %c0_427] : memref<12x4xf32, #tpu.memory_space<vmem>>, vector<1x4xf32>
    %998 = vector.broadcast %997 : vector<1x4xf32> to vector<8x4xf32>
    %999 = arith.addf %996, %998 : vector<8x4xf32>
    %c32_428 = arith.constant 32 : index
    %c0_429 = arith.constant 0 : index
    %1000 = vector.load %arg7[%c32_428, %c0_429] : memref<48x32xf32, #tpu.memory_space<vmem>>, vector<4x32xf32>
    %cst_430 = arith.constant dense<0.000000e+00> : vector<8x4xf32>
    %1001 = tpu.matmul %987, %1000, %cst_430 {dimension_numbers = #tpu.dot_dimension_numbers<[1], [1], [0], [0], [0, 0, 1, 0], [], []>} : vector<8x32xf32>, vector<4x32xf32>, vector<8x4xf32> -> vector<8x4xf32>
    %c8_431 = arith.constant 8 : index
    %c0_432 = arith.constant 0 : index
    %1002 = vector.load %arg8[%c8_431, %c0_432] : memref<12x4xf32, #tpu.memory_space<vmem>>, vector<1x4xf32>
    %1003 = vector.broadcast %1002 : vector<1x4xf32> to vector<8x4xf32>
    %1004 = arith.addf %1001, %1003 : vector<8x4xf32>
    %cst_433 = arith.constant 5.000000e-01 : f32
    %1005 = vector.broadcast %cst_433 : f32 to vector<8x4xf32>
    %1006 = arith.mulf %994, %1005 : vector<8x4xf32>
    %cst_434 = arith.constant dense<0.000000e+00> : vector<8x8xf32>
    %1007 = tpu.matmul %1006, %999, %cst_434 {dimension_numbers = #tpu.dot_dimension_numbers<[1], [1], [0], [0], [0, 0, 1, 0], [], []>} : vector<8x4xf32>, vector<8x4xf32>, vector<8x8xf32> -> vector<8x8xf32>
    %cst_435 = arith.constant dense<0xFF800000> : vector<8xf32>
    %1008 = vector.multi_reduction <maximumf>, %1007, %cst_435 [1] : vector<8x8xf32> to vector<8xf32>
    %1009 = vector.shape_cast %1008 : vector<8xf32> to vector<8x1xf32>
    %1010 = vector.broadcast %1009 : vector<8x1xf32> to vector<8x8xf32>
    %1011 = arith.subf %1007, %1010 : vector<8x8xf32>
    %1012 = math.exp %1011 : vector<8x8xf32>
    %cst_436 = arith.constant dense<0.000000e+00> : vector<8xf32>
    %1013 = vector.multi_reduction <add>, %1012, %cst_436 [1] : vector<8x8xf32> to vector<8xf32>
    %1014 = vector.shape_cast %1013 : vector<8xf32> to vector<8x1xf32>
    %1015 = vector.broadcast %1014 : vector<8x1xf32> to vector<8x8xf32>
    %1016 = arith.divf %1012, %1015 : vector<8x8xf32>
    %1017 = arith.addf %989, %1016 : vector<8x8xf32>
    %cst_437 = arith.constant dense<0.000000e+00> : vector<8x4xf32>
    %1018 = tpu.matmul %1016, %1004, %cst_437 {dimension_numbers = #tpu.dot_dimension_numbers<[1], [0], [0], [1], [0, 0, 1, 1], [], []>} : vector<8x8xf32>, vector<8x4xf32>, vector<8x4xf32> -> vector<8x4xf32>
    %c0_438 = arith.constant 0 : index
    %c0_439 = arith.constant 0 : index
    %1019 = vector.load %arg9[%c0_438, %c0_439] : memref<16x16xf32, #tpu.memory_space<vmem>>, vector<4x16xf32>
    %cst_440 = arith.constant dense<0.000000e+00> : vector<8x16xf32>
    %1020 = tpu.matmul %1018, %1019, %cst_440 {dimension_numbers = #tpu.dot_dimension_numbers<[1], [0], [0], [1], [0, 0, 1, 1], [], []>} : vector<8x4xf32>, vector<4x16xf32>, vector<8x16xf32> -> vector<8x16xf32>
    %1021 = arith.addf %988, %1020 : vector<8x16xf32>
    %c4_441 = arith.constant 4 : index
    %c0_442 = arith.constant 0 : index
    %1022 = vector.load %arg7[%c4_441, %c0_442] : memref<48x32xf32, #tpu.memory_space<vmem>>, vector<4x32xf32>
    %cst_443 = arith.constant dense<0.000000e+00> : vector<8x4xf32>
    %1023 = tpu.matmul %987, %1022, %cst_443 {dimension_numbers = #tpu.dot_dimension_numbers<[1], [1], [0], [0], [0, 0, 1, 0], [], []>} : vector<8x32xf32>, vector<4x32xf32>, vector<8x4xf32> -> vector<8x4xf32>
    %c1_444 = arith.constant 1 : index
    %c0_445 = arith.constant 0 : index
    %1024 = vector.load %arg8[%c1_444, %c0_445] : memref<12x4xf32, #tpu.memory_space<vmem>>, vector<1x4xf32>
    %1025 = vector.broadcast %1024 : vector<1x4xf32> to vector<8x4xf32>
    %1026 = arith.addf %1023, %1025 : vector<8x4xf32>
    %c20_446 = arith.constant 20 : index
    %c0_447 = arith.constant 0 : index
    %1027 = vector.load %arg7[%c20_446, %c0_447] : memref<48x32xf32, #tpu.memory_space<vmem>>, vector<4x32xf32>
    %cst_448 = arith.constant dense<0.000000e+00> : vector<8x4xf32>
    %1028 = tpu.matmul %987, %1027, %cst_448 {dimension_numbers = #tpu.dot_dimension_numbers<[1], [1], [0], [0], [0, 0, 1, 0], [], []>} : vector<8x32xf32>, vector<4x32xf32>, vector<8x4xf32> -> vector<8x4xf32>
    %c5_449 = arith.constant 5 : index
    %c0_450 = arith.constant 0 : index
    %1029 = vector.load %arg8[%c5_449, %c0_450] : memref<12x4xf32, #tpu.memory_space<vmem>>, vector<1x4xf32>
    %1030 = vector.broadcast %1029 : vector<1x4xf32> to vector<8x4xf32>
    %1031 = arith.addf %1028, %1030 : vector<8x4xf32>
    %c36_451 = arith.constant 36 : index
    %c0_452 = arith.constant 0 : index
    %1032 = vector.load %arg7[%c36_451, %c0_452] : memref<48x32xf32, #tpu.memory_space<vmem>>, vector<4x32xf32>
    %cst_453 = arith.constant dense<0.000000e+00> : vector<8x4xf32>
    %1033 = tpu.matmul %987, %1032, %cst_453 {dimension_numbers = #tpu.dot_dimension_numbers<[1], [1], [0], [0], [0, 0, 1, 0], [], []>} : vector<8x32xf32>, vector<4x32xf32>, vector<8x4xf32> -> vector<8x4xf32>
    %c9_454 = arith.constant 9 : index
    %c0_455 = arith.constant 0 : index
    %1034 = vector.load %arg8[%c9_454, %c0_455] : memref<12x4xf32, #tpu.memory_space<vmem>>, vector<1x4xf32>
    %1035 = vector.broadcast %1034 : vector<1x4xf32> to vector<8x4xf32>
    %1036 = arith.addf %1033, %1035 : vector<8x4xf32>
    %cst_456 = arith.constant 5.000000e-01 : f32
    %1037 = vector.broadcast %cst_456 : f32 to vector<8x4xf32>
    %1038 = arith.mulf %1026, %1037 : vector<8x4xf32>
    %cst_457 = arith.constant dense<0.000000e+00> : vector<8x8xf32>
    %1039 = tpu.matmul %1038, %1031, %cst_457 {dimension_numbers = #tpu.dot_dimension_numbers<[1], [1], [0], [0], [0, 0, 1, 0], [], []>} : vector<8x4xf32>, vector<8x4xf32>, vector<8x8xf32> -> vector<8x8xf32>
    %cst_458 = arith.constant dense<0xFF800000> : vector<8xf32>
    %1040 = vector.multi_reduction <maximumf>, %1039, %cst_458 [1] : vector<8x8xf32> to vector<8xf32>
    %1041 = vector.shape_cast %1040 : vector<8xf32> to vector<8x1xf32>
    %1042 = vector.broadcast %1041 : vector<8x1xf32> to vector<8x8xf32>
    %1043 = arith.subf %1039, %1042 : vector<8x8xf32>
    %1044 = math.exp %1043 : vector<8x8xf32>
    %cst_459 = arith.constant dense<0.000000e+00> : vector<8xf32>
    %1045 = vector.multi_reduction <add>, %1044, %cst_459 [1] : vector<8x8xf32> to vector<8xf32>
    %1046 = vector.shape_cast %1045 : vector<8xf32> to vector<8x1xf32>
    %1047 = vector.broadcast %1046 : vector<8x1xf32> to vector<8x8xf32>
    %1048 = arith.divf %1044, %1047 : vector<8x8xf32>
    %1049 = arith.addf %1017, %1048 : vector<8x8xf32>
    %cst_460 = arith.constant dense<0.000000e+00> : vector<8x4xf32>
    %1050 = tpu.matmul %1048, %1036, %cst_460 {dimension_numbers = #tpu.dot_dimension_numbers<[1], [0], [0], [1], [0, 0, 1, 1], [], []>} : vector<8x8xf32>, vector<8x4xf32>, vector<8x4xf32> -> vector<8x4xf32>
    %c4_461 = arith.constant 4 : index
    %c0_462 = arith.constant 0 : index
    %1051 = vector.load %arg9[%c4_461, %c0_462] : memref<16x16xf32, #tpu.memory_space<vmem>>, vector<4x16xf32>
    %cst_463 = arith.constant dense<0.000000e+00> : vector<8x16xf32>
    %1052 = tpu.matmul %1050, %1051, %cst_463 {dimension_numbers = #tpu.dot_dimension_numbers<[1], [0], [0], [1], [0, 0, 1, 1], [], []>} : vector<8x4xf32>, vector<4x16xf32>, vector<8x16xf32> -> vector<8x16xf32>
    %1053 = arith.addf %1021, %1052 : vector<8x16xf32>
    %c8_464 = arith.constant 8 : index
    %c0_465 = arith.constant 0 : index
    %1054 = vector.load %arg7[%c8_464, %c0_465] : memref<48x32xf32, #tpu.memory_space<vmem>>, vector<4x32xf32>
    %cst_466 = arith.constant dense<0.000000e+00> : vector<8x4xf32>
    %1055 = tpu.matmul %987, %1054, %cst_466 {dimension_numbers = #tpu.dot_dimension_numbers<[1], [1], [0], [0], [0, 0, 1, 0], [], []>} : vector<8x32xf32>, vector<4x32xf32>, vector<8x4xf32> -> vector<8x4xf32>
    %c2_467 = arith.constant 2 : index
    %c0_468 = arith.constant 0 : index
    %1056 = vector.load %arg8[%c2_467, %c0_468] : memref<12x4xf32, #tpu.memory_space<vmem>>, vector<1x4xf32>
    %1057 = vector.broadcast %1056 : vector<1x4xf32> to vector<8x4xf32>
    %1058 = arith.addf %1055, %1057 : vector<8x4xf32>
    %c24_469 = arith.constant 24 : index
    %c0_470 = arith.constant 0 : index
    %1059 = vector.load %arg7[%c24_469, %c0_470] : memref<48x32xf32, #tpu.memory_space<vmem>>, vector<4x32xf32>
    %cst_471 = arith.constant dense<0.000000e+00> : vector<8x4xf32>
    %1060 = tpu.matmul %987, %1059, %cst_471 {dimension_numbers = #tpu.dot_dimension_numbers<[1], [1], [0], [0], [0, 0, 1, 0], [], []>} : vector<8x32xf32>, vector<4x32xf32>, vector<8x4xf32> -> vector<8x4xf32>
    %c6_472 = arith.constant 6 : index
    %c0_473 = arith.constant 0 : index
    %1061 = vector.load %arg8[%c6_472, %c0_473] : memref<12x4xf32, #tpu.memory_space<vmem>>, vector<1x4xf32>
    %1062 = vector.broadcast %1061 : vector<1x4xf32> to vector<8x4xf32>
    %1063 = arith.addf %1060, %1062 : vector<8x4xf32>
    %c40_474 = arith.constant 40 : index
    %c0_475 = arith.constant 0 : index
    %1064 = vector.load %arg7[%c40_474, %c0_475] : memref<48x32xf32, #tpu.memory_space<vmem>>, vector<4x32xf32>
    %cst_476 = arith.constant dense<0.000000e+00> : vector<8x4xf32>
    %1065 = tpu.matmul %987, %1064, %cst_476 {dimension_numbers = #tpu.dot_dimension_numbers<[1], [1], [0], [0], [0, 0, 1, 0], [], []>} : vector<8x32xf32>, vector<4x32xf32>, vector<8x4xf32> -> vector<8x4xf32>
    %c10_477 = arith.constant 10 : index
    %c0_478 = arith.constant 0 : index
    %1066 = vector.load %arg8[%c10_477, %c0_478] : memref<12x4xf32, #tpu.memory_space<vmem>>, vector<1x4xf32>
    %1067 = vector.broadcast %1066 : vector<1x4xf32> to vector<8x4xf32>
    %1068 = arith.addf %1065, %1067 : vector<8x4xf32>
    %cst_479 = arith.constant 5.000000e-01 : f32
    %1069 = vector.broadcast %cst_479 : f32 to vector<8x4xf32>
    %1070 = arith.mulf %1058, %1069 : vector<8x4xf32>
    %cst_480 = arith.constant dense<0.000000e+00> : vector<8x8xf32>
    %1071 = tpu.matmul %1070, %1063, %cst_480 {dimension_numbers = #tpu.dot_dimension_numbers<[1], [1], [0], [0], [0, 0, 1, 0], [], []>} : vector<8x4xf32>, vector<8x4xf32>, vector<8x8xf32> -> vector<8x8xf32>
    %cst_481 = arith.constant dense<0xFF800000> : vector<8xf32>
    %1072 = vector.multi_reduction <maximumf>, %1071, %cst_481 [1] : vector<8x8xf32> to vector<8xf32>
    %1073 = vector.shape_cast %1072 : vector<8xf32> to vector<8x1xf32>
    %1074 = vector.broadcast %1073 : vector<8x1xf32> to vector<8x8xf32>
    %1075 = arith.subf %1071, %1074 : vector<8x8xf32>
    %1076 = math.exp %1075 : vector<8x8xf32>
    %cst_482 = arith.constant dense<0.000000e+00> : vector<8xf32>
    %1077 = vector.multi_reduction <add>, %1076, %cst_482 [1] : vector<8x8xf32> to vector<8xf32>
    %1078 = vector.shape_cast %1077 : vector<8xf32> to vector<8x1xf32>
    %1079 = vector.broadcast %1078 : vector<8x1xf32> to vector<8x8xf32>
    %1080 = arith.divf %1076, %1079 : vector<8x8xf32>
    %1081 = arith.addf %1049, %1080 : vector<8x8xf32>
    %cst_483 = arith.constant dense<0.000000e+00> : vector<8x4xf32>
    %1082 = tpu.matmul %1080, %1068, %cst_483 {dimension_numbers = #tpu.dot_dimension_numbers<[1], [0], [0], [1], [0, 0, 1, 1], [], []>} : vector<8x8xf32>, vector<8x4xf32>, vector<8x4xf32> -> vector<8x4xf32>
    %c8_484 = arith.constant 8 : index
    %c0_485 = arith.constant 0 : index
    %1083 = vector.load %arg9[%c8_484, %c0_485] : memref<16x16xf32, #tpu.memory_space<vmem>>, vector<4x16xf32>
    %cst_486 = arith.constant dense<0.000000e+00> : vector<8x16xf32>
    %1084 = tpu.matmul %1082, %1083, %cst_486 {dimension_numbers = #tpu.dot_dimension_numbers<[1], [0], [0], [1], [0, 0, 1, 1], [], []>} : vector<8x4xf32>, vector<4x16xf32>, vector<8x16xf32> -> vector<8x16xf32>
    %1085 = arith.addf %1053, %1084 : vector<8x16xf32>
    %c12_487 = arith.constant 12 : index
    %c0_488 = arith.constant 0 : index
    %1086 = vector.load %arg7[%c12_487, %c0_488] : memref<48x32xf32, #tpu.memory_space<vmem>>, vector<4x32xf32>
    %cst_489 = arith.constant dense<0.000000e+00> : vector<8x4xf32>
    %1087 = tpu.matmul %987, %1086, %cst_489 {dimension_numbers = #tpu.dot_dimension_numbers<[1], [1], [0], [0], [0, 0, 1, 0], [], []>} : vector<8x32xf32>, vector<4x32xf32>, vector<8x4xf32> -> vector<8x4xf32>
    %c3_490 = arith.constant 3 : index
    %c0_491 = arith.constant 0 : index
    %1088 = vector.load %arg8[%c3_490, %c0_491] : memref<12x4xf32, #tpu.memory_space<vmem>>, vector<1x4xf32>
    %1089 = vector.broadcast %1088 : vector<1x4xf32> to vector<8x4xf32>
    %1090 = arith.addf %1087, %1089 : vector<8x4xf32>
    %c28_492 = arith.constant 28 : index
    %c0_493 = arith.constant 0 : index
    %1091 = vector.load %arg7[%c28_492, %c0_493] : memref<48x32xf32, #tpu.memory_space<vmem>>, vector<4x32xf32>
    %cst_494 = arith.constant dense<0.000000e+00> : vector<8x4xf32>
    %1092 = tpu.matmul %987, %1091, %cst_494 {dimension_numbers = #tpu.dot_dimension_numbers<[1], [1], [0], [0], [0, 0, 1, 0], [], []>} : vector<8x32xf32>, vector<4x32xf32>, vector<8x4xf32> -> vector<8x4xf32>
    %c7_495 = arith.constant 7 : index
    %c0_496 = arith.constant 0 : index
    %1093 = vector.load %arg8[%c7_495, %c0_496] : memref<12x4xf32, #tpu.memory_space<vmem>>, vector<1x4xf32>
    %1094 = vector.broadcast %1093 : vector<1x4xf32> to vector<8x4xf32>
    %1095 = arith.addf %1092, %1094 : vector<8x4xf32>
    %c44_497 = arith.constant 44 : index
    %c0_498 = arith.constant 0 : index
    %1096 = vector.load %arg7[%c44_497, %c0_498] : memref<48x32xf32, #tpu.memory_space<vmem>>, vector<4x32xf32>
    %cst_499 = arith.constant dense<0.000000e+00> : vector<8x4xf32>
    %1097 = tpu.matmul %987, %1096, %cst_499 {dimension_numbers = #tpu.dot_dimension_numbers<[1], [1], [0], [0], [0, 0, 1, 0], [], []>} : vector<8x32xf32>, vector<4x32xf32>, vector<8x4xf32> -> vector<8x4xf32>
    %c11_500 = arith.constant 11 : index
    %c0_501 = arith.constant 0 : index
    %1098 = vector.load %arg8[%c11_500, %c0_501] : memref<12x4xf32, #tpu.memory_space<vmem>>, vector<1x4xf32>
    %1099 = vector.broadcast %1098 : vector<1x4xf32> to vector<8x4xf32>
    %1100 = arith.addf %1097, %1099 : vector<8x4xf32>
    %cst_502 = arith.constant 5.000000e-01 : f32
    %1101 = vector.broadcast %cst_502 : f32 to vector<8x4xf32>
    %1102 = arith.mulf %1090, %1101 : vector<8x4xf32>
    %cst_503 = arith.constant dense<0.000000e+00> : vector<8x8xf32>
    %1103 = tpu.matmul %1102, %1095, %cst_503 {dimension_numbers = #tpu.dot_dimension_numbers<[1], [1], [0], [0], [0, 0, 1, 0], [], []>} : vector<8x4xf32>, vector<8x4xf32>, vector<8x8xf32> -> vector<8x8xf32>
    %cst_504 = arith.constant dense<0xFF800000> : vector<8xf32>
    %1104 = vector.multi_reduction <maximumf>, %1103, %cst_504 [1] : vector<8x8xf32> to vector<8xf32>
    %1105 = vector.shape_cast %1104 : vector<8xf32> to vector<8x1xf32>
    %1106 = vector.broadcast %1105 : vector<8x1xf32> to vector<8x8xf32>
    %1107 = arith.subf %1103, %1106 : vector<8x8xf32>
    %1108 = math.exp %1107 : vector<8x8xf32>
    %cst_505 = arith.constant dense<0.000000e+00> : vector<8xf32>
    %1109 = vector.multi_reduction <add>, %1108, %cst_505 [1] : vector<8x8xf32> to vector<8xf32>
    %1110 = vector.shape_cast %1109 : vector<8xf32> to vector<8x1xf32>
    %1111 = vector.broadcast %1110 : vector<8x1xf32> to vector<8x8xf32>
    %1112 = arith.divf %1108, %1111 : vector<8x8xf32>
    %1113 = arith.addf %1081, %1112 : vector<8x8xf32>
    %cst_506 = arith.constant dense<0.000000e+00> : vector<8x4xf32>
    %1114 = tpu.matmul %1112, %1100, %cst_506 {dimension_numbers = #tpu.dot_dimension_numbers<[1], [0], [0], [1], [0, 0, 1, 1], [], []>} : vector<8x8xf32>, vector<8x4xf32>, vector<8x4xf32> -> vector<8x4xf32>
    %c12_507 = arith.constant 12 : index
    %c0_508 = arith.constant 0 : index
    %1115 = vector.load %arg9[%c12_507, %c0_508] : memref<16x16xf32, #tpu.memory_space<vmem>>, vector<4x16xf32>
    %cst_509 = arith.constant dense<0.000000e+00> : vector<8x16xf32>
    %1116 = tpu.matmul %1114, %1115, %cst_509 {dimension_numbers = #tpu.dot_dimension_numbers<[1], [0], [0], [1], [0, 0, 1, 1], [], []>} : vector<8x4xf32>, vector<4x16xf32>, vector<8x16xf32> -> vector<8x16xf32>
    %1117 = arith.addf %1085, %1116 : vector<8x16xf32>
    %1118 = vector.broadcast %843 : vector<1x16xf32> to vector<8x16xf32>
    %1119 = arith.addf %1117, %1118 : vector<8x16xf32>
    %c1_510 = arith.constant 1 : index
    %c0_511 = arith.constant 0 : index
    %c0_512 = arith.constant 0 : index
    %1120 = vector.load %arg12[%c1_510, %c0_511, %c0_512] : memref<2x8x16xf32, #tpu.memory_space<vmem>>, vector<1x8x16xf32>
    %1121 = vector.shape_cast %1120 : vector<1x8x16xf32> to vector<8x16xf32>
    %1122 = vector.shape_cast %1119 : vector<8x16xf32> to vector<1x8x16xf32>
    tpu.vector_store %arg12[%c1_510, %c0_511, %c0_512], %1122 {strides = array<i32>} : memref<2x8x16xf32, #tpu.memory_space<vmem>>, vector<1x8x16xf32>,
    %cst_513 = arith.constant 2.500000e-01 : f32
    %1123 = vector.broadcast %cst_513 : f32 to vector<8x8xf32>
    %1124 = arith.mulf %1113, %1123 : vector<8x8xf32>
    %c1_514 = arith.constant 1 : index
    %c0_515 = arith.constant 0 : index
    %c0_516 = arith.constant 0 : index
    %1125 = vector.load %arg13[%c1_514, %c0_515, %c0_516] : memref<2x8x8xf32, #tpu.memory_space<vmem>>, vector<1x8x8xf32>
    %1126 = vector.shape_cast %1125 : vector<1x8x8xf32> to vector<8x8xf32>
    %1127 = vector.shape_cast %1124 : vector<8x8xf32> to vector<1x8x8xf32>
    tpu.vector_store %arg13[%c1_514, %c0_515, %c0_516], %1127 {strides = array<i32>} : memref<2x8x8xf32, #tpu.memory_space<vmem>>, vector<1x8x8xf32>,
    return
  }
  func.func @transform_0(%arg0: i32) -> (i32, i32) {
    %c0_i32 = arith.constant 0 : i32
    %c0_i32_0 = arith.constant 0 : i32
    %c0_i32_1 = arith.constant 0 : i32
    return %c0_i32, %c0_i32_0 : i32, i32
  }
  func.func @transform_1(%arg0: i32) -> (i32, i32) {
    %c0_i32 = arith.constant 0 : i32
    %c0_i32_0 = arith.constant 0 : i32
    %c0_i32_1 = arith.constant 0 : i32
    return %c0_i32, %c0_i32_0 : i32, i32
  }
  func.func @transform_2(%arg0: i32) -> (i32, i32) {
    %c0_i32 = arith.constant 0 : i32
    %c0_i32_0 = arith.constant 0 : i32
    %c0_i32_1 = arith.constant 0 : i32
    return %c0_i32, %c0_i32_0 : i32, i32
  }
  func.func @transform_3(%arg0: i32) -> (i32, i32) {
    %c0_i32 = arith.constant 0 : i32
    %c0_i32_0 = arith.constant 0 : i32
    %c0_i32_1 = arith.constant 0 : i32
    return %c0_i32, %c0_i32_0 : i32, i32
  }
  func.func @transform_4(%arg0: i32) -> (i32, i32) {
    %c0_i32 = arith.constant 0 : i32
    %c0_i32_0 = arith.constant 0 : i32
    %c0_i32_1 = arith.constant 0 : i32
    return %c0_i32, %c0_i32_0 : i32, i32
  }
  func.func @transform_5(%arg0: i32) -> (i32, i32) {
    %c0_i32 = arith.constant 0 : i32
    %c0_i32_0 = arith.constant 0 : i32
    %c0_i32_1 = arith.constant 0 : i32
    return %c0_i32, %c0_i32_0 : i32, i32
  }
  func.func @transform_6(%arg0: i32) -> (i32, i32) {
    %c0_i32 = arith.constant 0 : i32
    %c0_i32_0 = arith.constant 0 : i32
    %c0_i32_1 = arith.constant 0 : i32
    return %c0_i32, %c0_i32_0 : i32, i32
  }
  func.func @transform_7(%arg0: i32) -> (i32, i32) {
    %c0_i32 = arith.constant 0 : i32
    %c0_i32_0 = arith.constant 0 : i32
    %c0_i32_1 = arith.constant 0 : i32
    return %c0_i32, %c0_i32_0 : i32, i32
  }
  func.func @transform_8(%arg0: i32) -> (i32, i32) {
    %c0_i32 = arith.constant 0 : i32
    %c0_i32_0 = arith.constant 0 : i32
    %c0_i32_1 = arith.constant 0 : i32
    return %c0_i32, %c0_i32_0 : i32, i32
  }
  func.func @transform_9(%arg0: i32) -> (i32, i32) {
    %c0_i32 = arith.constant 0 : i32
    %c0_i32_0 = arith.constant 0 : i32
    %c0_i32_1 = arith.constant 0 : i32
    return %c0_i32, %c0_i32_0 : i32, i32
  }
  func.func @transform_10(%arg0: i32) -> (i32, i32, i32) {
    %c0_i32 = arith.constant 0 : i32
    %c0_i32_0 = arith.constant 0 : i32
    %c0_i32_1 = arith.constant 0 : i32
    %c0_i32_2 = arith.constant 0 : i32
    return %c0_i32, %c0_i32_0, %c0_i32_1 : i32, i32, i32
  }
  func.func @transform_11(%arg0: i32) -> (i32, i32, i32) {
    %c0_i32 = arith.constant 0 : i32
    %c0_i32_0 = arith.constant 0 : i32
    %c0_i32_1 = arith.constant 0 : i32
    %c0_i32_2 = arith.constant 0 : i32
    return %c0_i32, %c0_i32_0, %c0_i32_1 : i32, i32, i32
  }
  func.func @transform_12(%arg0: i32) -> (i32, i32, i32) {
    %c0_i32 = arith.constant 0 : i32
    %c0_i32_0 = arith.constant 0 : i32
    %c0_i32_1 = arith.constant 0 : i32
    %c0_i32_2 = arith.constant 0 : i32
    return %c0_i32, %c0_i32_0, %c0_i32_1 : i32, i32, i32
  }
}

</mosaic_0001>

<llo_original>
// kernel: bilstm_attention_forward.1
$region0: #{bilstm_attention_forward.1}
  #allocation0 [shape = 'u32[]', space=smem, size = 0x4, offset = 0x4, fixed_abs, tag = 'smem constant byte address 0x4 - core index']
  #allocation1 [shape = 'u32[144,128]{1,0:T(1,128)}', space=vmem, size = 0x12000, scoped, tag = 'internal scratch']
  #allocation2 [shape = 'f32[2,8,32]{2,1,0:T(8,128)}', space=vmem, size = 0x2000, scoped, tag = 'scratch operand']
  %s0 = inlined_call_operand.vmem [shape: f32[16,32], index: 0, kind: input, shape index: {}]
  %s1 = inlined_call_operand.vmem [shape: f32[128,32], index: 1, kind: input, shape index: {}]
  %s2 = inlined_call_operand.vmem [shape: f32[1,128], index: 2, kind: input, shape index: {}]
  %s3 = inlined_call_operand.vmem [shape: f32[64,16], index: 3, kind: input, shape index: {}]
  %s4 = inlined_call_operand.vmem [shape: f32[64,16], index: 4, kind: input, shape index: {}]
  %s5 = inlined_call_operand.vmem [shape: s32[2,1], index: 5, kind: input, shape index: {}]
  %s6 = inlined_call_operand.vmem [shape: f32[48,32], index: 6, kind: input, shape index: {}]
  %s7 = inlined_call_operand.vmem [shape: f32[12,4], index: 7, kind: input, shape index: {}]
  %s8 = inlined_call_operand.vmem [shape: f32[16,16], index: 8, kind: input, shape index: {}]
  %s9 = inlined_call_operand.vmem [shape: f32[1,16], index: 9, kind: input, shape index: {}]
  %s10 = inlined_call_operand.hbm [shape: f32[8,2,32], index: 10, kind: output, shape index: {0}]
  %s11 = inlined_call_operand.vmem [shape: f32[2,8,16], index: 11, kind: output, shape index: {1}]
  %s12 = inlined_call_operand.hbm [shape: f32[2,8,8], index: 12, kind: output, shape index: {2}]
  %13 = xla_tuple %s10, %s11, %s12
  %s14 = sld [smem:[#allocation0]]
  $region66: #{bilstm_attention_forward.1} parent=0
    _
  %s16 = ssub.s32 1, %s14
  %s17 = scalar_select 0, %s16, %s14
  $region1: #{bilstm_attention_forward.1} parent=0
    #allocation3 [shape = 'u8[8192]{0}', space=vmem, size = 0x2000, scoped, tag = 'output window, operand 0, single buffered']
    #allocation4 [shape = 's32[1]{0}', space=sflag, size = 0x4, scoped, tag = 'scoped memory for bilstm_attention_forward.1']
    #allocation5 [shape = 'u8[8192]{0}', space=vmem, size = 0x2000, scoped, tag = 'output window, operand 2, single buffered']
    #allocation6 [shape = 's32[1]{0}', space=sflag, size = 0x4, scoped, tag = 'scoped memory for bilstm_attention_forward.1']
    %18 = vsyncpa [#allocation4], 0
    %19 = vsyncpa [#allocation6], 0
    // Predicated region
    $region2: #{bilstm_attention_forward.1} parent=1 // pred_check
      _
    $region3: #{bilstm_attention_forward.1} parent=1 // pred_check_branch
      %21 = sbr.rel (0) target = $region5
    $region4: #{bilstm_attention_forward.1} parent=1 // pred_region
      _
    $region5: #{bilstm_attention_forward.1} parent=1 // pred_fallthru
      _
    // Predicated region
    $region6: #{bilstm_attention_forward.1} parent=1 // pred_check
      _
    $region7: #{bilstm_attention_forward.1} parent=1 // pred_check_branch
      %23 = sbr.rel (0) target = $region9
    $region8: #{bilstm_attention_forward.1} parent=1 // pred_region
      _
    $region9: #{bilstm_attention_forward.1} parent=1 // pred_fallthru
      _
    // Predicated region
    $region10: #{bilstm_attention_forward.1} parent=1 // pred_check
      _
    $region11: #{bilstm_attention_forward.1} parent=1 // pred_check_branch
      %25 = sbr.rel (0) target = $region13
    $region12: #{bilstm_attention_forward.1} parent=1 // pred_region
      _
    $region13: #{bilstm_attention_forward.1} parent=1 // pred_fallthru
      _
    // Predicated region
    $region14: #{bilstm_attention_forward.1} parent=1 // pred_check
      _
    $region15: #{bilstm_attention_forward.1} parent=1 // pred_check_branch
      %27 = sbr.rel (0) target = $region17
    $region16: #{bilstm_attention_forward.1} parent=1 // pred_region
      _
    $region17: #{bilstm_attention_forward.1} parent=1 // pred_fallthru
      _
    // Predicated region
    $region18: #{bilstm_attention_forward.1} parent=1 // pred_check
      _
    $region19: #{bilstm_attention_forward.1} parent=1 // pred_check_branch
      %29 = sbr.rel (0) target = $region21
    $region20: #{bilstm_attention_forward.1} parent=1 // pred_region
      _
    $region21: #{bilstm_attention_forward.1} parent=1 // pred_fallthru
      _
    // Predicated region
    $region22: #{bilstm_attention_forward.1} parent=1 // pred_check
      _
    $region23: #{bilstm_attention_forward.1} parent=1 // pred_check_branch
      %31 = sbr.rel (0) target = $region25
    $region24: #{bilstm_attention_forward.1} parent=1 // pred_region
      _
    $region25: #{bilstm_attention_forward.1} parent=1 // pred_fallthru
      _
    // Predicated region
    $region26: #{bilstm_attention_forward.1} parent=1 // pred_check
      _
    $region27: #{bilstm_attention_forward.1} parent=1 // pred_check_branch
      %33 = sbr.rel (0) target = $region29
    $region28: #{bilstm_attention_forward.1} parent=1 // pred_region
      _
    $region29: #{bilstm_attention_forward.1} parent=1 // pred_fallthru
      _
    // Predicated region
    $region30: #{bilstm_attention_forward.1} parent=1 // pred_check
      _
    $region31: #{bilstm_attention_forward.1} parent=1 // pred_check_branch
      %35 = sbr.rel (0) target = $region33
    $region32: #{bilstm_attention_forward.1} parent=1 // pred_region
      _
    $region33: #{bilstm_attention_forward.1} parent=1 // pred_fallthru
      _
    // Predicated region
    $region34: #{bilstm_attention_forward.1} parent=1 // pred_check
      _
    $region35: #{bilstm_attention_forward.1} parent=1 // pred_check_branch
      %37 = sbr.rel (0) target = $region37
    $region36: #{bilstm_attention_forward.1} parent=1 // pred_region
      _
    $region37: #{bilstm_attention_forward.1} parent=1 // pred_fallthru
      _
    // Predicated region
    $region38: #{bilstm_attention_forward.1} parent=1 // pred_check
      _
    $region39: #{bilstm_attention_forward.1} parent=1 // pred_check_branch
      %39 = sbr.rel (0) target = $region41
    $region40: #{bilstm_attention_forward.1} parent=1 // pred_region
      _
    $region41: #{bilstm_attention_forward.1} parent=1 // pred_fallthru
      _
    %v40 = vld [vmem:[%s0] sm:$0xff]
    %v41 = vld [vmem:[%s0 + $0x8] sm:$0xff]
    %v42 = vld [vmem:[%s1] sm:$0xff]
    %v43 = vld [vmem:[%s1 + $0x8] sm:$0xff]
    %v44 = vld [vmem:[%s1 + $0x10] sm:$0xff]
    %v45 = vld [vmem:[%s1 + $0x18] sm:$0xff]
    %v46 = vld [vmem:[%s1 + $0x20] sm:$0xff]
    %v47 = vld [vmem:[%s1 + $0x28] sm:$0xff]
    %v48 = vld [vmem:[%s1 + $0x30] sm:$0xff]
    %v49 = vld [vmem:[%s1 + $0x38] sm:$0xff]
    %v50 = vld [vmem:[%s1 + $0x40] sm:$0xff]
    %v51 = vld [vmem:[%s1 + $0x48] sm:$0xff]
    %v52 = vld [vmem:[%s1 + $0x50] sm:$0xff]
    %v53 = vld [vmem:[%s1 + $0x58] sm:$0xff]
    %v54 = vld [vmem:[%s1 + $0x60] sm:$0xff]
    %v55 = vld [vmem:[%s1 + $0x68] sm:$0xff]
    %v56 = vld [vmem:[%s1 + $0x70] sm:$0xff]
    %v57 = vld [vmem:[%s1 + $0x78] sm:$0xff]
    %v58 = vld [vmem:[%s2] sm:$0x1]
    %v60 = vlaneseq
    %v61 = vshrl.u32 %v60, 7
    %v62 = vsub.s32 0, %v61
    %v63 = vrot.slane %v58, %v62
    %vm65 = vcmask 261120
    %v67 = vsel %vm65, %v40, 0
    %v70 = vsel %vm65, %v41, 0
    %v73 = vsel %vm65, %v42, 0
    %v76 = vsel %vm65, %v43, 0
    %v79 = vsel %vm65, %v44, 0
    %v82 = vsel %vm65, %v45, 0
    %v85 = vsel %vm65, %v46, 0
    %v88 = vsel %vm65, %v47, 0
    %v91 = vsel %vm65, %v48, 0
    %v94 = vsel %vm65, %v49, 0
    %v97 = vsel %vm65, %v50, 0
    %v100 = vsel %vm65, %v51, 0
    %v103 = vsel %vm65, %v52, 0
    %v106 = vsel %vm65, %v53, 0
    %v109 = vsel %vm65, %v54, 0
    %v112 = vsel %vm65, %v55, 0
    %v115 = vsel %vm65, %v56, 0
    %v118 = vsel %vm65, %v57, 0
    %120 = vmatprep.subr.mxu0 0.0
    %121 = vmatpush1.xpose.msra.mxu0 %v73
    %122 = vmatprep.subr.mxu0 0.0
    %123 = vmatpush1.xpose.msra.mxu0 %v76
    %124 = vmatprep.subr.mxu0 0.0
    %125 = vmatpush1.xpose.msra.mxu0 %v79
    %126 = vmatprep.subr.mxu0 0.0
    %127 = vmatpush1.xpose.msra.mxu0 %v82
    %128 = vmatprep.subr.mxu0 0.0
    %129 = vmatpush1.xpose.msra.mxu0 %v85
    %130 = vmatprep.subr.mxu0 0.0
    %131 = vmatpush1.xpose.msra.mxu0 %v88
    %132 = vmatprep.subr.mxu0 0.0
    %133 = vmatpush1.xpose.msra.mxu0 %v91
    %134 = vmatprep.subr.mxu0 0.0
    %135 = vmatpush1.xpose.msra.mxu0 %v94
    %136 = vmatprep.subr.mxu0 0.0
    %137 = vmatpush1.xpose.msra.mxu0 %v97
    %138 = vmatprep.subr.mxu0 0.0
    %139 = vmatpush1.xpose.msra.mxu0 %v100
    %140 = vmatprep.subr.mxu0 0.0
    %141 = vmatpush1.xpose.msra.mxu0 %v103
    %142 = vmatprep.subr.mxu0 0.0
    %143 = vmatpush1.xpose.msra.mxu0 %v106
    %144 = vmatprep.subr.mxu0 0.0
    %145 = vmatpush1.xpose.msra.mxu0 %v109
    %146 = vmatprep.subr.mxu0 0.0
    %147 = vmatpush1.xpose.msra.mxu0 %v112
    %148 = vmatprep.subr.mxu0 0.0
    %149 = vmatpush1.xpose.msra.mxu0 %v115
    %150 = vmatprep.subr.mxu0 0.0
    %151 = vmatpush1.xpose.msra.mxu0 %v118
    %152 = vmatprep.subr.mxu0 0.0
    %153 = vmatpush1.xpose.msra.mxu0 0.0
    %154 = vmatprep.subr.mxu0 0.0
    %155 = vmatpush1.xpose.msra.mxu0 0.0
    %156 = vmatprep.subr.mxu0 0.0
    %157 = vmatpush1.xpose.msra.mxu0 0.0
    %158 = vmatprep.subr.mxu0 0.0
    %159 = vmatpush1.xpose.msra.mxu0 0.0
    %160 = vmatprep.subr.mxu0 0.0
    %161 = vmatpush1.xpose.msra.mxu0 0.0
    %162 = vmatprep.subr.mxu0 0.0
    %163 = vmatpush1.xpose.msra.mxu0 0.0
    %164 = vmatprep.subr.mxu0 0.0
    %165 = vmatpush1.xpose.msra.mxu0 0.0
    %166 = vmatprep.subr.mxu0 0.0
    %167 = vmatpush1.xpose.msra.mxu0 0.0
    %168 = vmatprep.subr.mxu0 0.0
    %169 = vmatpush1.xpose.msra.mxu0 0.0
    %170 = vmatprep.subr.mxu0 0.0
    %171 = vmatpush1.xpose.msra.mxu0 0.0
    %172 = vmatprep.subr.mxu0 0.0
    %173 = vmatpush1.xpose.msra.mxu0 0.0
    %174 = vmatprep.subr.mxu0 0.0
    %175 = vmatpush1.xpose.msra.mxu0 0.0
    %176 = vmatprep.subr.mxu0 0.0
    %177 = vmatpush1.xpose.msra.mxu0 0.0
    %178 = vmatprep.subr.mxu0 0.0
    %179 = vmatpush1.xpose.msra.mxu0 0.0
    %180 = vmatprep.subr.mxu0 0.0
    %181 = vmatpush1.xpose.msra.mxu0 0.0
    %182 = vmatprep.subr.mxu0 0.0
    %183 = vmatpush1.xpose.msra.mxu0 0.0
    %184 = vmatprep.mubr.f32.mxu0 0.0
    %185 = vmatmul.mubr.f32.gmra.mrb[0].mxu0 %v67
    %v186 = vpop.f32.mrb[0].mxu0
    %v187 = vadd.f32 %v63, %v186
    %v188 = vpop.f32.mrb[0].mxu0
    %189 = vmatprep.mubr.f32.mxu0 0.0
    %190 = vmatmul.mubr.f32.gmra.mrb[0].mxu0 %v70
    %v191 = vpop.f32.mrb[0].mxu0
    %v192 = vadd.f32 %v63, %v191
    %v193 = vpop.f32.mrb[0].mxu0
    %194 = vdwg.mxu0
    %v195 = vld [vmem:[%s5] sm:$0x3]
    %v196 = vld [vmem:[%s3] sm:$0xff]
    %v197 = vld [vmem:[%s3 + $0x8] sm:$0xff]
    %v198 = vld [vmem:[%s3 + $0x10] sm:$0xff]
    %v199 = vld [vmem:[%s3 + $0x18] sm:$0xff]
    %v200 = vld [vmem:[%s3 + $0x20] sm:$0xff]
    %v201 = vld [vmem:[%s3 + $0x28] sm:$0xff]
    %v202 = vld [vmem:[%s3 + $0x30] sm:$0xff]
    %v203 = vld [vmem:[%s3 + $0x38] sm:$0xff]
    %v204 = vld [vmem:[%s4] sm:$0xff]
    %v205 = vld [vmem:[%s4 + $0x8] sm:$0xff]
    %v206 = vld [vmem:[%s4 + $0x10] sm:$0xff]
    %v207 = vld [vmem:[%s4 + $0x18] sm:$0xff]
    %v208 = vld [vmem:[%s4 + $0x20] sm:$0xff]
    %v209 = vld [vmem:[%s4 + $0x28] sm:$0xff]
    %v210 = vld [vmem:[%s4 + $0x30] sm:$0xff]
    %v211 = vld [vmem:[%s4 + $0x38] sm:$0xff]
    %vm212 = vcmask 130048
    %v214 = vsel %vm212, 0.0, 0
    %v217 = vsel %vm212, %v196, 0
    %v220 = vsel %vm212, %v197, 0
    %v223 = vsel %vm212, %v198, 0
    %v226 = vsel %vm212, %v199, 0
    %v229 = vsel %vm212, %v200, 0
    %v232 = vsel %vm212, %v201, 0
    %v235 = vsel %vm212, %v202, 0
    %v238 = vsel %vm212, %v203, 0
    %240 = vmatprep.subr.mxu0 0.0
    %241 = vmatpush1.xpose.msra.mxu0 %v217
    %242 = vmatprep.subr.mxu0 0.0
    %243 = vmatpush1.xpose.msra.mxu0 %v220
    %244 = vmatprep.subr.mxu0 0.0
    %245 = vmatpush1.xpose.msra.mxu0 %v223
    %246 = vmatprep.subr.mxu0 0.0
    %247 = vmatpush1.xpose.msra.mxu0 %v226
    %248 = vmatprep.subr.mxu0 0.0
    %249 = vmatpush1.xpose.msra.mxu0 %v229
    %250 = vmatprep.subr.mxu0 0.0
    %251 = vmatpush1.xpose.msra.mxu0 %v232
    %252 = vmatprep.subr.mxu0 0.0
    %253 = vmatpush1.xpose.msra.mxu0 %v235
    %254 = vmatprep.subr.mxu0 0.0
    %255 = vmatpush1.xpose.msra.mxu0 %v238
    %256 = vmatprep.subr.mxu0 0.0
    %257 = vmatpush1.xpose.msra.mxu0 0.0
    %258 = vmatprep.subr.mxu0 0.0
    %259 = vmatpush1.xpose.msra.mxu0 0.0
    %260 = vmatprep.subr.mxu0 0.0
    %261 = vmatpush1.xpose.msra.mxu0 0.0
    %262 = vmatprep.subr.mxu0 0.0
    %263 = vmatpush1.xpose.msra.mxu0 0.0
    %264 = vmatprep.subr.mxu0 0.0
    %265 = vmatpush1.xpose.msra.mxu0 0.0
    %266 = vmatprep.subr.mxu0 0.0
    %267 = vmatpush1.xpose.msra.mxu0 0.0
    %268 = vmatprep.subr.mxu0 0.0
    %269 = vmatpush1.xpose.msra.mxu0 0.0
    %270 = vmatprep.subr.mxu0 0.0
    %271 = vmatpush1.xpose.msra.mxu0 0.0
    %272 = vmatprep.subr.mxu0 0.0
    %273 = vmatpush1.xpose.msra.mxu0 0.0
    %274 = vmatprep.subr.mxu0 0.0
    %275 = vmatpush1.xpose.msra.mxu0 0.0
    %276 = vmatprep.subr.mxu0 0.0
    %277 = vmatpush1.xpose.msra.mxu0 0.0
    %278 = vmatprep.subr.mxu0 0.0
    %279 = vmatpush1.xpose.msra.mxu0 0.0
    %280 = vmatprep.subr.mxu0 0.0
    %281 = vmatpush1.xpose.msra.mxu0 0.0
    %282 = vmatprep.subr.mxu0 0.0
    %283 = vmatpush1.xpose.msra.mxu0 0.0
    %284 = vmatprep.subr.mxu0 0.0
    %285 = vmatpush1.xpose.msra.mxu0 0.0
    %286 = vmatprep.subr.mxu0 0.0
    %287 = vmatpush1.xpose.msra.mxu0 0.0
    %288 = vmatprep.subr.mxu0 0.0
    %289 = vmatpush1.xpose.msra.mxu0 0.0
    %290 = vmatprep.subr.mxu0 0.0
    %291 = vmatpush1.xpose.msra.mxu0 0.0
    %292 = vmatprep.subr.mxu0 0.0
    %293 = vmatpush1.xpose.msra.mxu0 0.0
    %294 = vmatprep.subr.mxu0 0.0
    %295 = vmatpush1.xpose.msra.mxu0 0.0
    %296 = vmatprep.subr.mxu0 0.0
    %297 = vmatpush1.xpose.msra.mxu0 0.0
    %298 = vmatprep.subr.mxu0 0.0
    %299 = vmatpush1.xpose.msra.mxu0 0.0
    %300 = vmatprep.subr.mxu0 0.0
    %301 = vmatpush1.xpose.msra.mxu0 0.0
    %302 = vmatprep.subr.mxu0 0.0
    %303 = vmatpush1.xpose.msra.mxu0 0.0
    %304 = vmatprep.mubr.f32.mxu0 0.0
    %305 = vmatmul.mubr.f32.gmra.mrb[0].mxu0 %v214
    %v306 = vpop.f32.mrb[0].mxu0
    %v307 = vadd.f32 0.0, %v306
    %v308 = vpop.f32.mrb[0].mxu0
    %309 = vdwg.mxu0
    %v310 = vadd.f32 %v187, %v307
    %v312 = vsel %vm212, %v204, 0
    %v315 = vsel %vm212, %v205, 0
    %v318 = vsel %vm212, %v206, 0
    %v321 = vsel %vm212, %v207, 0
    %v324 = vsel %vm212, %v208, 0
    %v327 = vsel %vm212, %v209, 0
    %v330 = vsel %vm212, %v210, 0
    %v333 = vsel %vm212, %v211, 0
    %335 = vmatprep.subr.mxu0 0.0
    %336 = vmatpush1.xpose.msra.mxu0 %v312
    %337 = vmatprep.subr.mxu0 0.0
    %338 = vmatpush1.xpose.msra.mxu0 %v315
    %339 = vmatprep.subr.mxu0 0.0
    %340 = vmatpush1.xpose.msra.mxu0 %v318
    %341 = vmatprep.subr.mxu0 0.0
    %342 = vmatpush1.xpose.msra.mxu0 %v321
    %343 = vmatprep.subr.mxu0 0.0
    %344 = vmatpush1.xpose.msra.mxu0 %v324
    %345 = vmatprep.subr.mxu0 0.0
    %346 = vmatpush1.xpose.msra.mxu0 %v327
    %347 = vmatprep.subr.mxu0 0.0
    %348 = vmatpush1.xpose.msra.mxu0 %v330
    %349 = vmatprep.subr.mxu0 0.0
    %350 = vmatpush1.xpose.msra.mxu0 %v333
    %351 = vmatprep.subr.mxu0 0.0
    %352 = vmatpush1.xpose.msra.mxu0 0.0
    %353 = vmatprep.subr.mxu0 0.0
    %354 = vmatpush1.xpose.msra.mxu0 0.0
    %355 = vmatprep.subr.mxu0 0.0
    %356 = vmatpush1.xpose.msra.mxu0 0.0
    %357 = vmatprep.subr.mxu0 0.0
    %358 = vmatpush1.xpose.msra.mxu0 0.0
    %359 = vmatprep.subr.mxu0 0.0
    %360 = vmatpush1.xpose.msra.mxu0 0.0
    %361 = vmatprep.subr.mxu0 0.0
    %362 = vmatpush1.xpose.msra.mxu0 0.0
    %363 = vmatprep.subr.mxu0 0.0
    %364 = vmatpush1.xpose.msra.mxu0 0.0
    %365 = vmatprep.subr.mxu0 0.0
    %366 = vmatpush1.xpose.msra.mxu0 0.0
    %367 = vmatprep.subr.mxu0 0.0
    %368 = vmatpush1.xpose.msra.mxu0 0.0
    %369 = vmatprep.subr.mxu0 0.0
    %370 = vmatpush1.xpose.msra.mxu0 0.0
    %371 = vmatprep.subr.mxu0 0.0
    %372 = vmatpush1.xpose.msra.mxu0 0.0
    %373 = vmatprep.subr.mxu0 0.0
    %374 = vmatpush1.xpose.msra.mxu0 0.0
    %375 = vmatprep.subr.mxu0 0.0
    %376 = vmatpush1.xpose.msra.mxu0 0.0
    %377 = vmatprep.subr.mxu0 0.0
    %378 = vmatpush1.xpose.msra.mxu0 0.0
    %379 = vmatprep.subr.mxu0 0.0
    %380 = vmatpush1.xpose.msra.mxu0 0.0
    %381 = vmatprep.subr.mxu0 0.0
    %382 = vmatpush1.xpose.msra.mxu0 0.0
    %383 = vmatprep.subr.mxu0 0.0
    %384 = vmatpush1.xpose.msra.mxu0 0.0
    %385 = vmatprep.subr.mxu0 0.0
    %386 = vmatpush1.xpose.msra.mxu0 0.0
    %387 = vmatprep.subr.mxu0 0.0
    %388 = vmatpush1.xpose.msra.mxu0 0.0
    %389 = vmatprep.subr.mxu0 0.0
    %390 = vmatpush1.xpose.msra.mxu0 0.0
    %391 = vmatprep.subr.mxu0 0.0
    %392 = vmatpush1.xpose.msra.mxu0 0.0
    %393 = vmatprep.subr.mxu0 0.0
    %394 = vmatpush1.xpose.msra.mxu0 0.0
    %395 = vmatprep.subr.mxu0 0.0
    %396 = vmatpush1.xpose.msra.mxu0 0.0
    %397 = vmatprep.subr.mxu0 0.0
    %398 = vmatpush1.xpose.msra.mxu0 0.0
    %399 = vmatprep.mubr.f32.mxu0 0.0
    %400 = vmatmul.mubr.f32.gmra.mrb[0].mxu0 %v214
    %v401 = vpop.f32.mrb[0].mxu0
    %v402 = vadd.f32 0.0, %v401
    %v403 = vpop.f32.mrb[0].mxu0
    %404 = vdwg.mxu0
    %v406 = vrot.slane %v402, 2
    %407 = vrot.lane.b32.xlu0 %v406, 64
    %v408 = vpop.permute.xlu0 %407
    %v410 = vadd.f32 %v192, %v408
    %v411 = vsub.f32 0.0, %v310
    %v412 = vmul.f32 %v411, 1.442695
    %v413 = vpow.pop %v412
    %v414 = vadd.f32 %v413, 1.0
    %v415 = vrcp.pop %v414
    %v416 = vmul.f32 1.0, %v415
    %v417 = vtanh.pop %v310
    %v418 = vmul.f32 %v416, 0.0
    %420 = vrot.lane.b32.xlu0 %v417, 96
    %v421 = vpop.permute.xlu0 %420
    %v423 = vmul.f32 %v416, %v421
    %425 = vrot.lane.b32.xlu0 %v423, 16
    %v426 = vpop.permute.xlu0 %425
    %v428 = vadd.f32 %v418, %v426
    %v429 = vtanh.pop %v428
    %431 = vrot.lane.b32.xlu0 %v429, 32
    %v432 = vpop.permute.xlu0 %431
    %v434 = vmul.f32 %v416, %v432
    %v435 = vsub.f32 0.0, %v410
    %v436 = vmul.f32 %v435, 1.442695
    %v437 = vpow.pop %v436
    %v438 = vadd.f32 %v437, 1.0
    %v439 = vrcp.pop %v438
    %v440 = vmul.f32 1.0, %v439
    %v441 = vtanh.pop %v410
    %v442 = vmul.f32 %v440, 0.0
    %444 = vrot.lane.b32.xlu0 %v441, 96
    %v445 = vpop.permute.xlu0 %444
    %v447 = vmul.f32 %v440, %v445
    %449 = vrot.lane.b32.xlu0 %v447, 16
    %v450 = vpop.permute.xlu0 %449
    %v452 = vadd.f32 %v442, %v450
    %v453 = vtanh.pop %v452
    %455 = vrot.lane.b32.xlu0 %v453, 32
    %v456 = vpop.permute.xlu0 %455
    %v458 = vmul.f32 %v440, %v456
    %vm459 = vcmp.gt.s32.totalorder %v195, 0
    %v460 = vsel %vm459, 1, 0
    %v461 = vcvt.s32.f32 %v460
    %vm462 = vcmp.gt.s32.totalorder %v195, 7
    %v463 = vsel %vm462, 1, 0
    %v464 = vcvt.s32.f32 %v463
    %466 = vset.pattern.permute.xlu0 0
    %467 = vperm.xlu0 %466, %v461
    %v468 = vpop.permute.xlu0 %467
    %v470 = vmul.f32 %v434, %v468
    %472 = vset.pattern.permute.xlu0 0
    %473 = vperm.xlu0 %472, %v464
    %v474 = vpop.permute.xlu0 %473
    %v475 = vrot.slane %v474, 2
    %v477 = vmul.f32 %v458, %v475
    %v478 = vmul.f32 %v452, %v475
    %480 = vrot.lane.b32.xlu0 %v470, 80
    %v481 = vpop.permute.xlu0 %480
    %vm483 = vcmask 123904
    %484 = vst.msk [vmem:[#allocation3] sm:$0x3] %vm483, %v481
    %486 = vrot.lane.b32.xlu0 %v477, 32
    %v487 = vpop.permute.xlu0 %486
    %s489 = scalar_lea.vmem [#allocation3], 14
    %vm490 = vcmask 261254
    %491 = vst.msk [vmem:[%s489 - $0x6] sm:$0xc0] %vm490, %v487
    %vm492 = vcmask 122880
    %493 = vst.msk [vmem:[#allocation2] sm:$0x1] %vm492, %v481
    %vm494 = vcmask 260230
    %495 = vst.msk [vmem:[#allocation2 + $0x1] sm:$0x40] %vm494, %v487
    %s496 = scalar_lea.vmem [#allocation2], 8
    %vm497 = vcmask 123905
    %498 = vst.msk [vmem:[%s496 - $0x1] sm:$0x2] %vm497, %v481
    %vm499 = vcmask 261255
    %500 = vst.msk [vmem:[%s496] sm:$0x80] %vm499, %v487
    %502 = vrot.lane.b32.xlu0 %v434, 80
    %v503 = vpop.permute.xlu0 %502
    %v504 = vsel %vm212, %v503, 0
    %506 = vmatprep.subr.mxu0 0.0
    %507 = vmatpush1.xpose.msra.mxu0 %v217
    %508 = vmatprep.subr.mxu0 0.0
    %509 = vmatpush1.xpose.msra.mxu0 %v220
    %510 = vmatprep.subr.mxu0 0.0
    %511 = vmatpush1.xpose.msra.mxu0 %v223
    %512 = vmatprep.subr.mxu0 0.0
    %513 = vmatpush1.xpose.msra.mxu0 %v226
    %514 = vmatprep.subr.mxu0 0.0
    %515 = vmatpush1.xpose.msra.mxu0 %v229
    %516 = vmatprep.subr.mxu0 0.0
    %517 = vmatpush1.xpose.msra.mxu0 %v232
    %518 = vmatprep.subr.mxu0 0.0
    %519 = vmatpush1.xpose.msra.mxu0 %v235
    %520 = vmatprep.subr.mxu0 0.0
    %521 = vmatpush1.xpose.msra.mxu0 %v238
    %522 = vmatprep.subr.mxu0 0.0
    %523 = vmatpush1.xpose.msra.mxu0 0.0
    %524 = vmatprep.subr.mxu0 0.0
    %525 = vmatpush1.xpose.msra.mxu0 0.0
    %526 = vmatprep.subr.mxu0 0.0
    %527 = vmatpush1.xpose.msra.mxu0 0.0
    %528 = vmatprep.subr.mxu0 0.0
    %529 = vmatpush1.xpose.msra.mxu0 0.0
    %530 = vmatprep.subr.mxu0 0.0
    %531 = vmatpush1.xpose.msra.mxu0 0.0
    %532 = vmatprep.subr.mxu0 0.0
    %533 = vmatpush1.xpose.msra.mxu0 0.0
    %534 = vmatprep.subr.mxu0 0.0
    %535 = vmatpush1.xpose.msra.mxu0 0.0
    %536 = vmatprep.subr.mxu0 0.0
    %537 = vmatpush1.xpose.msra.mxu0 0.0
    %538 = vmatprep.subr.mxu0 0.0
    %539 = vmatpush1.xpose.msra.mxu0 0.0
    %540 = vmatprep.subr.mxu0 0.0
    %541 = vmatpush1.xpose.msra.mxu0 0.0
    %542 = vmatprep.subr.mxu0 0.0
    %543 = vmatpush1.xpose.msra.mxu0 0.0
    %544 = vmatprep.subr.mxu0 0.0
    %545 = vmatpush1.xpose.msra.mxu0 0.0
    %546 = vmatprep.subr.mxu0 0.0
    %547 = vmatpush1.xpose.msra.mxu0 0.0
    %548 = vmatprep.subr.mxu0 0.0
    %549 = vmatpush1.xpose.msra.mxu0 0.0
    %550 = vmatprep.subr.mxu0 0.0
    %551 = vmatpush1.xpose.msra.mxu0 0.0
    %552 = vmatprep.subr.mxu0 0.0
    %553 = vmatpush1.xpose.msra.mxu0 0.0
    %554 = vmatprep.subr.mxu0 0.0
    %555 = vmatpush1.xpose.msra.mxu0 0.0
    %556 = vmatprep.subr.mxu0 0.0
    %557 = vmatpush1.xpose.msra.mxu0 0.0
    %558 = vmatprep.subr.mxu0 0.0
    %559 = vmatpush1.xpose.msra.mxu0 0.0
    %560 = vmatprep.subr.mxu0 0.0
    %561 = vmatpush1.xpose.msra.mxu0 0.0
    %562 = vmatprep.subr.mxu0 0.0
    %563 = vmatpush1.xpose.msra.mxu0 0.0
    %564 = vmatprep.subr.mxu0 0.0
    %565 = vmatpush1.xpose.msra.mxu0 0.0
    %566 = vmatprep.subr.mxu0 0.0
    %567 = vmatpush1.xpose.msra.mxu0 0.0
    %568 = vmatprep.subr.mxu0 0.0
    %569 = vmatpush1.xpose.msra.mxu0 0.0
    %570 = vmatprep.mubr.f32.mxu0 0.0
    %571 = vmatmul.mubr.f32.gmra.mrb[0].mxu0 %v504
    %v572 = vpop.f32.mrb[0].mxu0
    %v573 = vadd.f32 0.0, %v572
    %v574 = vpop.f32.mrb[0].mxu0
    %575 = vdwg.mxu0
    %v577 = vrot.slane %v573, 6
    %v579 = vadd.f32 %v187, %v577
    %v580 = vrot.slane %v477, 6
    %581 = vrot.lane.b32.xlu0 %v580, 16
    %v582 = vpop.permute.xlu0 %581
    %v583 = vsel %vm212, %v582, 0
    %585 = vmatprep.subr.mxu0 0.0
    %586 = vmatpush1.xpose.msra.mxu0 %v312
    %587 = vmatprep.subr.mxu0 0.0
    %588 = vmatpush1.xpose.msra.mxu0 %v315
    %589 = vmatprep.subr.mxu0 0.0
    %590 = vmatpush1.xpose.msra.mxu0 %v318
    %591 = vmatprep.subr.mxu0 0.0
    %592 = vmatpush1.xpose.msra.mxu0 %v321
    %593 = vmatprep.subr.mxu0 0.0
    %594 = vmatpush1.xpose.msra.mxu0 %v324
    %595 = vmatprep.subr.mxu0 0.0
    %596 = vmatpush1.xpose.msra.mxu0 %v327
    %597 = vmatprep.subr.mxu0 0.0
    %598 = vmatpush1.xpose.msra.mxu0 %v330
    %599 = vmatprep.subr.mxu0 0.0
    %600 = vmatpush1.xpose.msra.mxu0 %v333
    %601 = vmatprep.subr.mxu0 0.0
    %602 = vmatpush1.xpose.msra.mxu0 0.0
    %603 = vmatprep.subr.mxu0 0.0
    %604 = vmatpush1.xpose.msra.mxu0 0.0
    %605 = vmatprep.subr.mxu0 0.0
    %606 = vmatpush1.xpose.msra.mxu0 0.0
    %607 = vmatprep.subr.mxu0 0.0
    %608 = vmatpush1.xpose.msra.mxu0 0.0
    %609 = vmatprep.subr.mxu0 0.0
    %610 = vmatpush1.xpose.msra.mxu0 0.0
    %611 = vmatprep.subr.mxu0 0.0
    %612 = vmatpush1.xpose.msra.mxu0 0.0
    %613 = vmatprep.subr.mxu0 0.0
    %614 = vmatpush1.xpose.msra.mxu0 0.0
    %615 = vmatprep.subr.mxu0 0.0
    %616 = vmatpush1.xpose.msra.mxu0 0.0
    %617 = vmatprep.subr.mxu0 0.0
    %618 = vmatpush1.xpose.msra.mxu0 0.0
    %619 = vmatprep.subr.mxu0 0.0
    %620 = vmatpush1.xpose.msra.mxu0 0.0
    %621 = vmatprep.subr.mxu0 0.0
    %622 = vmatpush1.xpose.msra.mxu0 0.0
    %623 = vmatprep.subr.mxu0 0.0
    %624 = vmatpush1.xpose.msra.mxu0 0.0
    %625 = vmatprep.subr.mxu0 0.0
    %626 = vmatpush1.xpose.msra.mxu0 0.0
    %627 = vmatprep.subr.mxu0 0.0
    %628 = vmatpush1.xpose.msra.mxu0 0.0
    %629 = vmatprep.subr.mxu0 0.0
    %630 = vmatpush1.xpose.msra.mxu0 0.0
    %631 = vmatprep.subr.mxu0 0.0
    %632 = vmatpush1.xpose.msra.mxu0 0.0
    %633 = vmatprep.subr.mxu0 0.0
    %634 = vmatpush1.xpose.msra.mxu0 0.0
    %635 = vmatprep.subr.mxu0 0.0
    %636 = vmatpush1.xpose.msra.mxu0 0.0
    %637 = vmatprep.subr.mxu0 0.0
    %638 = vmatpush1.xpose.msra.mxu0 0.0
    %639 = vmatprep.subr.mxu0 0.0
    %640 = vmatpush1.xpose.msra.mxu0 0.0
    %641 = vmatprep.subr.mxu0 0.0
    %642 = vmatpush1.xpose.msra.mxu0 0.0
    %643 = vmatprep.subr.mxu0 0.0
    %644 = vmatpush1.xpose.msra.mxu0 0.0
    %645 = vmatprep.subr.mxu0 0.0
    %646 = vmatpush1.xpose.msra.mxu0 0.0
    %647 = vmatprep.subr.mxu0 0.0
    %648 = vmatpush1.xpose.msra.mxu0 0.0
    %649 = vmatprep.mubr.f32.mxu0 0.0
    %650 = vmatmul.mubr.f32.gmra.mrb[0].mxu0 %v583
    %v651 = vpop.f32.mrb[0].mxu0
    %v652 = vadd.f32 0.0, %v651
    %v653 = vpop.f32.mrb[0].mxu0
    %654 = vdwg.mxu0
    %v656 = vrot.slane %v652, 4
    %657 = vrot.lane.b32.xlu0 %v656, 64
    %v658 = vpop.permute.xlu0 %657
    %v660 = vadd.f32 %v192, %v658
    %v661 = vsub.f32 0.0, %v579
    %v662 = vmul.f32 %v661, 1.442695
    %v663 = vpow.pop %v662
    %v664 = vadd.f32 %v663, 1.0
    %v665 = vrcp.pop %v664
    %v666 = vmul.f32 1.0, %v665
    %v667 = vtanh.pop %v579
    %v669 = vrot.slane %v428, 6
    %v671 = vmul.f32 %v666, %v669
    %673 = vrot.lane.b32.xlu0 %v667, 96
    %v674 = vpop.permute.xlu0 %673
    %v676 = vmul.f32 %v666, %v674
    %678 = vrot.lane.b32.xlu0 %v676, 16
    %v679 = vpop.permute.xlu0 %678
    %v681 = vadd.f32 %v671, %v679
    %v682 = vtanh.pop %v681
    %684 = vrot.lane.b32.xlu0 %v682, 32
    %v685 = vpop.permute.xlu0 %684
    %v687 = vmul.f32 %v666, %v685
    %v688 = vsub.f32 0.0, %v660
    %v689 = vmul.f32 %v688, 1.442695
    %v690 = vpow.pop %v689
    %v691 = vadd.f32 %v690, 1.0
    %v692 = vrcp.pop %v691
    %v693 = vmul.f32 1.0, %v692
    %v694 = vtanh.pop %v660
    %v696 = vrot.slane %v478, 2
    %v698 = vmul.f32 %v693, %v696
    %700 = vrot.lane.b32.xlu0 %v694, 96
    %v701 = vpop.permute.xlu0 %700
    %v703 = vmul.f32 %v693, %v701
    %705 = vrot.lane.b32.xlu0 %v703, 16
    %v706 = vpop.permute.xlu0 %705
    %v708 = vadd.f32 %v698, %v706
    %v709 = vtanh.pop %v708
    %711 = vrot.lane.b32.xlu0 %v709, 32
    %v712 = vpop.permute.xlu0 %711
    %v714 = vmul.f32 %v693, %v712
    %vm715 = vcmp.gt.s32.totalorder %v195, 1
    %v716 = vsel %vm715, 1, 0
    %v717 = vcvt.s32.f32 %v716
    %vm718 = vcmp.gt.s32.totalorder %v195, 6
    %v719 = vsel %vm718, 1, 0
    %v720 = vcvt.s32.f32 %v719
    %722 = vset.pattern.permute.xlu0 0
    %723 = vperm.xlu0 %722, %v717
    %v724 = vpop.permute.xlu0 %723
    %v725 = vrot.slane %v724, 6
    %v727 = vmul.f32 %v687, %v725
    %729 = vset.pattern.permute.xlu0 0
    %730 = vperm.xlu0 %729, %v720
    %v731 = vpop.permute.xlu0 %730
    %v732 = vrot.slane %v731, 4
    %v734 = vmul.f32 %v714, %v732
    %v735 = vmul.f32 %v708, %v732
    %737 = vrot.lane.b32.xlu0 %v727, 80
    %v738 = vpop.permute.xlu0 %737
    %s740 = scalar_lea.vmem [#allocation3], 2
    %vm741 = vcmask 125954
    %742 = vst.msk [vmem:[%s740 - $0x2] sm:$0xc] %vm741, %v738
    %744 = vrot.lane.b32.xlu0 %v734, 32
    %v745 = vpop.permute.xlu0 %744
    %s747 = scalar_lea.vmem [#allocation3], 12
    %vm748 = vcmask 259204
    %749 = vst.msk [vmem:[%s747 - $0x4] sm:$0x30] %vm748, %v745
    %vm750 = vcmask 124930
    %751 = vst.msk [vmem:[#allocation2 - $0x1] sm:$0x4] %vm750, %v738
    %vm752 = vcmask 258180
    %753 = vst.msk [vmem:[#allocation2 + $0x2] sm:$0x10] %vm752, %v745
    %vm754 = vcmask 125955
    %755 = vst.msk [vmem:[%s496 - $0x2] sm:$0x8] %vm754, %v738
    %vm756 = vcmask 259205
    %757 = vst.msk [vmem:[%s496 + $0x1] sm:$0x20] %vm756, %v745
    %v759 = vrot.slane %v687, 2
    %760 = vrot.lane.b32.xlu0 %v759, 80
    %v761 = vpop.permute.xlu0 %760
    %v762 = vsel %vm212, %v761, 0
    %764 = vmatprep.subr.mxu0 0.0
    %765 = vmatpush1.xpose.msra.mxu0 %v217
    %766 = vmatprep.subr.mxu0 0.0
    %767 = vmatpush1.xpose.msra.mxu0 %v220
    %768 = vmatprep.subr.mxu0 0.0
    %769 = vmatpush1.xpose.msra.mxu0 %v223
    %770 = vmatprep.subr.mxu0 0.0
    %771 = vmatpush1.xpose.msra.mxu0 %v226
    %772 = vmatprep.subr.mxu0 0.0
    %773 = vmatpush1.xpose.msra.mxu0 %v229
    %774 = vmatprep.subr.mxu0 0.0
    %775 = vmatpush1.xpose.msra.mxu0 %v232
    %776 = vmatprep.subr.mxu0 0.0
    %777 = vmatpush1.xpose.msra.mxu0 %v235
    %778 = vmatprep.subr.mxu0 0.0
    %779 = vmatpush1.xpose.msra.mxu0 %v238
    %780 = vmatprep.subr.mxu0 0.0
    %781 = vmatpush1.xpose.msra.mxu0 0.0
    %782 = vmatprep.subr.mxu0 0.0
    %783 = vmatpush1.xpose.msra.mxu0 0.0
    %784 = vmatprep.subr.mxu0 0.0
    %785 = vmatpush1.xpose.msra.mxu0 0.0
    %786 = vmatprep.subr.mxu0 0.0
    %787 = vmatpush1.xpose.msra.mxu0 0.0
    %788 = vmatprep.subr.mxu0 0.0
    %789 = vmatpush1.xpose.msra.mxu0 0.0
    %790 = vmatprep.subr.mxu0 0.0
    %791 = vmatpush1.xpose.msra.mxu0 0.0
    %792 = vmatprep.subr.mxu0 0.0
    %793 = vmatpush1.xpose.msra.mxu0 0.0
    %794 = vmatprep.subr.mxu0 0.0
    %795 = vmatpush1.xpose.msra.mxu0 0.0
    %796 = vmatprep.subr.mxu0 0.0
    %797 = vmatpush1.xpose.msra.mxu0 0.0
    %798 = vmatprep.subr.mxu0 0.0
    %799 = vmatpush1.xpose.msra.mxu0 0.0
    %800 = vmatprep.subr.mxu0 0.0
    %801 = vmatpush1.xpose.msra.mxu0 0.0
    %802 = vmatprep.subr.mxu0 0.0
    %803 = vmatpush1.xpose.msra.mxu0 0.0
    %804 = vmatprep.subr.mxu0 0.0
    %805 = vmatpush1.xpose.msra.mxu0 0.0
    %806 = vmatprep.subr.mxu0 0.0
    %807 = vmatpush1.xpose.msra.mxu0 0.0
    %808 = vmatprep.subr.mxu0 0.0
    %809 = vmatpush1.xpose.msra.mxu0 0.0
    %810 = vmatprep.subr.mxu0 0.0
    %811 = vmatpush1.xpose.msra.mxu0 0.0
    %812 = vmatprep.subr.mxu0 0.0
    %813 = vmatpush1.xpose.msra.mxu0 0.0
    %814 = vmatprep.subr.mxu0 0.0
    %815 = vmatpush1.xpose.msra.mxu0 0.0
    %816 = vmatprep.subr.mxu0 0.0
    %817 = vmatpush1.xpose.msra.mxu0 0.0
    %818 = vmatprep.subr.mxu0 0.0
    %819 = vmatpush1.xpose.msra.mxu0 0.0
    %820 = vmatprep.subr.mxu0 0.0
    %821 = vmatpush1.xpose.msra.mxu0 0.0
    %822 = vmatprep.subr.mxu0 0.0
    %823 = vmatpush1.xpose.msra.mxu0 0.0
    %824 = vmatprep.subr.mxu0 0.0
    %825 = vmatpush1.xpose.msra.mxu0 0.0
    %826 = vmatprep.subr.mxu0 0.0
    %827 = vmatpush1.xpose.msra.mxu0 0.0
    %828 = vmatprep.mubr.f32.mxu0 0.0
    %829 = vmatmul.mubr.f32.gmra.mrb[0].mxu0 %v762
    %v830 = vpop.f32.mrb[0].mxu0
    %v831 = vadd.f32 0.0, %v830
    %v832 = vpop.f32.mrb[0].mxu0
    %833 = vdwg.mxu0
    %v835 = vrot.slane %v831, 4
    %v837 = vadd.f32 %v187, %v835
    %v838 = vrot.slane %v734, 4
    %839 = vrot.lane.b32.xlu0 %v838, 16
    %v840 = vpop.permute.xlu0 %839
    %v841 = vsel %vm212, %v840, 0
    %843 = vmatprep.subr.mxu0 0.0
    %844 = vmatpush1.xpose.msra.mxu0 %v312
    %845 = vmatprep.subr.mxu0 0.0
    %846 = vmatpush1.xpose.msra.mxu0 %v315
    %847 = vmatprep.subr.mxu0 0.0
    %848 = vmatpush1.xpose.msra.mxu0 %v318
    %849 = vmatprep.subr.mxu0 0.0
    %850 = vmatpush1.xpose.msra.mxu0 %v321
    %851 = vmatprep.subr.mxu0 0.0
    %852 = vmatpush1.xpose.msra.mxu0 %v324
    %853 = vmatprep.subr.mxu0 0.0
    %854 = vmatpush1.xpose.msra.mxu0 %v327
    %855 = vmatprep.subr.mxu0 0.0
    %856 = vmatpush1.xpose.msra.mxu0 %v330
    %857 = vmatprep.subr.mxu0 0.0
    %858 = vmatpush1.xpose.msra.mxu0 %v333
    %859 = vmatprep.subr.mxu0 0.0
    %860 = vmatpush1.xpose.msra.mxu0 0.0
    %861 = vmatprep.subr.mxu0 0.0
    %862 = vmatpush1.xpose.msra.mxu0 0.0
    %863 = vmatprep.subr.mxu0 0.0
    %864 = vmatpush1.xpose.msra.mxu0 0.0
    %865 = vmatprep.subr.mxu0 0.0
    %866 = vmatpush1.xpose.msra.mxu0 0.0
    %867 = vmatprep.subr.mxu0 0.0
    %868 = vmatpush1.xpose.msra.mxu0 0.0
    %869 = vmatprep.subr.mxu0 0.0
    %870 = vmatpush1.xpose.msra.mxu0 0.0
    %871 = vmatprep.subr.mxu0 0.0
    %872 = vmatpush1.xpose.msra.mxu0 0.0
    %873 = vmatprep.subr.mxu0 0.0
    %874 = vmatpush1.xpose.msra.mxu0 0.0
    %875 = vmatprep.subr.mxu0 0.0
    %876 = vmatpush1.xpose.msra.mxu0 0.0
    %877 = vmatprep.subr.mxu0 0.0
    %878 = vmatpush1.xpose.msra.mxu0 0.0
    %879 = vmatprep.subr.mxu0 0.0
    %880 = vmatpush1.xpose.msra.mxu0 0.0
    %881 = vmatprep.subr.mxu0 0.0
    %882 = vmatpush1.xpose.msra.mxu0 0.0
    %883 = vmatprep.subr.mxu0 0.0
    %884 = vmatpush1.xpose.msra.mxu0 0.0
    %885 = vmatprep.subr.mxu0 0.0
    %886 = vmatpush1.xpose.msra.mxu0 0.0
    %887 = vmatprep.subr.mxu0 0.0
    %888 = vmatpush1.xpose.msra.mxu0 0.0
    %889 = vmatprep.subr.mxu0 0.0
    %890 = vmatpush1.xpose.msra.mxu0 0.0
    %891 = vmatprep.subr.mxu0 0.0
    %892 = vmatpush1.xpose.msra.mxu0 0.0
    %893 = vmatprep.subr.mxu0 0.0
    %894 = vmatpush1.xpose.msra.mxu0 0.0
    %895 = vmatprep.subr.mxu0 0.0
    %896 = vmatpush1.xpose.msra.mxu0 0.0
    %897 = vmatprep.subr.mxu0 0.0
    %898 = vmatpush1.xpose.msra.mxu0 0.0
    %899 = vmatprep.subr.mxu0 0.0
    %900 = vmatpush1.xpose.msra.mxu0 0.0
    %901 = vmatprep.subr.mxu0 0.0
    %902 = vmatpush1.xpose.msra.mxu0 0.0
    %903 = vmatprep.subr.mxu0 0.0
    %904 = vmatpush1.xpose.msra.mxu0 0.0
    %905 = vmatprep.subr.mxu0 0.0
    %906 = vmatpush1.xpose.msra.mxu0 0.0
    %907 = vmatprep.mubr.f32.mxu0 0.0
    %908 = vmatmul.mubr.f32.gmra.mrb[0].mxu0 %v841
    %v909 = vpop.f32.mrb[0].mxu0
    %v910 = vadd.f32 0.0, %v909
    %v911 = vpop.f32.mrb[0].mxu0
    %912 = vdwg.mxu0
    %v914 = vrot.slane %v910, 6
    %915 = vrot.lane.b32.xlu0 %v914, 64
    %v916 = vpop.permute.xlu0 %915
    %v918 = vadd.f32 %v192, %v916
    %v919 = vsub.f32 0.0, %v837
    %v920 = vmul.f32 %v919, 1.442695
    %v921 = vpow.pop %v920
    %v922 = vadd.f32 %v921, 1.0
    %v923 = vrcp.pop %v922
    %v924 = vmul.f32 1.0, %v923
    %v925 = vtanh.pop %v837
    %v927 = vrot.slane %v681, 6
    %v929 = vmul.f32 %v924, %v927
    %931 = vrot.lane.b32.xlu0 %v925, 96
    %v932 = vpop.permute.xlu0 %931
    %v934 = vmul.f32 %v924, %v932
    %936 = vrot.lane.b32.xlu0 %v934, 16
    %v937 = vpop.permute.xlu0 %936
    %v939 = vadd.f32 %v929, %v937
    %v940 = vtanh.pop %v939
    %942 = vrot.lane.b32.xlu0 %v940, 32
    %v943 = vpop.permute.xlu0 %942
    %v945 = vmul.f32 %v924, %v943
    %v946 = vsub.f32 0.0, %v918
    %v947 = vmul.f32 %v946, 1.442695
    %v948 = vpow.pop %v947
    %v949 = vadd.f32 %v948, 1.0
    %v950 = vrcp.pop %v949
    %v951 = vmul.f32 1.0, %v950
    %v952 = vtanh.pop %v918
    %v954 = vrot.slane %v735, 2
    %v956 = vmul.f32 %v951, %v954
    %958 = vrot.lane.b32.xlu0 %v952, 96
    %v959 = vpop.permute.xlu0 %958
    %v961 = vmul.f32 %v951, %v959
    %963 = vrot.lane.b32.xlu0 %v961, 16
    %v964 = vpop.permute.xlu0 %963
    %v966 = vadd.f32 %v956, %v964
    %v967 = vtanh.pop %v966
    %969 = vrot.lane.b32.xlu0 %v967, 32
    %v970 = vpop.permute.xlu0 %969
    %v972 = vmul.f32 %v951, %v970
    %vm973 = vcmp.gt.s32.totalorder %v195, 2
    %v974 = vsel %vm973, 1, 0
    %v975 = vcvt.s32.f32 %v974
    %vm976 = vcmp.gt.s32.totalorder %v195, 5
    %v977 = vsel %vm976, 1, 0
    %v978 = vcvt.s32.f32 %v977
    %980 = vset.pattern.permute.xlu0 0
    %981 = vperm.xlu0 %980, %v975
    %v982 = vpop.permute.xlu0 %981
    %v983 = vrot.slane %v982, 4
    %v985 = vmul.f32 %v945, %v983
    %987 = vset.pattern.permute.xlu0 0
    %988 = vperm.xlu0 %987, %v978
    %v989 = vpop.permute.xlu0 %988
    %v990 = vrot.slane %v989, 6
    %v992 = vmul.f32 %v972, %v990
    %v993 = vmul.f32 %v966, %v990
    %995 = vrot.lane.b32.xlu0 %v985, 80
    %v996 = vpop.permute.xlu0 %995
    %s998 = scalar_lea.vmem [#allocation3], 4
    %vm999 = vcmask 128004
    %1000 = vst.msk [vmem:[%s998 - $0x4] sm:$0x30] %vm999, %v996
    %1002 = vrot.lane.b32.xlu0 %v992, 32
    %v1003 = vpop.permute.xlu0 %1002
    %s1005 = scalar_lea.vmem [#allocation3], 10
    %vm1006 = vcmask 257154
    %1007 = vst.msk [vmem:[%s1005 - $0x2] sm:$0xc] %vm1006, %v1003
    %vm1008 = vcmask 126980
    %1009 = vst.msk [vmem:[#allocation2 - $0x2] sm:$0x10] %vm1008, %v996
    %vm1010 = vcmask 256130
    %1011 = vst.msk [vmem:[#allocation2 + $0x3] sm:$0x4] %vm1010, %v1003
    %vm1012 = vcmask 128005
    %1013 = vst.msk [vmem:[%s496 - $0x3] sm:$0x20] %vm1012, %v996
    %vm1014 = vcmask 257155
    %1015 = vst.msk [vmem:[%s496 + $0x2] sm:$0x8] %vm1014, %v1003
    %v1017 = vrot.slane %v945, 4
    %1018 = vrot.lane.b32.xlu0 %v1017, 80
    %v1019 = vpop.permute.xlu0 %1018
    %v1020 = vsel %vm212, %v1019, 0
    %1022 = vmatprep.subr.mxu0 0.0
    %1023 = vmatpush1.xpose.msra.mxu0 %v217
    %1024 = vmatprep.subr.mxu0 0.0
    %1025 = vmatpush1.xpose.msra.mxu0 %v220
    %1026 = vmatprep.subr.mxu0 0.0
    %1027 = vmatpush1.xpose.msra.mxu0 %v223
    %1028 = vmatprep.subr.mxu0 0.0
    %1029 = vmatpush1.xpose.msra.mxu0 %v226
    %1030 = vmatprep.subr.mxu0 0.0
    %1031 = vmatpush1.xpose.msra.mxu0 %v229
    %1032 = vmatprep.subr.mxu0 0.0
    %1033 = vmatpush1.xpose.msra.mxu0 %v232
    %1034 = vmatprep.subr.mxu0 0.0
    %1035 = vmatpush1.xpose.msra.mxu0 %v235
    %1036 = vmatprep.subr.mxu0 0.0
    %1037 = vmatpush1.xpose.msra.mxu0 %v238
    %1038 = vmatprep.subr.mxu0 0.0
    %1039 = vmatpush1.xpose.msra.mxu0 0.0
    %1040 = vmatprep.subr.mxu0 0.0
    %1041 = vmatpush1.xpose.msra.mxu0 0.0
    %1042 = vmatprep.subr.mxu0 0.0
    %1043 = vmatpush1.xpose.msra.mxu0 0.0
    %1044 = vmatprep.subr.mxu0 0.0
    %1045 = vmatpush1.xpose.msra.mxu0 0.0
    %1046 = vmatprep.subr.mxu0 0.0
    %1047 = vmatpush1.xpose.msra.mxu0 0.0
    %1048 = vmatprep.subr.mxu0 0.0
    %1049 = vmatpush1.xpose.msra.mxu0 0.0
    %1050 = vmatprep.subr.mxu0 0.0
    %1051 = vmatpush1.xpose.msra.mxu0 0.0
    %1052 = vmatprep.subr.mxu0 0.0
    %1053 = vmatpush1.xpose.msra.mxu0 0.0
    %1054 = vmatprep.subr.mxu0 0.0
    %1055 = vmatpush1.xpose.msra.mxu0 0.0
    %1056 = vmatprep.subr.mxu0 0.0
    %1057 = vmatpush1.xpose.msra.mxu0 0.0
    %1058 = vmatprep.subr.mxu0 0.0
    %1059 = vmatpush1.xpose.msra.mxu0 0.0
    %1060 = vmatprep.subr.mxu0 0.0
    %1061 = vmatpush1.xpose.msra.mxu0 0.0
    %1062 = vmatprep.subr.mxu0 0.0
    %1063 = vmatpush1.xpose.msra.mxu0 0.0
    %1064 = vmatprep.subr.mxu0 0.0
    %1065 = vmatpush1.xpose.msra.mxu0 0.0
    %1066 = vmatprep.subr.mxu0 0.0
    %1067 = vmatpush1.xpose.msra.mxu0 0.0
    %1068 = vmatprep.subr.mxu0 0.0
    %1069 = vmatpush1.xpose.msra.mxu0 0.0
    %1070 = vmatprep.subr.mxu0 0.0
    %1071 = vmatpush1.xpose.msra.mxu0 0.0
    %1072 = vmatprep.subr.mxu0 0.0
    %1073 = vmatpush1.xpose.msra.mxu0 0.0
    %1074 = vmatprep.subr.mxu0 0.0
    %1075 = vmatpush1.xpose.msra.mxu0 0.0
    %1076 = vmatprep.subr.mxu0 0.0
    %1077 = vmatpush1.xpose.msra.mxu0 0.0
    %1078 = vmatprep.subr.mxu0 0.0
    %1079 = vmatpush1.xpose.msra.mxu0 0.0
    %1080 = vmatprep.subr.mxu0 0.0
    %1081 = vmatpush1.xpose.msra.mxu0 0.0
    %1082 = vmatprep.subr.mxu0 0.0
    %1083 = vmatpush1.xpose.msra.mxu0 0.0
    %1084 = vmatprep.subr.mxu0 0.0
    %1085 = vmatpush1.xpose.msra.mxu0 0.0
    %1086 = vmatprep.mubr.f32.mxu0 0.0
    %1087 = vmatmul.mubr.f32.gmra.mrb[0].mxu0 %v1020
    %v1088 = vpop.f32.mrb[0].mxu0
    %v1089 = vadd.f32 0.0, %v1088
    %v1090 = vpop.f32.mrb[0].mxu0
    %1091 = vdwg.mxu0
    %v1093 = vrot.slane %v1089, 2
    %v1095 = vadd.f32 %v187, %v1093
    %v1096 = vrot.slane %v992, 2
    %1097 = vrot.lane.b32.xlu0 %v1096, 16
    %v1098 = vpop.permute.xlu0 %1097
    %v1099 = vsel %vm212, %v1098, 0
    %1101 = vmatprep.subr.mxu0 0.0
    %1102 = vmatpush1.xpose.msra.mxu0 %v312
    %1103 = vmatprep.subr.mxu0 0.0
    %1104 = vmatpush1.xpose.msra.mxu0 %v315
    %1105 = vmatprep.subr.mxu0 0.0
    %1106 = vmatpush1.xpose.msra.mxu0 %v318
    %1107 = vmatprep.subr.mxu0 0.0
    %1108 = vmatpush1.xpose.msra.mxu0 %v321
    %1109 = vmatprep.subr.mxu0 0.0
    %1110 = vmatpush1.xpose.msra.mxu0 %v324
    %1111 = vmatprep.subr.mxu0 0.0
    %1112 = vmatpush1.xpose.msra.mxu0 %v327
    %1113 = vmatprep.subr.mxu0 0.0
    %1114 = vmatpush1.xpose.msra.mxu0 %v330
    %1115 = vmatprep.subr.mxu0 0.0
    %1116 = vmatpush1.xpose.msra.mxu0 %v333
    %1117 = vmatprep.subr.mxu0 0.0
    %1118 = vmatpush1.xpose.msra.mxu0 0.0
    %1119 = vmatprep.subr.mxu0 0.0
    %1120 = vmatpush1.xpose.msra.mxu0 0.0
    %1121 = vmatprep.subr.mxu0 0.0
    %1122 = vmatpush1.xpose.msra.mxu0 0.0
    %1123 = vmatprep.subr.mxu0 0.0
    %1124 = vmatpush1.xpose.msra.mxu0 0.0
    %1125 = vmatprep.subr.mxu0 0.0
    %1126 = vmatpush1.xpose.msra.mxu0 0.0
    %1127 = vmatprep.subr.mxu0 0.0
    %1128 = vmatpush1.xpose.msra.mxu0 0.0
    %1129 = vmatprep.subr.mxu0 0.0
    %1130 = vmatpush1.xpose.msra.mxu0 0.0
    %1131 = vmatprep.subr.mxu0 0.0
    %1132 = vmatpush1.xpose.msra.mxu0 0.0
    %1133 = vmatprep.subr.mxu0 0.0
    %1134 = vmatpush1.xpose.msra.mxu0 0.0
    %1135 = vmatprep.subr.mxu0 0.0
    %1136 = vmatpush1.xpose.msra.mxu0 0.0
    %1137 = vmatprep.subr.mxu0 0.0
    %1138 = vmatpush1.xpose.msra.mxu0 0.0
    %1139 = vmatprep.subr.mxu0 0.0
    %1140 = vmatpush1.xpose.msra.mxu0 0.0
    %1141 = vmatprep.subr.mxu0 0.0
    %1142 = vmatpush1.xpose.msra.mxu0 0.0
    %1143 = vmatprep.subr.mxu0 0.0
    %1144 = vmatpush1.xpose.msra.mxu0 0.0
    %1145 = vmatprep.subr.mxu0 0.0
    %1146 = vmatpush1.xpose.msra.mxu0 0.0
    %1147 = vmatprep.subr.mxu0 0.0
    %1148 = vmatpush1.xpose.msra.mxu0 0.0
    %1149 = vmatprep.subr.mxu0 0.0
    %1150 = vmatpush1.xpose.msra.mxu0 0.0
    %1151 = vmatprep.subr.mxu0 0.0
    %1152 = vmatpush1.xpose.msra.mxu0 0.0
    %1153 = vmatprep.subr.mxu0 0.0
    %1154 = vmatpush1.xpose.msra.mxu0 0.0
    %1155 = vmatprep.subr.mxu0 0.0
    %1156 = vmatpush1.xpose.msra.mxu0 0.0
    %1157 = vmatprep.subr.mxu0 0.0
    %1158 = vmatpush1.xpose.msra.mxu0 0.0
    %1159 = vmatprep.subr.mxu0 0.0
    %1160 = vmatpush1.xpose.msra.mxu0 0.0
    %1161 = vmatprep.subr.mxu0 0.0
    %1162 = vmatpush1.xpose.msra.mxu0 0.0
    %1163 = vmatprep.subr.mxu0 0.0
    %1164 = vmatpush1.xpose.msra.mxu0 0.0
    %1165 = vmatprep.mubr.f32.mxu0 0.0
    %1166 = vmatmul.mubr.f32.gmra.mrb[0].mxu0 %v1099
    %v1167 = vpop.f32.mrb[0].mxu0
    %v1168 = vadd.f32 0.0, %v1167
    %v1169 = vpop.f32.mrb[0].mxu0
    %1170 = vdwg.mxu0
    %1172 = vrot.lane.b32.xlu0 %v1168, 64
    %v1173 = vpop.permute.xlu0 %1172
    %v1175 = vadd.f32 %v192, %v1173
    %v1176 = vsub.f32 0.0, %v1095
    %v1177 = vmul.f32 %v1176, 1.442695
    %v1178 = vpow.pop %v1177
    %v1179 = vadd.f32 %v1178, 1.0
    %v1180 = vrcp.pop %v1179
    %v1181 = vmul.f32 1.0, %v1180
    %v1182 = vtanh.pop %v1095
    %v1184 = vrot.slane %v939, 6
    %v1186 = vmul.f32 %v1181, %v1184
    %1188 = vrot.lane.b32.xlu0 %v1182, 96
    %v1189 = vpop.permute.xlu0 %1188
    %v1191 = vmul.f32 %v1181, %v1189
    %1193 = vrot.lane.b32.xlu0 %v1191, 16
    %v1194 = vpop.permute.xlu0 %1193
    %v1196 = vadd.f32 %v1186, %v1194
    %v1197 = vtanh.pop %v1196
    %1199 = vrot.lane.b32.xlu0 %v1197, 32
    %v1200 = vpop.permute.xlu0 %1199
    %v1202 = vmul.f32 %v1181, %v1200
    %v1203 = vsub.f32 0.0, %v1175
    %v1204 = vmul.f32 %v1203, 1.442695
    %v1205 = vpow.pop %v1204
    %v1206 = vadd.f32 %v1205, 1.0
    %v1207 = vrcp.pop %v1206
    %v1208 = vmul.f32 1.0, %v1207
    %v1209 = vtanh.pop %v1175
    %v1211 = vrot.slane %v993, 2
    %v1213 = vmul.f32 %v1208, %v1211
    %1215 = vrot.lane.b32.xlu0 %v1209, 96
    %v1216 = vpop.permute.xlu0 %1215
    %v1218 = vmul.f32 %v1208, %v1216
    %1220 = vrot.lane.b32.xlu0 %v1218, 16
    %v1221 = vpop.permute.xlu0 %1220
    %v1223 = vadd.f32 %v1213, %v1221
    %v1224 = vtanh.pop %v1223
    %1226 = vrot.lane.b32.xlu0 %v1224, 32
    %v1227 = vpop.permute.xlu0 %1226
    %v1229 = vmul.f32 %v1208, %v1227
    %vm1230 = vcmp.gt.s32.totalorder %v195, 3
    %v1231 = vsel %vm1230, 1, 0
    %v1232 = vcvt.s32.f32 %v1231
    %vm1233 = vcmp.gt.s32.totalorder %v195, 4
    %v1234 = vsel %vm1233, 1, 0
    %v1235 = vcvt.s32.f32 %v1234
    %1237 = vset.pattern.permute.xlu0 0
    %1238 = vperm.xlu0 %1237, %v1232
    %v1239 = vpop.permute.xlu0 %1238
    %v1240 = vrot.slane %v1239, 2
    %v1242 = vmul.f32 %v1202, %v1240
    %1244 = vset.pattern.permute.xlu0 0
    %1245 = vperm.xlu0 %1244, %v1235
    %v1246 = vpop.permute.xlu0 %1245
    %v1248 = vmul.f32 %v1229, %v1246
    %v1249 = vmul.f32 %v1223, %v1246
    %1251 = vrot.lane.b32.xlu0 %v1242, 80
    %v1252 = vpop.permute.xlu0 %1251
    %s1254 = scalar_lea.vmem [#allocation3], 6
    %vm1255 = vcmask 130054
    %1256 = vst.msk [vmem:[%s1254 - $0x6] sm:$0xc0] %vm1255, %v1252
    %1258 = vrot.lane.b32.xlu0 %v1248, 32
    %v1259 = vpop.permute.xlu0 %1258
    %s1261 = scalar_lea.vmem [#allocation3], 8
    %vm1262 = vcmask 255104
    %1263 = vst.msk [vmem:[%s1261] sm:$0x3] %vm1262, %v1259
    %vm1264 = vcmask 129030
    %1265 = vst.msk [vmem:[#allocation2 - $0x3] sm:$0x40] %vm1264, %v1252
    %vm1266 = vcmask 254080
    %1267 = vst.msk [vmem:[#allocation2 + $0x4] sm:$0x1] %vm1266, %v1259
    %vm1268 = vcmask 130055
    %1269 = vst.msk [vmem:[%s496 - $0x4] sm:$0x80] %vm1268, %v1252
    %vm1270 = vcmask 255105
    %1271 = vst.msk [vmem:[%s496 + $0x3] sm:$0x2] %vm1270, %v1259
    %v1273 = vrot.slane %v1202, 6
    %1274 = vrot.lane.b32.xlu0 %v1273, 80
    %v1275 = vpop.permute.xlu0 %1274
    %v1276 = vsel %vm212, %v1275, 0
    %1278 = vmatprep.subr.mxu0 0.0
    %1279 = vmatpush1.xpose.msra.mxu0 %v217
    %1280 = vmatprep.subr.mxu0 0.0
    %1281 = vmatpush1.xpose.msra.mxu0 %v220
    %1282 = vmatprep.subr.mxu0 0.0
    %1283 = vmatpush1.xpose.msra.mxu0 %v223
    %1284 = vmatprep.subr.mxu0 0.0
    %1285 = vmatpush1.xpose.msra.mxu0 %v226
    %1286 = vmatprep.subr.mxu0 0.0
    %1287 = vmatpush1.xpose.msra.mxu0 %v229
    %1288 = vmatprep.subr.mxu0 0.0
    %1289 = vmatpush1.xpose.msra.mxu0 %v232
    %1290 = vmatprep.subr.mxu0 0.0
    %1291 = vmatpush1.xpose.msra.mxu0 %v235
    %1292 = vmatprep.subr.mxu0 0.0
    %1293 = vmatpush1.xpose.msra.mxu0 %v238
    %1294 = vmatprep.subr.mxu0 0.0
    %1295 = vmatpush1.xpose.msra.mxu0 0.0
    %1296 = vmatprep.subr.mxu0 0.0
    %1297 = vmatpush1.xpose.msra.mxu0 0.0
    %1298 = vmatprep.subr.mxu0 0.0
    %1299 = vmatpush1.xpose.msra.mxu0 0.0
    %1300 = vmatprep.subr.mxu0 0.0
    %1301 = vmatpush1.xpose.msra.mxu0 0.0
    %1302 = vmatprep.subr.mxu0 0.0
    %1303 = vmatpush1.xpose.msra.mxu0 0.0
    %1304 = vmatprep.subr.mxu0 0.0
    %1305 = vmatpush1.xpose.msra.mxu0 0.0
    %1306 = vmatprep.subr.mxu0 0.0
    %1307 = vmatpush1.xpose.msra.mxu0 0.0
    %1308 = vmatprep.subr.mxu0 0.0
    %1309 = vmatpush1.xpose.msra.mxu0 0.0
    %1310 = vmatprep.subr.mxu0 0.0
    %1311 = vmatpush1.xpose.msra.mxu0 0.0
    %1312 = vmatprep.subr.mxu0 0.0
    %1313 = vmatpush1.xpose.msra.mxu0 0.0
    %1314 = vmatprep.subr.mxu0 0.0
    %1315 = vmatpush1.xpose.msra.mxu0 0.0
    %1316 = vmatprep.subr.mxu0 0.0
    %1317 = vmatpush1.xpose.msra.mxu0 0.0
    %1318 = vmatprep.subr.mxu0 0.0
    %1319 = vmatpush1.xpose.msra.mxu0 0.0
    %1320 = vmatprep.subr.mxu0 0.0
    %1321 = vmatpush1.xpose.msra.mxu0 0.0
    %1322 = vmatprep.subr.mxu0 0.0
    %1323 = vmatpush1.xpose.msra.mxu0 0.0
    %1324 = vmatprep.subr.mxu0 0.0
    %1325 = vmatpush1.xpose.msra.mxu0 0.0
    %1326 = vmatprep.subr.mxu0 0.0
    %1327 = vmatpush1.xpose.msra.mxu0 0.0
    %1328 = vmatprep.subr.mxu0 0.0
    %1329 = vmatpush1.xpose.msra.mxu0 0.0
    %1330 = vmatprep.subr.mxu0 0.0
    %1331 = vmatpush1.xpose.msra.mxu0 0.0
    %1332 = vmatprep.subr.mxu0 0.0
    %1333 = vmatpush1.xpose.msra.mxu0 0.0
    %1334 = vmatprep.subr.mxu0 0.0
    %1335 = vmatpush1.xpose.msra.mxu0 0.0
    %1336 = vmatprep.subr.mxu0 0.0
    %1337 = vmatpush1.xpose.msra.mxu0 0.0
    %1338 = vmatprep.subr.mxu0 0.0
    %1339 = vmatpush1.xpose.msra.mxu0 0.0
    %1340 = vmatprep.subr.mxu0 0.0
    %1341 = vmatpush1.xpose.msra.mxu0 0.0
    %1342 = vmatprep.mubr.f32.mxu0 0.0
    %1343 = vmatmul.mubr.f32.gmra.mrb[0].mxu0 %v1276
    %v1344 = vpop.f32.mrb[0].mxu0
    %v1345 = vadd.f32 0.0, %v1344
    %v1346 = vpop.f32.mrb[0].mxu0
    %1347 = vdwg.mxu0
    %v1348 = vadd.f32 %v192, %v1345
    %1349 = vrot.lane.b32.xlu0 %v1248, 16
    %v1350 = vpop.permute.xlu0 %1349
    %v1351 = vsel %vm212, %v1350, 0
    %1353 = vmatprep.subr.mxu0 0.0
    %1354 = vmatpush1.xpose.msra.mxu0 %v312
    %1355 = vmatprep.subr.mxu0 0.0
    %1356 = vmatpush1.xpose.msra.mxu0 %v315
    %1357 = vmatprep.subr.mxu0 0.0
    %1358 = vmatpush1.xpose.msra.mxu0 %v318
    %1359 = vmatprep.subr.mxu0 0.0
    %1360 = vmatpush1.xpose.msra.mxu0 %v321
    %1361 = vmatprep.subr.mxu0 0.0
    %1362 = vmatpush1.xpose.msra.mxu0 %v324
    %1363 = vmatprep.subr.mxu0 0.0
    %1364 = vmatpush1.xpose.msra.mxu0 %v327
    %1365 = vmatprep.subr.mxu0 0.0
    %1366 = vmatpush1.xpose.msra.mxu0 %v330
    %1367 = vmatprep.subr.mxu0 0.0
    %1368 = vmatpush1.xpose.msra.mxu0 %v333
    %1369 = vmatprep.subr.mxu0 0.0
    %1370 = vmatpush1.xpose.msra.mxu0 0.0
    %1371 = vmatprep.subr.mxu0 0.0
    %1372 = vmatpush1.xpose.msra.mxu0 0.0
    %1373 = vmatprep.subr.mxu0 0.0
    %1374 = vmatpush1.xpose.msra.mxu0 0.0
    %1375 = vmatprep.subr.mxu0 0.0
    %1376 = vmatpush1.xpose.msra.mxu0 0.0
    %1377 = vmatprep.subr.mxu0 0.0
    %1378 = vmatpush1.xpose.msra.mxu0 0.0
    %1379 = vmatprep.subr.mxu0 0.0
    %1380 = vmatpush1.xpose.msra.mxu0 0.0
    %1381 = vmatprep.subr.mxu0 0.0
    %1382 = vmatpush1.xpose.msra.mxu0 0.0
    %1383 = vmatprep.subr.mxu0 0.0
    %1384 = vmatpush1.xpose.msra.mxu0 0.0
    %1385 = vmatprep.subr.mxu0 0.0
    %1386 = vmatpush1.xpose.msra.mxu0 0.0
    %1387 = vmatprep.subr.mxu0 0.0
    %1388 = vmatpush1.xpose.msra.mxu0 0.0
    %1389 = vmatprep.subr.mxu0 0.0
    %1390 = vmatpush1.xpose.msra.mxu0 0.0
    %1391 = vmatprep.subr.mxu0 0.0
    %1392 = vmatpush1.xpose.msra.mxu0 0.0
    %1393 = vmatprep.subr.mxu0 0.0
    %1394 = vmatpush1.xpose.msra.mxu0 0.0
    %1395 = vmatprep.subr.mxu0 0.0
    %1396 = vmatpush1.xpose.msra.mxu0 0.0
    %1397 = vmatprep.subr.mxu0 0.0
    %1398 = vmatpush1.xpose.msra.mxu0 0.0
    %1399 = vmatprep.subr.mxu0 0.0
    %1400 = vmatpush1.xpose.msra.mxu0 0.0
    %1401 = vmatprep.subr.mxu0 0.0
    %1402 = vmatpush1.xpose.msra.mxu0 0.0
    %1403 = vmatprep.subr.mxu0 0.0
    %1404 = vmatpush1.xpose.msra.mxu0 0.0
    %1405 = vmatprep.subr.mxu0 0.0
    %1406 = vmatpush1.xpose.msra.mxu0 0.0
    %1407 = vmatprep.subr.mxu0 0.0
    %1408 = vmatpush1.xpose.msra.mxu0 0.0
    %1409 = vmatprep.subr.mxu0 0.0
    %1410 = vmatpush1.xpose.msra.mxu0 0.0
    %1411 = vmatprep.subr.mxu0 0.0
    %1412 = vmatpush1.xpose.msra.mxu0 0.0
    %1413 = vmatprep.subr.mxu0 0.0
    %1414 = vmatpush1.xpose.msra.mxu0 0.0
    %1415 = vmatprep.subr.mxu0 0.0
    %1416 = vmatpush1.xpose.msra.mxu0 0.0
    %1417 = vmatprep.mubr.f32.mxu0 0.0
    %1418 = vmatmul.mubr.f32.gmra.mrb[0].mxu0 %v1351
    %v1419 = vpop.f32.mrb[0].mxu0
    %v1420 = vadd.f32 0.0, %v1419
    %v1421 = vpop.f32.mrb[0].mxu0
    %1422 = vdwg.mxu0
    %v1424 = vrot.slane %v1420, 2
    %1425 = vrot.lane.b32.xlu0 %v1424, 64
    %v1426 = vpop.permute.xlu0 %1425
    %v1428 = vadd.f32 %v187, %v1426
    %v1429 = vsub.f32 0.0, %v1348
    %v1430 = vmul.f32 %v1429, 1.442695
    %v1431 = vpow.pop %v1430
    %v1432 = vadd.f32 %v1431, 1.0
    %v1433 = vrcp.pop %v1432
    %v1434 = vmul.f32 1.0, %v1433
    %v1435 = vtanh.pop %v1348
    %v1437 = vrot.slane %v1196, 6
    %v1439 = vmul.f32 %v1434, %v1437
    %1441 = vrot.lane.b32.xlu0 %v1435, 96
    %v1442 = vpop.permute.xlu0 %1441
    %v1444 = vmul.f32 %v1434, %v1442
    %1446 = vrot.lane.b32.xlu0 %v1444, 16
    %v1447 = vpop.permute.xlu0 %1446
    %v1449 = vadd.f32 %v1439, %v1447
    %v1450 = vtanh.pop %v1449
    %1452 = vrot.lane.b32.xlu0 %v1450, 32
    %v1453 = vpop.permute.xlu0 %1452
    %v1455 = vmul.f32 %v1434, %v1453
    %v1456 = vsub.f32 0.0, %v1428
    %v1457 = vmul.f32 %v1456, 1.442695
    %v1458 = vpow.pop %v1457
    %v1459 = vadd.f32 %v1458, 1.0
    %v1460 = vrcp.pop %v1459
    %v1461 = vmul.f32 1.0, %v1460
    %v1462 = vtanh.pop %v1428
    %v1464 = vrot.slane %v1249, 2
    %v1466 = vmul.f32 %v1461, %v1464
    %1468 = vrot.lane.b32.xlu0 %v1462, 96
    %v1469 = vpop.permute.xlu0 %1468
    %v1471 = vmul.f32 %v1461, %v1469
    %1473 = vrot.lane.b32.xlu0 %v1471, 16
    %v1474 = vpop.permute.xlu0 %1473
    %v1476 = vadd.f32 %v1466, %v1474
    %v1477 = vtanh.pop %v1476
    %1479 = vrot.lane.b32.xlu0 %v1477, 32
    %v1480 = vpop.permute.xlu0 %1479
    %v1482 = vmul.f32 %v1461, %v1480
    %v1483 = vmul.f32 %v1455, %v1246
    %v1484 = vmul.f32 %v1482, %v1240
    %v1485 = vmul.f32 %v1476, %v1240
    %1487 = vrot.lane.b32.xlu0 %v1483, 80
    %v1488 = vpop.permute.xlu0 %1487
    %1490 = vst.msk [vmem:[%s1261] sm:$0x3] %vm483, %v1488
    %1492 = vrot.lane.b32.xlu0 %v1484, 32
    %v1493 = vpop.permute.xlu0 %1492
    %1495 = vst.msk [vmem:[%s1254 - $0x6] sm:$0xc0] %vm490, %v1493
    %1496 = vst.msk [vmem:[#allocation2 + $0x4] sm:$0x1] %vm492, %v1488
    %1497 = vst.msk [vmem:[#allocation2 - $0x3] sm:$0x40] %vm494, %v1493
    %1498 = vst.msk [vmem:[%s496 + $0x3] sm:$0x2] %vm497, %v1488
    %1499 = vst.msk [vmem:[%s496 - $0x4] sm:$0x80] %vm499, %v1493
    %1501 = vrot.lane.b32.xlu0 %v1455, 80
    %v1502 = vpop.permute.xlu0 %1501
    %v1503 = vsel %vm212, %v1502, 0
    %1505 = vmatprep.subr.mxu0 0.0
    %1506 = vmatpush1.xpose.msra.mxu0 %v217
    %1507 = vmatprep.subr.mxu0 0.0
    %1508 = vmatpush1.xpose.msra.mxu0 %v220
    %1509 = vmatprep.subr.mxu0 0.0
    %1510 = vmatpush1.xpose.msra.mxu0 %v223
    %1511 = vmatprep.subr.mxu0 0.0
    %1512 = vmatpush1.xpose.msra.mxu0 %v226
    %1513 = vmatprep.subr.mxu0 0.0
    %1514 = vmatpush1.xpose.msra.mxu0 %v229
    %1515 = vmatprep.subr.mxu0 0.0
    %1516 = vmatpush1.xpose.msra.mxu0 %v232
    %1517 = vmatprep.subr.mxu0 0.0
    %1518 = vmatpush1.xpose.msra.mxu0 %v235
    %1519 = vmatprep.subr.mxu0 0.0
    %1520 = vmatpush1.xpose.msra.mxu0 %v238
    %1521 = vmatprep.subr.mxu0 0.0
    %1522 = vmatpush1.xpose.msra.mxu0 0.0
    %1523 = vmatprep.subr.mxu0 0.0
    %1524 = vmatpush1.xpose.msra.mxu0 0.0
    %1525 = vmatprep.subr.mxu0 0.0
    %1526 = vmatpush1.xpose.msra.mxu0 0.0
    %1527 = vmatprep.subr.mxu0 0.0
    %1528 = vmatpush1.xpose.msra.mxu0 0.0
    %1529 = vmatprep.subr.mxu0 0.0
    %1530 = vmatpush1.xpose.msra.mxu0 0.0
    %1531 = vmatprep.subr.mxu0 0.0
    %1532 = vmatpush1.xpose.msra.mxu0 0.0
    %1533 = vmatprep.subr.mxu0 0.0
    %1534 = vmatpush1.xpose.msra.mxu0 0.0
    %1535 = vmatprep.subr.mxu0 0.0
    %1536 = vmatpush1.xpose.msra.mxu0 0.0
    %1537 = vmatprep.subr.mxu0 0.0
    %1538 = vmatpush1.xpose.msra.mxu0 0.0
    %1539 = vmatprep.subr.mxu0 0.0
    %1540 = vmatpush1.xpose.msra.mxu0 0.0
    %1541 = vmatprep.subr.mxu0 0.0
    %1542 = vmatpush1.xpose.msra.mxu0 0.0
    %1543 = vmatprep.subr.mxu0 0.0
    %1544 = vmatpush1.xpose.msra.mxu0 0.0
    %1545 = vmatprep.subr.mxu0 0.0
    %1546 = vmatpush1.xpose.msra.mxu0 0.0
    %1547 = vmatprep.subr.mxu0 0.0
    %1548 = vmatpush1.xpose.msra.mxu0 0.0
    %1549 = vmatprep.subr.mxu0 0.0
    %1550 = vmatpush1.xpose.msra.mxu0 0.0
    %1551 = vmatprep.subr.mxu0 0.0
    %1552 = vmatpush1.xpose.msra.mxu0 0.0
    %1553 = vmatprep.subr.mxu0 0.0
    %1554 = vmatpush1.xpose.msra.mxu0 0.0
    %1555 = vmatprep.subr.mxu0 0.0
    %1556 = vmatpush1.xpose.msra.mxu0 0.0
    %1557 = vmatprep.subr.mxu0 0.0
    %1558 = vmatpush1.xpose.msra.mxu0 0.0
    %1559 = vmatprep.subr.mxu0 0.0
    %1560 = vmatpush1.xpose.msra.mxu0 0.0
    %1561 = vmatprep.subr.mxu0 0.0
    %1562 = vmatpush1.xpose.msra.mxu0 0.0
    %1563 = vmatprep.subr.mxu0 0.0
    %1564 = vmatpush1.xpose.msra.mxu0 0.0
    %1565 = vmatprep.subr.mxu0 0.0
    %1566 = vmatpush1.xpose.msra.mxu0 0.0
    %1567 = vmatprep.subr.mxu0 0.0
    %1568 = vmatpush1.xpose.msra.mxu0 0.0
    %1569 = vmatprep.mubr.f32.mxu0 0.0
    %1570 = vmatmul.mubr.f32.gmra.mrb[0].mxu0 %v1503
    %v1571 = vpop.f32.mrb[0].mxu0
    %v1572 = vadd.f32 0.0, %v1571
    %v1573 = vpop.f32.mrb[0].mxu0
    %1574 = vdwg.mxu0
    %v1576 = vrot.slane %v1572, 6
    %v1578 = vadd.f32 %v192, %v1576
    %v1579 = vrot.slane %v1484, 6
    %1580 = vrot.lane.b32.xlu0 %v1579, 16
    %v1581 = vpop.permute.xlu0 %1580
    %v1582 = vsel %vm212, %v1581, 0
    %1584 = vmatprep.subr.mxu0 0.0
    %1585 = vmatpush1.xpose.msra.mxu0 %v312
    %1586 = vmatprep.subr.mxu0 0.0
    %1587 = vmatpush1.xpose.msra.mxu0 %v315
    %1588 = vmatprep.subr.mxu0 0.0
    %1589 = vmatpush1.xpose.msra.mxu0 %v318
    %1590 = vmatprep.subr.mxu0 0.0
    %1591 = vmatpush1.xpose.msra.mxu0 %v321
    %1592 = vmatprep.subr.mxu0 0.0
    %1593 = vmatpush1.xpose.msra.mxu0 %v324
    %1594 = vmatprep.subr.mxu0 0.0
    %1595 = vmatpush1.xpose.msra.mxu0 %v327
    %1596 = vmatprep.subr.mxu0 0.0
    %1597 = vmatpush1.xpose.msra.mxu0 %v330
    %1598 = vmatprep.subr.mxu0 0.0
    %1599 = vmatpush1.xpose.msra.mxu0 %v333
    %1600 = vmatprep.subr.mxu0 0.0
    %1601 = vmatpush1.xpose.msra.mxu0 0.0
    %1602 = vmatprep.subr.mxu0 0.0
    %1603 = vmatpush1.xpose.msra.mxu0 0.0
    %1604 = vmatprep.subr.mxu0 0.0
    %1605 = vmatpush1.xpose.msra.mxu0 0.0
    %1606 = vmatprep.subr.mxu0 0.0
    %1607 = vmatpush1.xpose.msra.mxu0 0.0
    %1608 = vmatprep.subr.mxu0 0.0
    %1609 = vmatpush1.xpose.msra.mxu0 0.0
    %1610 = vmatprep.subr.mxu0 0.0
    %1611 = vmatpush1.xpose.msra.mxu0 0.0
    %1612 = vmatprep.subr.mxu0 0.0
    %1613 = vmatpush1.xpose.msra.mxu0 0.0
    %1614 = vmatprep.subr.mxu0 0.0
    %1615 = vmatpush1.xpose.msra.mxu0 0.0
    %1616 = vmatprep.subr.mxu0 0.0
    %1617 = vmatpush1.xpose.msra.mxu0 0.0
    %1618 = vmatprep.subr.mxu0 0.0
    %1619 = vmatpush1.xpose.msra.mxu0 0.0
    %1620 = vmatprep.subr.mxu0 0.0
    %1621 = vmatpush1.xpose.msra.mxu0 0.0
    %1622 = vmatprep.subr.mxu0 0.0
    %1623 = vmatpush1.xpose.msra.mxu0 0.0
    %1624 = vmatprep.subr.mxu0 0.0
    %1625 = vmatpush1.xpose.msra.mxu0 0.0
    %1626 = vmatprep.subr.mxu0 0.0
    %1627 = vmatpush1.xpose.msra.mxu0 0.0
    %1628 = vmatprep.subr.mxu0 0.0
    %1629 = vmatpush1.xpose.msra.mxu0 0.0
    %1630 = vmatprep.subr.mxu0 0.0
    %1631 = vmatpush1.xpose.msra.mxu0 0.0
    %1632 = vmatprep.subr.mxu0 0.0
    %1633 = vmatpush1.xpose.msra.mxu0 0.0
    %1634 = vmatprep.subr.mxu0 0.0
    %1635 = vmatpush1.xpose.msra.mxu0 0.0
    %1636 = vmatprep.subr.mxu0 0.0
    %1637 = vmatpush1.xpose.msra.mxu0 0.0
    %1638 = vmatprep.subr.mxu0 0.0
    %1639 = vmatpush1.xpose.msra.mxu0 0.0
    %1640 = vmatprep.subr.mxu0 0.0
    %1641 = vmatpush1.xpose.msra.mxu0 0.0
    %1642 = vmatprep.subr.mxu0 0.0
    %1643 = vmatpush1.xpose.msra.mxu0 0.0
    %1644 = vmatprep.subr.mxu0 0.0
    %1645 = vmatpush1.xpose.msra.mxu0 0.0
    %1646 = vmatprep.subr.mxu0 0.0
    %1647 = vmatpush1.xpose.msra.mxu0 0.0
    %1648 = vmatprep.mubr.f32.mxu0 0.0
    %1649 = vmatmul.mubr.f32.gmra.mrb[0].mxu0 %v1582
    %v1650 = vpop.f32.mrb[0].mxu0
    %v1651 = vadd.f32 0.0, %v1650
    %v1652 = vpop.f32.mrb[0].mxu0
    %1653 = vdwg.mxu0
    %v1655 = vrot.slane %v1651, 4
    %1656 = vrot.lane.b32.xlu0 %v1655, 64
    %v1657 = vpop.permute.xlu0 %1656
    %v1659 = vadd.f32 %v187, %v1657
    %v1660 = vsub.f32 0.0, %v1578
    %v1661 = vmul.f32 %v1660, 1.442695
    %v1662 = vpow.pop %v1661
    %v1663 = vadd.f32 %v1662, 1.0
    %v1664 = vrcp.pop %v1663
    %v1665 = vmul.f32 1.0, %v1664
    %v1666 = vtanh.pop %v1578
    %v1668 = vrot.slane %v1449, 6
    %v1670 = vmul.f32 %v1665, %v1668
    %1672 = vrot.lane.b32.xlu0 %v1666, 96
    %v1673 = vpop.permute.xlu0 %1672
    %v1675 = vmul.f32 %v1665, %v1673
    %1677 = vrot.lane.b32.xlu0 %v1675, 16
    %v1678 = vpop.permute.xlu0 %1677
    %v1680 = vadd.f32 %v1670, %v1678
    %v1681 = vtanh.pop %v1680
    %1683 = vrot.lane.b32.xlu0 %v1681, 32
    %v1684 = vpop.permute.xlu0 %1683
    %v1686 = vmul.f32 %v1665, %v1684
    %v1687 = vsub.f32 0.0, %v1659
    %v1688 = vmul.f32 %v1687, 1.442695
    %v1689 = vpow.pop %v1688
    %v1690 = vadd.f32 %v1689, 1.0
    %v1691 = vrcp.pop %v1690
    %v1692 = vmul.f32 1.0, %v1691
    %v1693 = vtanh.pop %v1659
    %v1695 = vrot.slane %v1485, 2
    %v1697 = vmul.f32 %v1692, %v1695
    %1699 = vrot.lane.b32.xlu0 %v1693, 96
    %v1700 = vpop.permute.xlu0 %1699
    %v1702 = vmul.f32 %v1692, %v1700
    %1704 = vrot.lane.b32.xlu0 %v1702, 16
    %v1705 = vpop.permute.xlu0 %1704
    %v1707 = vadd.f32 %v1697, %v1705
    %v1708 = vtanh.pop %v1707
    %1710 = vrot.lane.b32.xlu0 %v1708, 32
    %v1711 = vpop.permute.xlu0 %1710
    %v1713 = vmul.f32 %v1692, %v1711
    %v1714 = vmul.f32 %v1686, %v990
    %v1715 = vmul.f32 %v1713, %v983
    %v1716 = vmul.f32 %v1707, %v983
    %1718 = vrot.lane.b32.xlu0 %v1714, 80
    %v1719 = vpop.permute.xlu0 %1718
    %1721 = vst.msk [vmem:[%s1005 - $0x2] sm:$0xc] %vm741, %v1719
    %1723 = vrot.lane.b32.xlu0 %v1715, 32
    %v1724 = vpop.permute.xlu0 %1723
    %1726 = vst.msk [vmem:[%s998 - $0x4] sm:$0x30] %vm748, %v1724
    %1727 = vst.msk [vmem:[#allocation2 + $0x3] sm:$0x4] %vm750, %v1719
    %1728 = vst.msk [vmem:[#allocation2 - $0x2] sm:$0x10] %vm752, %v1724
    %1729 = vst.msk [vmem:[%s496 + $0x2] sm:$0x8] %vm754, %v1719
    %1730 = vst.msk [vmem:[%s496 - $0x3] sm:$0x20] %vm756, %v1724
    %v1732 = vrot.slane %v1686, 2
    %1733 = vrot.lane.b32.xlu0 %v1732, 80
    %v1734 = vpop.permute.xlu0 %1733
    %v1735 = vsel %vm212, %v1734, 0
    %1737 = vmatprep.subr.mxu0 0.0
    %1738 = vmatpush1.xpose.msra.mxu0 %v217
    %1739 = vmatprep.subr.mxu0 0.0
    %1740 = vmatpush1.xpose.msra.mxu0 %v220
    %1741 = vmatprep.subr.mxu0 0.0
    %1742 = vmatpush1.xpose.msra.mxu0 %v223
    %1743 = vmatprep.subr.mxu0 0.0
    %1744 = vmatpush1.xpose.msra.mxu0 %v226
    %1745 = vmatprep.subr.mxu0 0.0
    %1746 = vmatpush1.xpose.msra.mxu0 %v229
    %1747 = vmatprep.subr.mxu0 0.0
    %1748 = vmatpush1.xpose.msra.mxu0 %v232
    %1749 = vmatprep.subr.mxu0 0.0
    %1750 = vmatpush1.xpose.msra.mxu0 %v235
    %1751 = vmatprep.subr.mxu0 0.0
    %1752 = vmatpush1.xpose.msra.mxu0 %v238
    %1753 = vmatprep.subr.mxu0 0.0
    %1754 = vmatpush1.xpose.msra.mxu0 0.0
    %1755 = vmatprep.subr.mxu0 0.0
    %1756 = vmatpush1.xpose.msra.mxu0 0.0
    %1757 = vmatprep.subr.mxu0 0.0
    %1758 = vmatpush1.xpose.msra.mxu0 0.0
    %1759 = vmatprep.subr.mxu0 0.0
    %1760 = vmatpush1.xpose.msra.mxu0 0.0
    %1761 = vmatprep.subr.mxu0 0.0
    %1762 = vmatpush1.xpose.msra.mxu0 0.0
    %1763 = vmatprep.subr.mxu0 0.0
    %1764 = vmatpush1.xpose.msra.mxu0 0.0
    %1765 = vmatprep.subr.mxu0 0.0
    %1766 = vmatpush1.xpose.msra.mxu0 0.0
    %1767 = vmatprep.subr.mxu0 0.0
    %1768 = vmatpush1.xpose.msra.mxu0 0.0
    %1769 = vmatprep.subr.mxu0 0.0
    %1770 = vmatpush1.xpose.msra.mxu0 0.0
    %1771 = vmatprep.subr.mxu0 0.0
    %1772 = vmatpush1.xpose.msra.mxu0 0.0
    %1773 = vmatprep.subr.mxu0 0.0
    %1774 = vmatpush1.xpose.msra.mxu0 0.0
    %1775 = vmatprep.subr.mxu0 0.0
    %1776 = vmatpush1.xpose.msra.mxu0 0.0
    %1777 = vmatprep.subr.mxu0 0.0
    %1778 = vmatpush1.xpose.msra.mxu0 0.0
    %1779 = vmatprep.subr.mxu0 0.0
    %1780 = vmatpush1.xpose.msra.mxu0 0.0
    %1781 = vmatprep.subr.mxu0 0.0
    %1782 = vmatpush1.xpose.msra.mxu0 0.0
    %1783 = vmatprep.subr.mxu0 0.0
    %1784 = vmatpush1.xpose.msra.mxu0 0.0
    %1785 = vmatprep.subr.mxu0 0.0
    %1786 = vmatpush1.xpose.msra.mxu0 0.0
    %1787 = vmatprep.subr.mxu0 0.0
    %1788 = vmatpush1.xpose.msra.mxu0 0.0
    %1789 = vmatprep.subr.mxu0 0.0
    %1790 = vmatpush1.xpose.msra.mxu0 0.0
    %1791 = vmatprep.subr.mxu0 0.0
    %1792 = vmatpush1.xpose.msra.mxu0 0.0
    %1793 = vmatprep.subr.mxu0 0.0
    %1794 = vmatpush1.xpose.msra.mxu0 0.0
    %1795 = vmatprep.subr.mxu0 0.0
    %1796 = vmatpush1.xpose.msra.mxu0 0.0
    %1797 = vmatprep.subr.mxu0 0.0
    %1798 = vmatpush1.xpose.msra.mxu0 0.0
    %1799 = vmatprep.subr.mxu0 0.0
    %1800 = vmatpush1.xpose.msra.mxu0 0.0
    %1801 = vmatprep.mubr.f32.mxu0 0.0
    %1802 = vmatmul.mubr.f32.gmra.mrb[0].mxu0 %v1735
    %v1803 = vpop.f32.mrb[0].mxu0
    %v1804 = vadd.f32 0.0, %v1803
    %v1805 = vpop.f32.mrb[0].mxu0
    %1806 = vdwg.mxu0
    %v1808 = vrot.slane %v1804, 4
    %v1810 = vadd.f32 %v192, %v1808
    %v1811 = vrot.slane %v1715, 4
    %1812 = vrot.lane.b32.xlu0 %v1811, 16
    %v1813 = vpop.permute.xlu0 %1812
    %v1814 = vsel %vm212, %v1813, 0
    %1816 = vmatprep.subr.mxu0 0.0
    %1817 = vmatpush1.xpose.msra.mxu0 %v312
    %1818 = vmatprep.subr.mxu0 0.0
    %1819 = vmatpush1.xpose.msra.mxu0 %v315
    %1820 = vmatprep.subr.mxu0 0.0
    %1821 = vmatpush1.xpose.msra.mxu0 %v318
    %1822 = vmatprep.subr.mxu0 0.0
    %1823 = vmatpush1.xpose.msra.mxu0 %v321
    %1824 = vmatprep.subr.mxu0 0.0
    %1825 = vmatpush1.xpose.msra.mxu0 %v324
    %1826 = vmatprep.subr.mxu0 0.0
    %1827 = vmatpush1.xpose.msra.mxu0 %v327
    %1828 = vmatprep.subr.mxu0 0.0
    %1829 = vmatpush1.xpose.msra.mxu0 %v330
    %1830 = vmatprep.subr.mxu0 0.0
    %1831 = vmatpush1.xpose.msra.mxu0 %v333
    %1832 = vmatprep.subr.mxu0 0.0
    %1833 = vmatpush1.xpose.msra.mxu0 0.0
    %1834 = vmatprep.subr.mxu0 0.0
    %1835 = vmatpush1.xpose.msra.mxu0 0.0
    %1836 = vmatprep.subr.mxu0 0.0
    %1837 = vmatpush1.xpose.msra.mxu0 0.0
    %1838 = vmatprep.subr.mxu0 0.0
    %1839 = vmatpush1.xpose.msra.mxu0 0.0
    %1840 = vmatprep.subr.mxu0 0.0
    %1841 = vmatpush1.xpose.msra.mxu0 0.0
    %1842 = vmatprep.subr.mxu0 0.0
    %1843 = vmatpush1.xpose.msra.mxu0 0.0
    %1844 = vmatprep.subr.mxu0 0.0
    %1845 = vmatpush1.xpose.msra.mxu0 0.0
    %1846 = vmatprep.subr.mxu0 0.0
    %1847 = vmatpush1.xpose.msra.mxu0 0.0
    %1848 = vmatprep.subr.mxu0 0.0
    %1849 = vmatpush1.xpose.msra.mxu0 0.0
    %1850 = vmatprep.subr.mxu0 0.0
    %1851 = vmatpush1.xpose.msra.mxu0 0.0
    %1852 = vmatprep.subr.mxu0 0.0
    %1853 = vmatpush1.xpose.msra.mxu0 0.0
    %1854 = vmatprep.subr.mxu0 0.0
    %1855 = vmatpush1.xpose.msra.mxu0 0.0
    %1856 = vmatprep.subr.mxu0 0.0
    %1857 = vmatpush1.xpose.msra.mxu0 0.0
    %1858 = vmatprep.subr.mxu0 0.0
    %1859 = vmatpush1.xpose.msra.mxu0 0.0
    %1860 = vmatprep.subr.mxu0 0.0
    %1861 = vmatpush1.xpose.msra.mxu0 0.0
    %1862 = vmatprep.subr.mxu0 0.0
    %1863 = vmatpush1.xpose.msra.mxu0 0.0
    %1864 = vmatprep.subr.mxu0 0.0
    %1865 = vmatpush1.xpose.msra.mxu0 0.0
    %1866 = vmatprep.subr.mxu0 0.0
    %1867 = vmatpush1.xpose.msra.mxu0 0.0
    %1868 = vmatprep.subr.mxu0 0.0
    %1869 = vmatpush1.xpose.msra.mxu0 0.0
    %1870 = vmatprep.subr.mxu0 0.0
    %1871 = vmatpush1.xpose.msra.mxu0 0.0
    %1872 = vmatprep.subr.mxu0 0.0
    %1873 = vmatpush1.xpose.msra.mxu0 0.0
    %1874 = vmatprep.subr.mxu0 0.0
    %1875 = vmatpush1.xpose.msra.mxu0 0.0
    %1876 = vmatprep.subr.mxu0 0.0
    %1877 = vmatpush1.xpose.msra.mxu0 0.0
    %1878 = vmatprep.subr.mxu0 0.0
    %1879 = vmatpush1.xpose.msra.mxu0 0.0
    %1880 = vmatprep.mubr.f32.mxu0 0.0
    %1881 = vmatmul.mubr.f32.gmra.mrb[0].mxu0 %v1814
    %v1882 = vpop.f32.mrb[0].mxu0
    %v1883 = vadd.f32 0.0, %v1882
    %v1884 = vpop.f32.mrb[0].mxu0
    %1885 = vdwg.mxu0
    %v1887 = vrot.slane %v1883, 6
    %1888 = vrot.lane.b32.xlu0 %v1887, 64
    %v1889 = vpop.permute.xlu0 %1888
    %v1891 = vadd.f32 %v187, %v1889
    %v1892 = vsub.f32 0.0, %v1810
    %v1893 = vmul.f32 %v1892, 1.442695
    %v1894 = vpow.pop %v1893
    %v1895 = vadd.f32 %v1894, 1.0
    %v1896 = vrcp.pop %v1895
    %v1897 = vmul.f32 1.0, %v1896
    %v1898 = vtanh.pop %v1810
    %v1900 = vrot.slane %v1680, 6
    %v1902 = vmul.f32 %v1897, %v1900
    %1904 = vrot.lane.b32.xlu0 %v1898, 96
    %v1905 = vpop.permute.xlu0 %1904
    %v1907 = vmul.f32 %v1897, %v1905
    %1909 = vrot.lane.b32.xlu0 %v1907, 16
    %v1910 = vpop.permute.xlu0 %1909
    %v1912 = vadd.f32 %v1902, %v1910
    %v1913 = vtanh.pop %v1912
    %1915 = vrot.lane.b32.xlu0 %v1913, 32
    %v1916 = vpop.permute.xlu0 %1915
    %v1918 = vmul.f32 %v1897, %v1916
    %v1919 = vsub.f32 0.0, %v1891
    %v1920 = vmul.f32 %v1919, 1.442695
    %v1921 = vpow.pop %v1920
    %v1922 = vadd.f32 %v1921, 1.0
    %v1923 = vrcp.pop %v1922
    %v1924 = vmul.f32 1.0, %v1923
    %v1925 = vtanh.pop %v1891
    %v1927 = vrot.slane %v1716, 2
    %v1929 = vmul.f32 %v1924, %v1927
    %1931 = vrot.lane.b32.xlu0 %v1925, 96
    %v1932 = vpop.permute.xlu0 %1931
    %v1934 = vmul.f32 %v1924, %v1932
    %1936 = vrot.lane.b32.xlu0 %v1934, 16
    %v1937 = vpop.permute.xlu0 %1936
    %v1939 = vadd.f32 %v1929, %v1937
    %v1940 = vtanh.pop %v1939
    %1942 = vrot.lane.b32.xlu0 %v1940, 32
    %v1943 = vpop.permute.xlu0 %1942
    %v1945 = vmul.f32 %v1924, %v1943
    %v1946 = vmul.f32 %v1918, %v732
    %v1947 = vmul.f32 %v1945, %v725
    %v1948 = vmul.f32 %v1939, %v725
    %1950 = vrot.lane.b32.xlu0 %v1946, 80
    %v1951 = vpop.permute.xlu0 %1950
    %1953 = vst.msk [vmem:[%s747 - $0x4] sm:$0x30] %vm999, %v1951
    %1955 = vrot.lane.b32.xlu0 %v1947, 32
    %v1956 = vpop.permute.xlu0 %1955
    %1958 = vst.msk [vmem:[%s740 - $0x2] sm:$0xc] %vm1006, %v1956
    %1959 = vst.msk [vmem:[#allocation2 + $0x2] sm:$0x10] %vm1008, %v1951
    %1960 = vst.msk [vmem:[#allocation2 - $0x1] sm:$0x4] %vm1010, %v1956
    %1961 = vst.msk [vmem:[%s496 + $0x1] sm:$0x20] %vm1012, %v1951
    %1962 = vst.msk [vmem:[%s496 - $0x2] sm:$0x8] %vm1014, %v1956
    %v1964 = vrot.slane %v1918, 4
    %1965 = vrot.lane.b32.xlu0 %v1964, 80
    %v1966 = vpop.permute.xlu0 %1965
    %v1967 = vsel %vm212, %v1966, 0
    %1969 = vmatprep.subr.mxu0 0.0
    %1970 = vmatpush1.xpose.msra.mxu0 %v217
    %1971 = vmatprep.subr.mxu0 0.0
    %1972 = vmatpush1.xpose.msra.mxu0 %v220
    %1973 = vmatprep.subr.mxu0 0.0
    %1974 = vmatpush1.xpose.msra.mxu0 %v223
    %1975 = vmatprep.subr.mxu0 0.0
    %1976 = vmatpush1.xpose.msra.mxu0 %v226
    %1977 = vmatprep.subr.mxu0 0.0
    %1978 = vmatpush1.xpose.msra.mxu0 %v229
    %1979 = vmatprep.subr.mxu0 0.0
    %1980 = vmatpush1.xpose.msra.mxu0 %v232
    %1981 = vmatprep.subr.mxu0 0.0
    %1982 = vmatpush1.xpose.msra.mxu0 %v235
    %1983 = vmatprep.subr.mxu0 0.0
    %1984 = vmatpush1.xpose.msra.mxu0 %v238
    %1985 = vmatprep.subr.mxu0 0.0
    %1986 = vmatpush1.xpose.msra.mxu0 0.0
    %1987 = vmatprep.subr.mxu0 0.0
    %1988 = vmatpush1.xpose.msra.mxu0 0.0
    %1989 = vmatprep.subr.mxu0 0.0
    %1990 = vmatpush1.xpose.msra.mxu0 0.0
    %1991 = vmatprep.subr.mxu0 0.0
    %1992 = vmatpush1.xpose.msra.mxu0 0.0
    %1993 = vmatprep.subr.mxu0 0.0
    %1994 = vmatpush1.xpose.msra.mxu0 0.0
    %1995 = vmatprep.subr.mxu0 0.0
    %1996 = vmatpush1.xpose.msra.mxu0 0.0
    %1997 = vmatprep.subr.mxu0 0.0
    %1998 = vmatpush1.xpose.msra.mxu0 0.0
    %1999 = vmatprep.subr.mxu0 0.0
    %2000 = vmatpush1.xpose.msra.mxu0 0.0
    %2001 = vmatprep.subr.mxu0 0.0
    %2002 = vmatpush1.xpose.msra.mxu0 0.0
    %2003 = vmatprep.subr.mxu0 0.0
    %2004 = vmatpush1.xpose.msra.mxu0 0.0
    %2005 = vmatprep.subr.mxu0 0.0
    %2006 = vmatpush1.xpose.msra.mxu0 0.0
    %2007 = vmatprep.subr.mxu0 0.0
    %2008 = vmatpush1.xpose.msra.mxu0 0.0
    %2009 = vmatprep.subr.mxu0 0.0
    %2010 = vmatpush1.xpose.msra.mxu0 0.0
    %2011 = vmatprep.subr.mxu0 0.0
    %2012 = vmatpush1.xpose.msra.mxu0 0.0
    %2013 = vmatprep.subr.mxu0 0.0
    %2014 = vmatpush1.xpose.msra.mxu0 0.0
    %2015 = vmatprep.subr.mxu0 0.0
    %2016 = vmatpush1.xpose.msra.mxu0 0.0
    %2017 = vmatprep.subr.mxu0 0.0
    %2018 = vmatpush1.xpose.msra.mxu0 0.0
    %2019 = vmatprep.subr.mxu0 0.0
    %2020 = vmatpush1.xpose.msra.mxu0 0.0
    %2021 = vmatprep.subr.mxu0 0.0
    %2022 = vmatpush1.xpose.msra.mxu0 0.0
    %2023 = vmatprep.subr.mxu0 0.0
    %2024 = vmatpush1.xpose.msra.mxu0 0.0
    %2025 = vmatprep.subr.mxu0 0.0
    %2026 = vmatpush1.xpose.msra.mxu0 0.0
    %2027 = vmatprep.subr.mxu0 0.0
    %2028 = vmatpush1.xpose.msra.mxu0 0.0
    %2029 = vmatprep.subr.mxu0 0.0
    %2030 = vmatpush1.xpose.msra.mxu0 0.0
    %2031 = vmatprep.subr.mxu0 0.0
    %2032 = vmatpush1.xpose.msra.mxu0 0.0
    %2033 = vmatprep.mubr.f32.mxu0 0.0
    %2034 = vmatmul.mubr.f32.gmra.mrb[0].mxu0 %v1967
    %v2035 = vpop.f32.mrb[0].mxu0
    %v2036 = vadd.f32 0.0, %v2035
    %v2037 = vpop.f32.mrb[0].mxu0
    %2038 = vdwg.mxu0
    %v2040 = vrot.slane %v2036, 2
    %v2042 = vadd.f32 %v192, %v2040
    %v2043 = vrot.slane %v1947, 2
    %2044 = vrot.lane.b32.xlu0 %v2043, 16
    %v2045 = vpop.permute.xlu0 %2044
    %v2046 = vsel %vm212, %v2045, 0
    %2048 = vmatprep.subr.mxu0 0.0
    %2049 = vmatpush1.xpose.msra.mxu0 %v312
    %2050 = vmatprep.subr.mxu0 0.0
    %2051 = vmatpush1.xpose.msra.mxu0 %v315
    %2052 = vmatprep.subr.mxu0 0.0
    %2053 = vmatpush1.xpose.msra.mxu0 %v318
    %2054 = vmatprep.subr.mxu0 0.0
    %2055 = vmatpush1.xpose.msra.mxu0 %v321
    %2056 = vmatprep.subr.mxu0 0.0
    %2057 = vmatpush1.xpose.msra.mxu0 %v324
    %2058 = vmatprep.subr.mxu0 0.0
    %2059 = vmatpush1.xpose.msra.mxu0 %v327
    %2060 = vmatprep.subr.mxu0 0.0
    %2061 = vmatpush1.xpose.msra.mxu0 %v330
    %2062 = vmatprep.subr.mxu0 0.0
    %2063 = vmatpush1.xpose.msra.mxu0 %v333
    %2064 = vmatprep.subr.mxu0 0.0
    %2065 = vmatpush1.xpose.msra.mxu0 0.0
    %2066 = vmatprep.subr.mxu0 0.0
    %2067 = vmatpush1.xpose.msra.mxu0 0.0
    %2068 = vmatprep.subr.mxu0 0.0
    %2069 = vmatpush1.xpose.msra.mxu0 0.0
    %2070 = vmatprep.subr.mxu0 0.0
    %2071 = vmatpush1.xpose.msra.mxu0 0.0
    %2072 = vmatprep.subr.mxu0 0.0
    %2073 = vmatpush1.xpose.msra.mxu0 0.0
    %2074 = vmatprep.subr.mxu0 0.0
    %2075 = vmatpush1.xpose.msra.mxu0 0.0
    %2076 = vmatprep.subr.mxu0 0.0
    %2077 = vmatpush1.xpose.msra.mxu0 0.0
    %2078 = vmatprep.subr.mxu0 0.0
    %2079 = vmatpush1.xpose.msra.mxu0 0.0
    %2080 = vmatprep.subr.mxu0 0.0
    %2081 = vmatpush1.xpose.msra.mxu0 0.0
    %2082 = vmatprep.subr.mxu0 0.0
    %2083 = vmatpush1.xpose.msra.mxu0 0.0
    %2084 = vmatprep.subr.mxu0 0.0
    %2085 = vmatpush1.xpose.msra.mxu0 0.0
    %2086 = vmatprep.subr.mxu0 0.0
    %2087 = vmatpush1.xpose.msra.mxu0 0.0
    %2088 = vmatprep.subr.mxu0 0.0
    %2089 = vmatpush1.xpose.msra.mxu0 0.0
    %2090 = vmatprep.subr.mxu0 0.0
    %2091 = vmatpush1.xpose.msra.mxu0 0.0
    %2092 = vmatprep.subr.mxu0 0.0
    %2093 = vmatpush1.xpose.msra.mxu0 0.0
    %2094 = vmatprep.subr.mxu0 0.0
    %2095 = vmatpush1.xpose.msra.mxu0 0.0
    %2096 = vmatprep.subr.mxu0 0.0
    %2097 = vmatpush1.xpose.msra.mxu0 0.0
    %2098 = vmatprep.subr.mxu0 0.0
    %2099 = vmatpush1.xpose.msra.mxu0 0.0
    %2100 = vmatprep.subr.mxu0 0.0
    %2101 = vmatpush1.xpose.msra.mxu0 0.0
    %2102 = vmatprep.subr.mxu0 0.0
    %2103 = vmatpush1.xpose.msra.mxu0 0.0
    %2104 = vmatprep.subr.mxu0 0.0
    %2105 = vmatpush1.xpose.msra.mxu0 0.0
    %2106 = vmatprep.subr.mxu0 0.0
    %2107 = vmatpush1.xpose.msra.mxu0 0.0
    %2108 = vmatprep.subr.mxu0 0.0
    %2109 = vmatpush1.xpose.msra.mxu0 0.0
    %2110 = vmatprep.subr.mxu0 0.0
    %2111 = vmatpush1.xpose.msra.mxu0 0.0
    %2112 = vmatprep.mubr.f32.mxu0 0.0
    %2113 = vmatmul.mubr.f32.gmra.mrb[0].mxu0 %v2046
    %v2114 = vpop.f32.mrb[0].mxu0
    %v2115 = vadd.f32 0.0, %v2114
    %v2116 = vpop.f32.mrb[0].mxu0
    %2117 = vdwg.mxu0
    %2119 = vrot.lane.b32.xlu0 %v2115, 64
    %v2120 = vpop.permute.xlu0 %2119
    %v2122 = vadd.f32 %v187, %v2120
    %v2123 = vsub.f32 0.0, %v2042
    %v2124 = vmul.f32 %v2123, 1.442695
    %v2125 = vpow.pop %v2124
    %v2126 = vadd.f32 %v2125, 1.0
    %v2127 = vrcp.pop %v2126
    %v2128 = vmul.f32 1.0, %v2127
    %v2129 = vtanh.pop %v2042
    %v2131 = vrot.slane %v1912, 6
    %v2133 = vmul.f32 %v2128, %v2131
    %2135 = vrot.lane.b32.xlu0 %v2129, 96
    %v2136 = vpop.permute.xlu0 %2135
    %v2138 = vmul.f32 %v2128, %v2136
    %2140 = vrot.lane.b32.xlu0 %v2138, 16
    %v2141 = vpop.permute.xlu0 %2140
    %v2143 = vadd.f32 %v2133, %v2141
    %v2144 = vtanh.pop %v2143
    %2146 = vrot.lane.b32.xlu0 %v2144, 32
    %v2147 = vpop.permute.xlu0 %2146
    %v2149 = vmul.f32 %v2128, %v2147
    %v2150 = vsub.f32 0.0, %v2122
    %v2151 = vmul.f32 %v2150, 1.442695
    %v2152 = vpow.pop %v2151
    %v2153 = vadd.f32 %v2152, 1.0
    %v2154 = vrcp.pop %v2153
    %v2155 = vmul.f32 1.0, %v2154
    %v2156 = vtanh.pop %v2122
    %v2158 = vrot.slane %v1948, 2
    %v2160 = vmul.f32 %v2155, %v2158
    %2162 = vrot.lane.b32.xlu0 %v2156, 96
    %v2163 = vpop.permute.xlu0 %2162
    %v2165 = vmul.f32 %v2155, %v2163
    %2167 = vrot.lane.b32.xlu0 %v2165, 16
    %v2168 = vpop.permute.xlu0 %2167
    %v2170 = vadd.f32 %v2160, %v2168
    %v2171 = vtanh.pop %v2170
    %2173 = vrot.lane.b32.xlu0 %v2171, 32
    %v2174 = vpop.permute.xlu0 %2173
    %v2176 = vmul.f32 %v2155, %v2174
    %v2177 = vmul.f32 %v2149, %v475
    %v2178 = vmul.f32 %v2176, %v468
    %2180 = vrot.lane.b32.xlu0 %v2177, 80
    %v2181 = vpop.permute.xlu0 %2180
    %2183 = vst.msk [vmem:[%s489 - $0x6] sm:$0xc0] %vm1255, %v2181
    %2185 = vrot.lane.b32.xlu0 %v2178, 32
    %v2186 = vpop.permute.xlu0 %2185
    %2188 = vst.msk [vmem:[#allocation3] sm:$0x3] %vm1262, %v2186
    %2189 = vst.msk [vmem:[#allocation2 + $0x1] sm:$0x40] %vm1264, %v2181
    %2190 = vst.msk [vmem:[#allocation2] sm:$0x1] %vm1266, %v2186
    %2191 = vst.msk [vmem:[%s496] sm:$0x80] %vm1268, %v2181
    %2192 = vst.msk [vmem:[%s496 - $0x1] sm:$0x2] %vm1270, %v2186
    %v2193 = vld [vmem:[%s9] sm:$0x1]
    %v2194 = vld [vmem:[#allocation2] sm:$0xff]
    %v2195 = vld [vmem:[%s6] sm:$0xf]
    %v2196 = vld [vmem:[%s7] sm:$0x1]
    %v2197 = vlaneseq
    %v2198 = vshrl.u32 %v2197, 7
    %v2199 = vsub.s32 0, %v2198
    %v2200 = vrot.slane %v2196, %v2199
    %v2202 = vsel %vm65, %v2194, 0
    %v2205 = vsel %vm65, %v2195, 0
    %2207 = vmatprep.subr.mxu0 0.0
    %2208 = vmatpush1.xpose.msra.mxu0 %v2205
    %2209 = vmatprep.subr.mxu0 0.0
    %2210 = vmatpush1.xpose.msra.mxu0 0.0
    %2211 = vmatprep.subr.mxu0 0.0
    %2212 = vmatpush1.xpose.msra.mxu0 0.0
    %2213 = vmatprep.subr.mxu0 0.0
    %2214 = vmatpush1.xpose.msra.mxu0 0.0
    %2215 = vmatprep.subr.mxu0 0.0
    %2216 = vmatpush1.xpose.msra.mxu0 0.0
    %2217 = vmatprep.subr.mxu0 0.0
    %2218 = vmatpush1.xpose.msra.mxu0 0.0
    %2219 = vmatprep.subr.mxu0 0.0
    %2220 = vmatpush1.xpose.msra.mxu0 0.0
    %2221 = vmatprep.subr.mxu0 0.0
    %2222 = vmatpush1.xpose.msra.mxu0 0.0
    %2223 = vmatprep.subr.mxu0 0.0
    %2224 = vmatpush1.xpose.msra.mxu0 0.0
    %2225 = vmatprep.subr.mxu0 0.0
    %2226 = vmatpush1.xpose.msra.mxu0 0.0
    %2227 = vmatprep.subr.mxu0 0.0
    %2228 = vmatpush1.xpose.msra.mxu0 0.0
    %2229 = vmatprep.subr.mxu0 0.0
    %2230 = vmatpush1.xpose.msra.mxu0 0.0
    %2231 = vmatprep.subr.mxu0 0.0
    %2232 = vmatpush1.xpose.msra.mxu0 0.0
    %2233 = vmatprep.subr.mxu0 0.0
    %2234 = vmatpush1.xpose.msra.mxu0 0.0
    %2235 = vmatprep.subr.mxu0 0.0
    %2236 = vmatpush1.xpose.msra.mxu0 0.0
    %2237 = vmatprep.subr.mxu0 0.0
    %2238 = vmatpush1.xpose.msra.mxu0 0.0
    %2239 = vmatprep.subr.mxu0 0.0
    %2240 = vmatpush1.xpose.msra.mxu0 0.0
    %2241 = vmatprep.subr.mxu0 0.0
    %2242 = vmatpush1.xpose.msra.mxu0 0.0
    %2243 = vmatprep.subr.mxu0 0.0
    %2244 = vmatpush1.xpose.msra.mxu0 0.0
    %2245 = vmatprep.subr.mxu0 0.0
    %2246 = vmatpush1.xpose.msra.mxu0 0.0
    %2247 = vmatprep.subr.mxu0 0.0
    %2248 = vmatpush1.xpose.msra.mxu0 0.0
    %2249 = vmatprep.subr.mxu0 0.0
    %2250 = vmatpush1.xpose.msra.mxu0 0.0
    %2251 = vmatprep.subr.mxu0 0.0
    %2252 = vmatpush1.xpose.msra.mxu0 0.0
    %2253 = vmatprep.subr.mxu0 0.0
    %2254 = vmatpush1.xpose.msra.mxu0 0.0
    %2255 = vmatprep.subr.mxu0 0.0
    %2256 = vmatpush1.xpose.msra.mxu0 0.0
    %2257 = vmatprep.subr.mxu0 0.0
    %2258 = vmatpush1.xpose.msra.mxu0 0.0
    %2259 = vmatprep.subr.mxu0 0.0
    %2260 = vmatpush1.xpose.msra.mxu0 0.0
    %2261 = vmatprep.subr.mxu0 0.0
    %2262 = vmatpush1.xpose.msra.mxu0 0.0
    %2263 = vmatprep.subr.mxu0 0.0
    %2264 = vmatpush1.xpose.msra.mxu0 0.0
    %2265 = vmatprep.subr.mxu0 0.0
    %2266 = vmatpush1.xpose.msra.mxu0 0.0
    %2267 = vmatprep.subr.mxu0 0.0
    %2268 = vmatpush1.xpose.msra.mxu0 0.0
    %2269 = vmatprep.subr.mxu0 0.0
    %2270 = vmatpush1.xpose.msra.mxu0 0.0
    %2271 = vmatprep.mubr.f32.mxu0 0.0
    %2272 = vmatmul.mubr.f32.gmra.mrb[0].mxu0 %v2202
    %v2273 = vpop.f32.mrb[0].mxu0
    %v2274 = vadd.f32 %v2200, %v2273
    %v2275 = vpop.f32.mrb[0].mxu0
    %2276 = vdwg.mxu0
    %v2277 = vld [vmem:[%s6 + $0x10] sm:$0xf]
    %v2278 = vld [vmem:[%s7 + $0x4] sm:$0x1]
    %v2279 = vlaneseq
    %v2280 = vshrl.u32 %v2279, 7
    %v2281 = vsub.s32 0, %v2280
    %v2282 = vrot.slane %v2278, %v2281
    %v2284 = vsel %vm65, %v2277, 0
    %2286 = vmatprep.subr.mxu0 0.0
    %2287 = vmatpush1.xpose.msra.mxu0 %v2284
    %2288 = vmatprep.subr.mxu0 0.0
    %2289 = vmatpush1.xpose.msra.mxu0 0.0
    %2290 = vmatprep.subr.mxu0 0.0
    %2291 = vmatpush1.xpose.msra.mxu0 0.0
    %2292 = vmatprep.subr.mxu0 0.0
    %2293 = vmatpush1.xpose.msra.mxu0 0.0
    %2294 = vmatprep.subr.mxu0 0.0
    %2295 = vmatpush1.xpose.msra.mxu0 0.0
    %2296 = vmatprep.subr.mxu0 0.0
    %2297 = vmatpush1.xpose.msra.mxu0 0.0
    %2298 = vmatprep.subr.mxu0 0.0
    %2299 = vmatpush1.xpose.msra.mxu0 0.0
    %2300 = vmatprep.subr.mxu0 0.0
    %2301 = vmatpush1.xpose.msra.mxu0 0.0
    %2302 = vmatprep.subr.mxu0 0.0
    %2303 = vmatpush1.xpose.msra.mxu0 0.0
    %2304 = vmatprep.subr.mxu0 0.0
    %2305 = vmatpush1.xpose.msra.mxu0 0.0
    %2306 = vmatprep.subr.mxu0 0.0
    %2307 = vmatpush1.xpose.msra.mxu0 0.0
    %2308 = vmatprep.subr.mxu0 0.0
    %2309 = vmatpush1.xpose.msra.mxu0 0.0
    %2310 = vmatprep.subr.mxu0 0.0
    %2311 = vmatpush1.xpose.msra.mxu0 0.0
    %2312 = vmatprep.subr.mxu0 0.0
    %2313 = vmatpush1.xpose.msra.mxu0 0.0
    %2314 = vmatprep.subr.mxu0 0.0
    %2315 = vmatpush1.xpose.msra.mxu0 0.0
    %2316 = vmatprep.subr.mxu0 0.0
    %2317 = vmatpush1.xpose.msra.mxu0 0.0
    %2318 = vmatprep.subr.mxu0 0.0
    %2319 = vmatpush1.xpose.msra.mxu0 0.0
    %2320 = vmatprep.subr.mxu0 0.0
    %2321 = vmatpush1.xpose.msra.mxu0 0.0
    %2322 = vmatprep.subr.mxu0 0.0
    %2323 = vmatpush1.xpose.msra.mxu0 0.0
    %2324 = vmatprep.subr.mxu0 0.0
    %2325 = vmatpush1.xpose.msra.mxu0 0.0
    %2326 = vmatprep.subr.mxu0 0.0
    %2327 = vmatpush1.xpose.msra.mxu0 0.0
    %2328 = vmatprep.subr.mxu0 0.0
    %2329 = vmatpush1.xpose.msra.mxu0 0.0
    %2330 = vmatprep.subr.mxu0 0.0
    %2331 = vmatpush1.xpose.msra.mxu0 0.0
    %2332 = vmatprep.subr.mxu0 0.0
    %2333 = vmatpush1.xpose.msra.mxu0 0.0
    %2334 = vmatprep.subr.mxu0 0.0
    %2335 = vmatpush1.xpose.msra.mxu0 0.0
    %2336 = vmatprep.subr.mxu0 0.0
    %2337 = vmatpush1.xpose.msra.mxu0 0.0
    %2338 = vmatprep.subr.mxu0 0.0
    %2339 = vmatpush1.xpose.msra.mxu0 0.0
    %2340 = vmatprep.subr.mxu0 0.0
    %2341 = vmatpush1.xpose.msra.mxu0 0.0
    %2342 = vmatprep.subr.mxu0 0.0
    %2343 = vmatpush1.xpose.msra.mxu0 0.0
    %2344 = vmatprep.subr.mxu0 0.0
    %2345 = vmatpush1.xpose.msra.mxu0 0.0
    %2346 = vmatprep.subr.mxu0 0.0
    %2347 = vmatpush1.xpose.msra.mxu0 0.0
    %2348 = vmatprep.subr.mxu0 0.0
    %2349 = vmatpush1.xpose.msra.mxu0 0.0
    %2350 = vmatprep.mubr.f32.mxu0 0.0
    %2351 = vmatmul.mubr.f32.gmra.mrb[0].mxu0 %v2202
    %v2352 = vpop.f32.mrb[0].mxu0
    %v2353 = vadd.f32 %v2282, %v2352
    %v2354 = vpop.f32.mrb[0].mxu0
    %2355 = vdwg.mxu0
    %v2356 = vld [vmem:[%s6 + $0x20] sm:$0xf]
    %v2357 = vld [vmem:[%s7 + $0x8] sm:$0x1]
    %v2358 = vlaneseq
    %v2359 = vshrl.u32 %v2358, 7
    %v2360 = vsub.s32 0, %v2359
    %v2361 = vrot.slane %v2357, %v2360
    %v2363 = vsel %vm65, %v2356, 0
    %2365 = vmatprep.subr.mxu0 0.0
    %2366 = vmatpush1.xpose.msra.mxu0 %v2363
    %2367 = vmatprep.subr.mxu0 0.0
    %2368 = vmatpush1.xpose.msra.mxu0 0.0
    %2369 = vmatprep.subr.mxu0 0.0
    %2370 = vmatpush1.xpose.msra.mxu0 0.0
    %2371 = vmatprep.subr.mxu0 0.0
    %2372 = vmatpush1.xpose.msra.mxu0 0.0
    %2373 = vmatprep.subr.mxu0 0.0
    %2374 = vmatpush1.xpose.msra.mxu0 0.0
    %2375 = vmatprep.subr.mxu0 0.0
    %2376 = vmatpush1.xpose.msra.mxu0 0.0
    %2377 = vmatprep.subr.mxu0 0.0
    %2378 = vmatpush1.xpose.msra.mxu0 0.0
    %2379 = vmatprep.subr.mxu0 0.0
    %2380 = vmatpush1.xpose.msra.mxu0 0.0
    %2381 = vmatprep.subr.mxu0 0.0
    %2382 = vmatpush1.xpose.msra.mxu0 0.0
    %2383 = vmatprep.subr.mxu0 0.0
    %2384 = vmatpush1.xpose.msra.mxu0 0.0
    %2385 = vmatprep.subr.mxu0 0.0
    %2386 = vmatpush1.xpose.msra.mxu0 0.0
    %2387 = vmatprep.subr.mxu0 0.0
    %2388 = vmatpush1.xpose.msra.mxu0 0.0
    %2389 = vmatprep.subr.mxu0 0.0
    %2390 = vmatpush1.xpose.msra.mxu0 0.0
    %2391 = vmatprep.subr.mxu0 0.0
    %2392 = vmatpush1.xpose.msra.mxu0 0.0
    %2393 = vmatprep.subr.mxu0 0.0
    %2394 = vmatpush1.xpose.msra.mxu0 0.0
    %2395 = vmatprep.subr.mxu0 0.0
    %2396 = vmatpush1.xpose.msra.mxu0 0.0
    %2397 = vmatprep.subr.mxu0 0.0
    %2398 = vmatpush1.xpose.msra.mxu0 0.0
    %2399 = vmatprep.subr.mxu0 0.0
    %2400 = vmatpush1.xpose.msra.mxu0 0.0
    %2401 = vmatprep.subr.mxu0 0.0
    %2402 = vmatpush1.xpose.msra.mxu0 0.0
    %2403 = vmatprep.subr.mxu0 0.0
    %2404 = vmatpush1.xpose.msra.mxu0 0.0
    %2405 = vmatprep.subr.mxu0 0.0
    %2406 = vmatpush1.xpose.msra.mxu0 0.0
    %2407 = vmatprep.subr.mxu0 0.0
    %2408 = vmatpush1.xpose.msra.mxu0 0.0
    %2409 = vmatprep.subr.mxu0 0.0
    %2410 = vmatpush1.xpose.msra.mxu0 0.0
    %2411 = vmatprep.subr.mxu0 0.0
    %2412 = vmatpush1.xpose.msra.mxu0 0.0
    %2413 = vmatprep.subr.mxu0 0.0
    %2414 = vmatpush1.xpose.msra.mxu0 0.0
    %2415 = vmatprep.subr.mxu0 0.0
    %2416 = vmatpush1.xpose.msra.mxu0 0.0
    %2417 = vmatprep.subr.mxu0 0.0
    %2418 = vmatpush1.xpose.msra.mxu0 0.0
    %2419 = vmatprep.subr.mxu0 0.0
    %2420 = vmatpush1.xpose.msra.mxu0 0.0
    %2421 = vmatprep.subr.mxu0 0.0
    %2422 = vmatpush1.xpose.msra.mxu0 0.0
    %2423 = vmatprep.subr.mxu0 0.0
    %2424 = vmatpush1.xpose.msra.mxu0 0.0
    %2425 = vmatprep.subr.mxu0 0.0
    %2426 = vmatpush1.xpose.msra.mxu0 0.0
    %2427 = vmatprep.subr.mxu0 0.0
    %2428 = vmatpush1.xpose.msra.mxu0 0.0
    %2429 = vmatprep.mubr.f32.mxu0 0.0
    %2430 = vmatmul.mubr.f32.gmra.mrb[0].mxu0 %v2202
    %v2431 = vpop.f32.mrb[0].mxu0
    %v2432 = vadd.f32 %v2361, %v2431
    %v2433 = vpop.f32.mrb[0].mxu0
    %2434 = vdwg.mxu0
    %v2435 = vmul.f32 %v2274, 0.5
    %vm2436 = vcmask 31744
    %v2438 = vsel %vm2436, %v2435, 0
    %v2441 = vsel %vm2436, %v2353, 0
    %2443 = vmatprep.subr.mxu0 0.0
    %2444 = vmatpush1.xpose.msra.mxu0 %v2441
    %2445 = vmatprep.subr.mxu0 0.0
    %2446 = vmatpush1.xpose.msra.mxu0 0.0
    %2447 = vmatprep.subr.mxu0 0.0
    %2448 = vmatpush1.xpose.msra.mxu0 0.0
    %2449 = vmatprep.subr.mxu0 0.0
    %2450 = vmatpush1.xpose.msra.mxu0 0.0
    %2451 = vmatprep.subr.mxu0 0.0
    %2452 = vmatpush1.xpose.msra.mxu0 0.0
    %2453 = vmatprep.subr.mxu0 0.0
    %2454 = vmatpush1.xpose.msra.mxu0 0.0
    %2455 = vmatprep.subr.mxu0 0.0
    %2456 = vmatpush1.xpose.msra.mxu0 0.0
    %2457 = vmatprep.subr.mxu0 0.0
    %2458 = vmatpush1.xpose.msra.mxu0 0.0
    %2459 = vmatprep.subr.mxu0 0.0
    %2460 = vmatpush1.xpose.msra.mxu0 0.0
    %2461 = vmatprep.subr.mxu0 0.0
    %2462 = vmatpush1.xpose.msra.mxu0 0.0
    %2463 = vmatprep.subr.mxu0 0.0
    %2464 = vmatpush1.xpose.msra.mxu0 0.0
    %2465 = vmatprep.subr.mxu0 0.0
    %2466 = vmatpush1.xpose.msra.mxu0 0.0
    %2467 = vmatprep.subr.mxu0 0.0
    %2468 = vmatpush1.xpose.msra.mxu0 0.0
    %2469 = vmatprep.subr.mxu0 0.0
    %2470 = vmatpush1.xpose.msra.mxu0 0.0
    %2471 = vmatprep.subr.mxu0 0.0
    %2472 = vmatpush1.xpose.msra.mxu0 0.0
    %2473 = vmatprep.subr.mxu0 0.0
    %2474 = vmatpush1.xpose.msra.mxu0 0.0
    %2475 = vmatprep.subr.mxu0 0.0
    %2476 = vmatpush1.xpose.msra.mxu0 0.0
    %2477 = vmatprep.subr.mxu0 0.0
    %2478 = vmatpush1.xpose.msra.mxu0 0.0
    %2479 = vmatprep.subr.mxu0 0.0
    %2480 = vmatpush1.xpose.msra.mxu0 0.0
    %2481 = vmatprep.subr.mxu0 0.0
    %2482 = vmatpush1.xpose.msra.mxu0 0.0
    %2483 = vmatprep.subr.mxu0 0.0
    %2484 = vmatpush1.xpose.msra.mxu0 0.0
    %2485 = vmatprep.subr.mxu0 0.0
    %2486 = vmatpush1.xpose.msra.mxu0 0.0
    %2487 = vmatprep.subr.mxu0 0.0
    %2488 = vmatpush1.xpose.msra.mxu0 0.0
    %2489 = vmatprep.subr.mxu0 0.0
    %2490 = vmatpush1.xpose.msra.mxu0 0.0
    %2491 = vmatprep.subr.mxu0 0.0
    %2492 = vmatpush1.xpose.msra.mxu0 0.0
    %2493 = vmatprep.subr.mxu0 0.0
    %2494 = vmatpush1.xpose.msra.mxu0 0.0
    %2495 = vmatprep.subr.mxu0 0.0
    %2496 = vmatpush1.xpose.msra.mxu0 0.0
    %2497 = vmatprep.subr.mxu0 0.0
    %2498 = vmatpush1.xpose.msra.mxu0 0.0
    %2499 = vmatprep.subr.mxu0 0.0
    %2500 = vmatpush1.xpose.msra.mxu0 0.0
    %2501 = vmatprep.subr.mxu0 0.0
    %2502 = vmatpush1.xpose.msra.mxu0 0.0
    %2503 = vmatprep.subr.mxu0 0.0
    %2504 = vmatpush1.xpose.msra.mxu0 0.0
    %2505 = vmatprep.subr.mxu0 0.0
    %2506 = vmatpush1.xpose.msra.mxu0 0.0
    %2507 = vmatprep.mubr.f32.mxu0 0.0
    %2508 = vmatmul.mubr.f32.gmra.mrb[0].mxu0 %v2438
    %v2509 = vpop.f32.mrb[0].mxu0
    %v2510 = vadd.f32 0.0, %v2509
    %v2511 = vpop.f32.mrb[0].mxu0
    %2512 = vdwg.mxu0
    %vm2513 = vcmask 64512
    %v2514 = vsel %vm2513, %v2510, -inf
    %2515 = vmax.xlane.f32.xlu0 %v2514
    %v2516 = vpop.xlane.xlu0 %2515
    %v2517 = vsub.f32 %v2510, %v2516
    %v2518 = vmul.f32 %v2517, 1.442695
    %v2519 = vpow.pop %v2518
    %v2520 = vsel %vm2513, %v2519, 0.0
    %2521 = vadd.xlane.f32.xlu0 %v2520
    %v2522 = vpop.xlane.xlu0 %2521
    %v2523 = vrcp.pop %v2522
    %v2524 = vmul.f32 %v2519, %v2523
    %v2525 = vadd.f32 %v2524, 0.0
    %v2527 = vsel %vm2513, %v2524, 0
    %2529 = vmatprep.subr.mxu0 0.0
    %2530 = vmatpush1.msra.mxu0 %v2432
    %2531 = vmatprep.subr.mxu0 0.0
    %2532 = vmatpush1.msra.mxu0 0.0
    %2533 = vmatprep.subr.mxu0 0.0
    %2534 = vmatpush1.msra.mxu0 0.0
    %2535 = vmatprep.subr.mxu0 0.0
    %2536 = vmatpush1.msra.mxu0 0.0
    %2537 = vmatprep.subr.mxu0 0.0
    %2538 = vmatpush1.msra.mxu0 0.0
    %2539 = vmatprep.subr.mxu0 0.0
    %2540 = vmatpush1.msra.mxu0 0.0
    %2541 = vmatprep.subr.mxu0 0.0
    %2542 = vmatpush1.msra.mxu0 0.0
    %2543 = vmatprep.subr.mxu0 0.0
    %2544 = vmatpush1.msra.mxu0 0.0
    %2545 = vmatprep.subr.mxu0 0.0
    %2546 = vmatpush1.msra.mxu0 0.0
    %2547 = vmatprep.subr.mxu0 0.0
    %2548 = vmatpush1.msra.mxu0 0.0
    %2549 = vmatprep.subr.mxu0 0.0
    %2550 = vmatpush1.msra.mxu0 0.0
    %2551 = vmatprep.subr.mxu0 0.0
    %2552 = vmatpush1.msra.mxu0 0.0
    %2553 = vmatprep.subr.mxu0 0.0
    %2554 = vmatpush1.msra.mxu0 0.0
    %2555 = vmatprep.subr.mxu0 0.0
    %2556 = vmatpush1.msra.mxu0 0.0
    %2557 = vmatprep.subr.mxu0 0.0
    %2558 = vmatpush1.msra.mxu0 0.0
    %2559 = vmatprep.subr.mxu0 0.0
    %2560 = vmatpush1.msra.mxu0 0.0
    %2561 = vmatprep.subr.mxu0 0.0
    %2562 = vmatpush1.msra.mxu0 0.0
    %2563 = vmatprep.subr.mxu0 0.0
    %2564 = vmatpush1.msra.mxu0 0.0
    %2565 = vmatprep.subr.mxu0 0.0
    %2566 = vmatpush1.msra.mxu0 0.0
    %2567 = vmatprep.subr.mxu0 0.0
    %2568 = vmatpush1.msra.mxu0 0.0
    %2569 = vmatprep.subr.mxu0 0.0
    %2570 = vmatpush1.msra.mxu0 0.0
    %2571 = vmatprep.subr.mxu0 0.0
    %2572 = vmatpush1.msra.mxu0 0.0
    %2573 = vmatprep.subr.mxu0 0.0
    %2574 = vmatpush1.msra.mxu0 0.0
    %2575 = vmatprep.subr.mxu0 0.0
    %2576 = vmatpush1.msra.mxu0 0.0
    %2577 = vmatprep.subr.mxu0 0.0
    %2578 = vmatpush1.msra.mxu0 0.0
    %2579 = vmatprep.subr.mxu0 0.0
    %2580 = vmatpush1.msra.mxu0 0.0
    %2581 = vmatprep.subr.mxu0 0.0
    %2582 = vmatpush1.msra.mxu0 0.0
    %2583 = vmatprep.subr.mxu0 0.0
    %2584 = vmatpush1.msra.mxu0 0.0
    %2585 = vmatprep.subr.mxu0 0.0
    %2586 = vmatpush1.msra.mxu0 0.0
    %2587 = vmatprep.subr.mxu0 0.0
    %2588 = vmatpush1.msra.mxu0 0.0
    %2589 = vmatprep.subr.mxu0 0.0
    %2590 = vmatpush1.msra.mxu0 0.0
    %2591 = vmatprep.subr.mxu0 0.0
    %2592 = vmatpush1.msra.mxu0 0.0
    %2593 = vmatprep.mubr.f32.mxu0 0.0
    %2594 = vmatmul.mubr.f32.gmra.mrb[0].mxu0 %v2527
    %v2595 = vpop.f32.mrb[0].mxu0
    %v2596 = vadd.f32 0.0, %v2595
    %v2597 = vpop.f32.mrb[0].mxu0
    %2598 = vdwg.mxu0
    %v2599 = vld [vmem:[%s8] sm:$0xf]
    %v2600 = vld [vmem:[%s6 + $0x4] sm:$0xf]
    %v2601 = vld [vmem:[%s7 + $0x1] sm:$0x1]
    %v2602 = vlaneseq
    %v2603 = vshrl.u32 %v2602, 7
    %v2604 = vsub.s32 0, %v2603
    %v2605 = vrot.slane %v2601, %v2604
    %v2607 = vsel %vm65, %v2600, 0
    %2609 = vmatprep.subr.mxu0 0.0
    %2610 = vmatpush1.xpose.msra.mxu0 %v2607
    %2611 = vmatprep.subr.mxu0 0.0
    %2612 = vmatpush1.xpose.msra.mxu0 0.0
    %2613 = vmatprep.subr.mxu0 0.0
    %2614 = vmatpush1.xpose.msra.mxu0 0.0
    %2615 = vmatprep.subr.mxu0 0.0
    %2616 = vmatpush1.xpose.msra.mxu0 0.0
    %2617 = vmatprep.subr.mxu0 0.0
    %2618 = vmatpush1.xpose.msra.mxu0 0.0
    %2619 = vmatprep.subr.mxu0 0.0
    %2620 = vmatpush1.xpose.msra.mxu0 0.0
    %2621 = vmatprep.subr.mxu0 0.0
    %2622 = vmatpush1.xpose.msra.mxu0 0.0
    %2623 = vmatprep.subr.mxu0 0.0
    %2624 = vmatpush1.xpose.msra.mxu0 0.0
    %2625 = vmatprep.subr.mxu0 0.0
    %2626 = vmatpush1.xpose.msra.mxu0 0.0
    %2627 = vmatprep.subr.mxu0 0.0
    %2628 = vmatpush1.xpose.msra.mxu0 0.0
    %2629 = vmatprep.subr.mxu0 0.0
    %2630 = vmatpush1.xpose.msra.mxu0 0.0
    %2631 = vmatprep.subr.mxu0 0.0
    %2632 = vmatpush1.xpose.msra.mxu0 0.0
    %2633 = vmatprep.subr.mxu0 0.0
    %2634 = vmatpush1.xpose.msra.mxu0 0.0
    %2635 = vmatprep.subr.mxu0 0.0
    %2636 = vmatpush1.xpose.msra.mxu0 0.0
    %2637 = vmatprep.subr.mxu0 0.0
    %2638 = vmatpush1.xpose.msra.mxu0 0.0
    %2639 = vmatprep.subr.mxu0 0.0
    %2640 = vmatpush1.xpose.msra.mxu0 0.0
    %2641 = vmatprep.subr.mxu0 0.0
    %2642 = vmatpush1.xpose.msra.mxu0 0.0
    %2643 = vmatprep.subr.mxu0 0.0
    %2644 = vmatpush1.xpose.msra.mxu0 0.0
    %2645 = vmatprep.subr.mxu0 0.0
    %2646 = vmatpush1.xpose.msra.mxu0 0.0
    %2647 = vmatprep.subr.mxu0 0.0
    %2648 = vmatpush1.xpose.msra.mxu0 0.0
    %2649 = vmatprep.subr.mxu0 0.0
    %2650 = vmatpush1.xpose.msra.mxu0 0.0
    %2651 = vmatprep.subr.mxu0 0.0
    %2652 = vmatpush1.xpose.msra.mxu0 0.0
    %2653 = vmatprep.subr.mxu0 0.0
    %2654 = vmatpush1.xpose.msra.mxu0 0.0
    %2655 = vmatprep.subr.mxu0 0.0
    %2656 = vmatpush1.xpose.msra.mxu0 0.0
    %2657 = vmatprep.subr.mxu0 0.0
    %2658 = vmatpush1.xpose.msra.mxu0 0.0
    %2659 = vmatprep.subr.mxu0 0.0
    %2660 = vmatpush1.xpose.msra.mxu0 0.0
    %2661 = vmatprep.subr.mxu0 0.0
    %2662 = vmatpush1.xpose.msra.mxu0 0.0
    %2663 = vmatprep.subr.mxu0 0.0
    %2664 = vmatpush1.xpose.msra.mxu0 0.0
    %2665 = vmatprep.subr.mxu0 0.0
    %2666 = vmatpush1.xpose.msra.mxu0 0.0
    %2667 = vmatprep.subr.mxu0 0.0
    %2668 = vmatpush1.xpose.msra.mxu0 0.0
    %2669 = vmatprep.subr.mxu0 0.0
    %2670 = vmatpush1.xpose.msra.mxu0 0.0
    %2671 = vmatprep.subr.mxu0 0.0
    %2672 = vmatpush1.xpose.msra.mxu0 0.0
    %2673 = vmatprep.mubr.f32.mxu0 0.0
    %2674 = vmatmul.mubr.f32.gmra.mrb[0].mxu0 %v2202
    %v2675 = vpop.f32.mrb[0].mxu0
    %v2676 = vadd.f32 %v2605, %v2675
    %v2677 = vpop.f32.mrb[0].mxu0
    %2678 = vdwg.mxu0
    %v2679 = vld [vmem:[%s6 + $0x14] sm:$0xf]
    %v2680 = vld [vmem:[%s7 + $0x5] sm:$0x1]
    %v2681 = vlaneseq
    %v2682 = vshrl.u32 %v2681, 7
    %v2683 = vsub.s32 0, %v2682
    %v2684 = vrot.slane %v2680, %v2683
    %v2686 = vsel %vm65, %v2679, 0
    %2688 = vmatprep.subr.mxu0 0.0
    %2689 = vmatpush1.xpose.msra.mxu0 %v2686
    %2690 = vmatprep.subr.mxu0 0.0
    %2691 = vmatpush1.xpose.msra.mxu0 0.0
    %2692 = vmatprep.subr.mxu0 0.0
    %2693 = vmatpush1.xpose.msra.mxu0 0.0
    %2694 = vmatprep.subr.mxu0 0.0
    %2695 = vmatpush1.xpose.msra.mxu0 0.0
    %2696 = vmatprep.subr.mxu0 0.0
    %2697 = vmatpush1.xpose.msra.mxu0 0.0
    %2698 = vmatprep.subr.mxu0 0.0
    %2699 = vmatpush1.xpose.msra.mxu0 0.0
    %2700 = vmatprep.subr.mxu0 0.0
    %2701 = vmatpush1.xpose.msra.mxu0 0.0
    %2702 = vmatprep.subr.mxu0 0.0
    %2703 = vmatpush1.xpose.msra.mxu0 0.0
    %2704 = vmatprep.subr.mxu0 0.0
    %2705 = vmatpush1.xpose.msra.mxu0 0.0
    %2706 = vmatprep.subr.mxu0 0.0
    %2707 = vmatpush1.xpose.msra.mxu0 0.0
    %2708 = vmatprep.subr.mxu0 0.0
    %2709 = vmatpush1.xpose.msra.mxu0 0.0
    %2710 = vmatprep.subr.mxu0 0.0
    %2711 = vmatpush1.xpose.msra.mxu0 0.0
    %2712 = vmatprep.subr.mxu0 0.0
    %2713 = vmatpush1.xpose.msra.mxu0 0.0
    %2714 = vmatprep.subr.mxu0 0.0
    %2715 = vmatpush1.xpose.msra.mxu0 0.0
    %2716 = vmatprep.subr.mxu0 0.0
    %2717 = vmatpush1.xpose.msra.mxu0 0.0
    %2718 = vmatprep.subr.mxu0 0.0
    %2719 = vmatpush1.xpose.msra.mxu0 0.0
    %2720 = vmatprep.subr.mxu0 0.0
    %2721 = vmatpush1.xpose.msra.mxu0 0.0
    %2722 = vmatprep.subr.mxu0 0.0
    %2723 = vmatpush1.xpose.msra.mxu0 0.0
    %2724 = vmatprep.subr.mxu0 0.0
    %2725 = vmatpush1.xpose.msra.mxu0 0.0
    %2726 = vmatprep.subr.mxu0 0.0
    %2727 = vmatpush1.xpose.msra.mxu0 0.0
    %2728 = vmatprep.subr.mxu0 0.0
    %2729 = vmatpush1.xpose.msra.mxu0 0.0
    %2730 = vmatprep.subr.mxu0 0.0
    %2731 = vmatpush1.xpose.msra.mxu0 0.0
    %2732 = vmatprep.subr.mxu0 0.0
    %2733 = vmatpush1.xpose.msra.mxu0 0.0
    %2734 = vmatprep.subr.mxu0 0.0
    %2735 = vmatpush1.xpose.msra.mxu0 0.0
    %2736 = vmatprep.subr.mxu0 0.0
    %2737 = vmatpush1.xpose.msra.mxu0 0.0
    %2738 = vmatprep.subr.mxu0 0.0
    %2739 = vmatpush1.xpose.msra.mxu0 0.0
    %2740 = vmatprep.subr.mxu0 0.0
    %2741 = vmatpush1.xpose.msra.mxu0 0.0
    %2742 = vmatprep.subr.mxu0 0.0
    %2743 = vmatpush1.xpose.msra.mxu0 0.0
    %2744 = vmatprep.subr.mxu0 0.0
    %2745 = vmatpush1.xpose.msra.mxu0 0.0
    %2746 = vmatprep.subr.mxu0 0.0
    %2747 = vmatpush1.xpose.msra.mxu0 0.0
    %2748 = vmatprep.subr.mxu0 0.0
    %2749 = vmatpush1.xpose.msra.mxu0 0.0
    %2750 = vmatprep.subr.mxu0 0.0
    %2751 = vmatpush1.xpose.msra.mxu0 0.0
    %2752 = vmatprep.mubr.f32.mxu0 0.0
    %2753 = vmatmul.mubr.f32.gmra.mrb[0].mxu0 %v2202
    %v2754 = vpop.f32.mrb[0].mxu0
    %v2755 = vadd.f32 %v2684, %v2754
    %v2756 = vpop.f32.mrb[0].mxu0
    %2757 = vdwg.mxu0
    %v2758 = vld [vmem:[%s6 + $0x24] sm:$0xf]
    %v2759 = vld [vmem:[%s7 + $0x9] sm:$0x1]
    %v2760 = vlaneseq
    %v2761 = vshrl.u32 %v2760, 7
    %v2762 = vsub.s32 0, %v2761
    %v2763 = vrot.slane %v2759, %v2762
    %v2765 = vsel %vm65, %v2758, 0
    %2767 = vmatprep.subr.mxu0 0.0
    %2768 = vmatpush1.xpose.msra.mxu0 %v2765
    %2769 = vmatprep.subr.mxu0 0.0
    %2770 = vmatpush1.xpose.msra.mxu0 0.0
    %2771 = vmatprep.subr.mxu0 0.0
    %2772 = vmatpush1.xpose.msra.mxu0 0.0
    %2773 = vmatprep.subr.mxu0 0.0
    %2774 = vmatpush1.xpose.msra.mxu0 0.0
    %2775 = vmatprep.subr.mxu0 0.0
    %2776 = vmatpush1.xpose.msra.mxu0 0.0
    %2777 = vmatprep.subr.mxu0 0.0
    %2778 = vmatpush1.xpose.msra.mxu0 0.0
    %2779 = vmatprep.subr.mxu0 0.0
    %2780 = vmatpush1.xpose.msra.mxu0 0.0
    %2781 = vmatprep.subr.mxu0 0.0
    %2782 = vmatpush1.xpose.msra.mxu0 0.0
    %2783 = vmatprep.subr.mxu0 0.0
    %2784 = vmatpush1.xpose.msra.mxu0 0.0
    %2785 = vmatprep.subr.mxu0 0.0
    %2786 = vmatpush1.xpose.msra.mxu0 0.0
    %2787 = vmatprep.subr.mxu0 0.0
    %2788 = vmatpush1.xpose.msra.mxu0 0.0
    %2789 = vmatprep.subr.mxu0 0.0
    %2790 = vmatpush1.xpose.msra.mxu0 0.0
    %2791 = vmatprep.subr.mxu0 0.0
    %2792 = vmatpush1.xpose.msra.mxu0 0.0
    %2793 = vmatprep.subr.mxu0 0.0
    %2794 = vmatpush1.xpose.msra.mxu0 0.0
    %2795 = vmatprep.subr.mxu0 0.0
    %2796 = vmatpush1.xpose.msra.mxu0 0.0
    %2797 = vmatprep.subr.mxu0 0.0
    %2798 = vmatpush1.xpose.msra.mxu0 0.0
    %2799 = vmatprep.subr.mxu0 0.0
    %2800 = vmatpush1.xpose.msra.mxu0 0.0
    %2801 = vmatprep.subr.mxu0 0.0
    %2802 = vmatpush1.xpose.msra.mxu0 0.0
    %2803 = vmatprep.subr.mxu0 0.0
    %2804 = vmatpush1.xpose.msra.mxu0 0.0
    %2805 = vmatprep.subr.mxu0 0.0
    %2806 = vmatpush1.xpose.msra.mxu0 0.0
    %2807 = vmatprep.subr.mxu0 0.0
    %2808 = vmatpush1.xpose.msra.mxu0 0.0
    %2809 = vmatprep.subr.mxu0 0.0
    %2810 = vmatpush1.xpose.msra.mxu0 0.0
    %2811 = vmatprep.subr.mxu0 0.0
    %2812 = vmatpush1.xpose.msra.mxu0 0.0
    %2813 = vmatprep.subr.mxu0 0.0
    %2814 = vmatpush1.xpose.msra.mxu0 0.0
    %2815 = vmatprep.subr.mxu0 0.0
    %2816 = vmatpush1.xpose.msra.mxu0 0.0
    %2817 = vmatprep.subr.mxu0 0.0
    %2818 = vmatpush1.xpose.msra.mxu0 0.0
    %2819 = vmatprep.subr.mxu0 0.0
    %2820 = vmatpush1.xpose.msra.mxu0 0.0
    %2821 = vmatprep.subr.mxu0 0.0
    %2822 = vmatpush1.xpose.msra.mxu0 0.0
    %2823 = vmatprep.subr.mxu0 0.0
    %2824 = vmatpush1.xpose.msra.mxu0 0.0
    %2825 = vmatprep.subr.mxu0 0.0
    %2826 = vmatpush1.xpose.msra.mxu0 0.0
    %2827 = vmatprep.subr.mxu0 0.0
    %2828 = vmatpush1.xpose.msra.mxu0 0.0
    %2829 = vmatprep.subr.mxu0 0.0
    %2830 = vmatpush1.xpose.msra.mxu0 0.0
    %2831 = vmatprep.mubr.f32.mxu0 0.0
    %2832 = vmatmul.mubr.f32.gmra.mrb[0].mxu0 %v2202
    %v2833 = vpop.f32.mrb[0].mxu0
    %v2834 = vadd.f32 %v2763, %v2833
    %v2835 = vpop.f32.mrb[0].mxu0
    %2836 = vdwg.mxu0
    %v2837 = vmul.f32 %v2676, 0.5
    %v2839 = vsel %vm2436, %v2837, 0
    %v2842 = vsel %vm2436, %v2755, 0
    %2844 = vmatprep.subr.mxu0 0.0
    %2845 = vmatpush1.xpose.msra.mxu0 %v2842
    %2846 = vmatprep.subr.mxu0 0.0
    %2847 = vmatpush1.xpose.msra.mxu0 0.0
    %2848 = vmatprep.subr.mxu0 0.0
    %2849 = vmatpush1.xpose.msra.mxu0 0.0
    %2850 = vmatprep.subr.mxu0 0.0
    %2851 = vmatpush1.xpose.msra.mxu0 0.0
    %2852 = vmatprep.subr.mxu0 0.0
    %2853 = vmatpush1.xpose.msra.mxu0 0.0
    %2854 = vmatprep.subr.mxu0 0.0
    %2855 = vmatpush1.xpose.msra.mxu0 0.0
    %2856 = vmatprep.subr.mxu0 0.0
    %2857 = vmatpush1.xpose.msra.mxu0 0.0
    %2858 = vmatprep.subr.mxu0 0.0
    %2859 = vmatpush1.xpose.msra.mxu0 0.0
    %2860 = vmatprep.subr.mxu0 0.0
    %2861 = vmatpush1.xpose.msra.mxu0 0.0
    %2862 = vmatprep.subr.mxu0 0.0
    %2863 = vmatpush1.xpose.msra.mxu0 0.0
    %2864 = vmatprep.subr.mxu0 0.0
    %2865 = vmatpush1.xpose.msra.mxu0 0.0
    %2866 = vmatprep.subr.mxu0 0.0
    %2867 = vmatpush1.xpose.msra.mxu0 0.0
    %2868 = vmatprep.subr.mxu0 0.0
    %2869 = vmatpush1.xpose.msra.mxu0 0.0
    %2870 = vmatprep.subr.mxu0 0.0
    %2871 = vmatpush1.xpose.msra.mxu0 0.0
    %2872 = vmatprep.subr.mxu0 0.0
    %2873 = vmatpush1.xpose.msra.mxu0 0.0
    %2874 = vmatprep.subr.mxu0 0.0
    %2875 = vmatpush1.xpose.msra.mxu0 0.0
    %2876 = vmatprep.subr.mxu0 0.0
    %2877 = vmatpush1.xpose.msra.mxu0 0.0
    %2878 = vmatprep.subr.mxu0 0.0
    %2879 = vmatpush1.xpose.msra.mxu0 0.0
    %2880 = vmatprep.subr.mxu0 0.0
    %2881 = vmatpush1.xpose.msra.mxu0 0.0
    %2882 = vmatprep.subr.mxu0 0.0
    %2883 = vmatpush1.xpose.msra.mxu0 0.0
    %2884 = vmatprep.subr.mxu0 0.0
    %2885 = vmatpush1.xpose.msra.mxu0 0.0
    %2886 = vmatprep.subr.mxu0 0.0
    %2887 = vmatpush1.xpose.msra.mxu0 0.0
    %2888 = vmatprep.subr.mxu0 0.0
    %2889 = vmatpush1.xpose.msra.mxu0 0.0
    %2890 = vmatprep.subr.mxu0 0.0
    %2891 = vmatpush1.xpose.msra.mxu0 0.0
    %2892 = vmatprep.subr.mxu0 0.0
    %2893 = vmatpush1.xpose.msra.mxu0 0.0
    %2894 = vmatprep.subr.mxu0 0.0
    %2895 = vmatpush1.xpose.msra.mxu0 0.0
    %2896 = vmatprep.subr.mxu0 0.0
    %2897 = vmatpush1.xpose.msra.mxu0 0.0
    %2898 = vmatprep.subr.mxu0 0.0
    %2899 = vmatpush1.xpose.msra.mxu0 0.0
    %2900 = vmatprep.subr.mxu0 0.0
    %2901 = vmatpush1.xpose.msra.mxu0 0.0
    %2902 = vmatprep.subr.mxu0 0.0
    %2903 = vmatpush1.xpose.msra.mxu0 0.0
    %2904 = vmatprep.subr.mxu0 0.0
    %2905 = vmatpush1.xpose.msra.mxu0 0.0
    %2906 = vmatprep.subr.mxu0 0.0
    %2907 = vmatpush1.xpose.msra.mxu0 0.0
    %2908 = vmatprep.mubr.f32.mxu0 0.0
    %2909 = vmatmul.mubr.f32.gmra.mrb[0].mxu0 %v2839
    %v2910 = vpop.f32.mrb[0].mxu0
    %v2911 = vadd.f32 0.0, %v2910
    %v2912 = vpop.f32.mrb[0].mxu0
    %2913 = vdwg.mxu0
    %v2914 = vsel %vm2513, %v2911, -inf
    %2915 = vmax.xlane.f32.xlu0 %v2914
    %v2916 = vpop.xlane.xlu0 %2915
    %v2917 = vsub.f32 %v2911, %v2916
    %v2918 = vmul.f32 %v2917, 1.442695
    %v2919 = vpow.pop %v2918
    %v2920 = vsel %vm2513, %v2919, 0.0
    %2921 = vadd.xlane.f32.xlu0 %v2920
    %v2922 = vpop.xlane.xlu0 %2921
    %v2923 = vrcp.pop %v2922
    %v2924 = vmul.f32 %v2919, %v2923
    %v2925 = vadd.f32 %v2525, %v2924
    %v2927 = vsel %vm2513, %v2924, 0
    %2929 = vmatprep.subr.mxu0 0.0
    %2930 = vmatpush1.msra.mxu0 %v2834
    %2931 = vmatprep.subr.mxu0 0.0
    %2932 = vmatpush1.msra.mxu0 0.0
    %2933 = vmatprep.subr.mxu0 0.0
    %2934 = vmatpush1.msra.mxu0 0.0
    %2935 = vmatprep.subr.mxu0 0.0
    %2936 = vmatpush1.msra.mxu0 0.0
    %2937 = vmatprep.subr.mxu0 0.0
    %2938 = vmatpush1.msra.mxu0 0.0
    %2939 = vmatprep.subr.mxu0 0.0
    %2940 = vmatpush1.msra.mxu0 0.0
    %2941 = vmatprep.subr.mxu0 0.0
    %2942 = vmatpush1.msra.mxu0 0.0
    %2943 = vmatprep.subr.mxu0 0.0
    %2944 = vmatpush1.msra.mxu0 0.0
    %2945 = vmatprep.subr.mxu0 0.0
    %2946 = vmatpush1.msra.mxu0 0.0
    %2947 = vmatprep.subr.mxu0 0.0
    %2948 = vmatpush1.msra.mxu0 0.0
    %2949 = vmatprep.subr.mxu0 0.0
    %2950 = vmatpush1.msra.mxu0 0.0
    %2951 = vmatprep.subr.mxu0 0.0
    %2952 = vmatpush1.msra.mxu0 0.0
    %2953 = vmatprep.subr.mxu0 0.0
    %2954 = vmatpush1.msra.mxu0 0.0
    %2955 = vmatprep.subr.mxu0 0.0
    %2956 = vmatpush1.msra.mxu0 0.0
    %2957 = vmatprep.subr.mxu0 0.0
    %2958 = vmatpush1.msra.mxu0 0.0
    %2959 = vmatprep.subr.mxu0 0.0
    %2960 = vmatpush1.msra.mxu0 0.0
    %2961 = vmatprep.subr.mxu0 0.0
    %2962 = vmatpush1.msra.mxu0 0.0
    %2963 = vmatprep.subr.mxu0 0.0
    %2964 = vmatpush1.msra.mxu0 0.0
    %2965 = vmatprep.subr.mxu0 0.0
    %2966 = vmatpush1.msra.mxu0 0.0
    %2967 = vmatprep.subr.mxu0 0.0
    %2968 = vmatpush1.msra.mxu0 0.0
    %2969 = vmatprep.subr.mxu0 0.0
    %2970 = vmatpush1.msra.mxu0 0.0
    %2971 = vmatprep.subr.mxu0 0.0
    %2972 = vmatpush1.msra.mxu0 0.0
    %2973 = vmatprep.subr.mxu0 0.0
    %2974 = vmatpush1.msra.mxu0 0.0
    %2975 = vmatprep.subr.mxu0 0.0
    %2976 = vmatpush1.msra.mxu0 0.0
    %2977 = vmatprep.subr.mxu0 0.0
    %2978 = vmatpush1.msra.mxu0 0.0
    %2979 = vmatprep.subr.mxu0 0.0
    %2980 = vmatpush1.msra.mxu0 0.0
    %2981 = vmatprep.subr.mxu0 0.0
    %2982 = vmatpush1.msra.mxu0 0.0
    %2983 = vmatprep.subr.mxu0 0.0
    %2984 = vmatpush1.msra.mxu0 0.0
    %2985 = vmatprep.subr.mxu0 0.0
    %2986 = vmatpush1.msra.mxu0 0.0
    %2987 = vmatprep.subr.mxu0 0.0
    %2988 = vmatpush1.msra.mxu0 0.0
    %2989 = vmatprep.subr.mxu0 0.0
    %2990 = vmatpush1.msra.mxu0 0.0
    %2991 = vmatprep.subr.mxu0 0.0
    %2992 = vmatpush1.msra.mxu0 0.0
    %2993 = vmatprep.mubr.f32.mxu0 0.0
    %2994 = vmatmul.mubr.f32.gmra.mrb[0].mxu0 %v2927
    %v2995 = vpop.f32.mrb[0].mxu0
    %v2996 = vadd.f32 0.0, %v2995
    %v2997 = vpop.f32.mrb[0].mxu0
    %2998 = vdwg.mxu0
    %v2999 = vld [vmem:[%s8 + $0x4] sm:$0xf]
    %v3001 = vsel %vm2436, %v2996, 0
    %vm3003 = vcmask 1043456
    %v3005 = vsel %vm3003, %v2999, 0
    %3007 = vmatprep.subr.mxu0 0.0
    %3008 = vmatpush1.msra.mxu0 %v3005
    %3009 = vmatprep.subr.mxu0 0.0
    %3010 = vmatpush1.msra.mxu0 0.0
    %3011 = vmatprep.subr.mxu0 0.0
    %3012 = vmatpush1.msra.mxu0 0.0
    %3013 = vmatprep.subr.mxu0 0.0
    %3014 = vmatpush1.msra.mxu0 0.0
    %3015 = vmatprep.subr.mxu0 0.0
    %3016 = vmatpush1.msra.mxu0 0.0
    %3017 = vmatprep.subr.mxu0 0.0
    %3018 = vmatpush1.msra.mxu0 0.0
    %3019 = vmatprep.subr.mxu0 0.0
    %3020 = vmatpush1.msra.mxu0 0.0
    %3021 = vmatprep.subr.mxu0 0.0
    %3022 = vmatpush1.msra.mxu0 0.0
    %3023 = vmatprep.subr.mxu0 0.0
    %3024 = vmatpush1.msra.mxu0 0.0
    %3025 = vmatprep.subr.mxu0 0.0
    %3026 = vmatpush1.msra.mxu0 0.0
    %3027 = vmatprep.subr.mxu0 0.0
    %3028 = vmatpush1.msra.mxu0 0.0
    %3029 = vmatprep.subr.mxu0 0.0
    %3030 = vmatpush1.msra.mxu0 0.0
    %3031 = vmatprep.subr.mxu0 0.0
    %3032 = vmatpush1.msra.mxu0 0.0
    %3033 = vmatprep.subr.mxu0 0.0
    %3034 = vmatpush1.msra.mxu0 0.0
    %3035 = vmatprep.subr.mxu0 0.0
    %3036 = vmatpush1.msra.mxu0 0.0
    %3037 = vmatprep.subr.mxu0 0.0
    %3038 = vmatpush1.msra.mxu0 0.0
    %3039 = vmatprep.subr.mxu0 0.0
    %3040 = vmatpush1.msra.mxu0 0.0
    %3041 = vmatprep.subr.mxu0 0.0
    %3042 = vmatpush1.msra.mxu0 0.0
    %3043 = vmatprep.subr.mxu0 0.0
    %3044 = vmatpush1.msra.mxu0 0.0
    %3045 = vmatprep.subr.mxu0 0.0
    %3046 = vmatpush1.msra.mxu0 0.0
    %3047 = vmatprep.subr.mxu0 0.0
    %3048 = vmatpush1.msra.mxu0 0.0
    %3049 = vmatprep.subr.mxu0 0.0
    %3050 = vmatpush1.msra.mxu0 0.0
    %3051 = vmatprep.subr.mxu0 0.0
    %3052 = vmatpush1.msra.mxu0 0.0
    %3053 = vmatprep.subr.mxu0 0.0
    %3054 = vmatpush1.msra.mxu0 0.0
    %3055 = vmatprep.subr.mxu0 0.0
    %3056 = vmatpush1.msra.mxu0 0.0
    %3057 = vmatprep.subr.mxu0 0.0
    %3058 = vmatpush1.msra.mxu0 0.0
    %3059 = vmatprep.subr.mxu0 0.0
    %3060 = vmatpush1.msra.mxu0 0.0
    %3061 = vmatprep.subr.mxu0 0.0
    %3062 = vmatpush1.msra.mxu0 0.0
    %3063 = vmatprep.subr.mxu0 0.0
    %3064 = vmatpush1.msra.mxu0 0.0
    %3065 = vmatprep.subr.mxu0 0.0
    %3066 = vmatpush1.msra.mxu0 0.0
    %3067 = vmatprep.subr.mxu0 0.0
    %3068 = vmatpush1.msra.mxu0 0.0
    %3069 = vmatprep.subr.mxu0 0.0
    %3070 = vmatpush1.msra.mxu0 0.0
    %3071 = vmatprep.mubr.f32.mxu0 0.0
    %3072 = vmatmul.mubr.f32.gmra.mrb[0].mxu0 %v3001
    %v3073 = vpop.f32.mrb[0].mxu0
    %v3074 = vadd.f32 0.0, %v3073
    %v3075 = vpop.f32.mrb[0].mxu0
    %3076 = vdwg.mxu0
    %v3078 = vsel %vm2436, %v2596, 0
    %v3081 = vsel %vm3003, %v2599, 0
    %3083 = vmatprep.subr.mxu0 0.0
    %3084 = vmatpush1.msra.mxu0 %v3081
    %3085 = vmatprep.subr.mxu0 0.0
    %3086 = vmatpush1.msra.mxu0 0.0
    %3087 = vmatprep.subr.mxu0 0.0
    %3088 = vmatpush1.msra.mxu0 0.0
    %3089 = vmatprep.subr.mxu0 0.0
    %3090 = vmatpush1.msra.mxu0 0.0
    %3091 = vmatprep.subr.mxu0 0.0
    %3092 = vmatpush1.msra.mxu0 0.0
    %3093 = vmatprep.subr.mxu0 0.0
    %3094 = vmatpush1.msra.mxu0 0.0
    %3095 = vmatprep.subr.mxu0 0.0
    %3096 = vmatpush1.msra.mxu0 0.0
    %3097 = vmatprep.subr.mxu0 0.0
    %3098 = vmatpush1.msra.mxu0 0.0
    %3099 = vmatprep.subr.mxu0 0.0
    %3100 = vmatpush1.msra.mxu0 0.0
    %3101 = vmatprep.subr.mxu0 0.0
    %3102 = vmatpush1.msra.mxu0 0.0
    %3103 = vmatprep.subr.mxu0 0.0
    %3104 = vmatpush1.msra.mxu0 0.0
    %3105 = vmatprep.subr.mxu0 0.0
    %3106 = vmatpush1.msra.mxu0 0.0
    %3107 = vmatprep.subr.mxu0 0.0
    %3108 = vmatpush1.msra.mxu0 0.0
    %3109 = vmatprep.subr.mxu0 0.0
    %3110 = vmatpush1.msra.mxu0 0.0
    %3111 = vmatprep.subr.mxu0 0.0
    %3112 = vmatpush1.msra.mxu0 0.0
    %3113 = vmatprep.subr.mxu0 0.0
    %3114 = vmatpush1.msra.mxu0 0.0
    %3115 = vmatprep.subr.mxu0 0.0
    %3116 = vmatpush1.msra.mxu0 0.0
    %3117 = vmatprep.subr.mxu0 0.0
    %3118 = vmatpush1.msra.mxu0 0.0
    %3119 = vmatprep.subr.mxu0 0.0
    %3120 = vmatpush1.msra.mxu0 0.0
    %3121 = vmatprep.subr.mxu0 0.0
    %3122 = vmatpush1.msra.mxu0 0.0
    %3123 = vmatprep.subr.mxu0 0.0
    %3124 = vmatpush1.msra.mxu0 0.0
    %3125 = vmatprep.subr.mxu0 0.0
    %3126 = vmatpush1.msra.mxu0 0.0
    %3127 = vmatprep.subr.mxu0 0.0
    %3128 = vmatpush1.msra.mxu0 0.0
    %3129 = vmatprep.subr.mxu0 0.0
    %3130 = vmatpush1.msra.mxu0 0.0
    %3131 = vmatprep.subr.mxu0 0.0
    %3132 = vmatpush1.msra.mxu0 0.0
    %3133 = vmatprep.subr.mxu0 0.0
    %3134 = vmatpush1.msra.mxu0 0.0
    %3135 = vmatprep.subr.mxu0 0.0
    %3136 = vmatpush1.msra.mxu0 0.0
    %3137 = vmatprep.subr.mxu0 0.0
    %3138 = vmatpush1.msra.mxu0 0.0
    %3139 = vmatprep.subr.mxu0 0.0
    %3140 = vmatpush1.msra.mxu0 0.0
    %3141 = vmatprep.subr.mxu0 0.0
    %3142 = vmatpush1.msra.mxu0 0.0
    %3143 = vmatprep.subr.mxu0 0.0
    %3144 = vmatpush1.msra.mxu0 0.0
    %3145 = vmatprep.subr.mxu0 0.0
    %3146 = vmatpush1.msra.mxu0 0.0
    %3147 = vmatprep.mubr.f32.mxu0 0.0
    %3148 = vmatmul.mubr.f32.gmra.mrb[0].mxu0 %v3078
    %v3149 = vpop.f32.mrb[0].mxu0
    %v3150 = vadd.f32 %v3074, %v3149
    %v3151 = vpop.f32.mrb[0].mxu0
    %3152 = vdwg.mxu0
    %v3153 = vld [vmem:[%s6 + $0x8] sm:$0xf]
    %v3154 = vld [vmem:[%s7 + $0x2] sm:$0x1]
    %v3155 = vlaneseq
    %v3156 = vshrl.u32 %v3155, 7
    %v3157 = vsub.s32 0, %v3156
    %v3158 = vrot.slane %v3154, %v3157
    %v3160 = vsel %vm65, %v3153, 0
    %3162 = vmatprep.subr.mxu0 0.0
    %3163 = vmatpush1.xpose.msra.mxu0 %v3160
    %3164 = vmatprep.subr.mxu0 0.0
    %3165 = vmatpush1.xpose.msra.mxu0 0.0
    %3166 = vmatprep.subr.mxu0 0.0
    %3167 = vmatpush1.xpose.msra.mxu0 0.0
    %3168 = vmatprep.subr.mxu0 0.0
    %3169 = vmatpush1.xpose.msra.mxu0 0.0
    %3170 = vmatprep.subr.mxu0 0.0
    %3171 = vmatpush1.xpose.msra.mxu0 0.0
    %3172 = vmatprep.subr.mxu0 0.0
    %3173 = vmatpush1.xpose.msra.mxu0 0.0
    %3174 = vmatprep.subr.mxu0 0.0
    %3175 = vmatpush1.xpose.msra.mxu0 0.0
    %3176 = vmatprep.subr.mxu0 0.0
    %3177 = vmatpush1.xpose.msra.mxu0 0.0
    %3178 = vmatprep.subr.mxu0 0.0
    %3179 = vmatpush1.xpose.msra.mxu0 0.0
    %3180 = vmatprep.subr.mxu0 0.0
    %3181 = vmatpush1.xpose.msra.mxu0 0.0
    %3182 = vmatprep.subr.mxu0 0.0
    %3183 = vmatpush1.xpose.msra.mxu0 0.0
    %3184 = vmatprep.subr.mxu0 0.0
    %3185 = vmatpush1.xpose.msra.mxu0 0.0
    %3186 = vmatprep.subr.mxu0 0.0
    %3187 = vmatpush1.xpose.msra.mxu0 0.0
    %3188 = vmatprep.subr.mxu0 0.0
    %3189 = vmatpush1.xpose.msra.mxu0 0.0
    %3190 = vmatprep.subr.mxu0 0.0
    %3191 = vmatpush1.xpose.msra.mxu0 0.0
    %3192 = vmatprep.subr.mxu0 0.0
    %3193 = vmatpush1.xpose.msra.mxu0 0.0
    %3194 = vmatprep.subr.mxu0 0.0
    %3195 = vmatpush1.xpose.msra.mxu0 0.0
    %3196 = vmatprep.subr.mxu0 0.0
    %3197 = vmatpush1.xpose.msra.mxu0 0.0
    %3198 = vmatprep.subr.mxu0 0.0
    %3199 = vmatpush1.xpose.msra.mxu0 0.0
    %3200 = vmatprep.subr.mxu0 0.0
    %3201 = vmatpush1.xpose.msra.mxu0 0.0
    %3202 = vmatprep.subr.mxu0 0.0
    %3203 = vmatpush1.xpose.msra.mxu0 0.0
    %3204 = vmatprep.subr.mxu0 0.0
    %3205 = vmatpush1.xpose.msra.mxu0 0.0
    %3206 = vmatprep.subr.mxu0 0.0
    %3207 = vmatpush1.xpose.msra.mxu0 0.0
    %3208 = vmatprep.subr.mxu0 0.0
    %3209 = vmatpush1.xpose.msra.mxu0 0.0
    %3210 = vmatprep.subr.mxu0 0.0
    %3211 = vmatpush1.xpose.msra.mxu0 0.0
    %3212 = vmatprep.subr.mxu0 0.0
    %3213 = vmatpush1.xpose.msra.mxu0 0.0
    %3214 = vmatprep.subr.mxu0 0.0
    %3215 = vmatpush1.xpose.msra.mxu0 0.0
    %3216 = vmatprep.subr.mxu0 0.0
    %3217 = vmatpush1.xpose.msra.mxu0 0.0
    %3218 = vmatprep.subr.mxu0 0.0
    %3219 = vmatpush1.xpose.msra.mxu0 0.0
    %3220 = vmatprep.subr.mxu0 0.0
    %3221 = vmatpush1.xpose.msra.mxu0 0.0
    %3222 = vmatprep.subr.mxu0 0.0
    %3223 = vmatpush1.xpose.msra.mxu0 0.0
    %3224 = vmatprep.subr.mxu0 0.0
    %3225 = vmatpush1.xpose.msra.mxu0 0.0
    %3226 = vmatprep.mubr.f32.mxu0 0.0
    %3227 = vmatmul.mubr.f32.gmra.mrb[0].mxu0 %v2202
    %v3228 = vpop.f32.mrb[0].mxu0
    %v3229 = vadd.f32 %v3158, %v3228
    %v3230 = vpop.f32.mrb[0].mxu0
    %3231 = vdwg.mxu0
    %v3232 = vld [vmem:[%s6 + $0x18] sm:$0xf]
    %v3233 = vld [vmem:[%s7 + $0x6] sm:$0x1]
    %v3234 = vlaneseq
    %v3235 = vshrl.u32 %v3234, 7
    %v3236 = vsub.s32 0, %v3235
    %v3237 = vrot.slane %v3233, %v3236
    %v3239 = vsel %vm65, %v3232, 0
    %3241 = vmatprep.subr.mxu0 0.0
    %3242 = vmatpush1.xpose.msra.mxu0 %v3239
    %3243 = vmatprep.subr.mxu0 0.0
    %3244 = vmatpush1.xpose.msra.mxu0 0.0
    %3245 = vmatprep.subr.mxu0 0.0
    %3246 = vmatpush1.xpose.msra.mxu0 0.0
    %3247 = vmatprep.subr.mxu0 0.0
    %3248 = vmatpush1.xpose.msra.mxu0 0.0
    %3249 = vmatprep.subr.mxu0 0.0
    %3250 = vmatpush1.xpose.msra.mxu0 0.0
    %3251 = vmatprep.subr.mxu0 0.0
    %3252 = vmatpush1.xpose.msra.mxu0 0.0
    %3253 = vmatprep.subr.mxu0 0.0
    %3254 = vmatpush1.xpose.msra.mxu0 0.0
    %3255 = vmatprep.subr.mxu0 0.0
    %3256 = vmatpush1.xpose.msra.mxu0 0.0
    %3257 = vmatprep.subr.mxu0 0.0
    %3258 = vmatpush1.xpose.msra.mxu0 0.0
    %3259 = vmatprep.subr.mxu0 0.0
    %3260 = vmatpush1.xpose.msra.mxu0 0.0
    %3261 = vmatprep.subr.mxu0 0.0
    %3262 = vmatpush1.xpose.msra.mxu0 0.0
    %3263 = vmatprep.subr.mxu0 0.0
    %3264 = vmatpush1.xpose.msra.mxu0 0.0
    %3265 = vmatprep.subr.mxu0 0.0
    %3266 = vmatpush1.xpose.msra.mxu0 0.0
    %3267 = vmatprep.subr.mxu0 0.0
    %3268 = vmatpush1.xpose.msra.mxu0 0.0
    %3269 = vmatprep.subr.mxu0 0.0
    %3270 = vmatpush1.xpose.msra.mxu0 0.0
    %3271 = vmatprep.subr.mxu0 0.0
    %3272 = vmatpush1.xpose.msra.mxu0 0.0
    %3273 = vmatprep.subr.mxu0 0.0
    %3274 = vmatpush1.xpose.msra.mxu0 0.0
    %3275 = vmatprep.subr.mxu0 0.0
    %3276 = vmatpush1.xpose.msra.mxu0 0.0
    %3277 = vmatprep.subr.mxu0 0.0
    %3278 = vmatpush1.xpose.msra.mxu0 0.0
    %3279 = vmatprep.subr.mxu0 0.0
    %3280 = vmatpush1.xpose.msra.mxu0 0.0
    %3281 = vmatprep.subr.mxu0 0.0
    %3282 = vmatpush1.xpose.msra.mxu0 0.0
    %3283 = vmatprep.subr.mxu0 0.0
    %3284 = vmatpush1.xpose.msra.mxu0 0.0
    %3285 = vmatprep.subr.mxu0 0.0
    %3286 = vmatpush1.xpose.msra.mxu0 0.0
    %3287 = vmatprep.subr.mxu0 0.0
    %3288 = vmatpush1.xpose.msra.mxu0 0.0
    %3289 = vmatprep.subr.mxu0 0.0
    %3290 = vmatpush1.xpose.msra.mxu0 0.0
    %3291 = vmatprep.subr.mxu0 0.0
    %3292 = vmatpush1.xpose.msra.mxu0 0.0
    %3293 = vmatprep.subr.mxu0 0.0
    %3294 = vmatpush1.xpose.msra.mxu0 0.0
    %3295 = vmatprep.subr.mxu0 0.0
    %3296 = vmatpush1.xpose.msra.mxu0 0.0
    %3297 = vmatprep.subr.mxu0 0.0
    %3298 = vmatpush1.xpose.msra.mxu0 0.0
    %3299 = vmatprep.subr.mxu0 0.0
    %3300 = vmatpush1.xpose.msra.mxu0 0.0
    %3301 = vmatprep.subr.mxu0 0.0
    %3302 = vmatpush1.xpose.msra.mxu0 0.0
    %3303 = vmatprep.subr.mxu0 0.0
    %3304 = vmatpush1.xpose.msra.mxu0 0.0
    %3305 = vmatprep.mubr.f32.mxu0 0.0
    %3306 = vmatmul.mubr.f32.gmra.mrb[0].mxu0 %v2202
    %v3307 = vpop.f32.mrb[0].mxu0
    %v3308 = vadd.f32 %v3237, %v3307
    %v3309 = vpop.f32.mrb[0].mxu0
    %3310 = vdwg.mxu0
    %v3311 = vld [vmem:[%s6 + $0x28] sm:$0xf]
    %v3312 = vld [vmem:[%s7 + $0xa] sm:$0x1]
    %v3313 = vlaneseq
    %v3314 = vshrl.u32 %v3313, 7
    %v3315 = vsub.s32 0, %v3314
    %v3316 = vrot.slane %v3312, %v3315
    %v3318 = vsel %vm65, %v3311, 0
    %3320 = vmatprep.subr.mxu0 0.0
    %3321 = vmatpush1.xpose.msra.mxu0 %v3318
    %3322 = vmatprep.subr.mxu0 0.0
    %3323 = vmatpush1.xpose.msra.mxu0 0.0
    %3324 = vmatprep.subr.mxu0 0.0
    %3325 = vmatpush1.xpose.msra.mxu0 0.0
    %3326 = vmatprep.subr.mxu0 0.0
    %3327 = vmatpush1.xpose.msra.mxu0 0.0
    %3328 = vmatprep.subr.mxu0 0.0
    %3329 = vmatpush1.xpose.msra.mxu0 0.0
    %3330 = vmatprep.subr.mxu0 0.0
    %3331 = vmatpush1.xpose.msra.mxu0 0.0
    %3332 = vmatprep.subr.mxu0 0.0
    %3333 = vmatpush1.xpose.msra.mxu0 0.0
    %3334 = vmatprep.subr.mxu0 0.0
    %3335 = vmatpush1.xpose.msra.mxu0 0.0
    %3336 = vmatprep.subr.mxu0 0.0
    %3337 = vmatpush1.xpose.msra.mxu0 0.0
    %3338 = vmatprep.subr.mxu0 0.0
    %3339 = vmatpush1.xpose.msra.mxu0 0.0
    %3340 = vmatprep.subr.mxu0 0.0
    %3341 = vmatpush1.xpose.msra.mxu0 0.0
    %3342 = vmatprep.subr.mxu0 0.0
    %3343 = vmatpush1.xpose.msra.mxu0 0.0
    %3344 = vmatprep.subr.mxu0 0.0
    %3345 = vmatpush1.xpose.msra.mxu0 0.0
    %3346 = vmatprep.subr.mxu0 0.0
    %3347 = vmatpush1.xpose.msra.mxu0 0.0
    %3348 = vmatprep.subr.mxu0 0.0
    %3349 = vmatpush1.xpose.msra.mxu0 0.0
    %3350 = vmatprep.subr.mxu0 0.0
    %3351 = vmatpush1.xpose.msra.mxu0 0.0
    %3352 = vmatprep.subr.mxu0 0.0
    %3353 = vmatpush1.xpose.msra.mxu0 0.0
    %3354 = vmatprep.subr.mxu0 0.0
    %3355 = vmatpush1.xpose.msra.mxu0 0.0
    %3356 = vmatprep.subr.mxu0 0.0
    %3357 = vmatpush1.xpose.msra.mxu0 0.0
    %3358 = vmatprep.subr.mxu0 0.0
    %3359 = vmatpush1.xpose.msra.mxu0 0.0
    %3360 = vmatprep.subr.mxu0 0.0
    %3361 = vmatpush1.xpose.msra.mxu0 0.0
    %3362 = vmatprep.subr.mxu0 0.0
    %3363 = vmatpush1.xpose.msra.mxu0 0.0
    %3364 = vmatprep.subr.mxu0 0.0
    %3365 = vmatpush1.xpose.msra.mxu0 0.0
    %3366 = vmatprep.subr.mxu0 0.0
    %3367 = vmatpush1.xpose.msra.mxu0 0.0
    %3368 = vmatprep.subr.mxu0 0.0
    %3369 = vmatpush1.xpose.msra.mxu0 0.0
    %3370 = vmatprep.subr.mxu0 0.0
    %3371 = vmatpush1.xpose.msra.mxu0 0.0
    %3372 = vmatprep.subr.mxu0 0.0
    %3373 = vmatpush1.xpose.msra.mxu0 0.0
    %3374 = vmatprep.subr.mxu0 0.0
    %3375 = vmatpush1.xpose.msra.mxu0 0.0
    %3376 = vmatprep.subr.mxu0 0.0
    %3377 = vmatpush1.xpose.msra.mxu0 0.0
    %3378 = vmatprep.subr.mxu0 0.0
    %3379 = vmatpush1.xpose.msra.mxu0 0.0
    %3380 = vmatprep.subr.mxu0 0.0
    %3381 = vmatpush1.xpose.msra.mxu0 0.0
    %3382 = vmatprep.subr.mxu0 0.0
    %3383 = vmatpush1.xpose.msra.mxu0 0.0
    %3384 = vmatprep.mubr.f32.mxu0 0.0
    %3385 = vmatmul.mubr.f32.gmra.mrb[0].mxu0 %v2202
    %v3386 = vpop.f32.mrb[0].mxu0
    %v3387 = vadd.f32 %v3316, %v3386
    %v3388 = vpop.f32.mrb[0].mxu0
    %3389 = vdwg.mxu0
    %v3390 = vmul.f32 %v3229, 0.5
    %v3392 = vsel %vm2436, %v3390, 0
    %v3395 = vsel %vm2436, %v3308, 0
    %3397 = vmatprep.subr.mxu0 0.0
    %3398 = vmatpush1.xpose.msra.mxu0 %v3395
    %3399 = vmatprep.subr.mxu0 0.0
    %3400 = vmatpush1.xpose.msra.mxu0 0.0
    %3401 = vmatprep.subr.mxu0 0.0
    %3402 = vmatpush1.xpose.msra.mxu0 0.0
    %3403 = vmatprep.subr.mxu0 0.0
    %3404 = vmatpush1.xpose.msra.mxu0 0.0
    %3405 = vmatprep.subr.mxu0 0.0
    %3406 = vmatpush1.xpose.msra.mxu0 0.0
    %3407 = vmatprep.subr.mxu0 0.0
    %3408 = vmatpush1.xpose.msra.mxu0 0.0
    %3409 = vmatprep.subr.mxu0 0.0
    %3410 = vmatpush1.xpose.msra.mxu0 0.0
    %3411 = vmatprep.subr.mxu0 0.0
    %3412 = vmatpush1.xpose.msra.mxu0 0.0
    %3413 = vmatprep.subr.mxu0 0.0
    %3414 = vmatpush1.xpose.msra.mxu0 0.0
    %3415 = vmatprep.subr.mxu0 0.0
    %3416 = vmatpush1.xpose.msra.mxu0 0.0
    %3417 = vmatprep.subr.mxu0 0.0
    %3418 = vmatpush1.xpose.msra.mxu0 0.0
    %3419 = vmatprep.subr.mxu0 0.0
    %3420 = vmatpush1.xpose.msra.mxu0 0.0
    %3421 = vmatprep.subr.mxu0 0.0
    %3422 = vmatpush1.xpose.msra.mxu0 0.0
    %3423 = vmatprep.subr.mxu0 0.0
    %3424 = vmatpush1.xpose.msra.mxu0 0.0
    %3425 = vmatprep.subr.mxu0 0.0
    %3426 = vmatpush1.xpose.msra.mxu0 0.0
    %3427 = vmatprep.subr.mxu0 0.0
    %3428 = vmatpush1.xpose.msra.mxu0 0.0
    %3429 = vmatprep.subr.mxu0 0.0
    %3430 = vmatpush1.xpose.msra.mxu0 0.0
    %3431 = vmatprep.subr.mxu0 0.0
    %3432 = vmatpush1.xpose.msra.mxu0 0.0
    %3433 = vmatprep.subr.mxu0 0.0
    %3434 = vmatpush1.xpose.msra.mxu0 0.0
    %3435 = vmatprep.subr.mxu0 0.0
    %3436 = vmatpush1.xpose.msra.mxu0 0.0
    %3437 = vmatprep.subr.mxu0 0.0
    %3438 = vmatpush1.xpose.msra.mxu0 0.0
    %3439 = vmatprep.subr.mxu0 0.0
    %3440 = vmatpush1.xpose.msra.mxu0 0.0
    %3441 = vmatprep.subr.mxu0 0.0
    %3442 = vmatpush1.xpose.msra.mxu0 0.0
    %3443 = vmatprep.subr.mxu0 0.0
    %3444 = vmatpush1.xpose.msra.mxu0 0.0
    %3445 = vmatprep.subr.mxu0 0.0
    %3446 = vmatpush1.xpose.msra.mxu0 0.0
    %3447 = vmatprep.subr.mxu0 0.0
    %3448 = vmatpush1.xpose.msra.mxu0 0.0
    %3449 = vmatprep.subr.mxu0 0.0
    %3450 = vmatpush1.xpose.msra.mxu0 0.0
    %3451 = vmatprep.subr.mxu0 0.0
    %3452 = vmatpush1.xpose.msra.mxu0 0.0
    %3453 = vmatprep.subr.mxu0 0.0
    %3454 = vmatpush1.xpose.msra.mxu0 0.0
    %3455 = vmatprep.subr.mxu0 0.0
    %3456 = vmatpush1.xpose.msra.mxu0 0.0
    %3457 = vmatprep.subr.mxu0 0.0
    %3458 = vmatpush1.xpose.msra.mxu0 0.0
    %3459 = vmatprep.subr.mxu0 0.0
    %3460 = vmatpush1.xpose.msra.mxu0 0.0
    %3461 = vmatprep.mubr.f32.mxu0 0.0
    %3462 = vmatmul.mubr.f32.gmra.mrb[0].mxu0 %v3392
    %v3463 = vpop.f32.mrb[0].mxu0
    %v3464 = vadd.f32 0.0, %v3463
    %v3465 = vpop.f32.mrb[0].mxu0
    %3466 = vdwg.mxu0
    %v3467 = vsel %vm2513, %v3464, -inf
    %3468 = vmax.xlane.f32.xlu0 %v3467
    %v3469 = vpop.xlane.xlu0 %3468
    %v3470 = vsub.f32 %v3464, %v3469
    %v3471 = vmul.f32 %v3470, 1.442695
    %v3472 = vpow.pop %v3471
    %v3473 = vsel %vm2513, %v3472, 0.0
    %3474 = vadd.xlane.f32.xlu0 %v3473
    %v3475 = vpop.xlane.xlu0 %3474
    %v3476 = vrcp.pop %v3475
    %v3477 = vmul.f32 %v3472, %v3476
    %v3478 = vadd.f32 %v2925, %v3477
    %v3480 = vsel %vm2513, %v3477, 0
    %3482 = vmatprep.subr.mxu0 0.0
    %3483 = vmatpush1.msra.mxu0 %v3387
    %3484 = vmatprep.subr.mxu0 0.0
    %3485 = vmatpush1.msra.mxu0 0.0
    %3486 = vmatprep.subr.mxu0 0.0
    %3487 = vmatpush1.msra.mxu0 0.0
    %3488 = vmatprep.subr.mxu0 0.0
    %3489 = vmatpush1.msra.mxu0 0.0
    %3490 = vmatprep.subr.mxu0 0.0
    %3491 = vmatpush1.msra.mxu0 0.0
    %3492 = vmatprep.subr.mxu0 0.0
    %3493 = vmatpush1.msra.mxu0 0.0
    %3494 = vmatprep.subr.mxu0 0.0
    %3495 = vmatpush1.msra.mxu0 0.0
    %3496 = vmatprep.subr.mxu0 0.0
    %3497 = vmatpush1.msra.mxu0 0.0
    %3498 = vmatprep.subr.mxu0 0.0
    %3499 = vmatpush1.msra.mxu0 0.0
    %3500 = vmatprep.subr.mxu0 0.0
    %3501 = vmatpush1.msra.mxu0 0.0
    %3502 = vmatprep.subr.mxu0 0.0
    %3503 = vmatpush1.msra.mxu0 0.0
    %3504 = vmatprep.subr.mxu0 0.0
    %3505 = vmatpush1.msra.mxu0 0.0
    %3506 = vmatprep.subr.mxu0 0.0
    %3507 = vmatpush1.msra.mxu0 0.0
    %3508 = vmatprep.subr.mxu0 0.0
    %3509 = vmatpush1.msra.mxu0 0.0
    %3510 = vmatprep.subr.mxu0 0.0
    %3511 = vmatpush1.msra.mxu0 0.0
    %3512 = vmatprep.subr.mxu0 0.0
    %3513 = vmatpush1.msra.mxu0 0.0
    %3514 = vmatprep.subr.mxu0 0.0
    %3515 = vmatpush1.msra.mxu0 0.0
    %3516 = vmatprep.subr.mxu0 0.0
    %3517 = vmatpush1.msra.mxu0 0.0
    %3518 = vmatprep.subr.mxu0 0.0
    %3519 = vmatpush1.msra.mxu0 0.0
    %3520 = vmatprep.subr.mxu0 0.0
    %3521 = vmatpush1.msra.mxu0 0.0
    %3522 = vmatprep.subr.mxu0 0.0
    %3523 = vmatpush1.msra.mxu0 0.0
    %3524 = vmatprep.subr.mxu0 0.0
    %3525 = vmatpush1.msra.mxu0 0.0
    %3526 = vmatprep.subr.mxu0 0.0
    %3527 = vmatpush1.msra.mxu0 0.0
    %3528 = vmatprep.subr.mxu0 0.0
    %3529 = vmatpush1.msra.mxu0 0.0
    %3530 = vmatprep.subr.mxu0 0.0
    %3531 = vmatpush1.msra.mxu0 0.0
    %3532 = vmatprep.subr.mxu0 0.0
    %3533 = vmatpush1.msra.mxu0 0.0
    %3534 = vmatprep.subr.mxu0 0.0
    %3535 = vmatpush1.msra.mxu0 0.0
    %3536 = vmatprep.subr.mxu0 0.0
    %3537 = vmatpush1.msra.mxu0 0.0
    %3538 = vmatprep.subr.mxu0 0.0
    %3539 = vmatpush1.msra.mxu0 0.0
    %3540 = vmatprep.subr.mxu0 0.0
    %3541 = vmatpush1.msra.mxu0 0.0
    %3542 = vmatprep.subr.mxu0 0.0
    %3543 = vmatpush1.msra.mxu0 0.0
    %3544 = vmatprep.subr.mxu0 0.0
    %3545 = vmatpush1.msra.mxu0 0.0
    %3546 = vmatprep.mubr.f32.mxu0 0.0
    %3547 = vmatmul.mubr.f32.gmra.mrb[0].mxu0 %v3480
    %v3548 = vpop.f32.mrb[0].mxu0
    %v3549 = vadd.f32 0.0, %v3548
    %v3550 = vpop.f32.mrb[0].mxu0
    %3551 = vdwg.mxu0
    %v3552 = vld [vmem:[%s8 + $0x8] sm:$0xf]
    %v3554 = vsel %vm2436, %v3549, 0
    %v3557 = vsel %vm3003, %v3552, 0
    %3559 = vmatprep.subr.mxu0 0.0
    %3560 = vmatpush1.msra.mxu0 %v3557
    %3561 = vmatprep.subr.mxu0 0.0
    %3562 = vmatpush1.msra.mxu0 0.0
    %3563 = vmatprep.subr.mxu0 0.0
    %3564 = vmatpush1.msra.mxu0 0.0
    %3565 = vmatprep.subr.mxu0 0.0
    %3566 = vmatpush1.msra.mxu0 0.0
    %3567 = vmatprep.subr.mxu0 0.0
    %3568 = vmatpush1.msra.mxu0 0.0
    %3569 = vmatprep.subr.mxu0 0.0
    %3570 = vmatpush1.msra.mxu0 0.0
    %3571 = vmatprep.subr.mxu0 0.0
    %3572 = vmatpush1.msra.mxu0 0.0
    %3573 = vmatprep.subr.mxu0 0.0
    %3574 = vmatpush1.msra.mxu0 0.0
    %3575 = vmatprep.subr.mxu0 0.0
    %3576 = vmatpush1.msra.mxu0 0.0
    %3577 = vmatprep.subr.mxu0 0.0
    %3578 = vmatpush1.msra.mxu0 0.0
    %3579 = vmatprep.subr.mxu0 0.0
    %3580 = vmatpush1.msra.mxu0 0.0
    %3581 = vmatprep.subr.mxu0 0.0
    %3582 = vmatpush1.msra.mxu0 0.0
    %3583 = vmatprep.subr.mxu0 0.0
    %3584 = vmatpush1.msra.mxu0 0.0
    %3585 = vmatprep.subr.mxu0 0.0
    %3586 = vmatpush1.msra.mxu0 0.0
    %3587 = vmatprep.subr.mxu0 0.0
    %3588 = vmatpush1.msra.mxu0 0.0
    %3589 = vmatprep.subr.mxu0 0.0
    %3590 = vmatpush1.msra.mxu0 0.0
    %3591 = vmatprep.subr.mxu0 0.0
    %3592 = vmatpush1.msra.mxu0 0.0
    %3593 = vmatprep.subr.mxu0 0.0
    %3594 = vmatpush1.msra.mxu0 0.0
    %3595 = vmatprep.subr.mxu0 0.0
    %3596 = vmatpush1.msra.mxu0 0.0
    %3597 = vmatprep.subr.mxu0 0.0
    %3598 = vmatpush1.msra.mxu0 0.0
    %3599 = vmatprep.subr.mxu0 0.0
    %3600 = vmatpush1.msra.mxu0 0.0
    %3601 = vmatprep.subr.mxu0 0.0
    %3602 = vmatpush1.msra.mxu0 0.0
    %3603 = vmatprep.subr.mxu0 0.0
    %3604 = vmatpush1.msra.mxu0 0.0
    %3605 = vmatprep.subr.mxu0 0.0
    %3606 = vmatpush1.msra.mxu0 0.0
    %3607 = vmatprep.subr.mxu0 0.0
    %3608 = vmatpush1.msra.mxu0 0.0
    %3609 = vmatprep.subr.mxu0 0.0
    %3610 = vmatpush1.msra.mxu0 0.0
    %3611 = vmatprep.subr.mxu0 0.0
    %3612 = vmatpush1.msra.mxu0 0.0
    %3613 = vmatprep.subr.mxu0 0.0
    %3614 = vmatpush1.msra.mxu0 0.0
    %3615 = vmatprep.subr.mxu0 0.0
    %3616 = vmatpush1.msra.mxu0 0.0
    %3617 = vmatprep.subr.mxu0 0.0
    %3618 = vmatpush1.msra.mxu0 0.0
    %3619 = vmatprep.subr.mxu0 0.0
    %3620 = vmatpush1.msra.mxu0 0.0
    %3621 = vmatprep.subr.mxu0 0.0
    %3622 = vmatpush1.msra.mxu0 0.0
    %3623 = vmatprep.mubr.f32.mxu0 0.0
    %3624 = vmatmul.mubr.f32.gmra.mrb[0].mxu0 %v3554
    %v3625 = vpop.f32.mrb[0].mxu0
    %v3626 = vadd.f32 0.0, %v3625
    %v3627 = vpop.f32.mrb[0].mxu0
    %3628 = vdwg.mxu0
    %v3629 = vadd.f32 %v3150, %v3626
    %v3630 = vld [vmem:[%s6 + $0xc] sm:$0xf]
    %v3631 = vld [vmem:[%s7 + $0x3] sm:$0x1]
    %v3632 = vlaneseq
    %v3633 = vshrl.u32 %v3632, 7
    %v3634 = vsub.s32 0, %v3633
    %v3635 = vrot.slane %v3631, %v3634
    %v3637 = vsel %vm65, %v3630, 0
    %3639 = vmatprep.subr.mxu0 0.0
    %3640 = vmatpush1.xpose.msra.mxu0 %v3637
    %3641 = vmatprep.subr.mxu0 0.0
    %3642 = vmatpush1.xpose.msra.mxu0 0.0
    %3643 = vmatprep.subr.mxu0 0.0
    %3644 = vmatpush1.xpose.msra.mxu0 0.0
    %3645 = vmatprep.subr.mxu0 0.0
    %3646 = vmatpush1.xpose.msra.mxu0 0.0
    %3647 = vmatprep.subr.mxu0 0.0
    %3648 = vmatpush1.xpose.msra.mxu0 0.0
    %3649 = vmatprep.subr.mxu0 0.0
    %3650 = vmatpush1.xpose.msra.mxu0 0.0
    %3651 = vmatprep.subr.mxu0 0.0
    %3652 = vmatpush1.xpose.msra.mxu0 0.0
    %3653 = vmatprep.subr.mxu0 0.0
    %3654 = vmatpush1.xpose.msra.mxu0 0.0
    %3655 = vmatprep.subr.mxu0 0.0
    %3656 = vmatpush1.xpose.msra.mxu0 0.0
    %3657 = vmatprep.subr.mxu0 0.0
    %3658 = vmatpush1.xpose.msra.mxu0 0.0
    %3659 = vmatprep.subr.mxu0 0.0
    %3660 = vmatpush1.xpose.msra.mxu0 0.0
    %3661 = vmatprep.subr.mxu0 0.0
    %3662 = vmatpush1.xpose.msra.mxu0 0.0
    %3663 = vmatprep.subr.mxu0 0.0
    %3664 = vmatpush1.xpose.msra.mxu0 0.0
    %3665 = vmatprep.subr.mxu0 0.0
    %3666 = vmatpush1.xpose.msra.mxu0 0.0
    %3667 = vmatprep.subr.mxu0 0.0
    %3668 = vmatpush1.xpose.msra.mxu0 0.0
    %3669 = vmatprep.subr.mxu0 0.0
    %3670 = vmatpush1.xpose.msra.mxu0 0.0
    %3671 = vmatprep.subr.mxu0 0.0
    %3672 = vmatpush1.xpose.msra.mxu0 0.0
    %3673 = vmatprep.subr.mxu0 0.0
    %3674 = vmatpush1.xpose.msra.mxu0 0.0
    %3675 = vmatprep.subr.mxu0 0.0
    %3676 = vmatpush1.xpose.msra.mxu0 0.0
    %3677 = vmatprep.subr.mxu0 0.0
    %3678 = vmatpush1.xpose.msra.mxu0 0.0
    %3679 = vmatprep.subr.mxu0 0.0
    %3680 = vmatpush1.xpose.msra.mxu0 0.0
    %3681 = vmatprep.subr.mxu0 0.0
    %3682 = vmatpush1.xpose.msra.mxu0 0.0
    %3683 = vmatprep.subr.mxu0 0.0
    %3684 = vmatpush1.xpose.msra.mxu0 0.0
    %3685 = vmatprep.subr.mxu0 0.0
    %3686 = vmatpush1.xpose.msra.mxu0 0.0
    %3687 = vmatprep.subr.mxu0 0.0
    %3688 = vmatpush1.xpose.msra.mxu0 0.0
    %3689 = vmatprep.subr.mxu0 0.0
    %3690 = vmatpush1.xpose.msra.mxu0 0.0
    %3691 = vmatprep.subr.mxu0 0.0
    %3692 = vmatpush1.xpose.msra.mxu0 0.0
    %3693 = vmatprep.subr.mxu0 0.0
    %3694 = vmatpush1.xpose.msra.mxu0 0.0
    %3695 = vmatprep.subr.mxu0 0.0
    %3696 = vmatpush1.xpose.msra.mxu0 0.0
    %3697 = vmatprep.subr.mxu0 0.0
    %3698 = vmatpush1.xpose.msra.mxu0 0.0
    %3699 = vmatprep.subr.mxu0 0.0
    %3700 = vmatpush1.xpose.msra.mxu0 0.0
    %3701 = vmatprep.subr.mxu0 0.0
    %3702 = vmatpush1.xpose.msra.mxu0 0.0
    %3703 = vmatprep.mubr.f32.mxu0 0.0
    %3704 = vmatmul.mubr.f32.gmra.mrb[0].mxu0 %v2202
    %v3705 = vpop.f32.mrb[0].mxu0
    %v3706 = vadd.f32 %v3635, %v3705
    %v3707 = vpop.f32.mrb[0].mxu0
    %3708 = vdwg.mxu0
    %v3709 = vld [vmem:[%s6 + $0x1c] sm:$0xf]
    %v3710 = vld [vmem:[%s7 + $0x7] sm:$0x1]
    %v3711 = vlaneseq
    %v3712 = vshrl.u32 %v3711, 7
    %v3713 = vsub.s32 0, %v3712
    %v3714 = vrot.slane %v3710, %v3713
    %v3716 = vsel %vm65, %v3709, 0
    %3718 = vmatprep.subr.mxu0 0.0
    %3719 = vmatpush1.xpose.msra.mxu0 %v3716
    %3720 = vmatprep.subr.mxu0 0.0
    %3721 = vmatpush1.xpose.msra.mxu0 0.0
    %3722 = vmatprep.subr.mxu0 0.0
    %3723 = vmatpush1.xpose.msra.mxu0 0.0
    %3724 = vmatprep.subr.mxu0 0.0
    %3725 = vmatpush1.xpose.msra.mxu0 0.0
    %3726 = vmatprep.subr.mxu0 0.0
    %3727 = vmatpush1.xpose.msra.mxu0 0.0
    %3728 = vmatprep.subr.mxu0 0.0
    %3729 = vmatpush1.xpose.msra.mxu0 0.0
    %3730 = vmatprep.subr.mxu0 0.0
    %3731 = vmatpush1.xpose.msra.mxu0 0.0
    %3732 = vmatprep.subr.mxu0 0.0
    %3733 = vmatpush1.xpose.msra.mxu0 0.0
    %3734 = vmatprep.subr.mxu0 0.0
    %3735 = vmatpush1.xpose.msra.mxu0 0.0
    %3736 = vmatprep.subr.mxu0 0.0
    %3737 = vmatpush1.xpose.msra.mxu0 0.0
    %3738 = vmatprep.subr.mxu0 0.0
    %3739 = vmatpush1.xpose.msra.mxu0 0.0
    %3740 = vmatprep.subr.mxu0 0.0
    %3741 = vmatpush1.xpose.msra.mxu0 0.0
    %3742 = vmatprep.subr.mxu0 0.0
    %3743 = vmatpush1.xpose.msra.mxu0 0.0
    %3744 = vmatprep.subr.mxu0 0.0
    %3745 = vmatpush1.xpose.msra.mxu0 0.0
    %3746 = vmatprep.subr.mxu0 0.0
    %3747 = vmatpush1.xpose.msra.mxu0 0.0
    %3748 = vmatprep.subr.mxu0 0.0
    %3749 = vmatpush1.xpose.msra.mxu0 0.0
    %3750 = vmatprep.subr.mxu0 0.0
    %3751 = vmatpush1.xpose.msra.mxu0 0.0
    %3752 = vmatprep.subr.mxu0 0.0
    %3753 = vmatpush1.xpose.msra.mxu0 0.0
    %3754 = vmatprep.subr.mxu0 0.0
    %3755 = vmatpush1.xpose.msra.mxu0 0.0
    %3756 = vmatprep.subr.mxu0 0.0
    %3757 = vmatpush1.xpose.msra.mxu0 0.0
    %3758 = vmatprep.subr.mxu0 0.0
    %3759 = vmatpush1.xpose.msra.mxu0 0.0
    %3760 = vmatprep.subr.mxu0 0.0
    %3761 = vmatpush1.xpose.msra.mxu0 0.0
    %3762 = vmatprep.subr.mxu0 0.0
    %3763 = vmatpush1.xpose.msra.mxu0 0.0
    %3764 = vmatprep.subr.mxu0 0.0
    %3765 = vmatpush1.xpose.msra.mxu0 0.0
    %3766 = vmatprep.subr.mxu0 0.0
    %3767 = vmatpush1.xpose.msra.mxu0 0.0
    %3768 = vmatprep.subr.mxu0 0.0
    %3769 = vmatpush1.xpose.msra.mxu0 0.0
    %3770 = vmatprep.subr.mxu0 0.0
    %3771 = vmatpush1.xpose.msra.mxu0 0.0
    %3772 = vmatprep.subr.mxu0 0.0
    %3773 = vmatpush1.xpose.msra.mxu0 0.0
    %3774 = vmatprep.subr.mxu0 0.0
    %3775 = vmatpush1.xpose.msra.mxu0 0.0
    %3776 = vmatprep.subr.mxu0 0.0
    %3777 = vmatpush1.xpose.msra.mxu0 0.0
    %3778 = vmatprep.subr.mxu0 0.0
    %3779 = vmatpush1.xpose.msra.mxu0 0.0
    %3780 = vmatprep.subr.mxu0 0.0
    %3781 = vmatpush1.xpose.msra.mxu0 0.0
    %3782 = vmatprep.mubr.f32.mxu0 0.0
    %3783 = vmatmul.mubr.f32.gmra.mrb[0].mxu0 %v2202
    %v3784 = vpop.f32.mrb[0].mxu0
    %v3785 = vadd.f32 %v3714, %v3784
    %v3786 = vpop.f32.mrb[0].mxu0
    %3787 = vdwg.mxu0
    %v3788 = vld [vmem:[%s6 + $0x2c] sm:$0xf]
    %v3789 = vld [vmem:[%s7 + $0xb] sm:$0x1]
    %v3790 = vlaneseq
    %v3791 = vshrl.u32 %v3790, 7
    %v3792 = vsub.s32 0, %v3791
    %v3793 = vrot.slane %v3789, %v3792
    %v3795 = vsel %vm65, %v3788, 0
    %3797 = vmatprep.subr.mxu0 0.0
    %3798 = vmatpush1.xpose.msra.mxu0 %v3795
    %3799 = vmatprep.subr.mxu0 0.0
    %3800 = vmatpush1.xpose.msra.mxu0 0.0
    %3801 = vmatprep.subr.mxu0 0.0
    %3802 = vmatpush1.xpose.msra.mxu0 0.0
    %3803 = vmatprep.subr.mxu0 0.0
    %3804 = vmatpush1.xpose.msra.mxu0 0.0
    %3805 = vmatprep.subr.mxu0 0.0
    %3806 = vmatpush1.xpose.msra.mxu0 0.0
    %3807 = vmatprep.subr.mxu0 0.0
    %3808 = vmatpush1.xpose.msra.mxu0 0.0
    %3809 = vmatprep.subr.mxu0 0.0
    %3810 = vmatpush1.xpose.msra.mxu0 0.0
    %3811 = vmatprep.subr.mxu0 0.0
    %3812 = vmatpush1.xpose.msra.mxu0 0.0
    %3813 = vmatprep.subr.mxu0 0.0
    %3814 = vmatpush1.xpose.msra.mxu0 0.0
    %3815 = vmatprep.subr.mxu0 0.0
    %3816 = vmatpush1.xpose.msra.mxu0 0.0
    %3817 = vmatprep.subr.mxu0 0.0
    %3818 = vmatpush1.xpose.msra.mxu0 0.0
    %3819 = vmatprep.subr.mxu0 0.0
    %3820 = vmatpush1.xpose.msra.mxu0 0.0
    %3821 = vmatprep.subr.mxu0 0.0
    %3822 = vmatpush1.xpose.msra.mxu0 0.0
    %3823 = vmatprep.subr.mxu0 0.0
    %3824 = vmatpush1.xpose.msra.mxu0 0.0
    %3825 = vmatprep.subr.mxu0 0.0
    %3826 = vmatpush1.xpose.msra.mxu0 0.0
    %3827 = vmatprep.subr.mxu0 0.0
    %3828 = vmatpush1.xpose.msra.mxu0 0.0
    %3829 = vmatprep.subr.mxu0 0.0
    %3830 = vmatpush1.xpose.msra.mxu0 0.0
    %3831 = vmatprep.subr.mxu0 0.0
    %3832 = vmatpush1.xpose.msra.mxu0 0.0
    %3833 = vmatprep.subr.mxu0 0.0
    %3834 = vmatpush1.xpose.msra.mxu0 0.0
    %3835 = vmatprep.subr.mxu0 0.0
    %3836 = vmatpush1.xpose.msra.mxu0 0.0
    %3837 = vmatprep.subr.mxu0 0.0
    %3838 = vmatpush1.xpose.msra.mxu0 0.0
    %3839 = vmatprep.subr.mxu0 0.0
    %3840 = vmatpush1.xpose.msra.mxu0 0.0
    %3841 = vmatprep.subr.mxu0 0.0
    %3842 = vmatpush1.xpose.msra.mxu0 0.0
    %3843 = vmatprep.subr.mxu0 0.0
    %3844 = vmatpush1.xpose.msra.mxu0 0.0
    %3845 = vmatprep.subr.mxu0 0.0
    %3846 = vmatpush1.xpose.msra.mxu0 0.0
    %3847 = vmatprep.subr.mxu0 0.0
    %3848 = vmatpush1.xpose.msra.mxu0 0.0
    %3849 = vmatprep.subr.mxu0 0.0
    %3850 = vmatpush1.xpose.msra.mxu0 0.0
    %3851 = vmatprep.subr.mxu0 0.0
    %3852 = vmatpush1.xpose.msra.mxu0 0.0
    %3853 = vmatprep.subr.mxu0 0.0
    %3854 = vmatpush1.xpose.msra.mxu0 0.0
    %3855 = vmatprep.subr.mxu0 0.0
    %3856 = vmatpush1.xpose.msra.mxu0 0.0
    %3857 = vmatprep.subr.mxu0 0.0
    %3858 = vmatpush1.xpose.msra.mxu0 0.0
    %3859 = vmatprep.subr.mxu0 0.0
    %3860 = vmatpush1.xpose.msra.mxu0 0.0
    %3861 = vmatprep.mubr.f32.mxu0 0.0
    %3862 = vmatmul.mubr.f32.gmra.mrb[0].mxu0 %v2202
    %v3863 = vpop.f32.mrb[0].mxu0
    %v3864 = vadd.f32 %v3793, %v3863
    %v3865 = vpop.f32.mrb[0].mxu0
    %3866 = vdwg.mxu0
    %v3867 = vmul.f32 %v3706, 0.5
    %v3869 = vsel %vm2436, %v3867, 0
    %v3872 = vsel %vm2436, %v3785, 0
    %3874 = vmatprep.subr.mxu0 0.0
    %3875 = vmatpush1.xpose.msra.mxu0 %v3872
    %3876 = vmatprep.subr.mxu0 0.0
    %3877 = vmatpush1.xpose.msra.mxu0 0.0
    %3878 = vmatprep.subr.mxu0 0.0
    %3879 = vmatpush1.xpose.msra.mxu0 0.0
    %3880 = vmatprep.subr.mxu0 0.0
    %3881 = vmatpush1.xpose.msra.mxu0 0.0
    %3882 = vmatprep.subr.mxu0 0.0
    %3883 = vmatpush1.xpose.msra.mxu0 0.0
    %3884 = vmatprep.subr.mxu0 0.0
    %3885 = vmatpush1.xpose.msra.mxu0 0.0
    %3886 = vmatprep.subr.mxu0 0.0
    %3887 = vmatpush1.xpose.msra.mxu0 0.0
    %3888 = vmatprep.subr.mxu0 0.0
    %3889 = vmatpush1.xpose.msra.mxu0 0.0
    %3890 = vmatprep.subr.mxu0 0.0
    %3891 = vmatpush1.xpose.msra.mxu0 0.0
    %3892 = vmatprep.subr.mxu0 0.0
    %3893 = vmatpush1.xpose.msra.mxu0 0.0
    %3894 = vmatprep.subr.mxu0 0.0
    %3895 = vmatpush1.xpose.msra.mxu0 0.0
    %3896 = vmatprep.subr.mxu0 0.0
    %3897 = vmatpush1.xpose.msra.mxu0 0.0
    %3898 = vmatprep.subr.mxu0 0.0
    %3899 = vmatpush1.xpose.msra.mxu0 0.0
    %3900 = vmatprep.subr.mxu0 0.0
    %3901 = vmatpush1.xpose.msra.mxu0 0.0
    %3902 = vmatprep.subr.mxu0 0.0
    %3903 = vmatpush1.xpose.msra.mxu0 0.0
    %3904 = vmatprep.subr.mxu0 0.0
    %3905 = vmatpush1.xpose.msra.mxu0 0.0
    %3906 = vmatprep.subr.mxu0 0.0
    %3907 = vmatpush1.xpose.msra.mxu0 0.0
    %3908 = vmatprep.subr.mxu0 0.0
    %3909 = vmatpush1.xpose.msra.mxu0 0.0
    %3910 = vmatprep.subr.mxu0 0.0
    %3911 = vmatpush1.xpose.msra.mxu0 0.0
    %3912 = vmatprep.subr.mxu0 0.0
    %3913 = vmatpush1.xpose.msra.mxu0 0.0
    %3914 = vmatprep.subr.mxu0 0.0
    %3915 = vmatpush1.xpose.msra.mxu0 0.0
    %3916 = vmatprep.subr.mxu0 0.0
    %3917 = vmatpush1.xpose.msra.mxu0 0.0
    %3918 = vmatprep.subr.mxu0 0.0
    %3919 = vmatpush1.xpose.msra.mxu0 0.0
    %3920 = vmatprep.subr.mxu0 0.0
    %3921 = vmatpush1.xpose.msra.mxu0 0.0
    %3922 = vmatprep.subr.mxu0 0.0
    %3923 = vmatpush1.xpose.msra.mxu0 0.0
    %3924 = vmatprep.subr.mxu0 0.0
    %3925 = vmatpush1.xpose.msra.mxu0 0.0
    %3926 = vmatprep.subr.mxu0 0.0
    %3927 = vmatpush1.xpose.msra.mxu0 0.0
    %3928 = vmatprep.subr.mxu0 0.0
    %3929 = vmatpush1.xpose.msra.mxu0 0.0
    %3930 = vmatprep.subr.mxu0 0.0
    %3931 = vmatpush1.xpose.msra.mxu0 0.0
    %3932 = vmatprep.subr.mxu0 0.0
    %3933 = vmatpush1.xpose.msra.mxu0 0.0
    %3934 = vmatprep.subr.mxu0 0.0
    %3935 = vmatpush1.xpose.msra.mxu0 0.0
    %3936 = vmatprep.subr.mxu0 0.0
    %3937 = vmatpush1.xpose.msra.mxu0 0.0
    %3938 = vmatprep.mubr.f32.mxu0 0.0
    %3939 = vmatmul.mubr.f32.gmra.mrb[0].mxu0 %v3869
    %v3940 = vpop.f32.mrb[0].mxu0
    %v3941 = vadd.f32 0.0, %v3940
    %v3942 = vpop.f32.mrb[0].mxu0
    %3943 = vdwg.mxu0
    %v3944 = vsel %vm2513, %v3941, -inf
    %3945 = vmax.xlane.f32.xlu0 %v3944
    %v3946 = vpop.xlane.xlu0 %3945
    %v3947 = vsub.f32 %v3941, %v3946
    %v3948 = vmul.f32 %v3947, 1.442695
    %v3949 = vpow.pop %v3948
    %v3950 = vsel %vm2513, %v3949, 0.0
    %3951 = vadd.xlane.f32.xlu0 %v3950
    %v3952 = vpop.xlane.xlu0 %3951
    %v3953 = vrcp.pop %v3952
    %v3954 = vmul.f32 %v3949, %v3953
    %v3955 = vadd.f32 %v3478, %v3954
    %v3957 = vsel %vm2513, %v3954, 0
    %3959 = vmatprep.subr.mxu0 0.0
    %3960 = vmatpush1.msra.mxu0 %v3864
    %3961 = vmatprep.subr.mxu0 0.0
    %3962 = vmatpush1.msra.mxu0 0.0
    %3963 = vmatprep.subr.mxu0 0.0
    %3964 = vmatpush1.msra.mxu0 0.0
    %3965 = vmatprep.subr.mxu0 0.0
    %3966 = vmatpush1.msra.mxu0 0.0
    %3967 = vmatprep.subr.mxu0 0.0
    %3968 = vmatpush1.msra.mxu0 0.0
    %3969 = vmatprep.subr.mxu0 0.0
    %3970 = vmatpush1.msra.mxu0 0.0
    %3971 = vmatprep.subr.mxu0 0.0
    %3972 = vmatpush1.msra.mxu0 0.0
    %3973 = vmatprep.subr.mxu0 0.0
    %3974 = vmatpush1.msra.mxu0 0.0
    %3975 = vmatprep.subr.mxu0 0.0
    %3976 = vmatpush1.msra.mxu0 0.0
    %3977 = vmatprep.subr.mxu0 0.0
    %3978 = vmatpush1.msra.mxu0 0.0
    %3979 = vmatprep.subr.mxu0 0.0
    %3980 = vmatpush1.msra.mxu0 0.0
    %3981 = vmatprep.subr.mxu0 0.0
    %3982 = vmatpush1.msra.mxu0 0.0
    %3983 = vmatprep.subr.mxu0 0.0
    %3984 = vmatpush1.msra.mxu0 0.0
    %3985 = vmatprep.subr.mxu0 0.0
    %3986 = vmatpush1.msra.mxu0 0.0
    %3987 = vmatprep.subr.mxu0 0.0
    %3988 = vmatpush1.msra.mxu0 0.0
    %3989 = vmatprep.subr.mxu0 0.0
    %3990 = vmatpush1.msra.mxu0 0.0
    %3991 = vmatprep.subr.mxu0 0.0
    %3992 = vmatpush1.msra.mxu0 0.0
    %3993 = vmatprep.subr.mxu0 0.0
    %3994 = vmatpush1.msra.mxu0 0.0
    %3995 = vmatprep.subr.mxu0 0.0
    %3996 = vmatpush1.msra.mxu0 0.0
    %3997 = vmatprep.subr.mxu0 0.0
    %3998 = vmatpush1.msra.mxu0 0.0
    %3999 = vmatprep.subr.mxu0 0.0
    %4000 = vmatpush1.msra.mxu0 0.0
    %4001 = vmatprep.subr.mxu0 0.0
    %4002 = vmatpush1.msra.mxu0 0.0
    %4003 = vmatprep.subr.mxu0 0.0
    %4004 = vmatpush1.msra.mxu0 0.0
    %4005 = vmatprep.subr.mxu0 0.0
    %4006 = vmatpush1.msra.mxu0 0.0
    %4007 = vmatprep.subr.mxu0 0.0
    %4008 = vmatpush1.msra.mxu0 0.0
    %4009 = vmatprep.subr.mxu0 0.0
    %4010 = vmatpush1.msra.mxu0 0.0
    %4011 = vmatprep.subr.mxu0 0.0
    %4012 = vmatpush1.msra.mxu0 0.0
    %4013 = vmatprep.subr.mxu0 0.0
    %4014 = vmatpush1.msra.mxu0 0.0
    %4015 = vmatprep.subr.mxu0 0.0
    %4016 = vmatpush1.msra.mxu0 0.0
    %4017 = vmatprep.subr.mxu0 0.0
    %4018 = vmatpush1.msra.mxu0 0.0
    %4019 = vmatprep.subr.mxu0 0.0
    %4020 = vmatpush1.msra.mxu0 0.0
    %4021 = vmatprep.subr.mxu0 0.0
    %4022 = vmatpush1.msra.mxu0 0.0
    %4023 = vmatprep.mubr.f32.mxu0 0.0
    %4024 = vmatmul.mubr.f32.gmra.mrb[0].mxu0 %v3957
    %v4025 = vpop.f32.mrb[0].mxu0
    %v4026 = vadd.f32 0.0, %v4025
    %v4027 = vpop.f32.mrb[0].mxu0
    %4028 = vdwg.mxu0
    %v4029 = vld [vmem:[%s8 + $0xc] sm:$0xf]
    %v4031 = vsel %vm2436, %v4026, 0
    %v4034 = vsel %vm3003, %v4029, 0
    %4036 = vmatprep.subr.mxu0 0.0
    %4037 = vmatpush1.msra.mxu0 %v4034
    %4038 = vmatprep.subr.mxu0 0.0
    %4039 = vmatpush1.msra.mxu0 0.0
    %4040 = vmatprep.subr.mxu0 0.0
    %4041 = vmatpush1.msra.mxu0 0.0
    %4042 = vmatprep.subr.mxu0 0.0
    %4043 = vmatpush1.msra.mxu0 0.0
    %4044 = vmatprep.subr.mxu0 0.0
    %4045 = vmatpush1.msra.mxu0 0.0
    %4046 = vmatprep.subr.mxu0 0.0
    %4047 = vmatpush1.msra.mxu0 0.0
    %4048 = vmatprep.subr.mxu0 0.0
    %4049 = vmatpush1.msra.mxu0 0.0
    %4050 = vmatprep.subr.mxu0 0.0
    %4051 = vmatpush1.msra.mxu0 0.0
    %4052 = vmatprep.subr.mxu0 0.0
    %4053 = vmatpush1.msra.mxu0 0.0
    %4054 = vmatprep.subr.mxu0 0.0
    %4055 = vmatpush1.msra.mxu0 0.0
    %4056 = vmatprep.subr.mxu0 0.0
    %4057 = vmatpush1.msra.mxu0 0.0
    %4058 = vmatprep.subr.mxu0 0.0
    %4059 = vmatpush1.msra.mxu0 0.0
    %4060 = vmatprep.subr.mxu0 0.0
    %4061 = vmatpush1.msra.mxu0 0.0
    %4062 = vmatprep.subr.mxu0 0.0
    %4063 = vmatpush1.msra.mxu0 0.0
    %4064 = vmatprep.subr.mxu0 0.0
    %4065 = vmatpush1.msra.mxu0 0.0
    %4066 = vmatprep.subr.mxu0 0.0
    %4067 = vmatpush1.msra.mxu0 0.0
    %4068 = vmatprep.subr.mxu0 0.0
    %4069 = vmatpush1.msra.mxu0 0.0
    %4070 = vmatprep.subr.mxu0 0.0
    %4071 = vmatpush1.msra.mxu0 0.0
    %4072 = vmatprep.subr.mxu0 0.0
    %4073 = vmatpush1.msra.mxu0 0.0
    %4074 = vmatprep.subr.mxu0 0.0
    %4075 = vmatpush1.msra.mxu0 0.0
    %4076 = vmatprep.subr.mxu0 0.0
    %4077 = vmatpush1.msra.mxu0 0.0
    %4078 = vmatprep.subr.mxu0 0.0
    %4079 = vmatpush1.msra.mxu0 0.0
    %4080 = vmatprep.subr.mxu0 0.0
    %4081 = vmatpush1.msra.mxu0 0.0
    %4082 = vmatprep.subr.mxu0 0.0
    %4083 = vmatpush1.msra.mxu0 0.0
    %4084 = vmatprep.subr.mxu0 0.0
    %4085 = vmatpush1.msra.mxu0 0.0
    %4086 = vmatprep.subr.mxu0 0.0
    %4087 = vmatpush1.msra.mxu0 0.0
    %4088 = vmatprep.subr.mxu0 0.0
    %4089 = vmatpush1.msra.mxu0 0.0
    %4090 = vmatprep.subr.mxu0 0.0
    %4091 = vmatpush1.msra.mxu0 0.0
    %4092 = vmatprep.subr.mxu0 0.0
    %4093 = vmatpush1.msra.mxu0 0.0
    %4094 = vmatprep.subr.mxu0 0.0
    %4095 = vmatpush1.msra.mxu0 0.0
    %4096 = vmatprep.subr.mxu0 0.0
    %4097 = vmatpush1.msra.mxu0 0.0
    %4098 = vmatprep.subr.mxu0 0.0
    %4099 = vmatpush1.msra.mxu0 0.0
    %4100 = vmatprep.mubr.f32.mxu0 0.0
    %4101 = vmatmul.mubr.f32.gmra.mrb[0].mxu0 %v4031
    %v4102 = vpop.f32.mrb[0].mxu0
    %v4103 = vadd.f32 0.0, %v4102
    %v4104 = vpop.f32.mrb[0].mxu0
    %4105 = vdwg.mxu0
    %v4106 = vadd.f32 %v3629, %v4103
    %v4108 = vlaneseq
    %v4109 = vshrl.u32 %v4108, 7
    %v4110 = vsub.s32 0, %v4109
    %v4111 = vrot.slane %v2193, %v4110
    %v4113 = vadd.f32 %v4106, %v4111
    %4114 = vst.msk [vmem:[%s11] sm:$0xff] %vm212, %v4113
    %v4115 = vmul.f32 %v3955, 0.25
    %4116 = vst.msk [vmem:[#allocation5] sm:$0xff] %vm2513, %v4115
    %v4117 = vld [vmem:[%s496] sm:$0xff]
    %v4118 = vld [vmem:[%s6] sm:$0xf]
    %v4119 = vld [vmem:[%s7] sm:$0x1]
    %v4120 = vlaneseq
    %v4121 = vshrl.u32 %v4120, 7
    %v4122 = vsub.s32 0, %v4121
    %v4123 = vrot.slane %v4119, %v4122
    %v4125 = vsel %vm65, %v4117, 0
    %v4128 = vsel %vm65, %v4118, 0
    %4130 = vmatprep.subr.mxu0 0.0
    %4131 = vmatpush1.xpose.msra.mxu0 %v4128
    %4132 = vmatprep.subr.mxu0 0.0
    %4133 = vmatpush1.xpose.msra.mxu0 0.0
    %4134 = vmatprep.subr.mxu0 0.0
    %4135 = vmatpush1.xpose.msra.mxu0 0.0
    %4136 = vmatprep.subr.mxu0 0.0
    %4137 = vmatpush1.xpose.msra.mxu0 0.0
    %4138 = vmatprep.subr.mxu0 0.0
    %4139 = vmatpush1.xpose.msra.mxu0 0.0
    %4140 = vmatprep.subr.mxu0 0.0
    %4141 = vmatpush1.xpose.msra.mxu0 0.0
    %4142 = vmatprep.subr.mxu0 0.0
    %4143 = vmatpush1.xpose.msra.mxu0 0.0
    %4144 = vmatprep.subr.mxu0 0.0
    %4145 = vmatpush1.xpose.msra.mxu0 0.0
    %4146 = vmatprep.subr.mxu0 0.0
    %4147 = vmatpush1.xpose.msra.mxu0 0.0
    %4148 = vmatprep.subr.mxu0 0.0
    %4149 = vmatpush1.xpose.msra.mxu0 0.0
    %4150 = vmatprep.subr.mxu0 0.0
    %4151 = vmatpush1.xpose.msra.mxu0 0.0
    %4152 = vmatprep.subr.mxu0 0.0
    %4153 = vmatpush1.xpose.msra.mxu0 0.0
    %4154 = vmatprep.subr.mxu0 0.0
    %4155 = vmatpush1.xpose.msra.mxu0 0.0
    %4156 = vmatprep.subr.mxu0 0.0
    %4157 = vmatpush1.xpose.msra.mxu0 0.0
    %4158 = vmatprep.subr.mxu0 0.0
    %4159 = vmatpush1.xpose.msra.mxu0 0.0
    %4160 = vmatprep.subr.mxu0 0.0
    %4161 = vmatpush1.xpose.msra.mxu0 0.0
    %4162 = vmatprep.subr.mxu0 0.0
    %4163 = vmatpush1.xpose.msra.mxu0 0.0
    %4164 = vmatprep.subr.mxu0 0.0
    %4165 = vmatpush1.xpose.msra.mxu0 0.0
    %4166 = vmatprep.subr.mxu0 0.0
    %4167 = vmatpush1.xpose.msra.mxu0 0.0
    %4168 = vmatprep.subr.mxu0 0.0
    %4169 = vmatpush1.xpose.msra.mxu0 0.0
    %4170 = vmatprep.subr.mxu0 0.0
    %4171 = vmatpush1.xpose.msra.mxu0 0.0
    %4172 = vmatprep.subr.mxu0 0.0
    %4173 = vmatpush1.xpose.msra.mxu0 0.0
    %4174 = vmatprep.subr.mxu0 0.0
    %4175 = vmatpush1.xpose.msra.mxu0 0.0
    %4176 = vmatprep.subr.mxu0 0.0
    %4177 = vmatpush1.xpose.msra.mxu0 0.0
    %4178 = vmatprep.subr.mxu0 0.0
    %4179 = vmatpush1.xpose.msra.mxu0 0.0
    %4180 = vmatprep.subr.mxu0 0.0
    %4181 = vmatpush1.xpose.msra.mxu0 0.0
    %4182 = vmatprep.subr.mxu0 0.0
    %4183 = vmatpush1.xpose.msra.mxu0 0.0
    %4184 = vmatprep.subr.mxu0 0.0
    %4185 = vmatpush1.xpose.msra.mxu0 0.0
    %4186 = vmatprep.subr.mxu0 0.0
    %4187 = vmatpush1.xpose.msra.mxu0 0.0
    %4188 = vmatprep.subr.mxu0 0.0
    %4189 = vmatpush1.xpose.msra.mxu0 0.0
    %4190 = vmatprep.subr.mxu0 0.0
    %4191 = vmatpush1.xpose.msra.mxu0 0.0
    %4192 = vmatprep.subr.mxu0 0.0
    %4193 = vmatpush1.xpose.msra.mxu0 0.0
    %4194 = vmatprep.mubr.f32.mxu0 0.0
    %4195 = vmatmul.mubr.f32.gmra.mrb[0].mxu0 %v4125
    %v4196 = vpop.f32.mrb[0].mxu0
    %v4197 = vadd.f32 %v4123, %v4196
    %v4198 = vpop.f32.mrb[0].mxu0
    %4199 = vdwg.mxu0
    %v4200 = vld [vmem:[%s6 + $0x10] sm:$0xf]
    %v4201 = vld [vmem:[%s7 + $0x4] sm:$0x1]
    %v4202 = vlaneseq
    %v4203 = vshrl.u32 %v4202, 7
    %v4204 = vsub.s32 0, %v4203
    %v4205 = vrot.slane %v4201, %v4204
    %v4207 = vsel %vm65, %v4200, 0
    %4209 = vmatprep.subr.mxu0 0.0
    %4210 = vmatpush1.xpose.msra.mxu0 %v4207
    %4211 = vmatprep.subr.mxu0 0.0
    %4212 = vmatpush1.xpose.msra.mxu0 0.0
    %4213 = vmatprep.subr.mxu0 0.0
    %4214 = vmatpush1.xpose.msra.mxu0 0.0
    %4215 = vmatprep.subr.mxu0 0.0
    %4216 = vmatpush1.xpose.msra.mxu0 0.0
    %4217 = vmatprep.subr.mxu0 0.0
    %4218 = vmatpush1.xpose.msra.mxu0 0.0
    %4219 = vmatprep.subr.mxu0 0.0
    %4220 = vmatpush1.xpose.msra.mxu0 0.0
    %4221 = vmatprep.subr.mxu0 0.0
    %4222 = vmatpush1.xpose.msra.mxu0 0.0
    %4223 = vmatprep.subr.mxu0 0.0
    %4224 = vmatpush1.xpose.msra.mxu0 0.0
    %4225 = vmatprep.subr.mxu0 0.0
    %4226 = vmatpush1.xpose.msra.mxu0 0.0
    %4227 = vmatprep.subr.mxu0 0.0
    %4228 = vmatpush1.xpose.msra.mxu0 0.0
    %4229 = vmatprep.subr.mxu0 0.0
    %4230 = vmatpush1.xpose.msra.mxu0 0.0
    %4231 = vmatprep.subr.mxu0 0.0
    %4232 = vmatpush1.xpose.msra.mxu0 0.0
    %4233 = vmatprep.subr.mxu0 0.0
    %4234 = vmatpush1.xpose.msra.mxu0 0.0
    %4235 = vmatprep.subr.mxu0 0.0
    %4236 = vmatpush1.xpose.msra.mxu0 0.0
    %4237 = vmatprep.subr.mxu0 0.0
    %4238 = vmatpush1.xpose.msra.mxu0 0.0
    %4239 = vmatprep.subr.mxu0 0.0
    %4240 = vmatpush1.xpose.msra.mxu0 0.0
    %4241 = vmatprep.subr.mxu0 0.0
    %4242 = vmatpush1.xpose.msra.mxu0 0.0
    %4243 = vmatprep.subr.mxu0 0.0
    %4244 = vmatpush1.xpose.msra.mxu0 0.0
    %4245 = vmatprep.subr.mxu0 0.0
    %4246 = vmatpush1.xpose.msra.mxu0 0.0
    %4247 = vmatprep.subr.mxu0 0.0
    %4248 = vmatpush1.xpose.msra.mxu0 0.0
    %4249 = vmatprep.subr.mxu0 0.0
    %4250 = vmatpush1.xpose.msra.mxu0 0.0
    %4251 = vmatprep.subr.mxu0 0.0
    %4252 = vmatpush1.xpose.msra.mxu0 0.0
    %4253 = vmatprep.subr.mxu0 0.0
    %4254 = vmatpush1.xpose.msra.mxu0 0.0
    %4255 = vmatprep.subr.mxu0 0.0
    %4256 = vmatpush1.xpose.msra.mxu0 0.0
    %4257 = vmatprep.subr.mxu0 0.0
    %4258 = vmatpush1.xpose.msra.mxu0 0.0
    %4259 = vmatprep.subr.mxu0 0.0
    %4260 = vmatpush1.xpose.msra.mxu0 0.0
    %4261 = vmatprep.subr.mxu0 0.0
    %4262 = vmatpush1.xpose.msra.mxu0 0.0
    %4263 = vmatprep.subr.mxu0 0.0
    %4264 = vmatpush1.xpose.msra.mxu0 0.0
    %4265 = vmatprep.subr.mxu0 0.0
    %4266 = vmatpush1.xpose.msra.mxu0 0.0
    %4267 = vmatprep.subr.mxu0 0.0
    %4268 = vmatpush1.xpose.msra.mxu0 0.0
    %4269 = vmatprep.subr.mxu0 0.0
    %4270 = vmatpush1.xpose.msra.mxu0 0.0
    %4271 = vmatprep.subr.mxu0 0.0
    %4272 = vmatpush1.xpose.msra.mxu0 0.0
    %4273 = vmatprep.mubr.f32.mxu0 0.0
    %4274 = vmatmul.mubr.f32.gmra.mrb[0].mxu0 %v4125
    %v4275 = vpop.f32.mrb[0].mxu0
    %v4276 = vadd.f32 %v4205, %v4275
    %v4277 = vpop.f32.mrb[0].mxu0
    %4278 = vdwg.mxu0
    %v4279 = vld [vmem:[%s6 + $0x20] sm:$0xf]
    %v4280 = vld [vmem:[%s7 + $0x8] sm:$0x1]
    %v4281 = vlaneseq
    %v4282 = vshrl.u32 %v4281, 7
    %v4283 = vsub.s32 0, %v4282
    %v4284 = vrot.slane %v4280, %v4283
    %v4286 = vsel %vm65, %v4279, 0
    %4288 = vmatprep.subr.mxu0 0.0
    %4289 = vmatpush1.xpose.msra.mxu0 %v4286
    %4290 = vmatprep.subr.mxu0 0.0
    %4291 = vmatpush1.xpose.msra.mxu0 0.0
    %4292 = vmatprep.subr.mxu0 0.0
    %4293 = vmatpush1.xpose.msra.mxu0 0.0
    %4294 = vmatprep.subr.mxu0 0.0
    %4295 = vmatpush1.xpose.msra.mxu0 0.0
    %4296 = vmatprep.subr.mxu0 0.0
    %4297 = vmatpush1.xpose.msra.mxu0 0.0
    %4298 = vmatprep.subr.mxu0 0.0
    %4299 = vmatpush1.xpose.msra.mxu0 0.0
    %4300 = vmatprep.subr.mxu0 0.0
    %4301 = vmatpush1.xpose.msra.mxu0 0.0
    %4302 = vmatprep.subr.mxu0 0.0
    %4303 = vmatpush1.xpose.msra.mxu0 0.0
    %4304 = vmatprep.subr.mxu0 0.0
    %4305 = vmatpush1.xpose.msra.mxu0 0.0
    %4306 = vmatprep.subr.mxu0 0.0
    %4307 = vmatpush1.xpose.msra.mxu0 0.0
    %4308 = vmatprep.subr.mxu0 0.0
    %4309 = vmatpush1.xpose.msra.mxu0 0.0
    %4310 = vmatprep.subr.mxu0 0.0
    %4311 = vmatpush1.xpose.msra.mxu0 0.0
    %4312 = vmatprep.subr.mxu0 0.0
    %4313 = vmatpush1.xpose.msra.mxu0 0.0
    %4314 = vmatprep.subr.mxu0 0.0
    %4315 = vmatpush1.xpose.msra.mxu0 0.0
    %4316 = vmatprep.subr.mxu0 0.0
    %4317 = vmatpush1.xpose.msra.mxu0 0.0
    %4318 = vmatprep.subr.mxu0 0.0
    %4319 = vmatpush1.xpose.msra.mxu0 0.0
    %4320 = vmatprep.subr.mxu0 0.0
    %4321 = vmatpush1.xpose.msra.mxu0 0.0
    %4322 = vmatprep.subr.mxu0 0.0
    %4323 = vmatpush1.xpose.msra.mxu0 0.0
    %4324 = vmatprep.subr.mxu0 0.0
    %4325 = vmatpush1.xpose.msra.mxu0 0.0
    %4326 = vmatprep.subr.mxu0 0.0
    %4327 = vmatpush1.xpose.msra.mxu0 0.0
    %4328 = vmatprep.subr.mxu0 0.0
    %4329 = vmatpush1.xpose.msra.mxu0 0.0
    %4330 = vmatprep.subr.mxu0 0.0
    %4331 = vmatpush1.xpose.msra.mxu0 0.0
    %4332 = vmatprep.subr.mxu0 0.0
    %4333 = vmatpush1.xpose.msra.mxu0 0.0
    %4334 = vmatprep.subr.mxu0 0.0
    %4335 = vmatpush1.xpose.msra.mxu0 0.0
    %4336 = vmatprep.subr.mxu0 0.0
    %4337 = vmatpush1.xpose.msra.mxu0 0.0
    %4338 = vmatprep.subr.mxu0 0.0
    %4339 = vmatpush1.xpose.msra.mxu0 0.0
    %4340 = vmatprep.subr.mxu0 0.0
    %4341 = vmatpush1.xpose.msra.mxu0 0.0
    %4342 = vmatprep.subr.mxu0 0.0
    %4343 = vmatpush1.xpose.msra.mxu0 0.0
    %4344 = vmatprep.subr.mxu0 0.0
    %4345 = vmatpush1.xpose.msra.mxu0 0.0
    %4346 = vmatprep.subr.mxu0 0.0
    %4347 = vmatpush1.xpose.msra.mxu0 0.0
    %4348 = vmatprep.subr.mxu0 0.0
    %4349 = vmatpush1.xpose.msra.mxu0 0.0
    %4350 = vmatprep.subr.mxu0 0.0
    %4351 = vmatpush1.xpose.msra.mxu0 0.0
    %4352 = vmatprep.mubr.f32.mxu0 0.0
    %4353 = vmatmul.mubr.f32.gmra.mrb[0].mxu0 %v4125
    %v4354 = vpop.f32.mrb[0].mxu0
    %v4355 = vadd.f32 %v4284, %v4354
    %v4356 = vpop.f32.mrb[0].mxu0
    %4357 = vdwg.mxu0
    %v4358 = vmul.f32 %v4197, 0.5
    %v4360 = vsel %vm2436, %v4358, 0
    %v4363 = vsel %vm2436, %v4276, 0
    %4365 = vmatprep.subr.mxu0 0.0
    %4366 = vmatpush1.xpose.msra.mxu0 %v4363
    %4367 = vmatprep.subr.mxu0 0.0
    %4368 = vmatpush1.xpose.msra.mxu0 0.0
    %4369 = vmatprep.subr.mxu0 0.0
    %4370 = vmatpush1.xpose.msra.mxu0 0.0
    %4371 = vmatprep.subr.mxu0 0.0
    %4372 = vmatpush1.xpose.msra.mxu0 0.0
    %4373 = vmatprep.subr.mxu0 0.0
    %4374 = vmatpush1.xpose.msra.mxu0 0.0
    %4375 = vmatprep.subr.mxu0 0.0
    %4376 = vmatpush1.xpose.msra.mxu0 0.0
    %4377 = vmatprep.subr.mxu0 0.0
    %4378 = vmatpush1.xpose.msra.mxu0 0.0
    %4379 = vmatprep.subr.mxu0 0.0
    %4380 = vmatpush1.xpose.msra.mxu0 0.0
    %4381 = vmatprep.subr.mxu0 0.0
    %4382 = vmatpush1.xpose.msra.mxu0 0.0
    %4383 = vmatprep.subr.mxu0 0.0
    %4384 = vmatpush1.xpose.msra.mxu0 0.0
    %4385 = vmatprep.subr.mxu0 0.0
    %4386 = vmatpush1.xpose.msra.mxu0 0.0
    %4387 = vmatprep.subr.mxu0 0.0
    %4388 = vmatpush1.xpose.msra.mxu0 0.0
    %4389 = vmatprep.subr.mxu0 0.0
    %4390 = vmatpush1.xpose.msra.mxu0 0.0
    %4391 = vmatprep.subr.mxu0 0.0
    %4392 = vmatpush1.xpose.msra.mxu0 0.0
    %4393 = vmatprep.subr.mxu0 0.0
    %4394 = vmatpush1.xpose.msra.mxu0 0.0
    %4395 = vmatprep.subr.mxu0 0.0
    %4396 = vmatpush1.xpose.msra.mxu0 0.0
    %4397 = vmatprep.subr.mxu0 0.0
    %4398 = vmatpush1.xpose.msra.mxu0 0.0
    %4399 = vmatprep.subr.mxu0 0.0
    %4400 = vmatpush1.xpose.msra.mxu0 0.0
    %4401 = vmatprep.subr.mxu0 0.0
    %4402 = vmatpush1.xpose.msra.mxu0 0.0
    %4403 = vmatprep.subr.mxu0 0.0
    %4404 = vmatpush1.xpose.msra.mxu0 0.0
    %4405 = vmatprep.subr.mxu0 0.0
    %4406 = vmatpush1.xpose.msra.mxu0 0.0
    %4407 = vmatprep.subr.mxu0 0.0
    %4408 = vmatpush1.xpose.msra.mxu0 0.0
    %4409 = vmatprep.subr.mxu0 0.0
    %4410 = vmatpush1.xpose.msra.mxu0 0.0
    %4411 = vmatprep.subr.mxu0 0.0
    %4412 = vmatpush1.xpose.msra.mxu0 0.0
    %4413 = vmatprep.subr.mxu0 0.0
    %4414 = vmatpush1.xpose.msra.mxu0 0.0
    %4415 = vmatprep.subr.mxu0 0.0
    %4416 = vmatpush1.xpose.msra.mxu0 0.0
    %4417 = vmatprep.subr.mxu0 0.0
    %4418 = vmatpush1.xpose.msra.mxu0 0.0
    %4419 = vmatprep.subr.mxu0 0.0
    %4420 = vmatpush1.xpose.msra.mxu0 0.0
    %4421 = vmatprep.subr.mxu0 0.0
    %4422 = vmatpush1.xpose.msra.mxu0 0.0
    %4423 = vmatprep.subr.mxu0 0.0
    %4424 = vmatpush1.xpose.msra.mxu0 0.0
    %4425 = vmatprep.subr.mxu0 0.0
    %4426 = vmatpush1.xpose.msra.mxu0 0.0
    %4427 = vmatprep.subr.mxu0 0.0
    %4428 = vmatpush1.xpose.msra.mxu0 0.0
    %4429 = vmatprep.mubr.f32.mxu0 0.0
    %4430 = vmatmul.mubr.f32.gmra.mrb[0].mxu0 %v4360
    %v4431 = vpop.f32.mrb[0].mxu0
    %v4432 = vadd.f32 0.0, %v4431
    %v4433 = vpop.f32.mrb[0].mxu0
    %4434 = vdwg.mxu0
    %v4435 = vsel %vm2513, %v4432, -inf
    %4436 = vmax.xlane.f32.xlu0 %v4435
    %v4437 = vpop.xlane.xlu0 %4436
    %v4438 = vsub.f32 %v4432, %v4437
    %v4439 = vmul.f32 %v4438, 1.442695
    %v4440 = vpow.pop %v4439
    %v4441 = vsel %vm2513, %v4440, 0.0
    %4442 = vadd.xlane.f32.xlu0 %v4441
    %v4443 = vpop.xlane.xlu0 %4442
    %v4444 = vrcp.pop %v4443
    %v4445 = vmul.f32 %v4440, %v4444
    %v4446 = vadd.f32 %v4445, 0.0
    %v4448 = vsel %vm2513, %v4445, 0
    %4450 = vmatprep.subr.mxu0 0.0
    %4451 = vmatpush1.msra.mxu0 %v4355
    %4452 = vmatprep.subr.mxu0 0.0
    %4453 = vmatpush1.msra.mxu0 0.0
    %4454 = vmatprep.subr.mxu0 0.0
    %4455 = vmatpush1.msra.mxu0 0.0
    %4456 = vmatprep.subr.mxu0 0.0
    %4457 = vmatpush1.msra.mxu0 0.0
    %4458 = vmatprep.subr.mxu0 0.0
    %4459 = vmatpush1.msra.mxu0 0.0
    %4460 = vmatprep.subr.mxu0 0.0
    %4461 = vmatpush1.msra.mxu0 0.0
    %4462 = vmatprep.subr.mxu0 0.0
    %4463 = vmatpush1.msra.mxu0 0.0
    %4464 = vmatprep.subr.mxu0 0.0
    %4465 = vmatpush1.msra.mxu0 0.0
    %4466 = vmatprep.subr.mxu0 0.0
    %4467 = vmatpush1.msra.mxu0 0.0
    %4468 = vmatprep.subr.mxu0 0.0
    %4469 = vmatpush1.msra.mxu0 0.0
    %4470 = vmatprep.subr.mxu0 0.0
    %4471 = vmatpush1.msra.mxu0 0.0
    %4472 = vmatprep.subr.mxu0 0.0
    %4473 = vmatpush1.msra.mxu0 0.0
    %4474 = vmatprep.subr.mxu0 0.0
    %4475 = vmatpush1.msra.mxu0 0.0
    %4476 = vmatprep.subr.mxu0 0.0
    %4477 = vmatpush1.msra.mxu0 0.0
    %4478 = vmatprep.subr.mxu0 0.0
    %4479 = vmatpush1.msra.mxu0 0.0
    %4480 = vmatprep.subr.mxu0 0.0
    %4481 = vmatpush1.msra.mxu0 0.0
    %4482 = vmatprep.subr.mxu0 0.0
    %4483 = vmatpush1.msra.mxu0 0.0
    %4484 = vmatprep.subr.mxu0 0.0
    %4485 = vmatpush1.msra.mxu0 0.0
    %4486 = vmatprep.subr.mxu0 0.0
    %4487 = vmatpush1.msra.mxu0 0.0
    %4488 = vmatprep.subr.mxu0 0.0
    %4489 = vmatpush1.msra.mxu0 0.0
    %4490 = vmatprep.subr.mxu0 0.0
    %4491 = vmatpush1.msra.mxu0 0.0
    %4492 = vmatprep.subr.mxu0 0.0
    %4493 = vmatpush1.msra.mxu0 0.0
    %4494 = vmatprep.subr.mxu0 0.0
    %4495 = vmatpush1.msra.mxu0 0.0
    %4496 = vmatprep.subr.mxu0 0.0
    %4497 = vmatpush1.msra.mxu0 0.0
    %4498 = vmatprep.subr.mxu0 0.0
    %4499 = vmatpush1.msra.mxu0 0.0
    %4500 = vmatprep.subr.mxu0 0.0
    %4501 = vmatpush1.msra.mxu0 0.0
    %4502 = vmatprep.subr.mxu0 0.0
    %4503 = vmatpush1.msra.mxu0 0.0
    %4504 = vmatprep.subr.mxu0 0.0
    %4505 = vmatpush1.msra.mxu0 0.0
    %4506 = vmatprep.subr.mxu0 0.0
    %4507 = vmatpush1.msra.mxu0 0.0
    %4508 = vmatprep.subr.mxu0 0.0
    %4509 = vmatpush1.msra.mxu0 0.0
    %4510 = vmatprep.subr.mxu0 0.0
    %4511 = vmatpush1.msra.mxu0 0.0
    %4512 = vmatprep.subr.mxu0 0.0
    %4513 = vmatpush1.msra.mxu0 0.0
    %4514 = vmatprep.mubr.f32.mxu0 0.0
    %4515 = vmatmul.mubr.f32.gmra.mrb[0].mxu0 %v4448
    %v4516 = vpop.f32.mrb[0].mxu0
    %v4517 = vadd.f32 0.0, %v4516
    %v4518 = vpop.f32.mrb[0].mxu0
    %4519 = vdwg.mxu0
    %v4520 = vld [vmem:[%s8] sm:$0xf]
    %v4521 = vld [vmem:[%s6 + $0x4] sm:$0xf]
    %v4522 = vld [vmem:[%s7 + $0x1] sm:$0x1]
    %v4523 = vlaneseq
    %v4524 = vshrl.u32 %v4523, 7
    %v4525 = vsub.s32 0, %v4524
    %v4526 = vrot.slane %v4522, %v4525
    %v4528 = vsel %vm65, %v4521, 0
    %4530 = vmatprep.subr.mxu0 0.0
    %4531 = vmatpush1.xpose.msra.mxu0 %v4528
    %4532 = vmatprep.subr.mxu0 0.0
    %4533 = vmatpush1.xpose.msra.mxu0 0.0
    %4534 = vmatprep.subr.mxu0 0.0
    %4535 = vmatpush1.xpose.msra.mxu0 0.0
    %4536 = vmatprep.subr.mxu0 0.0
    %4537 = vmatpush1.xpose.msra.mxu0 0.0
    %4538 = vmatprep.subr.mxu0 0.0
    %4539 = vmatpush1.xpose.msra.mxu0 0.0
    %4540 = vmatprep.subr.mxu0 0.0
    %4541 = vmatpush1.xpose.msra.mxu0 0.0
    %4542 = vmatprep.subr.mxu0 0.0
    %4543 = vmatpush1.xpose.msra.mxu0 0.0
    %4544 = vmatprep.subr.mxu0 0.0
    %4545 = vmatpush1.xpose.msra.mxu0 0.0
    %4546 = vmatprep.subr.mxu0 0.0
    %4547 = vmatpush1.xpose.msra.mxu0 0.0
    %4548 = vmatprep.subr.mxu0 0.0
    %4549 = vmatpush1.xpose.msra.mxu0 0.0
    %4550 = vmatprep.subr.mxu0 0.0
    %4551 = vmatpush1.xpose.msra.mxu0 0.0
    %4552 = vmatprep.subr.mxu0 0.0
    %4553 = vmatpush1.xpose.msra.mxu0 0.0
    %4554 = vmatprep.subr.mxu0 0.0
    %4555 = vmatpush1.xpose.msra.mxu0 0.0
    %4556 = vmatprep.subr.mxu0 0.0
    %4557 = vmatpush1.xpose.msra.mxu0 0.0
    %4558 = vmatprep.subr.mxu0 0.0
    %4559 = vmatpush1.xpose.msra.mxu0 0.0
    %4560 = vmatprep.subr.mxu0 0.0
    %4561 = vmatpush1.xpose.msra.mxu0 0.0
    %4562 = vmatprep.subr.mxu0 0.0
    %4563 = vmatpush1.xpose.msra.mxu0 0.0
    %4564 = vmatprep.subr.mxu0 0.0
    %4565 = vmatpush1.xpose.msra.mxu0 0.0
    %4566 = vmatprep.subr.mxu0 0.0
    %4567 = vmatpush1.xpose.msra.mxu0 0.0
    %4568 = vmatprep.subr.mxu0 0.0
    %4569 = vmatpush1.xpose.msra.mxu0 0.0
    %4570 = vmatprep.subr.mxu0 0.0
    %4571 = vmatpush1.xpose.msra.mxu0 0.0
    %4572 = vmatprep.subr.mxu0 0.0
    %4573 = vmatpush1.xpose.msra.mxu0 0.0
    %4574 = vmatprep.subr.mxu0 0.0
    %4575 = vmatpush1.xpose.msra.mxu0 0.0
    %4576 = vmatprep.subr.mxu0 0.0
    %4577 = vmatpush1.xpose.msra.mxu0 0.0
    %4578 = vmatprep.subr.mxu0 0.0
    %4579 = vmatpush1.xpose.msra.mxu0 0.0
    %4580 = vmatprep.subr.mxu0 0.0
    %4581 = vmatpush1.xpose.msra.mxu0 0.0
    %4582 = vmatprep.subr.mxu0 0.0
    %4583 = vmatpush1.xpose.msra.mxu0 0.0
    %4584 = vmatprep.subr.mxu0 0.0
    %4585 = vmatpush1.xpose.msra.mxu0 0.0
    %4586 = vmatprep.subr.mxu0 0.0
    %4587 = vmatpush1.xpose.msra.mxu0 0.0
    %4588 = vmatprep.subr.mxu0 0.0
    %4589 = vmatpush1.xpose.msra.mxu0 0.0
    %4590 = vmatprep.subr.mxu0 0.0
    %4591 = vmatpush1.xpose.msra.mxu0 0.0
    %4592 = vmatprep.subr.mxu0 0.0
    %4593 = vmatpush1.xpose.msra.mxu0 0.0
    %4594 = vmatprep.mubr.f32.mxu0 0.0
    %4595 = vmatmul.mubr.f32.gmra.mrb[0].mxu0 %v4125
    %v4596 = vpop.f32.mrb[0].mxu0
    %v4597 = vadd.f32 %v4526, %v4596
    %v4598 = vpop.f32.mrb[0].mxu0
    %4599 = vdwg.mxu0
    %v4600 = vld [vmem:[%s6 + $0x14] sm:$0xf]
    %v4601 = vld [vmem:[%s7 + $0x5] sm:$0x1]
    %v4602 = vlaneseq
    %v4603 = vshrl.u32 %v4602, 7
    %v4604 = vsub.s32 0, %v4603
    %v4605 = vrot.slane %v4601, %v4604
    %v4607 = vsel %vm65, %v4600, 0
    %4609 = vmatprep.subr.mxu0 0.0
    %4610 = vmatpush1.xpose.msra.mxu0 %v4607
    %4611 = vmatprep.subr.mxu0 0.0
    %4612 = vmatpush1.xpose.msra.mxu0 0.0
    %4613 = vmatprep.subr.mxu0 0.0
    %4614 = vmatpush1.xpose.msra.mxu0 0.0
    %4615 = vmatprep.subr.mxu0 0.0
    %4616 = vmatpush1.xpose.msra.mxu0 0.0
    %4617 = vmatprep.subr.mxu0 0.0
    %4618 = vmatpush1.xpose.msra.mxu0 0.0
    %4619 = vmatprep.subr.mxu0 0.0
    %4620 = vmatpush1.xpose.msra.mxu0 0.0
    %4621 = vmatprep.subr.mxu0 0.0
    %4622 = vmatpush1.xpose.msra.mxu0 0.0
    %4623 = vmatprep.subr.mxu0 0.0
    %4624 = vmatpush1.xpose.msra.mxu0 0.0
    %4625 = vmatprep.subr.mxu0 0.0
    %4626 = vmatpush1.xpose.msra.mxu0 0.0
    %4627 = vmatprep.subr.mxu0 0.0
    %4628 = vmatpush1.xpose.msra.mxu0 0.0
    %4629 = vmatprep.subr.mxu0 0.0
    %4630 = vmatpush1.xpose.msra.mxu0 0.0
    %4631 = vmatprep.subr.mxu0 0.0
    %4632 = vmatpush1.xpose.msra.mxu0 0.0
    %4633 = vmatprep.subr.mxu0 0.0
    %4634 = vmatpush1.xpose.msra.mxu0 0.0
    %4635 = vmatprep.subr.mxu0 0.0
    %4636 = vmatpush1.xpose.msra.mxu0 0.0
    %4637 = vmatprep.subr.mxu0 0.0
    %4638 = vmatpush1.xpose.msra.mxu0 0.0
    %4639 = vmatprep.subr.mxu0 0.0
    %4640 = vmatpush1.xpose.msra.mxu0 0.0
    %4641 = vmatprep.subr.mxu0 0.0
    %4642 = vmatpush1.xpose.msra.mxu0 0.0
    %4643 = vmatprep.subr.mxu0 0.0
    %4644 = vmatpush1.xpose.msra.mxu0 0.0
    %4645 = vmatprep.subr.mxu0 0.0
    %4646 = vmatpush1.xpose.msra.mxu0 0.0
    %4647 = vmatprep.subr.mxu0 0.0
    %4648 = vmatpush1.xpose.msra.mxu0 0.0
    %4649 = vmatprep.subr.mxu0 0.0
    %4650 = vmatpush1.xpose.msra.mxu0 0.0
    %4651 = vmatprep.subr.mxu0 0.0
    %4652 = vmatpush1.xpose.msra.mxu0 0.0
    %4653 = vmatprep.subr.mxu0 0.0
    %4654 = vmatpush1.xpose.msra.mxu0 0.0
    %4655 = vmatprep.subr.mxu0 0.0
    %4656 = vmatpush1.xpose.msra.mxu0 0.0
    %4657 = vmatprep.subr.mxu0 0.0
    %4658 = vmatpush1.xpose.msra.mxu0 0.0
    %4659 = vmatprep.subr.mxu0 0.0
    %4660 = vmatpush1.xpose.msra.mxu0 0.0
    %4661 = vmatprep.subr.mxu0 0.0
    %4662 = vmatpush1.xpose.msra.mxu0 0.0
    %4663 = vmatprep.subr.mxu0 0.0
    %4664 = vmatpush1.xpose.msra.mxu0 0.0
    %4665 = vmatprep.subr.mxu0 0.0
    %4666 = vmatpush1.xpose.msra.mxu0 0.0
    %4667 = vmatprep.subr.mxu0 0.0
    %4668 = vmatpush1.xpose.msra.mxu0 0.0
    %4669 = vmatprep.subr.mxu0 0.0
    %4670 = vmatpush1.xpose.msra.mxu0 0.0
    %4671 = vmatprep.subr.mxu0 0.0
    %4672 = vmatpush1.xpose.msra.mxu0 0.0
    %4673 = vmatprep.mubr.f32.mxu0 0.0
    %4674 = vmatmul.mubr.f32.gmra.mrb[0].mxu0 %v4125
    %v4675 = vpop.f32.mrb[0].mxu0
    %v4676 = vadd.f32 %v4605, %v4675
    %v4677 = vpop.f32.mrb[0].mxu0
    %4678 = vdwg.mxu0
    %v4679 = vld [vmem:[%s6 + $0x24] sm:$0xf]
    %v4680 = vld [vmem:[%s7 + $0x9] sm:$0x1]
    %v4681 = vlaneseq
    %v4682 = vshrl.u32 %v4681, 7
    %v4683 = vsub.s32 0, %v4682
    %v4684 = vrot.slane %v4680, %v4683
    %v4686 = vsel %vm65, %v4679, 0
    %4688 = vmatprep.subr.mxu0 0.0
    %4689 = vmatpush1.xpose.msra.mxu0 %v4686
    %4690 = vmatprep.subr.mxu0 0.0
    %4691 = vmatpush1.xpose.msra.mxu0 0.0
    %4692 = vmatprep.subr.mxu0 0.0
    %4693 = vmatpush1.xpose.msra.mxu0 0.0
    %4694 = vmatprep.subr.mxu0 0.0
    %4695 = vmatpush1.xpose.msra.mxu0 0.0
    %4696 = vmatprep.subr.mxu0 0.0
    %4697 = vmatpush1.xpose.msra.mxu0 0.0
    %4698 = vmatprep.subr.mxu0 0.0
    %4699 = vmatpush1.xpose.msra.mxu0 0.0
    %4700 = vmatprep.subr.mxu0 0.0
    %4701 = vmatpush1.xpose.msra.mxu0 0.0
    %4702 = vmatprep.subr.mxu0 0.0
    %4703 = vmatpush1.xpose.msra.mxu0 0.0
    %4704 = vmatprep.subr.mxu0 0.0
    %4705 = vmatpush1.xpose.msra.mxu0 0.0
    %4706 = vmatprep.subr.mxu0 0.0
    %4707 = vmatpush1.xpose.msra.mxu0 0.0
    %4708 = vmatprep.subr.mxu0 0.0
    %4709 = vmatpush1.xpose.msra.mxu0 0.0
    %4710 = vmatprep.subr.mxu0 0.0
    %4711 = vmatpush1.xpose.msra.mxu0 0.0
    %4712 = vmatprep.subr.mxu0 0.0
    %4713 = vmatpush1.xpose.msra.mxu0 0.0
    %4714 = vmatprep.subr.mxu0 0.0
    %4715 = vmatpush1.xpose.msra.mxu0 0.0
    %4716 = vmatprep.subr.mxu0 0.0
    %4717 = vmatpush1.xpose.msra.mxu0 0.0
    %4718 = vmatprep.subr.mxu0 0.0
    %4719 = vmatpush1.xpose.msra.mxu0 0.0
    %4720 = vmatprep.subr.mxu0 0.0
    %4721 = vmatpush1.xpose.msra.mxu0 0.0
    %4722 = vmatprep.subr.mxu0 0.0
    %4723 = vmatpush1.xpose.msra.mxu0 0.0
    %4724 = vmatprep.subr.mxu0 0.0
    %4725 = vmatpush1.xpose.msra.mxu0 0.0
    %4726 = vmatprep.subr.mxu0 0.0
    %4727 = vmatpush1.xpose.msra.mxu0 0.0
    %4728 = vmatprep.subr.mxu0 0.0
    %4729 = vmatpush1.xpose.msra.mxu0 0.0
    %4730 = vmatprep.subr.mxu0 0.0
    %4731 = vmatpush1.xpose.msra.mxu0 0.0
    %4732 = vmatprep.subr.mxu0 0.0
    %4733 = vmatpush1.xpose.msra.mxu0 0.0
    %4734 = vmatprep.subr.mxu0 0.0
    %4735 = vmatpush1.xpose.msra.mxu0 0.0
    %4736 = vmatprep.subr.mxu0 0.0
    %4737 = vmatpush1.xpose.msra.mxu0 0.0
    %4738 = vmatprep.subr.mxu0 0.0
    %4739 = vmatpush1.xpose.msra.mxu0 0.0
    %4740 = vmatprep.subr.mxu0 0.0
    %4741 = vmatpush1.xpose.msra.mxu0 0.0
    %4742 = vmatprep.subr.mxu0 0.0
    %4743 = vmatpush1.xpose.msra.mxu0 0.0
    %4744 = vmatprep.subr.mxu0 0.0
    %4745 = vmatpush1.xpose.msra.mxu0 0.0
    %4746 = vmatprep.subr.mxu0 0.0
    %4747 = vmatpush1.xpose.msra.mxu0 0.0
    %4748 = vmatprep.subr.mxu0 0.0
    %4749 = vmatpush1.xpose.msra.mxu0 0.0
    %4750 = vmatprep.subr.mxu0 0.0
    %4751 = vmatpush1.xpose.msra.mxu0 0.0
    %4752 = vmatprep.mubr.f32.mxu0 0.0
    %4753 = vmatmul.mubr.f32.gmra.mrb[0].mxu0 %v4125
    %v4754 = vpop.f32.mrb[0].mxu0
    %v4755 = vadd.f32 %v4684, %v4754
    %v4756 = vpop.f32.mrb[0].mxu0
    %4757 = vdwg.mxu0
    %v4758 = vmul.f32 %v4597, 0.5
    %v4760 = vsel %vm2436, %v4758, 0
    %v4763 = vsel %vm2436, %v4676, 0
    %4765 = vmatprep.subr.mxu0 0.0
    %4766 = vmatpush1.xpose.msra.mxu0 %v4763
    %4767 = vmatprep.subr.mxu0 0.0
    %4768 = vmatpush1.xpose.msra.mxu0 0.0
    %4769 = vmatprep.subr.mxu0 0.0
    %4770 = vmatpush1.xpose.msra.mxu0 0.0
    %4771 = vmatprep.subr.mxu0 0.0
    %4772 = vmatpush1.xpose.msra.mxu0 0.0
    %4773 = vmatprep.subr.mxu0 0.0
    %4774 = vmatpush1.xpose.msra.mxu0 0.0
    %4775 = vmatprep.subr.mxu0 0.0
    %4776 = vmatpush1.xpose.msra.mxu0 0.0
    %4777 = vmatprep.subr.mxu0 0.0
    %4778 = vmatpush1.xpose.msra.mxu0 0.0
    %4779 = vmatprep.subr.mxu0 0.0
    %4780 = vmatpush1.xpose.msra.mxu0 0.0
    %4781 = vmatprep.subr.mxu0 0.0
    %4782 = vmatpush1.xpose.msra.mxu0 0.0
    %4783 = vmatprep.subr.mxu0 0.0
    %4784 = vmatpush1.xpose.msra.mxu0 0.0
    %4785 = vmatprep.subr.mxu0 0.0
    %4786 = vmatpush1.xpose.msra.mxu0 0.0
    %4787 = vmatprep.subr.mxu0 0.0
    %4788 = vmatpush1.xpose.msra.mxu0 0.0
    %4789 = vmatprep.subr.mxu0 0.0
    %4790 = vmatpush1.xpose.msra.mxu0 0.0
    %4791 = vmatprep.subr.mxu0 0.0
    %4792 = vmatpush1.xpose.msra.mxu0 0.0
    %4793 = vmatprep.subr.mxu0 0.0
    %4794 = vmatpush1.xpose.msra.mxu0 0.0
    %4795 = vmatprep.subr.mxu0 0.0
    %4796 = vmatpush1.xpose.msra.mxu0 0.0
    %4797 = vmatprep.subr.mxu0 0.0
    %4798 = vmatpush1.xpose.msra.mxu0 0.0
    %4799 = vmatprep.subr.mxu0 0.0
    %4800 = vmatpush1.xpose.msra.mxu0 0.0
    %4801 = vmatprep.subr.mxu0 0.0
    %4802 = vmatpush1.xpose.msra.mxu0 0.0
    %4803 = vmatprep.subr.mxu0 0.0
    %4804 = vmatpush1.xpose.msra.mxu0 0.0
    %4805 = vmatprep.subr.mxu0 0.0
    %4806 = vmatpush1.xpose.msra.mxu0 0.0
    %4807 = vmatprep.subr.mxu0 0.0
    %4808 = vmatpush1.xpose.msra.mxu0 0.0
    %4809 = vmatprep.subr.mxu0 0.0
    %4810 = vmatpush1.xpose.msra.mxu0 0.0
    %4811 = vmatprep.subr.mxu0 0.0
    %4812 = vmatpush1.xpose.msra.mxu0 0.0
    %4813 = vmatprep.subr.mxu0 0.0
    %4814 = vmatpush1.xpose.msra.mxu0 0.0
    %4815 = vmatprep.subr.mxu0 0.0
    %4816 = vmatpush1.xpose.msra.mxu0 0.0
    %4817 = vmatprep.subr.mxu0 0.0
    %4818 = vmatpush1.xpose.msra.mxu0 0.0
    %4819 = vmatprep.subr.mxu0 0.0
    %4820 = vmatpush1.xpose.msra.mxu0 0.0
    %4821 = vmatprep.subr.mxu0 0.0
    %4822 = vmatpush1.xpose.msra.mxu0 0.0
    %4823 = vmatprep.subr.mxu0 0.0
    %4824 = vmatpush1.xpose.msra.mxu0 0.0
    %4825 = vmatprep.subr.mxu0 0.0
    %4826 = vmatpush1.xpose.msra.mxu0 0.0
    %4827 = vmatprep.subr.mxu0 0.0
    %4828 = vmatpush1.xpose.msra.mxu0 0.0
    %4829 = vmatprep.mubr.f32.mxu0 0.0
    %4830 = vmatmul.mubr.f32.gmra.mrb[0].mxu0 %v4760
    %v4831 = vpop.f32.mrb[0].mxu0
    %v4832 = vadd.f32 0.0, %v4831
    %v4833 = vpop.f32.mrb[0].mxu0
    %4834 = vdwg.mxu0
    %v4835 = vsel %vm2513, %v4832, -inf
    %4836 = vmax.xlane.f32.xlu0 %v4835
    %v4837 = vpop.xlane.xlu0 %4836
    %v4838 = vsub.f32 %v4832, %v4837
    %v4839 = vmul.f32 %v4838, 1.442695
    %v4840 = vpow.pop %v4839
    %v4841 = vsel %vm2513, %v4840, 0.0
    %4842 = vadd.xlane.f32.xlu0 %v4841
    %v4843 = vpop.xlane.xlu0 %4842
    %v4844 = vrcp.pop %v4843
    %v4845 = vmul.f32 %v4840, %v4844
    %v4846 = vadd.f32 %v4446, %v4845
    %v4848 = vsel %vm2513, %v4845, 0
    %4850 = vmatprep.subr.mxu0 0.0
    %4851 = vmatpush1.msra.mxu0 %v4755
    %4852 = vmatprep.subr.mxu0 0.0
    %4853 = vmatpush1.msra.mxu0 0.0
    %4854 = vmatprep.subr.mxu0 0.0
    %4855 = vmatpush1.msra.mxu0 0.0
    %4856 = vmatprep.subr.mxu0 0.0
    %4857 = vmatpush1.msra.mxu0 0.0
    %4858 = vmatprep.subr.mxu0 0.0
    %4859 = vmatpush1.msra.mxu0 0.0
    %4860 = vmatprep.subr.mxu0 0.0
    %4861 = vmatpush1.msra.mxu0 0.0
    %4862 = vmatprep.subr.mxu0 0.0
    %4863 = vmatpush1.msra.mxu0 0.0
    %4864 = vmatprep.subr.mxu0 0.0
    %4865 = vmatpush1.msra.mxu0 0.0
    %4866 = vmatprep.subr.mxu0 0.0
    %4867 = vmatpush1.msra.mxu0 0.0
    %4868 = vmatprep.subr.mxu0 0.0
    %4869 = vmatpush1.msra.mxu0 0.0
    %4870 = vmatprep.subr.mxu0 0.0
    %4871 = vmatpush1.msra.mxu0 0.0
    %4872 = vmatprep.subr.mxu0 0.0
    %4873 = vmatpush1.msra.mxu0 0.0
    %4874 = vmatprep.subr.mxu0 0.0
    %4875 = vmatpush1.msra.mxu0 0.0
    %4876 = vmatprep.subr.mxu0 0.0
    %4877 = vmatpush1.msra.mxu0 0.0
    %4878 = vmatprep.subr.mxu0 0.0
    %4879 = vmatpush1.msra.mxu0 0.0
    %4880 = vmatprep.subr.mxu0 0.0
    %4881 = vmatpush1.msra.mxu0 0.0
    %4882 = vmatprep.subr.mxu0 0.0
    %4883 = vmatpush1.msra.mxu0 0.0
    %4884 = vmatprep.subr.mxu0 0.0
    %4885 = vmatpush1.msra.mxu0 0.0
    %4886 = vmatprep.subr.mxu0 0.0
    %4887 = vmatpush1.msra.mxu0 0.0
    %4888 = vmatprep.subr.mxu0 0.0
    %4889 = vmatpush1.msra.mxu0 0.0
    %4890 = vmatprep.subr.mxu0 0.0
    %4891 = vmatpush1.msra.mxu0 0.0
    %4892 = vmatprep.subr.mxu0 0.0
    %4893 = vmatpush1.msra.mxu0 0.0
    %4894 = vmatprep.subr.mxu0 0.0
    %4895 = vmatpush1.msra.mxu0 0.0
    %4896 = vmatprep.subr.mxu0 0.0
    %4897 = vmatpush1.msra.mxu0 0.0
    %4898 = vmatprep.subr.mxu0 0.0
    %4899 = vmatpush1.msra.mxu0 0.0
    %4900 = vmatprep.subr.mxu0 0.0
    %4901 = vmatpush1.msra.mxu0 0.0
    %4902 = vmatprep.subr.mxu0 0.0
    %4903 = vmatpush1.msra.mxu0 0.0
    %4904 = vmatprep.subr.mxu0 0.0
    %4905 = vmatpush1.msra.mxu0 0.0
    %4906 = vmatprep.subr.mxu0 0.0
    %4907 = vmatpush1.msra.mxu0 0.0
    %4908 = vmatprep.subr.mxu0 0.0
    %4909 = vmatpush1.msra.mxu0 0.0
    %4910 = vmatprep.subr.mxu0 0.0
    %4911 = vmatpush1.msra.mxu0 0.0
    %4912 = vmatprep.subr.mxu0 0.0
    %4913 = vmatpush1.msra.mxu0 0.0
    %4914 = vmatprep.mubr.f32.mxu0 0.0
    %4915 = vmatmul.mubr.f32.gmra.mrb[0].mxu0 %v4848
    %v4916 = vpop.f32.mrb[0].mxu0
    %v4917 = vadd.f32 0.0, %v4916
    %v4918 = vpop.f32.mrb[0].mxu0
    %4919 = vdwg.mxu0
    %v4920 = vld [vmem:[%s8 + $0x4] sm:$0xf]
    %v4922 = vsel %vm2436, %v4917, 0
    %v4925 = vsel %vm3003, %v4920, 0
    %4927 = vmatprep.subr.mxu0 0.0
    %4928 = vmatpush1.msra.mxu0 %v4925
    %4929 = vmatprep.subr.mxu0 0.0
    %4930 = vmatpush1.msra.mxu0 0.0
    %4931 = vmatprep.subr.mxu0 0.0
    %4932 = vmatpush1.msra.mxu0 0.0
    %4933 = vmatprep.subr.mxu0 0.0
    %4934 = vmatpush1.msra.mxu0 0.0
    %4935 = vmatprep.subr.mxu0 0.0
    %4936 = vmatpush1.msra.mxu0 0.0
    %4937 = vmatprep.subr.mxu0 0.0
    %4938 = vmatpush1.msra.mxu0 0.0
    %4939 = vmatprep.subr.mxu0 0.0
    %4940 = vmatpush1.msra.mxu0 0.0
    %4941 = vmatprep.subr.mxu0 0.0
    %4942 = vmatpush1.msra.mxu0 0.0
    %4943 = vmatprep.subr.mxu0 0.0
    %4944 = vmatpush1.msra.mxu0 0.0
    %4945 = vmatprep.subr.mxu0 0.0
    %4946 = vmatpush1.msra.mxu0 0.0
    %4947 = vmatprep.subr.mxu0 0.0
    %4948 = vmatpush1.msra.mxu0 0.0
    %4949 = vmatprep.subr.mxu0 0.0
    %4950 = vmatpush1.msra.mxu0 0.0
    %4951 = vmatprep.subr.mxu0 0.0
    %4952 = vmatpush1.msra.mxu0 0.0
    %4953 = vmatprep.subr.mxu0 0.0
    %4954 = vmatpush1.msra.mxu0 0.0
    %4955 = vmatprep.subr.mxu0 0.0
    %4956 = vmatpush1.msra.mxu0 0.0
    %4957 = vmatprep.subr.mxu0 0.0
    %4958 = vmatpush1.msra.mxu0 0.0
    %4959 = vmatprep.subr.mxu0 0.0
    %4960 = vmatpush1.msra.mxu0 0.0
    %4961 = vmatprep.subr.mxu0 0.0
    %4962 = vmatpush1.msra.mxu0 0.0
    %4963 = vmatprep.subr.mxu0 0.0
    %4964 = vmatpush1.msra.mxu0 0.0
    %4965 = vmatprep.subr.mxu0 0.0
    %4966 = vmatpush1.msra.mxu0 0.0
    %4967 = vmatprep.subr.mxu0 0.0
    %4968 = vmatpush1.msra.mxu0 0.0
    %4969 = vmatprep.subr.mxu0 0.0
    %4970 = vmatpush1.msra.mxu0 0.0
    %4971 = vmatprep.subr.mxu0 0.0
    %4972 = vmatpush1.msra.mxu0 0.0
    %4973 = vmatprep.subr.mxu0 0.0
    %4974 = vmatpush1.msra.mxu0 0.0
    %4975 = vmatprep.subr.mxu0 0.0
    %4976 = vmatpush1.msra.mxu0 0.0
    %4977 = vmatprep.subr.mxu0 0.0
    %4978 = vmatpush1.msra.mxu0 0.0
    %4979 = vmatprep.subr.mxu0 0.0
    %4980 = vmatpush1.msra.mxu0 0.0
    %4981 = vmatprep.subr.mxu0 0.0
    %4982 = vmatpush1.msra.mxu0 0.0
    %4983 = vmatprep.subr.mxu0 0.0
    %4984 = vmatpush1.msra.mxu0 0.0
    %4985 = vmatprep.subr.mxu0 0.0
    %4986 = vmatpush1.msra.mxu0 0.0
    %4987 = vmatprep.subr.mxu0 0.0
    %4988 = vmatpush1.msra.mxu0 0.0
    %4989 = vmatprep.subr.mxu0 0.0
    %4990 = vmatpush1.msra.mxu0 0.0
    %4991 = vmatprep.mubr.f32.mxu0 0.0
    %4992 = vmatmul.mubr.f32.gmra.mrb[0].mxu0 %v4922
    %v4993 = vpop.f32.mrb[0].mxu0
    %v4994 = vadd.f32 0.0, %v4993
    %v4995 = vpop.f32.mrb[0].mxu0
    %4996 = vdwg.mxu0
    %v4998 = vsel %vm2436, %v4517, 0
    %v5001 = vsel %vm3003, %v4520, 0
    %5003 = vmatprep.subr.mxu0 0.0
    %5004 = vmatpush1.msra.mxu0 %v5001
    %5005 = vmatprep.subr.mxu0 0.0
    %5006 = vmatpush1.msra.mxu0 0.0
    %5007 = vmatprep.subr.mxu0 0.0
    %5008 = vmatpush1.msra.mxu0 0.0
    %5009 = vmatprep.subr.mxu0 0.0
    %5010 = vmatpush1.msra.mxu0 0.0
    %5011 = vmatprep.subr.mxu0 0.0
    %5012 = vmatpush1.msra.mxu0 0.0
    %5013 = vmatprep.subr.mxu0 0.0
    %5014 = vmatpush1.msra.mxu0 0.0
    %5015 = vmatprep.subr.mxu0 0.0
    %5016 = vmatpush1.msra.mxu0 0.0
    %5017 = vmatprep.subr.mxu0 0.0
    %5018 = vmatpush1.msra.mxu0 0.0
    %5019 = vmatprep.subr.mxu0 0.0
    %5020 = vmatpush1.msra.mxu0 0.0
    %5021 = vmatprep.subr.mxu0 0.0
    %5022 = vmatpush1.msra.mxu0 0.0
    %5023 = vmatprep.subr.mxu0 0.0
    %5024 = vmatpush1.msra.mxu0 0.0
    %5025 = vmatprep.subr.mxu0 0.0
    %5026 = vmatpush1.msra.mxu0 0.0
    %5027 = vmatprep.subr.mxu0 0.0
    %5028 = vmatpush1.msra.mxu0 0.0
    %5029 = vmatprep.subr.mxu0 0.0
    %5030 = vmatpush1.msra.mxu0 0.0
    %5031 = vmatprep.subr.mxu0 0.0
    %5032 = vmatpush1.msra.mxu0 0.0
    %5033 = vmatprep.subr.mxu0 0.0
    %5034 = vmatpush1.msra.mxu0 0.0
    %5035 = vmatprep.subr.mxu0 0.0
    %5036 = vmatpush1.msra.mxu0 0.0
    %5037 = vmatprep.subr.mxu0 0.0
    %5038 = vmatpush1.msra.mxu0 0.0
    %5039 = vmatprep.subr.mxu0 0.0
    %5040 = vmatpush1.msra.mxu0 0.0
    %5041 = vmatprep.subr.mxu0 0.0
    %5042 = vmatpush1.msra.mxu0 0.0
    %5043 = vmatprep.subr.mxu0 0.0
    %5044 = vmatpush1.msra.mxu0 0.0
    %5045 = vmatprep.subr.mxu0 0.0
    %5046 = vmatpush1.msra.mxu0 0.0
    %5047 = vmatprep.subr.mxu0 0.0
    %5048 = vmatpush1.msra.mxu0 0.0
    %5049 = vmatprep.subr.mxu0 0.0
    %5050 = vmatpush1.msra.mxu0 0.0
    %5051 = vmatprep.subr.mxu0 0.0
    %5052 = vmatpush1.msra.mxu0 0.0
    %5053 = vmatprep.subr.mxu0 0.0
    %5054 = vmatpush1.msra.mxu0 0.0
    %5055 = vmatprep.subr.mxu0 0.0
    %5056 = vmatpush1.msra.mxu0 0.0
    %5057 = vmatprep.subr.mxu0 0.0
    %5058 = vmatpush1.msra.mxu0 0.0
    %5059 = vmatprep.subr.mxu0 0.0
    %5060 = vmatpush1.msra.mxu0 0.0
    %5061 = vmatprep.subr.mxu0 0.0
    %5062 = vmatpush1.msra.mxu0 0.0
    %5063 = vmatprep.subr.mxu0 0.0
    %5064 = vmatpush1.msra.mxu0 0.0
    %5065 = vmatprep.subr.mxu0 0.0
    %5066 = vmatpush1.msra.mxu0 0.0
    %5067 = vmatprep.mubr.f32.mxu0 0.0
    %5068 = vmatmul.mubr.f32.gmra.mrb[0].mxu0 %v4998
    %v5069 = vpop.f32.mrb[0].mxu0
    %v5070 = vadd.f32 %v4994, %v5069
    %v5071 = vpop.f32.mrb[0].mxu0
    %5072 = vdwg.mxu0
    %v5073 = vld [vmem:[%s6 + $0x8] sm:$0xf]
    %v5074 = vld [vmem:[%s7 + $0x2] sm:$0x1]
    %v5075 = vlaneseq
    %v5076 = vshrl.u32 %v5075, 7
    %v5077 = vsub.s32 0, %v5076
    %v5078 = vrot.slane %v5074, %v5077
    %v5080 = vsel %vm65, %v5073, 0
    %5082 = vmatprep.subr.mxu0 0.0
    %5083 = vmatpush1.xpose.msra.mxu0 %v5080
    %5084 = vmatprep.subr.mxu0 0.0
    %5085 = vmatpush1.xpose.msra.mxu0 0.0
    %5086 = vmatprep.subr.mxu0 0.0
    %5087 = vmatpush1.xpose.msra.mxu0 0.0
    %5088 = vmatprep.subr.mxu0 0.0
    %5089 = vmatpush1.xpose.msra.mxu0 0.0
    %5090 = vmatprep.subr.mxu0 0.0
    %5091 = vmatpush1.xpose.msra.mxu0 0.0
    %5092 = vmatprep.subr.mxu0 0.0
    %5093 = vmatpush1.xpose.msra.mxu0 0.0
    %5094 = vmatprep.subr.mxu0 0.0
    %5095 = vmatpush1.xpose.msra.mxu0 0.0
    %5096 = vmatprep.subr.mxu0 0.0
    %5097 = vmatpush1.xpose.msra.mxu0 0.0
    %5098 = vmatprep.subr.mxu0 0.0
    %5099 = vmatpush1.xpose.msra.mxu0 0.0
    %5100 = vmatprep.subr.mxu0 0.0
    %5101 = vmatpush1.xpose.msra.mxu0 0.0
    %5102 = vmatprep.subr.mxu0 0.0
    %5103 = vmatpush1.xpose.msra.mxu0 0.0
    %5104 = vmatprep.subr.mxu0 0.0
    %5105 = vmatpush1.xpose.msra.mxu0 0.0
    %5106 = vmatprep.subr.mxu0 0.0
    %5107 = vmatpush1.xpose.msra.mxu0 0.0
    %5108 = vmatprep.subr.mxu0 0.0
    %5109 = vmatpush1.xpose.msra.mxu0 0.0
    %5110 = vmatprep.subr.mxu0 0.0
    %5111 = vmatpush1.xpose.msra.mxu0 0.0
    %5112 = vmatprep.subr.mxu0 0.0
    %5113 = vmatpush1.xpose.msra.mxu0 0.0
    %5114 = vmatprep.subr.mxu0 0.0
    %5115 = vmatpush1.xpose.msra.mxu0 0.0
    %5116 = vmatprep.subr.mxu0 0.0
    %5117 = vmatpush1.xpose.msra.mxu0 0.0
    %5118 = vmatprep.subr.mxu0 0.0
    %5119 = vmatpush1.xpose.msra.mxu0 0.0
    %5120 = vmatprep.subr.mxu0 0.0
    %5121 = vmatpush1.xpose.msra.mxu0 0.0
    %5122 = vmatprep.subr.mxu0 0.0
    %5123 = vmatpush1.xpose.msra.mxu0 0.0
    %5124 = vmatprep.subr.mxu0 0.0
    %5125 = vmatpush1.xpose.msra.mxu0 0.0
    %5126 = vmatprep.subr.mxu0 0.0
    %5127 = vmatpush1.xpose.msra.mxu0 0.0
    %5128 = vmatprep.subr.mxu0 0.0
    %5129 = vmatpush1.xpose.msra.mxu0 0.0
    %5130 = vmatprep.subr.mxu0 0.0
    %5131 = vmatpush1.xpose.msra.mxu0 0.0
    %5132 = vmatprep.subr.mxu0 0.0
    %5133 = vmatpush1.xpose.msra.mxu0 0.0
    %5134 = vmatprep.subr.mxu0 0.0
    %5135 = vmatpush1.xpose.msra.mxu0 0.0
    %5136 = vmatprep.subr.mxu0 0.0
    %5137 = vmatpush1.xpose.msra.mxu0 0.0
    %5138 = vmatprep.subr.mxu0 0.0
    %5139 = vmatpush1.xpose.msra.mxu0 0.0
    %5140 = vmatprep.subr.mxu0 0.0
    %5141 = vmatpush1.xpose.msra.mxu0 0.0
    %5142 = vmatprep.subr.mxu0 0.0
    %5143 = vmatpush1.xpose.msra.mxu0 0.0
    %5144 = vmatprep.subr.mxu0 0.0
    %5145 = vmatpush1.xpose.msra.mxu0 0.0
    %5146 = vmatprep.mubr.f32.mxu0 0.0
    %5147 = vmatmul.mubr.f32.gmra.mrb[0].mxu0 %v4125
    %v5148 = vpop.f32.mrb[0].mxu0
    %v5149 = vadd.f32 %v5078, %v5148
    %v5150 = vpop.f32.mrb[0].mxu0
    %5151 = vdwg.mxu0
    %v5152 = vld [vmem:[%s6 + $0x18] sm:$0xf]
    %v5153 = vld [vmem:[%s7 + $0x6] sm:$0x1]
    %v5154 = vlaneseq
    %v5155 = vshrl.u32 %v5154, 7
    %v5156 = vsub.s32 0, %v5155
    %v5157 = vrot.slane %v5153, %v5156
    %v5159 = vsel %vm65, %v5152, 0
    %5161 = vmatprep.subr.mxu0 0.0
    %5162 = vmatpush1.xpose.msra.mxu0 %v5159
    %5163 = vmatprep.subr.mxu0 0.0
    %5164 = vmatpush1.xpose.msra.mxu0 0.0
    %5165 = vmatprep.subr.mxu0 0.0
    %5166 = vmatpush1.xpose.msra.mxu0 0.0
    %5167 = vmatprep.subr.mxu0 0.0
    %5168 = vmatpush1.xpose.msra.mxu0 0.0
    %5169 = vmatprep.subr.mxu0 0.0
    %5170 = vmatpush1.xpose.msra.mxu0 0.0
    %5171 = vmatprep.subr.mxu0 0.0
    %5172 = vmatpush1.xpose.msra.mxu0 0.0
    %5173 = vmatprep.subr.mxu0 0.0
    %5174 = vmatpush1.xpose.msra.mxu0 0.0
    %5175 = vmatprep.subr.mxu0 0.0
    %5176 = vmatpush1.xpose.msra.mxu0 0.0
    %5177 = vmatprep.subr.mxu0 0.0
    %5178 = vmatpush1.xpose.msra.mxu0 0.0
    %5179 = vmatprep.subr.mxu0 0.0
    %5180 = vmatpush1.xpose.msra.mxu0 0.0
    %5181 = vmatprep.subr.mxu0 0.0
    %5182 = vmatpush1.xpose.msra.mxu0 0.0
    %5183 = vmatprep.subr.mxu0 0.0
    %5184 = vmatpush1.xpose.msra.mxu0 0.0
    %5185 = vmatprep.subr.mxu0 0.0
    %5186 = vmatpush1.xpose.msra.mxu0 0.0
    %5187 = vmatprep.subr.mxu0 0.0
    %5188 = vmatpush1.xpose.msra.mxu0 0.0
    %5189 = vmatprep.subr.mxu0 0.0
    %5190 = vmatpush1.xpose.msra.mxu0 0.0
    %5191 = vmatprep.subr.mxu0 0.0
    %5192 = vmatpush1.xpose.msra.mxu0 0.0
    %5193 = vmatprep.subr.mxu0 0.0
    %5194 = vmatpush1.xpose.msra.mxu0 0.0
    %5195 = vmatprep.subr.mxu0 0.0
    %5196 = vmatpush1.xpose.msra.mxu0 0.0
    %5197 = vmatprep.subr.mxu0 0.0
    %5198 = vmatpush1.xpose.msra.mxu0 0.0
    %5199 = vmatprep.subr.mxu0 0.0
    %5200 = vmatpush1.xpose.msra.mxu0 0.0
    %5201 = vmatprep.subr.mxu0 0.0
    %5202 = vmatpush1.xpose.msra.mxu0 0.0
    %5203 = vmatprep.subr.mxu0 0.0
    %5204 = vmatpush1.xpose.msra.mxu0 0.0
    %5205 = vmatprep.subr.mxu0 0.0
    %5206 = vmatpush1.xpose.msra.mxu0 0.0
    %5207 = vmatprep.subr.mxu0 0.0
    %5208 = vmatpush1.xpose.msra.mxu0 0.0
    %5209 = vmatprep.subr.mxu0 0.0
    %5210 = vmatpush1.xpose.msra.mxu0 0.0
    %5211 = vmatprep.subr.mxu0 0.0
    %5212 = vmatpush1.xpose.msra.mxu0 0.0
    %5213 = vmatprep.subr.mxu0 0.0
    %5214 = vmatpush1.xpose.msra.mxu0 0.0
    %5215 = vmatprep.subr.mxu0 0.0
    %5216 = vmatpush1.xpose.msra.mxu0 0.0
    %5217 = vmatprep.subr.mxu0 0.0
    %5218 = vmatpush1.xpose.msra.mxu0 0.0
    %5219 = vmatprep.subr.mxu0 0.0
    %5220 = vmatpush1.xpose.msra.mxu0 0.0
    %5221 = vmatprep.subr.mxu0 0.0
    %5222 = vmatpush1.xpose.msra.mxu0 0.0
    %5223 = vmatprep.subr.mxu0 0.0
    %5224 = vmatpush1.xpose.msra.mxu0 0.0
    %5225 = vmatprep.mubr.f32.mxu0 0.0
    %5226 = vmatmul.mubr.f32.gmra.mrb[0].mxu0 %v4125
    %v5227 = vpop.f32.mrb[0].mxu0
    %v5228 = vadd.f32 %v5157, %v5227
    %v5229 = vpop.f32.mrb[0].mxu0
    %5230 = vdwg.mxu0
    %v5231 = vld [vmem:[%s6 + $0x28] sm:$0xf]
    %v5232 = vld [vmem:[%s7 + $0xa] sm:$0x1]
    %v5233 = vlaneseq
    %v5234 = vshrl.u32 %v5233, 7
    %v5235 = vsub.s32 0, %v5234
    %v5236 = vrot.slane %v5232, %v5235
    %v5238 = vsel %vm65, %v5231, 0
    %5240 = vmatprep.subr.mxu0 0.0
    %5241 = vmatpush1.xpose.msra.mxu0 %v5238
    %5242 = vmatprep.subr.mxu0 0.0
    %5243 = vmatpush1.xpose.msra.mxu0 0.0
    %5244 = vmatprep.subr.mxu0 0.0
    %5245 = vmatpush1.xpose.msra.mxu0 0.0
    %5246 = vmatprep.subr.mxu0 0.0
    %5247 = vmatpush1.xpose.msra.mxu0 0.0
    %5248 = vmatprep.subr.mxu0 0.0
    %5249 = vmatpush1.xpose.msra.mxu0 0.0
    %5250 = vmatprep.subr.mxu0 0.0
    %5251 = vmatpush1.xpose.msra.mxu0 0.0
    %5252 = vmatprep.subr.mxu0 0.0
    %5253 = vmatpush1.xpose.msra.mxu0 0.0
    %5254 = vmatprep.subr.mxu0 0.0
    %5255 = vmatpush1.xpose.msra.mxu0 0.0
    %5256 = vmatprep.subr.mxu0 0.0
    %5257 = vmatpush1.xpose.msra.mxu0 0.0
    %5258 = vmatprep.subr.mxu0 0.0
    %5259 = vmatpush1.xpose.msra.mxu0 0.0
    %5260 = vmatprep.subr.mxu0 0.0
    %5261 = vmatpush1.xpose.msra.mxu0 0.0
    %5262 = vmatprep.subr.mxu0 0.0
    %5263 = vmatpush1.xpose.msra.mxu0 0.0
    %5264 = vmatprep.subr.mxu0 0.0
    %5265 = vmatpush1.xpose.msra.mxu0 0.0
    %5266 = vmatprep.subr.mxu0 0.0
    %5267 = vmatpush1.xpose.msra.mxu0 0.0
    %5268 = vmatprep.subr.mxu0 0.0
    %5269 = vmatpush1.xpose.msra.mxu0 0.0
    %5270 = vmatprep.subr.mxu0 0.0
    %5271 = vmatpush1.xpose.msra.mxu0 0.0
    %5272 = vmatprep.subr.mxu0 0.0
    %5273 = vmatpush1.xpose.msra.mxu0 0.0
    %5274 = vmatprep.subr.mxu0 0.0
    %5275 = vmatpush1.xpose.msra.mxu0 0.0
    %5276 = vmatprep.subr.mxu0 0.0
    %5277 = vmatpush1.xpose.msra.mxu0 0.0
    %5278 = vmatprep.subr.mxu0 0.0
    %5279 = vmatpush1.xpose.msra.mxu0 0.0
    %5280 = vmatprep.subr.mxu0 0.0
    %5281 = vmatpush1.xpose.msra.mxu0 0.0
    %5282 = vmatprep.subr.mxu0 0.0
    %5283 = vmatpush1.xpose.msra.mxu0 0.0
    %5284 = vmatprep.subr.mxu0 0.0
    %5285 = vmatpush1.xpose.msra.mxu0 0.0
    %5286 = vmatprep.subr.mxu0 0.0
    %5287 = vmatpush1.xpose.msra.mxu0 0.0
    %5288 = vmatprep.subr.mxu0 0.0
    %5289 = vmatpush1.xpose.msra.mxu0 0.0
    %5290 = vmatprep.subr.mxu0 0.0
    %5291 = vmatpush1.xpose.msra.mxu0 0.0
    %5292 = vmatprep.subr.mxu0 0.0
    %5293 = vmatpush1.xpose.msra.mxu0 0.0
    %5294 = vmatprep.subr.mxu0 0.0
    %5295 = vmatpush1.xpose.msra.mxu0 0.0
    %5296 = vmatprep.subr.mxu0 0.0
    %5297 = vmatpush1.xpose.msra.mxu0 0.0
    %5298 = vmatprep.subr.mxu0 0.0
    %5299 = vmatpush1.xpose.msra.mxu0 0.0
    %5300 = vmatprep.subr.mxu0 0.0
    %5301 = vmatpush1.xpose.msra.mxu0 0.0
    %5302 = vmatprep.subr.mxu0 0.0
    %5303 = vmatpush1.xpose.msra.mxu0 0.0
    %5304 = vmatprep.mubr.f32.mxu0 0.0
    %5305 = vmatmul.mubr.f32.gmra.mrb[0].mxu0 %v4125
    %v5306 = vpop.f32.mrb[0].mxu0
    %v5307 = vadd.f32 %v5236, %v5306
    %v5308 = vpop.f32.mrb[0].mxu0
    %5309 = vdwg.mxu0
    %v5310 = vmul.f32 %v5149, 0.5
    %v5312 = vsel %vm2436, %v5310, 0
    %v5315 = vsel %vm2436, %v5228, 0
    %5317 = vmatprep.subr.mxu0 0.0
    %5318 = vmatpush1.xpose.msra.mxu0 %v5315
    %5319 = vmatprep.subr.mxu0 0.0
    %5320 = vmatpush1.xpose.msra.mxu0 0.0
    %5321 = vmatprep.subr.mxu0 0.0
    %5322 = vmatpush1.xpose.msra.mxu0 0.0
    %5323 = vmatprep.subr.mxu0 0.0
    %5324 = vmatpush1.xpose.msra.mxu0 0.0
    %5325 = vmatprep.subr.mxu0 0.0
    %5326 = vmatpush1.xpose.msra.mxu0 0.0
    %5327 = vmatprep.subr.mxu0 0.0
    %5328 = vmatpush1.xpose.msra.mxu0 0.0
    %5329 = vmatprep.subr.mxu0 0.0
    %5330 = vmatpush1.xpose.msra.mxu0 0.0
    %5331 = vmatprep.subr.mxu0 0.0
    %5332 = vmatpush1.xpose.msra.mxu0 0.0
    %5333 = vmatprep.subr.mxu0 0.0
    %5334 = vmatpush1.xpose.msra.mxu0 0.0
    %5335 = vmatprep.subr.mxu0 0.0
    %5336 = vmatpush1.xpose.msra.mxu0 0.0
    %5337 = vmatprep.subr.mxu0 0.0
    %5338 = vmatpush1.xpose.msra.mxu0 0.0
    %5339 = vmatprep.subr.mxu0 0.0
    %5340 = vmatpush1.xpose.msra.mxu0 0.0
    %5341 = vmatprep.subr.mxu0 0.0
    %5342 = vmatpush1.xpose.msra.mxu0 0.0
    %5343 = vmatprep.subr.mxu0 0.0
    %5344 = vmatpush1.xpose.msra.mxu0 0.0
    %5345 = vmatprep.subr.mxu0 0.0
    %5346 = vmatpush1.xpose.msra.mxu0 0.0
    %5347 = vmatprep.subr.mxu0 0.0
    %5348 = vmatpush1.xpose.msra.mxu0 0.0
    %5349 = vmatprep.subr.mxu0 0.0
    %5350 = vmatpush1.xpose.msra.mxu0 0.0
    %5351 = vmatprep.subr.mxu0 0.0
    %5352 = vmatpush1.xpose.msra.mxu0 0.0
    %5353 = vmatprep.subr.mxu0 0.0
    %5354 = vmatpush1.xpose.msra.mxu0 0.0
    %5355 = vmatprep.subr.mxu0 0.0
    %5356 = vmatpush1.xpose.msra.mxu0 0.0
    %5357 = vmatprep.subr.mxu0 0.0
    %5358 = vmatpush1.xpose.msra.mxu0 0.0
    %5359 = vmatprep.subr.mxu0 0.0
    %5360 = vmatpush1.xpose.msra.mxu0 0.0
    %5361 = vmatprep.subr.mxu0 0.0
    %5362 = vmatpush1.xpose.msra.mxu0 0.0
    %5363 = vmatprep.subr.mxu0 0.0
    %5364 = vmatpush1.xpose.msra.mxu0 0.0
    %5365 = vmatprep.subr.mxu0 0.0
    %5366 = vmatpush1.xpose.msra.mxu0 0.0
    %5367 = vmatprep.subr.mxu0 0.0
    %5368 = vmatpush1.xpose.msra.mxu0 0.0
    %5369 = vmatprep.subr.mxu0 0.0
    %5370 = vmatpush1.xpose.msra.mxu0 0.0
    %5371 = vmatprep.subr.mxu0 0.0
    %5372 = vmatpush1.xpose.msra.mxu0 0.0
    %5373 = vmatprep.subr.mxu0 0.0
    %5374 = vmatpush1.xpose.msra.mxu0 0.0
    %5375 = vmatprep.subr.mxu0 0.0
    %5376 = vmatpush1.xpose.msra.mxu0 0.0
    %5377 = vmatprep.subr.mxu0 0.0
    %5378 = vmatpush1.xpose.msra.mxu0 0.0
    %5379 = vmatprep.subr.mxu0 0.0
    %5380 = vmatpush1.xpose.msra.mxu0 0.0
    %5381 = vmatprep.mubr.f32.mxu0 0.0
    %5382 = vmatmul.mubr.f32.gmra.mrb[0].mxu0 %v5312
    %v5383 = vpop.f32.mrb[0].mxu0
    %v5384 = vadd.f32 0.0, %v5383
    %v5385 = vpop.f32.mrb[0].mxu0
    %5386 = vdwg.mxu0
    %v5387 = vsel %vm2513, %v5384, -inf
    %5388 = vmax.xlane.f32.xlu0 %v5387
    %v5389 = vpop.xlane.xlu0 %5388
    %v5390 = vsub.f32 %v5384, %v5389
    %v5391 = vmul.f32 %v5390, 1.442695
    %v5392 = vpow.pop %v5391
    %v5393 = vsel %vm2513, %v5392, 0.0
    %5394 = vadd.xlane.f32.xlu0 %v5393
    %v5395 = vpop.xlane.xlu0 %5394
    %v5396 = vrcp.pop %v5395
    %v5397 = vmul.f32 %v5392, %v5396
    %v5398 = vadd.f32 %v4846, %v5397
    %v5400 = vsel %vm2513, %v5397, 0
    %5402 = vmatprep.subr.mxu0 0.0
    %5403 = vmatpush1.msra.mxu0 %v5307
    %5404 = vmatprep.subr.mxu0 0.0
    %5405 = vmatpush1.msra.mxu0 0.0
    %5406 = vmatprep.subr.mxu0 0.0
    %5407 = vmatpush1.msra.mxu0 0.0
    %5408 = vmatprep.subr.mxu0 0.0
    %5409 = vmatpush1.msra.mxu0 0.0
    %5410 = vmatprep.subr.mxu0 0.0
    %5411 = vmatpush1.msra.mxu0 0.0
    %5412 = vmatprep.subr.mxu0 0.0
    %5413 = vmatpush1.msra.mxu0 0.0
    %5414 = vmatprep.subr.mxu0 0.0
    %5415 = vmatpush1.msra.mxu0 0.0
    %5416 = vmatprep.subr.mxu0 0.0
    %5417 = vmatpush1.msra.mxu0 0.0
    %5418 = vmatprep.subr.mxu0 0.0
    %5419 = vmatpush1.msra.mxu0 0.0
    %5420 = vmatprep.subr.mxu0 0.0
    %5421 = vmatpush1.msra.mxu0 0.0
    %5422 = vmatprep.subr.mxu0 0.0
    %5423 = vmatpush1.msra.mxu0 0.0
    %5424 = vmatprep.subr.mxu0 0.0
    %5425 = vmatpush1.msra.mxu0 0.0
    %5426 = vmatprep.subr.mxu0 0.0
    %5427 = vmatpush1.msra.mxu0 0.0
    %5428 = vmatprep.subr.mxu0 0.0
    %5429 = vmatpush1.msra.mxu0 0.0
    %5430 = vmatprep.subr.mxu0 0.0
    %5431 = vmatpush1.msra.mxu0 0.0
    %5432 = vmatprep.subr.mxu0 0.0
    %5433 = vmatpush1.msra.mxu0 0.0
    %5434 = vmatprep.subr.mxu0 0.0
    %5435 = vmatpush1.msra.mxu0 0.0
    %5436 = vmatprep.subr.mxu0 0.0
    %5437 = vmatpush1.msra.mxu0 0.0
    %5438 = vmatprep.subr.mxu0 0.0
    %5439 = vmatpush1.msra.mxu0 0.0
    %5440 = vmatprep.subr.mxu0 0.0
    %5441 = vmatpush1.msra.mxu0 0.0
    %5442 = vmatprep.subr.mxu0 0.0
    %5443 = vmatpush1.msra.mxu0 0.0
    %5444 = vmatprep.subr.mxu0 0.0
    %5445 = vmatpush1.msra.mxu0 0.0
    %5446 = vmatprep.subr.mxu0 0.0
    %5447 = vmatpush1.msra.mxu0 0.0
    %5448 = vmatprep.subr.mxu0 0.0
    %5449 = vmatpush1.msra.mxu0 0.0
    %5450 = vmatprep.subr.mxu0 0.0
    %5451 = vmatpush1.msra.mxu0 0.0
    %5452 = vmatprep.subr.mxu0 0.0
    %5453 = vmatpush1.msra.mxu0 0.0
    %5454 = vmatprep.subr.mxu0 0.0
    %5455 = vmatpush1.msra.mxu0 0.0
    %5456 = vmatprep.subr.mxu0 0.0
    %5457 = vmatpush1.msra.mxu0 0.0
    %5458 = vmatprep.subr.mxu0 0.0
    %5459 = vmatpush1.msra.mxu0 0.0
    %5460 = vmatprep.subr.mxu0 0.0
    %5461 = vmatpush1.msra.mxu0 0.0
    %5462 = vmatprep.subr.mxu0 0.0
    %5463 = vmatpush1.msra.mxu0 0.0
    %5464 = vmatprep.subr.mxu0 0.0
    %5465 = vmatpush1.msra.mxu0 0.0
    %5466 = vmatprep.mubr.f32.mxu0 0.0
    %5467 = vmatmul.mubr.f32.gmra.mrb[0].mxu0 %v5400
    %v5468 = vpop.f32.mrb[0].mxu0
    %v5469 = vadd.f32 0.0, %v5468
    %v5470 = vpop.f32.mrb[0].mxu0
    %5471 = vdwg.mxu0
    %v5472 = vld [vmem:[%s8 + $0x8] sm:$0xf]
    %v5474 = vsel %vm2436, %v5469, 0
    %v5477 = vsel %vm3003, %v5472, 0
    %5479 = vmatprep.subr.mxu0 0.0
    %5480 = vmatpush1.msra.mxu0 %v5477
    %5481 = vmatprep.subr.mxu0 0.0
    %5482 = vmatpush1.msra.mxu0 0.0
    %5483 = vmatprep.subr.mxu0 0.0
    %5484 = vmatpush1.msra.mxu0 0.0
    %5485 = vmatprep.subr.mxu0 0.0
    %5486 = vmatpush1.msra.mxu0 0.0
    %5487 = vmatprep.subr.mxu0 0.0
    %5488 = vmatpush1.msra.mxu0 0.0
    %5489 = vmatprep.subr.mxu0 0.0
    %5490 = vmatpush1.msra.mxu0 0.0
    %5491 = vmatprep.subr.mxu0 0.0
    %5492 = vmatpush1.msra.mxu0 0.0
    %5493 = vmatprep.subr.mxu0 0.0
    %5494 = vmatpush1.msra.mxu0 0.0
    %5495 = vmatprep.subr.mxu0 0.0
    %5496 = vmatpush1.msra.mxu0 0.0
    %5497 = vmatprep.subr.mxu0 0.0
    %5498 = vmatpush1.msra.mxu0 0.0
    %5499 = vmatprep.subr.mxu0 0.0
    %5500 = vmatpush1.msra.mxu0 0.0
    %5501 = vmatprep.subr.mxu0 0.0
    %5502 = vmatpush1.msra.mxu0 0.0
    %5503 = vmatprep.subr.mxu0 0.0
    %5504 = vmatpush1.msra.mxu0 0.0
    %5505 = vmatprep.subr.mxu0 0.0
    %5506 = vmatpush1.msra.mxu0 0.0
    %5507 = vmatprep.subr.mxu0 0.0
    %5508 = vmatpush1.msra.mxu0 0.0
    %5509 = vmatprep.subr.mxu0 0.0
    %5510 = vmatpush1.msra.mxu0 0.0
    %5511 = vmatprep.subr.mxu0 0.0
    %5512 = vmatpush1.msra.mxu0 0.0
    %5513 = vmatprep.subr.mxu0 0.0
    %5514 = vmatpush1.msra.mxu0 0.0
    %5515 = vmatprep.subr.mxu0 0.0
    %5516 = vmatpush1.msra.mxu0 0.0
    %5517 = vmatprep.subr.mxu0 0.0
    %5518 = vmatpush1.msra.mxu0 0.0
    %5519 = vmatprep.subr.mxu0 0.0
    %5520 = vmatpush1.msra.mxu0 0.0
    %5521 = vmatprep.subr.mxu0 0.0
    %5522 = vmatpush1.msra.mxu0 0.0
    %5523 = vmatprep.subr.mxu0 0.0
    %5524 = vmatpush1.msra.mxu0 0.0
    %5525 = vmatprep.subr.mxu0 0.0
    %5526 = vmatpush1.msra.mxu0 0.0
    %5527 = vmatprep.subr.mxu0 0.0
    %5528 = vmatpush1.msra.mxu0 0.0
    %5529 = vmatprep.subr.mxu0 0.0
    %5530 = vmatpush1.msra.mxu0 0.0
    %5531 = vmatprep.subr.mxu0 0.0
    %5532 = vmatpush1.msra.mxu0 0.0
    %5533 = vmatprep.subr.mxu0 0.0
    %5534 = vmatpush1.msra.mxu0 0.0
    %5535 = vmatprep.subr.mxu0 0.0
    %5536 = vmatpush1.msra.mxu0 0.0
    %5537 = vmatprep.subr.mxu0 0.0
    %5538 = vmatpush1.msra.mxu0 0.0
    %5539 = vmatprep.subr.mxu0 0.0
    %5540 = vmatpush1.msra.mxu0 0.0
    %5541 = vmatprep.subr.mxu0 0.0
    %5542 = vmatpush1.msra.mxu0 0.0
    %5543 = vmatprep.mubr.f32.mxu0 0.0
    %5544 = vmatmul.mubr.f32.gmra.mrb[0].mxu0 %v5474
    %v5545 = vpop.f32.mrb[0].mxu0
    %v5546 = vadd.f32 0.0, %v5545
    %v5547 = vpop.f32.mrb[0].mxu0
    %5548 = vdwg.mxu0
    %v5549 = vadd.f32 %v5070, %v5546
    %v5550 = vld [vmem:[%s6 + $0xc] sm:$0xf]
    %v5551 = vld [vmem:[%s7 + $0x3] sm:$0x1]
    %v5552 = vlaneseq
    %v5553 = vshrl.u32 %v5552, 7
    %v5554 = vsub.s32 0, %v5553
    %v5555 = vrot.slane %v5551, %v5554
    %v5557 = vsel %vm65, %v5550, 0
    %5559 = vmatprep.subr.mxu0 0.0
    %5560 = vmatpush1.xpose.msra.mxu0 %v5557
    %5561 = vmatprep.subr.mxu0 0.0
    %5562 = vmatpush1.xpose.msra.mxu0 0.0
    %5563 = vmatprep.subr.mxu0 0.0
    %5564 = vmatpush1.xpose.msra.mxu0 0.0
    %5565 = vmatprep.subr.mxu0 0.0
    %5566 = vmatpush1.xpose.msra.mxu0 0.0
    %5567 = vmatprep.subr.mxu0 0.0
    %5568 = vmatpush1.xpose.msra.mxu0 0.0
    %5569 = vmatprep.subr.mxu0 0.0
    %5570 = vmatpush1.xpose.msra.mxu0 0.0
    %5571 = vmatprep.subr.mxu0 0.0
    %5572 = vmatpush1.xpose.msra.mxu0 0.0
    %5573 = vmatprep.subr.mxu0 0.0
    %5574 = vmatpush1.xpose.msra.mxu0 0.0
    %5575 = vmatprep.subr.mxu0 0.0
    %5576 = vmatpush1.xpose.msra.mxu0 0.0
    %5577 = vmatprep.subr.mxu0 0.0
    %5578 = vmatpush1.xpose.msra.mxu0 0.0
    %5579 = vmatprep.subr.mxu0 0.0
    %5580 = vmatpush1.xpose.msra.mxu0 0.0
    %5581 = vmatprep.subr.mxu0 0.0
    %5582 = vmatpush1.xpose.msra.mxu0 0.0
    %5583 = vmatprep.subr.mxu0 0.0
    %5584 = vmatpush1.xpose.msra.mxu0 0.0
    %5585 = vmatprep.subr.mxu0 0.0
    %5586 = vmatpush1.xpose.msra.mxu0 0.0
    %5587 = vmatprep.subr.mxu0 0.0
    %5588 = vmatpush1.xpose.msra.mxu0 0.0
    %5589 = vmatprep.subr.mxu0 0.0
    %5590 = vmatpush1.xpose.msra.mxu0 0.0
    %5591 = vmatprep.subr.mxu0 0.0
    %5592 = vmatpush1.xpose.msra.mxu0 0.0
    %5593 = vmatprep.subr.mxu0 0.0
    %5594 = vmatpush1.xpose.msra.mxu0 0.0
    %5595 = vmatprep.subr.mxu0 0.0
    %5596 = vmatpush1.xpose.msra.mxu0 0.0
    %5597 = vmatprep.subr.mxu0 0.0
    %5598 = vmatpush1.xpose.msra.mxu0 0.0
    %5599 = vmatprep.subr.mxu0 0.0
    %5600 = vmatpush1.xpose.msra.mxu0 0.0
    %5601 = vmatprep.subr.mxu0 0.0
    %5602 = vmatpush1.xpose.msra.mxu0 0.0
    %5603 = vmatprep.subr.mxu0 0.0
    %5604 = vmatpush1.xpose.msra.mxu0 0.0
    %5605 = vmatprep.subr.mxu0 0.0
    %5606 = vmatpush1.xpose.msra.mxu0 0.0
    %5607 = vmatprep.subr.mxu0 0.0
    %5608 = vmatpush1.xpose.msra.mxu0 0.0
    %5609 = vmatprep.subr.mxu0 0.0
    %5610 = vmatpush1.xpose.msra.mxu0 0.0
    %5611 = vmatprep.subr.mxu0 0.0
    %5612 = vmatpush1.xpose.msra.mxu0 0.0
    %5613 = vmatprep.subr.mxu0 0.0
    %5614 = vmatpush1.xpose.msra.mxu0 0.0
    %5615 = vmatprep.subr.mxu0 0.0
    %5616 = vmatpush1.xpose.msra.mxu0 0.0
    %5617 = vmatprep.subr.mxu0 0.0
    %5618 = vmatpush1.xpose.msra.mxu0 0.0
    %5619 = vmatprep.subr.mxu0 0.0
    %5620 = vmatpush1.xpose.msra.mxu0 0.0
    %5621 = vmatprep.subr.mxu0 0.0
    %5622 = vmatpush1.xpose.msra.mxu0 0.0
    %5623 = vmatprep.mubr.f32.mxu0 0.0
    %5624 = vmatmul.mubr.f32.gmra.mrb[0].mxu0 %v4125
    %v5625 = vpop.f32.mrb[0].mxu0
    %v5626 = vadd.f32 %v5555, %v5625
    %v5627 = vpop.f32.mrb[0].mxu0
    %5628 = vdwg.mxu0
    %v5629 = vld [vmem:[%s6 + $0x1c] sm:$0xf]
    %v5630 = vld [vmem:[%s7 + $0x7] sm:$0x1]
    %v5631 = vlaneseq
    %v5632 = vshrl.u32 %v5631, 7
    %v5633 = vsub.s32 0, %v5632
    %v5634 = vrot.slane %v5630, %v5633
    %v5636 = vsel %vm65, %v5629, 0
    %5638 = vmatprep.subr.mxu0 0.0
    %5639 = vmatpush1.xpose.msra.mxu0 %v5636
    %5640 = vmatprep.subr.mxu0 0.0
    %5641 = vmatpush1.xpose.msra.mxu0 0.0
    %5642 = vmatprep.subr.mxu0 0.0
    %5643 = vmatpush1.xpose.msra.mxu0 0.0
    %5644 = vmatprep.subr.mxu0 0.0
    %5645 = vmatpush1.xpose.msra.mxu0 0.0
    %5646 = vmatprep.subr.mxu0 0.0
    %5647 = vmatpush1.xpose.msra.mxu0 0.0
    %5648 = vmatprep.subr.mxu0 0.0
    %5649 = vmatpush1.xpose.msra.mxu0 0.0
    %5650 = vmatprep.subr.mxu0 0.0
    %5651 = vmatpush1.xpose.msra.mxu0 0.0
    %5652 = vmatprep.subr.mxu0 0.0
    %5653 = vmatpush1.xpose.msra.mxu0 0.0
    %5654 = vmatprep.subr.mxu0 0.0
    %5655 = vmatpush1.xpose.msra.mxu0 0.0
    %5656 = vmatprep.subr.mxu0 0.0
    %5657 = vmatpush1.xpose.msra.mxu0 0.0
    %5658 = vmatprep.subr.mxu0 0.0
    %5659 = vmatpush1.xpose.msra.mxu0 0.0
    %5660 = vmatprep.subr.mxu0 0.0
    %5661 = vmatpush1.xpose.msra.mxu0 0.0
    %5662 = vmatprep.subr.mxu0 0.0
    %5663 = vmatpush1.xpose.msra.mxu0 0.0
    %5664 = vmatprep.subr.mxu0 0.0
    %5665 = vmatpush1.xpose.msra.mxu0 0.0
    %5666 = vmatprep.subr.mxu0 0.0
    %5667 = vmatpush1.xpose.msra.mxu0 0.0
    %5668 = vmatprep.subr.mxu0 0.0
    %5669 = vmatpush1.xpose.msra.mxu0 0.0
    %5670 = vmatprep.subr.mxu0 0.0
    %5671 = vmatpush1.xpose.msra.mxu0 0.0
    %5672 = vmatprep.subr.mxu0 0.0
    %5673 = vmatpush1.xpose.msra.mxu0 0.0
    %5674 = vmatprep.subr.mxu0 0.0
    %5675 = vmatpush1.xpose.msra.mxu0 0.0
    %5676 = vmatprep.subr.mxu0 0.0
    %5677 = vmatpush1.xpose.msra.mxu0 0.0
    %5678 = vmatprep.subr.mxu0 0.0
    %5679 = vmatpush1.xpose.msra.mxu0 0.0
    %5680 = vmatprep.subr.mxu0 0.0
    %5681 = vmatpush1.xpose.msra.mxu0 0.0
    %5682 = vmatprep.subr.mxu0 0.0
    %5683 = vmatpush1.xpose.msra.mxu0 0.0
    %5684 = vmatprep.subr.mxu0 0.0
    %5685 = vmatpush1.xpose.msra.mxu0 0.0
    %5686 = vmatprep.subr.mxu0 0.0
    %5687 = vmatpush1.xpose.msra.mxu0 0.0
    %5688 = vmatprep.subr.mxu0 0.0
    %5689 = vmatpush1.xpose.msra.mxu0 0.0
    %5690 = vmatprep.subr.mxu0 0.0
    %5691 = vmatpush1.xpose.msra.mxu0 0.0
    %5692 = vmatprep.subr.mxu0 0.0
    %5693 = vmatpush1.xpose.msra.mxu0 0.0
    %5694 = vmatprep.subr.mxu0 0.0
    %5695 = vmatpush1.xpose.msra.mxu0 0.0
    %5696 = vmatprep.subr.mxu0 0.0
    %5697 = vmatpush1.xpose.msra.mxu0 0.0
    %5698 = vmatprep.subr.mxu0 0.0
    %5699 = vmatpush1.xpose.msra.mxu0 0.0
    %5700 = vmatprep.subr.mxu0 0.0
    %5701 = vmatpush1.xpose.msra.mxu0 0.0
    %5702 = vmatprep.mubr.f32.mxu0 0.0
    %5703 = vmatmul.mubr.f32.gmra.mrb[0].mxu0 %v4125
    %v5704 = vpop.f32.mrb[0].mxu0
    %v5705 = vadd.f32 %v5634, %v5704
    %v5706 = vpop.f32.mrb[0].mxu0
    %5707 = vdwg.mxu0
    %v5708 = vld [vmem:[%s6 + $0x2c] sm:$0xf]
    %v5709 = vld [vmem:[%s7 + $0xb] sm:$0x1]
    %v5710 = vlaneseq
    %v5711 = vshrl.u32 %v5710, 7
    %v5712 = vsub.s32 0, %v5711
    %v5713 = vrot.slane %v5709, %v5712
    %v5715 = vsel %vm65, %v5708, 0
    %5717 = vmatprep.subr.mxu0 0.0
    %5718 = vmatpush1.xpose.msra.mxu0 %v5715
    %5719 = vmatprep.subr.mxu0 0.0
    %5720 = vmatpush1.xpose.msra.mxu0 0.0
    %5721 = vmatprep.subr.mxu0 0.0
    %5722 = vmatpush1.xpose.msra.mxu0 0.0
    %5723 = vmatprep.subr.mxu0 0.0
    %5724 = vmatpush1.xpose.msra.mxu0 0.0
    %5725 = vmatprep.subr.mxu0 0.0
    %5726 = vmatpush1.xpose.msra.mxu0 0.0
    %5727 = vmatprep.subr.mxu0 0.0
    %5728 = vmatpush1.xpose.msra.mxu0 0.0
    %5729 = vmatprep.subr.mxu0 0.0
    %5730 = vmatpush1.xpose.msra.mxu0 0.0
    %5731 = vmatprep.subr.mxu0 0.0
    %5732 = vmatpush1.xpose.msra.mxu0 0.0
    %5733 = vmatprep.subr.mxu0 0.0
    %5734 = vmatpush1.xpose.msra.mxu0 0.0
    %5735 = vmatprep.subr.mxu0 0.0
    %5736 = vmatpush1.xpose.msra.mxu0 0.0
    %5737 = vmatprep.subr.mxu0 0.0
    %5738 = vmatpush1.xpose.msra.mxu0 0.0
    %5739 = vmatprep.subr.mxu0 0.0
    %5740 = vmatpush1.xpose.msra.mxu0 0.0
    %5741 = vmatprep.subr.mxu0 0.0
    %5742 = vmatpush1.xpose.msra.mxu0 0.0
    %5743 = vmatprep.subr.mxu0 0.0
    %5744 = vmatpush1.xpose.msra.mxu0 0.0
    %5745 = vmatprep.subr.mxu0 0.0
    %5746 = vmatpush1.xpose.msra.mxu0 0.0
    %5747 = vmatprep.subr.mxu0 0.0
    %5748 = vmatpush1.xpose.msra.mxu0 0.0
    %5749 = vmatprep.subr.mxu0 0.0
    %5750 = vmatpush1.xpose.msra.mxu0 0.0
    %5751 = vmatprep.subr.mxu0 0.0
    %5752 = vmatpush1.xpose.msra.mxu0 0.0
    %5753 = vmatprep.subr.mxu0 0.0
    %5754 = vmatpush1.xpose.msra.mxu0 0.0
    %5755 = vmatprep.subr.mxu0 0.0
    %5756 = vmatpush1.xpose.msra.mxu0 0.0
    %5757 = vmatprep.subr.mxu0 0.0
    %5758 = vmatpush1.xpose.msra.mxu0 0.0
    %5759 = vmatprep.subr.mxu0 0.0
    %5760 = vmatpush1.xpose.msra.mxu0 0.0
    %5761 = vmatprep.subr.mxu0 0.0
    %5762 = vmatpush1.xpose.msra.mxu0 0.0
    %5763 = vmatprep.subr.mxu0 0.0
    %5764 = vmatpush1.xpose.msra.mxu0 0.0
    %5765 = vmatprep.subr.mxu0 0.0
    %5766 = vmatpush1.xpose.msra.mxu0 0.0
    %5767 = vmatprep.subr.mxu0 0.0
    %5768 = vmatpush1.xpose.msra.mxu0 0.0
    %5769 = vmatprep.subr.mxu0 0.0
    %5770 = vmatpush1.xpose.msra.mxu0 0.0
    %5771 = vmatprep.subr.mxu0 0.0
    %5772 = vmatpush1.xpose.msra.mxu0 0.0
    %5773 = vmatprep.subr.mxu0 0.0
    %5774 = vmatpush1.xpose.msra.mxu0 0.0
    %5775 = vmatprep.subr.mxu0 0.0
    %5776 = vmatpush1.xpose.msra.mxu0 0.0
    %5777 = vmatprep.subr.mxu0 0.0
    %5778 = vmatpush1.xpose.msra.mxu0 0.0
    %5779 = vmatprep.subr.mxu0 0.0
    %5780 = vmatpush1.xpose.msra.mxu0 0.0
    %5781 = vmatprep.mubr.f32.mxu0 0.0
    %5782 = vmatmul.mubr.f32.gmra.mrb[0].mxu0 %v4125
    %v5783 = vpop.f32.mrb[0].mxu0
    %v5784 = vadd.f32 %v5713, %v5783
    %v5785 = vpop.f32.mrb[0].mxu0
    %5786 = vdwg.mxu0
    %v5787 = vmul.f32 %v5626, 0.5
    %v5789 = vsel %vm2436, %v5787, 0
    %v5792 = vsel %vm2436, %v5705, 0
    %5794 = vmatprep.subr.mxu0 0.0
    %5795 = vmatpush1.xpose.msra.mxu0 %v5792
    %5796 = vmatprep.subr.mxu0 0.0
    %5797 = vmatpush1.xpose.msra.mxu0 0.0
    %5798 = vmatprep.subr.mxu0 0.0
    %5799 = vmatpush1.xpose.msra.mxu0 0.0
    %5800 = vmatprep.subr.mxu0 0.0
    %5801 = vmatpush1.xpose.msra.mxu0 0.0
    %5802 = vmatprep.subr.mxu0 0.0
    %5803 = vmatpush1.xpose.msra.mxu0 0.0
    %5804 = vmatprep.subr.mxu0 0.0
    %5805 = vmatpush1.xpose.msra.mxu0 0.0
    %5806 = vmatprep.subr.mxu0 0.0
    %5807 = vmatpush1.xpose.msra.mxu0 0.0
    %5808 = vmatprep.subr.mxu0 0.0
    %5809 = vmatpush1.xpose.msra.mxu0 0.0
    %5810 = vmatprep.subr.mxu0 0.0
    %5811 = vmatpush1.xpose.msra.mxu0 0.0
    %5812 = vmatprep.subr.mxu0 0.0
    %5813 = vmatpush1.xpose.msra.mxu0 0.0
    %5814 = vmatprep.subr.mxu0 0.0
    %5815 = vmatpush1.xpose.msra.mxu0 0.0
    %5816 = vmatprep.subr.mxu0 0.0
    %5817 = vmatpush1.xpose.msra.mxu0 0.0
    %5818 = vmatprep.subr.mxu0 0.0
    %5819 = vmatpush1.xpose.msra.mxu0 0.0
    %5820 = vmatprep.subr.mxu0 0.0
    %5821 = vmatpush1.xpose.msra.mxu0 0.0
    %5822 = vmatprep.subr.mxu0 0.0
    %5823 = vmatpush1.xpose.msra.mxu0 0.0
    %5824 = vmatprep.subr.mxu0 0.0
    %5825 = vmatpush1.xpose.msra.mxu0 0.0
    %5826 = vmatprep.subr.mxu0 0.0
    %5827 = vmatpush1.xpose.msra.mxu0 0.0
    %5828 = vmatprep.subr.mxu0 0.0
    %5829 = vmatpush1.xpose.msra.mxu0 0.0
    %5830 = vmatprep.subr.mxu0 0.0
    %5831 = vmatpush1.xpose.msra.mxu0 0.0
    %5832 = vmatprep.subr.mxu0 0.0
    %5833 = vmatpush1.xpose.msra.mxu0 0.0
    %5834 = vmatprep.subr.mxu0 0.0
    %5835 = vmatpush1.xpose.msra.mxu0 0.0
    %5836 = vmatprep.subr.mxu0 0.0
    %5837 = vmatpush1.xpose.msra.mxu0 0.0
    %5838 = vmatprep.subr.mxu0 0.0
    %5839 = vmatpush1.xpose.msra.mxu0 0.0
    %5840 = vmatprep.subr.mxu0 0.0
    %5841 = vmatpush1.xpose.msra.mxu0 0.0
    %5842 = vmatprep.subr.mxu0 0.0
    %5843 = vmatpush1.xpose.msra.mxu0 0.0
    %5844 = vmatprep.subr.mxu0 0.0
    %5845 = vmatpush1.xpose.msra.mxu0 0.0
    %5846 = vmatprep.subr.mxu0 0.0
    %5847 = vmatpush1.xpose.msra.mxu0 0.0
    %5848 = vmatprep.subr.mxu0 0.0
    %5849 = vmatpush1.xpose.msra.mxu0 0.0
    %5850 = vmatprep.subr.mxu0 0.0
    %5851 = vmatpush1.xpose.msra.mxu0 0.0
    %5852 = vmatprep.subr.mxu0 0.0
    %5853 = vmatpush1.xpose.msra.mxu0 0.0
    %5854 = vmatprep.subr.mxu0 0.0
    %5855 = vmatpush1.xpose.msra.mxu0 0.0
    %5856 = vmatprep.subr.mxu0 0.0
    %5857 = vmatpush1.xpose.msra.mxu0 0.0
    %5858 = vmatprep.mubr.f32.mxu0 0.0
    %5859 = vmatmul.mubr.f32.gmra.mrb[0].mxu0 %v5789
    %v5860 = vpop.f32.mrb[0].mxu0
    %v5861 = vadd.f32 0.0, %v5860
    %v5862 = vpop.f32.mrb[0].mxu0
    %5863 = vdwg.mxu0
    %v5864 = vsel %vm2513, %v5861, -inf
    %5865 = vmax.xlane.f32.xlu0 %v5864
    %v5866 = vpop.xlane.xlu0 %5865
    %v5867 = vsub.f32 %v5861, %v5866
    %v5868 = vmul.f32 %v5867, 1.442695
    %v5869 = vpow.pop %v5868
    %v5870 = vsel %vm2513, %v5869, 0.0
    %5871 = vadd.xlane.f32.xlu0 %v5870
    %v5872 = vpop.xlane.xlu0 %5871
    %v5873 = vrcp.pop %v5872
    %v5874 = vmul.f32 %v5869, %v5873
    %v5875 = vadd.f32 %v5398, %v5874
    %v5877 = vsel %vm2513, %v5874, 0
    %5879 = vmatprep.subr.mxu0 0.0
    %5880 = vmatpush1.msra.mxu0 %v5784
    %5881 = vmatprep.subr.mxu0 0.0
    %5882 = vmatpush1.msra.mxu0 0.0
    %5883 = vmatprep.subr.mxu0 0.0
    %5884 = vmatpush1.msra.mxu0 0.0
    %5885 = vmatprep.subr.mxu0 0.0
    %5886 = vmatpush1.msra.mxu0 0.0
    %5887 = vmatprep.subr.mxu0 0.0
    %5888 = vmatpush1.msra.mxu0 0.0
    %5889 = vmatprep.subr.mxu0 0.0
    %5890 = vmatpush1.msra.mxu0 0.0
    %5891 = vmatprep.subr.mxu0 0.0
    %5892 = vmatpush1.msra.mxu0 0.0
    %5893 = vmatprep.subr.mxu0 0.0
    %5894 = vmatpush1.msra.mxu0 0.0
    %5895 = vmatprep.subr.mxu0 0.0
    %5896 = vmatpush1.msra.mxu0 0.0
    %5897 = vmatprep.subr.mxu0 0.0
    %5898 = vmatpush1.msra.mxu0 0.0
    %5899 = vmatprep.subr.mxu0 0.0
    %5900 = vmatpush1.msra.mxu0 0.0
    %5901 = vmatprep.subr.mxu0 0.0
    %5902 = vmatpush1.msra.mxu0 0.0
    %5903 = vmatprep.subr.mxu0 0.0
    %5904 = vmatpush1.msra.mxu0 0.0
    %5905 = vmatprep.subr.mxu0 0.0
    %5906 = vmatpush1.msra.mxu0 0.0
    %5907 = vmatprep.subr.mxu0 0.0
    %5908 = vmatpush1.msra.mxu0 0.0
    %5909 = vmatprep.subr.mxu0 0.0
    %5910 = vmatpush1.msra.mxu0 0.0
    %5911 = vmatprep.subr.mxu0 0.0
    %5912 = vmatpush1.msra.mxu0 0.0
    %5913 = vmatprep.subr.mxu0 0.0
    %5914 = vmatpush1.msra.mxu0 0.0
    %5915 = vmatprep.subr.mxu0 0.0
    %5916 = vmatpush1.msra.mxu0 0.0
    %5917 = vmatprep.subr.mxu0 0.0
    %5918 = vmatpush1.msra.mxu0 0.0
    %5919 = vmatprep.subr.mxu0 0.0
    %5920 = vmatpush1.msra.mxu0 0.0
    %5921 = vmatprep.subr.mxu0 0.0
    %5922 = vmatpush1.msra.mxu0 0.0
    %5923 = vmatprep.subr.mxu0 0.0
    %5924 = vmatpush1.msra.mxu0 0.0
    %5925 = vmatprep.subr.mxu0 0.0
    %5926 = vmatpush1.msra.mxu0 0.0
    %5927 = vmatprep.subr.mxu0 0.0
    %5928 = vmatpush1.msra.mxu0 0.0
    %5929 = vmatprep.subr.mxu0 0.0
    %5930 = vmatpush1.msra.mxu0 0.0
    %5931 = vmatprep.subr.mxu0 0.0
    %5932 = vmatpush1.msra.mxu0 0.0
    %5933 = vmatprep.subr.mxu0 0.0
    %5934 = vmatpush1.msra.mxu0 0.0
    %5935 = vmatprep.subr.mxu0 0.0
    %5936 = vmatpush1.msra.mxu0 0.0
    %5937 = vmatprep.subr.mxu0 0.0
    %5938 = vmatpush1.msra.mxu0 0.0
    %5939 = vmatprep.subr.mxu0 0.0
    %5940 = vmatpush1.msra.mxu0 0.0
    %5941 = vmatprep.subr.mxu0 0.0
    %5942 = vmatpush1.msra.mxu0 0.0
    %5943 = vmatprep.mubr.f32.mxu0 0.0
    %5944 = vmatmul.mubr.f32.gmra.mrb[0].mxu0 %v5877
    %v5945 = vpop.f32.mrb[0].mxu0
    %v5946 = vadd.f32 0.0, %v5945
    %v5947 = vpop.f32.mrb[0].mxu0
    %5948 = vdwg.mxu0
    %v5949 = vld [vmem:[%s8 + $0xc] sm:$0xf]
    %v5951 = vsel %vm2436, %v5946, 0
    %v5954 = vsel %vm3003, %v5949, 0
    %5956 = vmatprep.subr.mxu0 0.0
    %5957 = vmatpush1.msra.mxu0 %v5954
    %5958 = vmatprep.subr.mxu0 0.0
    %5959 = vmatpush1.msra.mxu0 0.0
    %5960 = vmatprep.subr.mxu0 0.0
    %5961 = vmatpush1.msra.mxu0 0.0
    %5962 = vmatprep.subr.mxu0 0.0
    %5963 = vmatpush1.msra.mxu0 0.0
    %5964 = vmatprep.subr.mxu0 0.0
    %5965 = vmatpush1.msra.mxu0 0.0
    %5966 = vmatprep.subr.mxu0 0.0
    %5967 = vmatpush1.msra.mxu0 0.0
    %5968 = vmatprep.subr.mxu0 0.0
    %5969 = vmatpush1.msra.mxu0 0.0
    %5970 = vmatprep.subr.mxu0 0.0
    %5971 = vmatpush1.msra.mxu0 0.0
    %5972 = vmatprep.subr.mxu0 0.0
    %5973 = vmatpush1.msra.mxu0 0.0
    %5974 = vmatprep.subr.mxu0 0.0
    %5975 = vmatpush1.msra.mxu0 0.0
    %5976 = vmatprep.subr.mxu0 0.0
    %5977 = vmatpush1.msra.mxu0 0.0
    %5978 = vmatprep.subr.mxu0 0.0
    %5979 = vmatpush1.msra.mxu0 0.0
    %5980 = vmatprep.subr.mxu0 0.0
    %5981 = vmatpush1.msra.mxu0 0.0
    %5982 = vmatprep.subr.mxu0 0.0
    %5983 = vmatpush1.msra.mxu0 0.0
    %5984 = vmatprep.subr.mxu0 0.0
    %5985 = vmatpush1.msra.mxu0 0.0
    %5986 = vmatprep.subr.mxu0 0.0
    %5987 = vmatpush1.msra.mxu0 0.0
    %5988 = vmatprep.subr.mxu0 0.0
    %5989 = vmatpush1.msra.mxu0 0.0
    %5990 = vmatprep.subr.mxu0 0.0
    %5991 = vmatpush1.msra.mxu0 0.0
    %5992 = vmatprep.subr.mxu0 0.0
    %5993 = vmatpush1.msra.mxu0 0.0
    %5994 = vmatprep.subr.mxu0 0.0
    %5995 = vmatpush1.msra.mxu0 0.0
    %5996 = vmatprep.subr.mxu0 0.0
    %5997 = vmatpush1.msra.mxu0 0.0
    %5998 = vmatprep.subr.mxu0 0.0
    %5999 = vmatpush1.msra.mxu0 0.0
    %6000 = vmatprep.subr.mxu0 0.0
    %6001 = vmatpush1.msra.mxu0 0.0
    %6002 = vmatprep.subr.mxu0 0.0
    %6003 = vmatpush1.msra.mxu0 0.0
    %6004 = vmatprep.subr.mxu0 0.0
    %6005 = vmatpush1.msra.mxu0 0.0
    %6006 = vmatprep.subr.mxu0 0.0
    %6007 = vmatpush1.msra.mxu0 0.0
    %6008 = vmatprep.subr.mxu0 0.0
    %6009 = vmatpush1.msra.mxu0 0.0
    %6010 = vmatprep.subr.mxu0 0.0
    %6011 = vmatpush1.msra.mxu0 0.0
    %6012 = vmatprep.subr.mxu0 0.0
    %6013 = vmatpush1.msra.mxu0 0.0
    %6014 = vmatprep.subr.mxu0 0.0
    %6015 = vmatpush1.msra.mxu0 0.0
    %6016 = vmatprep.subr.mxu0 0.0
    %6017 = vmatpush1.msra.mxu0 0.0
    %6018 = vmatprep.subr.mxu0 0.0
    %6019 = vmatpush1.msra.mxu0 0.0
    %6020 = vmatprep.mubr.f32.mxu0 0.0
    %6021 = vmatmul.mubr.f32.gmra.mrb[0].mxu0 %v5951
    %v6022 = vpop.f32.mrb[0].mxu0
    %v6023 = vadd.f32 0.0, %v6022
    %v6024 = vpop.f32.mrb[0].mxu0
    %6025 = vdwg.mxu0
    %v6026 = vadd.f32 %v5549, %v6023
    %v6027 = vadd.f32 %v6026, %v4111
    %s6028 = scalar_lea.vmem %s11, 8
    %6029 = vst.msk [vmem:[%s6028] sm:$0xff] %vm212, %v6027
    %v6030 = vmul.f32 %v5875, 0.25
    %s6031 = scalar_lea.vmem [#allocation5], 8
    %6032 = vst.msk [vmem:[%s6031] sm:$0xff] %vm2513, %v6030
    // Predicated region
    $region42: #{bilstm_attention_forward.1} parent=1 // pred_check
      _
    $region43: #{bilstm_attention_forward.1} parent=1 // pred_check_branch
      %6034 = sbr.rel (0) target = $region45
    $region44: #{bilstm_attention_forward.1} parent=1 // pred_region
      %s6036 = ssub.s32 256, 256
      %6037 = vsyncadd [#allocation4], %s6036
      %s6038 = sshll.u32 [#allocation3], 4
      %s6039 = int_to_ptr.vmem [resolvable:$true] %s6038
      %6044 = dma.vmem_to_hbm [thread:$0]  %s6039, 256, %s10, [#allocation4], 32, 32, 2
    $region45: #{bilstm_attention_forward.1} parent=1 // pred_fallthru
      _
    // Predicated region
    $region46: #{bilstm_attention_forward.1} parent=1 // pred_check
      _
    $region47: #{bilstm_attention_forward.1} parent=1 // pred_check_branch
      %6046 = sbr.rel (0) target = $region49
    $region48: #{bilstm_attention_forward.1} parent=1 // pred_region
      _
    $region49: #{bilstm_attention_forward.1} parent=1 // pred_fallthru
      _
    // Predicated region
    $region50: #{bilstm_attention_forward.1} parent=1 // pred_check
      _
    $region51: #{bilstm_attention_forward.1} parent=1 // pred_check_branch
      %6048 = sbr.rel (0) target = $region53
    $region52: #{bilstm_attention_forward.1} parent=1 // pred_region
      %s6050 = ssub.s32 256, 256
      %6051 = vsyncadd [#allocation6], %s6050
      %s6052 = sshll.u32 [#allocation5], 4
      %s6053 = int_to_ptr.vmem [resolvable:$true] %s6052
      %6058 = dma.vmem_to_hbm [thread:$0]  %s6053, 256, %s12, [#allocation6], 128, 128, 8
    $region53: #{bilstm_attention_forward.1} parent=1 // pred_fallthru
      _
    // Predicated region
    $region54: #{bilstm_attention_forward.1} parent=1 // pred_check
      _
    $region55: #{bilstm_attention_forward.1} parent=1 // pred_check_branch
      %6060 = sbr.rel (0) target = $region57
    $region56: #{bilstm_attention_forward.1} parent=1 // pred_region
      %6061 = dma.done [#allocation4], 256
    $region57: #{bilstm_attention_forward.1} parent=1 // pred_fallthru
      _
    // Predicated region
    $region58: #{bilstm_attention_forward.1} parent=1 // pred_check
      _
    $region59: #{bilstm_attention_forward.1} parent=1 // pred_check_branch
      %6063 = sbr.rel (0) target = $region61
    $region60: #{bilstm_attention_forward.1} parent=1 // pred_region
      _
    $region61: #{bilstm_attention_forward.1} parent=1 // pred_fallthru
      _
    // Predicated region
    $region62: #{bilstm_attention_forward.1} parent=1 // pred_check
      _
    $region63: #{bilstm_attention_forward.1} parent=1 // pred_check_branch
      %6065 = sbr.rel (0) target = $region65
    $region64: #{bilstm_attention_forward.1} parent=1 // pred_region
      %6066 = dma.done [#allocation6], 256
    $region65: #{bilstm_attention_forward.1} parent=1 // pred_fallthru
      _
    %6067 = vsyncpa [#allocation4], 1
    %6068 = vsyncpa [#allocation6], 1

</llo_original>
